<compile_context>
chip_gen: v7x
topology: tpu7x:2x2x1
jax: 0.10.0
libtpu: 0.0.40
codegen_flags: <defaults>
</compile_context>

<pallas_src>
import functools

import numpy as np
import jax
import jax.numpy as jnp
from jax import lax
from jax.experimental import pallas as pl
from jax.experimental.pallas import tpu as pltpu


# ----------------------------------------------------------------------------
# Fused forward kernel (one image per grid step, everything in VMEM/registers).
# ----------------------------------------------------------------------------
def cnn_fused_kernel(x_ref, shifts_ref, *rest, num_blocks, cins, couts, H, W,
                     hidden):
    out_ref = rest[-1]
    refs = rest[:-1]
    HW = H * W

    def conv3x3(x, w_ref, cin, cout):
        # x: (cin, HW);  w_ref: (9, cout, cin);  shifts_ref[t]: (HW, HW)
        acc = jnp.zeros((cout, HW), jnp.float32)
        for t in range(9):
            w_t = w_ref[t]                                        # (cout, cin)
            if cin == 1:
                mixed = w_t * x                                   # (cout,1)*(1,HW)
            else:
                mixed = jnp.dot(w_t, x, preferred_element_type=jnp.float32)
            # spatial shift + zero-padding mask, as an MXU matmul
            acc = acc + jnp.dot(mixed, shifts_ref[t],
                                preferred_element_type=jnp.float32)
        return acc

    x = x_ref[0].astype(jnp.float32)                              # (Cin0, HW)
    idx = 0
    for b in range(num_blocks):
        w1, s1, t1, w2, s2, t2 = refs[idx:idx + 6]
        idx += 6
        cin, cout = cins[b], couts[b]
        identity = x
        # conv1 + folded eval-BN + ReLU   (Dropout = identity in eval mode)
        h = jnp.maximum(conv3x3(x, w1, cin, cout) * s1[...] + t1[...], 0.0)
        # conv2 + folded eval-BN + ReLU
        h = jnp.maximum(conv3x3(h, w2, cout, cout) * s2[...] + t2[...], 0.0)
        # residual add (broadcasts over channels when cin == 1)
        y = h + identity
        # LayerNorm over (H, W) per channel: gamma=1, beta=0, eps=1e-5
        mean = jnp.mean(y, axis=1, keepdims=True)
        var = jnp.mean((y - mean) ** 2, axis=1, keepdims=True)
        y = (y - mean) * lax.rsqrt(var + 1e-5)
        if b > 0:                      # standalone nn.ReLU() after hidden blocks
            y = jnp.maximum(y, 0.0)
        x = y

    # ---- MaxPool2d(2, 2): horizontal then vertical pairwise max via shifts ----
    m = jnp.maximum(x, jnp.dot(x, shifts_ref[1 * 3 + 2],      # (dy=0, dx=+1)
                               preferred_element_type=jnp.float32))
    m = jnp.maximum(m, jnp.dot(m, shifts_ref[2 * 3 + 1],      # (dy=+1, dx=0)
                               preferred_element_type=jnp.float32))
    # m[c, 2i*W + 2j] now holds the pooled value; other lanes are ignored because
    # the corresponding rows of the (rearranged) dense weight are zero.

    # ---- Dense head: Linear -> ReLU -> Linear, all on the MXU ----
    w1r_ref, b1_ref, w2_ref, b2_ref = refs[idx:idx + 4]
    cout = couts[-1]
    h = jnp.zeros((1, hidden), jnp.float32)
    lane_c = lax.broadcasted_iota(jnp.int32, (1, cout), 1)
    for c in range(cout):
        e_c = (lane_c == c).astype(jnp.float32)                   # one-hot (1, cout)
        row = jnp.dot(e_c, m, preferred_element_type=jnp.float32)  # (1, HW)
        h = h + jnp.dot(row, w1r_ref[c], preferred_element_type=jnp.float32)
    h = jnp.maximum(h + b1_ref[...], 0.0)
    out_ref[0] = (jnp.dot(h, w2_ref[...], preferred_element_type=jnp.float32)
                  + b2_ref[...])


# ----------------------------------------------------------------------------
# Single fused pallas_call wrapper.
# ----------------------------------------------------------------------------
def cnn_forward(x_nchw, params):
    N, Cin0, H, W = x_nchw.shape
    HW = H * W
    x2 = x_nchw.reshape(N, Cin0, HW).astype(jnp.float32)   # NCHW with HW flattened

    blocks = params["blocks"]
    cins = tuple(b["cin"] for b in blocks)
    couts = tuple(b["cout"] for b in blocks)
    hidden = params["db1"].shape[-1]
    num_classes = params["dw2"].shape[-1]

    inputs = [x2, params["shifts"]]
    in_specs = [
        pl.BlockSpec((1, Cin0, HW), lambda n: (n, 0, 0)),
        pl.BlockSpec(params["shifts"].shape, lambda n: (0, 0, 0)),
    ]

    def resident(arr):   # weight arrays: constant index_map -> stays in VMEM
        inputs.append(arr)
        in_specs.append(pl.BlockSpec(arr.shape, lambda n, nd=arr.ndim: (0,) * nd))

    for b in blocks:
        for name in ("w1", "s1", "t1", "w2", "s2", "t2"):
            resident(b[name])
    for name in ("dw1r", "db1", "dw2", "db2"):
        resident(params[name])

    kernel = functools.partial(
        cnn_fused_kernel, num_blocks=len(blocks), cins=cins, couts=couts,
        H=H, W=W, hidden=hidden)

    out = pl.pallas_call(
        kernel,
        out_shape=jax.ShapeDtypeStruct((N, 1, num_classes), jnp.float32),
        grid_spec=pltpu.PrefetchScalarGridSpec(
            num_scalar_prefetch=0,
            grid=(N,),
            in_specs=in_specs,
            out_specs=pl.BlockSpec((1, 1, num_classes), lambda n: (n, 0, 0)),
        ),
        compiler_params=pltpu.CompilerParams(
            dimension_semantics=("parallel",)),
    )(*inputs)
    return out.reshape(N, num_classes)


# ----------------------------------------------------------------------------
# Precomputed constants & deterministic synthetic parameters.
# ----------------------------------------------------------------------------
def make_shift_matrices(H, W):
    """S[t][q, p] = 1 iff q = (y_p+dy)*W + (x_p+dx) with the source in-bounds,
    where t = ky*3+kx and (dy, dx) = (ky-1, kx-1).  Right-multiplying a (C, HW)
    activation by S[t] shifts it by one conv tap with zero padding baked in."""
    HW = H * W
    s = np.zeros((9, HW, HW), np.float32)
    for ky in range(3):
        for kx in range(3):
            t = ky * 3 + kx
            dy, dx = ky - 1, kx - 1
            for y in range(H):
                yy = y + dy
                if not (0 <= yy < H):
                    continue
                for x in range(W):
                    xx = x + dx
                    if not (0 <= xx < W):
                        continue
                    s[t, yy * W + xx, y * W + x] = 1.0
    return jnp.asarray(s)


def _fold_bn(conv_b, gamma, beta, rmean, rvar, eps=1e-5):
    scale = gamma / jnp.sqrt(rvar + eps)
    shift = beta + (conv_b - rmean) * scale
    return scale.reshape(-1, 1), shift.reshape(-1, 1)      # (Cout, 1) for (C, HW)


def init_conv_block(key, cin, cout):
    ks = jax.random.split(key, 12)
    w1 = jax.random.normal(ks[0], (3, 3, cin, cout), jnp.float32) / np.sqrt(9 * cin)
    b1 = 0.01 * jax.random.normal(ks[1], (cout,), jnp.float32)
    g1 = 1.0 + 0.1 * jax.random.normal(ks[2], (cout,), jnp.float32)
    be1 = 0.05 * jax.random.normal(ks[3], (cout,), jnp.float32)
    rm1 = 0.01 * jax.random.normal(ks[4], (cout,), jnp.float32)
    rv1 = 1.0 + 0.1 * jnp.abs(jax.random.normal(ks[5], (cout,), jnp.float32))

    w2 = jax.random.normal(ks[6], (3, 3, cout, cout), jnp.float32) / np.sqrt(9 * cout)
    b2 = 0.01 * jax.random.normal(ks[7], (cout,), jnp.float32)
    g2 = 1.0 + 0.1 * jax.random.normal(ks[8], (cout,), jnp.float32)
    be2 = 0.05 * jax.random.normal(ks[9], (cout,), jnp.float32)
    rm2 = 0.01 * jax.random.normal(ks[10], (cout,), jnp.float32)
    rv2 = 1.0 + 0.1 * jnp.abs(jax.random.normal(ks[11], (cout,), jnp.float32))

    s1, t1 = _fold_bn(b1, g1, be1, rm1, rv1)
    s2, t2 = _fold_bn(b2, g2, be2, rm2, rv2)
    # (ky, kx, ci, co) -> (t, co, ci) so the kernel's per-tap (Cout,Cin) mix matches.
    w1k = jnp.transpose(w1.reshape(9, cin, cout), (0, 2, 1))
    w2k = jnp.transpose(w2.reshape(9, cout, cout), (0, 2, 1))
    return dict(cin=cin, cout=cout, w1=w1k, s1=s1, t1=t1, w2=w2k, s2=s2, t2=t2)


def init_cnn(key, hidden, num_layers, num_classes, H, W):
    n_blocks = 1 + num_layers
    keys = jax.random.split(key, n_blocks + 4)
    blocks = [init_conv_block(keys[0], 1, hidden)]
    for i in range(num_layers):
        blocks.append(init_conv_block(keys[1 + i], hidden, hidden))

    Hp, Wp = H // 2, W // 2
    feat = hidden * Hp * Wp                   # == 8*6*hidden for a 16x12 input
    dw1 = jax.random.normal(keys[-4], (feat, hidden), jnp.float32) / np.sqrt(feat)
    db1 = 0.01 * jax.random.normal(keys[-3], (1, hidden), jnp.float32)
    dw2 = jax.random.normal(keys[-2], (hidden, num_classes), jnp.float32) / np.sqrt(hidden)
    db2 = 0.01 * jax.random.normal(keys[-1], (1, num_classes), jnp.float32)

    # Fold MaxPool compaction + PyTorch NCHW flatten order (c*Hp*Wp + i*Wp + j)
    # into the first dense weight: scatter its rows to the 2x2 pool anchor lanes
    # (p = 2i*W + 2j) of the full (H*W)-wide layout; all other rows stay zero.
    anchors = (2 * np.arange(Hp)[:, None] * W + 2 * np.arange(Wp)[None, :]).reshape(-1)
    dw1r = jnp.zeros((hidden, H * W, hidden), jnp.float32).at[:, anchors, :].set(
        dw1.reshape(hidden, Hp * Wp, hidden))

    return dict(blocks=blocks, shifts=make_shift_matrices(H, W),
                dw1r=dw1r, db1=db1, dw2=dw2, db2=db2)


if __name__ == "__main__":
    config = dict(hidden=8, dropout=0.1, num_layers=1, num_classes=4)
    key = jax.random.PRNGKey(0)
    kx, kp = jax.random.split(key)

    # Spatial 16x12 so that after MaxPool2d(2,2) -> 8x6, matching Linear(8*6*hidden, .)
    H, W = 16, 12
    x = jax.random.normal(kx, (2, 1, H, W), jnp.float32)
    params = init_cnn(kp, config["hidden"], config["num_layers"],
                      config["num_classes"], H, W)

    out = cnn_forward(x, params)
    out = jax.block_until_ready(out)

    assert out.shape == (2, config["num_classes"]), out.shape
    assert bool(jnp.all(jnp.isfinite(out)))
    print("KERNEL_OK")
</pallas_src>

<mosaic_0001>
module attributes {stable_mosaic.version = 11 : i64} {
  func.func @cnn_fused_kernel(%arg0: i32, %arg1: memref<1x1x192xf32, #tpu.memory_space<vmem>>, %arg2: memref<9x192x192xf32, #tpu.memory_space<vmem>>, %arg3: memref<9x8x1xf32, #tpu.memory_space<vmem>>, %arg4: memref<8x1xf32, #tpu.memory_space<vmem>>, %arg5: memref<8x1xf32, #tpu.memory_space<vmem>>, %arg6: memref<9x8x8xf32, #tpu.memory_space<vmem>>, %arg7: memref<8x1xf32, #tpu.memory_space<vmem>>, %arg8: memref<8x1xf32, #tpu.memory_space<vmem>>, %arg9: memref<9x8x8xf32, #tpu.memory_space<vmem>>, %arg10: memref<8x1xf32, #tpu.memory_space<vmem>>, %arg11: memref<8x1xf32, #tpu.memory_space<vmem>>, %arg12: memref<9x8x8xf32, #tpu.memory_space<vmem>>, %arg13: memref<8x1xf32, #tpu.memory_space<vmem>>, %arg14: memref<8x1xf32, #tpu.memory_space<vmem>>, %arg15: memref<8x192x8xf32, #tpu.memory_space<vmem>>, %arg16: memref<1x8xf32, #tpu.memory_space<vmem>>, %arg17: memref<8x4xf32, #tpu.memory_space<vmem>>, %arg18: memref<1x4xf32, #tpu.memory_space<vmem>>, %arg19: memref<1x1x4xf32, #tpu.memory_space<vmem>>) attributes {dimension_semantics = [#tpu.dimension_semantics<parallel>], iteration_bounds = array<i64: 2>, scalar_prefetch = 0 : i64, scratch_operands = 0 : i64, tpu.core_type = #tpu.core_type<tc>, window_params = [{transform_indices = @transform_0, window_bounds = array<i64: 1, 1, 192>}, {pipeline_mode = #tpu.pipeline_mode<synchronous>, transform_indices = @transform_1, window_bounds = array<i64: 9, 192, 192>}, {pipeline_mode = #tpu.pipeline_mode<synchronous>, transform_indices = @transform_2, window_bounds = array<i64: 9, 8, 1>}, {pipeline_mode = #tpu.pipeline_mode<synchronous>, transform_indices = @transform_3, window_bounds = array<i64: 8, 1>}, {pipeline_mode = #tpu.pipeline_mode<synchronous>, transform_indices = @transform_4, window_bounds = array<i64: 8, 1>}, {pipeline_mode = #tpu.pipeline_mode<synchronous>, transform_indices = @transform_5, window_bounds = array<i64: 9, 8, 8>}, {pipeline_mode = #tpu.pipeline_mode<synchronous>, transform_indices = @transform_6, window_bounds = array<i64: 8, 1>}, {pipeline_mode = #tpu.pipeline_mode<synchronous>, transform_indices = @transform_7, window_bounds = array<i64: 8, 1>}, {pipeline_mode = #tpu.pipeline_mode<synchronous>, transform_indices = @transform_8, window_bounds = array<i64: 9, 8, 8>}, {pipeline_mode = #tpu.pipeline_mode<synchronous>, transform_indices = @transform_9, window_bounds = array<i64: 8, 1>}, {pipeline_mode = #tpu.pipeline_mode<synchronous>, transform_indices = @transform_10, window_bounds = array<i64: 8, 1>}, {pipeline_mode = #tpu.pipeline_mode<synchronous>, transform_indices = @transform_11, window_bounds = array<i64: 9, 8, 8>}, {pipeline_mode = #tpu.pipeline_mode<synchronous>, transform_indices = @transform_12, window_bounds = array<i64: 8, 1>}, {pipeline_mode = #tpu.pipeline_mode<synchronous>, transform_indices = @transform_13, window_bounds = array<i64: 8, 1>}, {pipeline_mode = #tpu.pipeline_mode<synchronous>, transform_indices = @transform_14, window_bounds = array<i64: 8, 192, 8>}, {pipeline_mode = #tpu.pipeline_mode<synchronous>, transform_indices = @transform_15, window_bounds = array<i64: 1, 8>}, {pipeline_mode = #tpu.pipeline_mode<synchronous>, transform_indices = @transform_16, window_bounds = array<i64: 8, 4>}, {pipeline_mode = #tpu.pipeline_mode<synchronous>, transform_indices = @transform_17, window_bounds = array<i64: 1, 4>}, {transform_indices = @transform_18, window_bounds = array<i64: 1, 1, 4>}]} {
    %c0 = arith.constant 0 : index
    %c0_0 = arith.constant 0 : index
    %c0_1 = arith.constant 0 : index
    %0 = vector.load %arg1[%c0, %c0_0, %c0_1] : memref<1x1x192xf32, #tpu.memory_space<vmem>>, vector<1x1x192xf32>
    %1 = vector.shape_cast %0 : vector<1x1x192xf32> to vector<1x192xf32>
    %cst = arith.constant 0.000000e+00 : f32
    %2 = vector.broadcast %cst : f32 to vector<8x192xf32>
    %c0_2 = arith.constant 0 : index
    %c0_3 = arith.constant 0 : index
    %c0_4 = arith.constant 0 : index
    %3 = vector.load %arg3[%c0_2, %c0_3, %c0_4] : memref<9x8x1xf32, #tpu.memory_space<vmem>>, vector<1x8x1xf32>
    %4 = vector.shape_cast %3 : vector<1x8x1xf32> to vector<8x1xf32>
    %5 = vector.broadcast %4 : vector<8x1xf32> to vector<8x192xf32>
    %6 = vector.broadcast %1 : vector<1x192xf32> to vector<8x192xf32>
    %7 = arith.mulf %5, %6 : vector<8x192xf32>
    %c0_5 = arith.constant 0 : index
    %c0_6 = arith.constant 0 : index
    %c0_7 = arith.constant 0 : index
    %8 = vector.load %arg2[%c0_5, %c0_6, %c0_7] : memref<9x192x192xf32, #tpu.memory_space<vmem>>, vector<1x192x192xf32>
    %9 = vector.shape_cast %8 : vector<1x192x192xf32> to vector<192x192xf32>
    %cst_8 = arith.constant dense<0.000000e+00> : vector<8x192xf32>
    %10 = tpu.matmul %7, %9, %cst_8 {dimension_numbers = #tpu.dot_dimension_numbers<[1], [0], [0], [1], [0, 0, 1, 1], [], []>} : vector<8x192xf32>, vector<192x192xf32>, vector<8x192xf32> -> vector<8x192xf32>
    %11 = arith.addf %2, %10 : vector<8x192xf32>
    %c1 = arith.constant 1 : index
    %c0_9 = arith.constant 0 : index
    %c0_10 = arith.constant 0 : index
    %12 = vector.load %arg3[%c1, %c0_9, %c0_10] : memref<9x8x1xf32, #tpu.memory_space<vmem>>, vector<1x8x1xf32>
    %13 = vector.shape_cast %12 : vector<1x8x1xf32> to vector<8x1xf32>
    %14 = vector.broadcast %13 : vector<8x1xf32> to vector<8x192xf32>
    %15 = vector.broadcast %1 : vector<1x192xf32> to vector<8x192xf32>
    %16 = arith.mulf %14, %15 : vector<8x192xf32>
    %c1_11 = arith.constant 1 : index
    %c0_12 = arith.constant 0 : index
    %c0_13 = arith.constant 0 : index
    %17 = vector.load %arg2[%c1_11, %c0_12, %c0_13] : memref<9x192x192xf32, #tpu.memory_space<vmem>>, vector<1x192x192xf32>
    %18 = vector.shape_cast %17 : vector<1x192x192xf32> to vector<192x192xf32>
    %cst_14 = arith.constant dense<0.000000e+00> : vector<8x192xf32>
    %19 = tpu.matmul %16, %18, %cst_14 {dimension_numbers = #tpu.dot_dimension_numbers<[1], [0], [0], [1], [0, 0, 1, 1], [], []>} : vector<8x192xf32>, vector<192x192xf32>, vector<8x192xf32> -> vector<8x192xf32>
    %20 = arith.addf %11, %19 : vector<8x192xf32>
    %c2 = arith.constant 2 : index
    %c0_15 = arith.constant 0 : index
    %c0_16 = arith.constant 0 : index
    %21 = vector.load %arg3[%c2, %c0_15, %c0_16] : memref<9x8x1xf32, #tpu.memory_space<vmem>>, vector<1x8x1xf32>
    %22 = vector.shape_cast %21 : vector<1x8x1xf32> to vector<8x1xf32>
    %23 = vector.broadcast %22 : vector<8x1xf32> to vector<8x192xf32>
    %24 = vector.broadcast %1 : vector<1x192xf32> to vector<8x192xf32>
    %25 = arith.mulf %23, %24 : vector<8x192xf32>
    %c2_17 = arith.constant 2 : index
    %c0_18 = arith.constant 0 : index
    %c0_19 = arith.constant 0 : index
    %26 = vector.load %arg2[%c2_17, %c0_18, %c0_19] : memref<9x192x192xf32, #tpu.memory_space<vmem>>, vector<1x192x192xf32>
    %27 = vector.shape_cast %26 : vector<1x192x192xf32> to vector<192x192xf32>
    %cst_20 = arith.constant dense<0.000000e+00> : vector<8x192xf32>
    %28 = tpu.matmul %25, %27, %cst_20 {dimension_numbers = #tpu.dot_dimension_numbers<[1], [0], [0], [1], [0, 0, 1, 1], [], []>} : vector<8x192xf32>, vector<192x192xf32>, vector<8x192xf32> -> vector<8x192xf32>
    %29 = arith.addf %20, %28 : vector<8x192xf32>
    %c3 = arith.constant 3 : index
    %c0_21 = arith.constant 0 : index
    %c0_22 = arith.constant 0 : index
    %30 = vector.load %arg3[%c3, %c0_21, %c0_22] : memref<9x8x1xf32, #tpu.memory_space<vmem>>, vector<1x8x1xf32>
    %31 = vector.shape_cast %30 : vector<1x8x1xf32> to vector<8x1xf32>
    %32 = vector.broadcast %31 : vector<8x1xf32> to vector<8x192xf32>
    %33 = vector.broadcast %1 : vector<1x192xf32> to vector<8x192xf32>
    %34 = arith.mulf %32, %33 : vector<8x192xf32>
    %c3_23 = arith.constant 3 : index
    %c0_24 = arith.constant 0 : index
    %c0_25 = arith.constant 0 : index
    %35 = vector.load %arg2[%c3_23, %c0_24, %c0_25] : memref<9x192x192xf32, #tpu.memory_space<vmem>>, vector<1x192x192xf32>
    %36 = vector.shape_cast %35 : vector<1x192x192xf32> to vector<192x192xf32>
    %cst_26 = arith.constant dense<0.000000e+00> : vector<8x192xf32>
    %37 = tpu.matmul %34, %36, %cst_26 {dimension_numbers = #tpu.dot_dimension_numbers<[1], [0], [0], [1], [0, 0, 1, 1], [], []>} : vector<8x192xf32>, vector<192x192xf32>, vector<8x192xf32> -> vector<8x192xf32>
    %38 = arith.addf %29, %37 : vector<8x192xf32>
    %c4 = arith.constant 4 : index
    %c0_27 = arith.constant 0 : index
    %c0_28 = arith.constant 0 : index
    %39 = vector.load %arg3[%c4, %c0_27, %c0_28] : memref<9x8x1xf32, #tpu.memory_space<vmem>>, vector<1x8x1xf32>
    %40 = vector.shape_cast %39 : vector<1x8x1xf32> to vector<8x1xf32>
    %41 = vector.broadcast %40 : vector<8x1xf32> to vector<8x192xf32>
    %42 = vector.broadcast %1 : vector<1x192xf32> to vector<8x192xf32>
    %43 = arith.mulf %41, %42 : vector<8x192xf32>
    %c4_29 = arith.constant 4 : index
    %c0_30 = arith.constant 0 : index
    %c0_31 = arith.constant 0 : index
    %44 = vector.load %arg2[%c4_29, %c0_30, %c0_31] : memref<9x192x192xf32, #tpu.memory_space<vmem>>, vector<1x192x192xf32>
    %45 = vector.shape_cast %44 : vector<1x192x192xf32> to vector<192x192xf32>
    %cst_32 = arith.constant dense<0.000000e+00> : vector<8x192xf32>
    %46 = tpu.matmul %43, %45, %cst_32 {dimension_numbers = #tpu.dot_dimension_numbers<[1], [0], [0], [1], [0, 0, 1, 1], [], []>} : vector<8x192xf32>, vector<192x192xf32>, vector<8x192xf32> -> vector<8x192xf32>
    %47 = arith.addf %38, %46 : vector<8x192xf32>
    %c5 = arith.constant 5 : index
    %c0_33 = arith.constant 0 : index
    %c0_34 = arith.constant 0 : index
    %48 = vector.load %arg3[%c5, %c0_33, %c0_34] : memref<9x8x1xf32, #tpu.memory_space<vmem>>, vector<1x8x1xf32>
    %49 = vector.shape_cast %48 : vector<1x8x1xf32> to vector<8x1xf32>
    %50 = vector.broadcast %49 : vector<8x1xf32> to vector<8x192xf32>
    %51 = vector.broadcast %1 : vector<1x192xf32> to vector<8x192xf32>
    %52 = arith.mulf %50, %51 : vector<8x192xf32>
    %c5_35 = arith.constant 5 : index
    %c0_36 = arith.constant 0 : index
    %c0_37 = arith.constant 0 : index
    %53 = vector.load %arg2[%c5_35, %c0_36, %c0_37] : memref<9x192x192xf32, #tpu.memory_space<vmem>>, vector<1x192x192xf32>
    %54 = vector.shape_cast %53 : vector<1x192x192xf32> to vector<192x192xf32>
    %cst_38 = arith.constant dense<0.000000e+00> : vector<8x192xf32>
    %55 = tpu.matmul %52, %54, %cst_38 {dimension_numbers = #tpu.dot_dimension_numbers<[1], [0], [0], [1], [0, 0, 1, 1], [], []>} : vector<8x192xf32>, vector<192x192xf32>, vector<8x192xf32> -> vector<8x192xf32>
    %56 = arith.addf %47, %55 : vector<8x192xf32>
    %c6 = arith.constant 6 : index
    %c0_39 = arith.constant 0 : index
    %c0_40 = arith.constant 0 : index
    %57 = vector.load %arg3[%c6, %c0_39, %c0_40] : memref<9x8x1xf32, #tpu.memory_space<vmem>>, vector<1x8x1xf32>
    %58 = vector.shape_cast %57 : vector<1x8x1xf32> to vector<8x1xf32>
    %59 = vector.broadcast %58 : vector<8x1xf32> to vector<8x192xf32>
    %60 = vector.broadcast %1 : vector<1x192xf32> to vector<8x192xf32>
    %61 = arith.mulf %59, %60 : vector<8x192xf32>
    %c6_41 = arith.constant 6 : index
    %c0_42 = arith.constant 0 : index
    %c0_43 = arith.constant 0 : index
    %62 = vector.load %arg2[%c6_41, %c0_42, %c0_43] : memref<9x192x192xf32, #tpu.memory_space<vmem>>, vector<1x192x192xf32>
    %63 = vector.shape_cast %62 : vector<1x192x192xf32> to vector<192x192xf32>
    %cst_44 = arith.constant dense<0.000000e+00> : vector<8x192xf32>
    %64 = tpu.matmul %61, %63, %cst_44 {dimension_numbers = #tpu.dot_dimension_numbers<[1], [0], [0], [1], [0, 0, 1, 1], [], []>} : vector<8x192xf32>, vector<192x192xf32>, vector<8x192xf32> -> vector<8x192xf32>
    %65 = arith.addf %56, %64 : vector<8x192xf32>
    %c7 = arith.constant 7 : index
    %c0_45 = arith.constant 0 : index
    %c0_46 = arith.constant 0 : index
    %66 = vector.load %arg3[%c7, %c0_45, %c0_46] : memref<9x8x1xf32, #tpu.memory_space<vmem>>, vector<1x8x1xf32>
    %67 = vector.shape_cast %66 : vector<1x8x1xf32> to vector<8x1xf32>
    %68 = vector.broadcast %67 : vector<8x1xf32> to vector<8x192xf32>
    %69 = vector.broadcast %1 : vector<1x192xf32> to vector<8x192xf32>
    %70 = arith.mulf %68, %69 : vector<8x192xf32>
    %c7_47 = arith.constant 7 : index
    %c0_48 = arith.constant 0 : index
    %c0_49 = arith.constant 0 : index
    %71 = vector.load %arg2[%c7_47, %c0_48, %c0_49] : memref<9x192x192xf32, #tpu.memory_space<vmem>>, vector<1x192x192xf32>
    %72 = vector.shape_cast %71 : vector<1x192x192xf32> to vector<192x192xf32>
    %cst_50 = arith.constant dense<0.000000e+00> : vector<8x192xf32>
    %73 = tpu.matmul %70, %72, %cst_50 {dimension_numbers = #tpu.dot_dimension_numbers<[1], [0], [0], [1], [0, 0, 1, 1], [], []>} : vector<8x192xf32>, vector<192x192xf32>, vector<8x192xf32> -> vector<8x192xf32>
    %74 = arith.addf %65, %73 : vector<8x192xf32>
    %c8 = arith.constant 8 : index
    %c0_51 = arith.constant 0 : index
    %c0_52 = arith.constant 0 : index
    %75 = vector.load %arg3[%c8, %c0_51, %c0_52] : memref<9x8x1xf32, #tpu.memory_space<vmem>>, vector<1x8x1xf32>
    %76 = vector.shape_cast %75 : vector<1x8x1xf32> to vector<8x1xf32>
    %77 = vector.broadcast %76 : vector<8x1xf32> to vector<8x192xf32>
    %78 = vector.broadcast %1 : vector<1x192xf32> to vector<8x192xf32>
    %79 = arith.mulf %77, %78 : vector<8x192xf32>
    %c8_53 = arith.constant 8 : index
    %c0_54 = arith.constant 0 : index
    %c0_55 = arith.constant 0 : index
    %80 = vector.load %arg2[%c8_53, %c0_54, %c0_55] : memref<9x192x192xf32, #tpu.memory_space<vmem>>, vector<1x192x192xf32>
    %81 = vector.shape_cast %80 : vector<1x192x192xf32> to vector<192x192xf32>
    %cst_56 = arith.constant dense<0.000000e+00> : vector<8x192xf32>
    %82 = tpu.matmul %79, %81, %cst_56 {dimension_numbers = #tpu.dot_dimension_numbers<[1], [0], [0], [1], [0, 0, 1, 1], [], []>} : vector<8x192xf32>, vector<192x192xf32>, vector<8x192xf32> -> vector<8x192xf32>
    %83 = arith.addf %74, %82 : vector<8x192xf32>
    %c0_57 = arith.constant 0 : index
    %c0_58 = arith.constant 0 : index
    %84 = vector.load %arg4[%c0_57, %c0_58] : memref<8x1xf32, #tpu.memory_space<vmem>>, vector<8x1xf32>
    %85 = vector.broadcast %84 : vector<8x1xf32> to vector<8x192xf32>
    %86 = arith.mulf %83, %85 : vector<8x192xf32>
    %c0_59 = arith.constant 0 : index
    %c0_60 = arith.constant 0 : index
    %87 = vector.load %arg5[%c0_59, %c0_60] : memref<8x1xf32, #tpu.memory_space<vmem>>, vector<8x1xf32>
    %88 = vector.broadcast %87 : vector<8x1xf32> to vector<8x192xf32>
    %89 = arith.addf %86, %88 : vector<8x192xf32>
    %cst_61 = arith.constant 0.000000e+00 : f32
    %90 = vector.broadcast %cst_61 : f32 to vector<8x192xf32>
    %91 = arith.maximumf %89, %90 : vector<8x192xf32>
    %cst_62 = arith.constant 0.000000e+00 : f32
    %92 = vector.broadcast %cst_62 : f32 to vector<8x192xf32>
    %c0_63 = arith.constant 0 : index
    %c0_64 = arith.constant 0 : index
    %c0_65 = arith.constant 0 : index
    %93 = vector.load %arg6[%c0_63, %c0_64, %c0_65] : memref<9x8x8xf32, #tpu.memory_space<vmem>>, vector<1x8x8xf32>
    %94 = vector.shape_cast %93 : vector<1x8x8xf32> to vector<8x8xf32>
    %cst_66 = arith.constant dense<0.000000e+00> : vector<8x192xf32>
    %95 = tpu.matmul %94, %91, %cst_66 {dimension_numbers = #tpu.dot_dimension_numbers<[1], [0], [0], [1], [0, 0, 1, 1], [], []>} : vector<8x8xf32>, vector<8x192xf32>, vector<8x192xf32> -> vector<8x192xf32>
    %c0_67 = arith.constant 0 : index
    %c0_68 = arith.constant 0 : index
    %c0_69 = arith.constant 0 : index
    %96 = vector.load %arg2[%c0_67, %c0_68, %c0_69] : memref<9x192x192xf32, #tpu.memory_space<vmem>>, vector<1x192x192xf32>
    %97 = vector.shape_cast %96 : vector<1x192x192xf32> to vector<192x192xf32>
    %cst_70 = arith.constant dense<0.000000e+00> : vector<8x192xf32>
    %98 = tpu.matmul %95, %97, %cst_70 {dimension_numbers = #tpu.dot_dimension_numbers<[1], [0], [0], [1], [0, 0, 1, 1], [], []>} : vector<8x192xf32>, vector<192x192xf32>, vector<8x192xf32> -> vector<8x192xf32>
    %99 = arith.addf %92, %98 : vector<8x192xf32>
    %c1_71 = arith.constant 1 : index
    %c0_72 = arith.constant 0 : index
    %c0_73 = arith.constant 0 : index
    %100 = vector.load %arg6[%c1_71, %c0_72, %c0_73] : memref<9x8x8xf32, #tpu.memory_space<vmem>>, vector<1x8x8xf32>
    %101 = vector.shape_cast %100 : vector<1x8x8xf32> to vector<8x8xf32>
    %cst_74 = arith.constant dense<0.000000e+00> : vector<8x192xf32>
    %102 = tpu.matmul %101, %91, %cst_74 {dimension_numbers = #tpu.dot_dimension_numbers<[1], [0], [0], [1], [0, 0, 1, 1], [], []>} : vector<8x8xf32>, vector<8x192xf32>, vector<8x192xf32> -> vector<8x192xf32>
    %c1_75 = arith.constant 1 : index
    %c0_76 = arith.constant 0 : index
    %c0_77 = arith.constant 0 : index
    %103 = vector.load %arg2[%c1_75, %c0_76, %c0_77] : memref<9x192x192xf32, #tpu.memory_space<vmem>>, vector<1x192x192xf32>
    %104 = vector.shape_cast %103 : vector<1x192x192xf32> to vector<192x192xf32>
    %cst_78 = arith.constant dense<0.000000e+00> : vector<8x192xf32>
    %105 = tpu.matmul %102, %104, %cst_78 {dimension_numbers = #tpu.dot_dimension_numbers<[1], [0], [0], [1], [0, 0, 1, 1], [], []>} : vector<8x192xf32>, vector<192x192xf32>, vector<8x192xf32> -> vector<8x192xf32>
    %106 = arith.addf %99, %105 : vector<8x192xf32>
    %c2_79 = arith.constant 2 : index
    %c0_80 = arith.constant 0 : index
    %c0_81 = arith.constant 0 : index
    %107 = vector.load %arg6[%c2_79, %c0_80, %c0_81] : memref<9x8x8xf32, #tpu.memory_space<vmem>>, vector<1x8x8xf32>
    %108 = vector.shape_cast %107 : vector<1x8x8xf32> to vector<8x8xf32>
    %cst_82 = arith.constant dense<0.000000e+00> : vector<8x192xf32>
    %109 = tpu.matmul %108, %91, %cst_82 {dimension_numbers = #tpu.dot_dimension_numbers<[1], [0], [0], [1], [0, 0, 1, 1], [], []>} : vector<8x8xf32>, vector<8x192xf32>, vector<8x192xf32> -> vector<8x192xf32>
    %c2_83 = arith.constant 2 : index
    %c0_84 = arith.constant 0 : index
    %c0_85 = arith.constant 0 : index
    %110 = vector.load %arg2[%c2_83, %c0_84, %c0_85] : memref<9x192x192xf32, #tpu.memory_space<vmem>>, vector<1x192x192xf32>
    %111 = vector.shape_cast %110 : vector<1x192x192xf32> to vector<192x192xf32>
    %cst_86 = arith.constant dense<0.000000e+00> : vector<8x192xf32>
    %112 = tpu.matmul %109, %111, %cst_86 {dimension_numbers = #tpu.dot_dimension_numbers<[1], [0], [0], [1], [0, 0, 1, 1], [], []>} : vector<8x192xf32>, vector<192x192xf32>, vector<8x192xf32> -> vector<8x192xf32>
    %113 = arith.addf %106, %112 : vector<8x192xf32>
    %c3_87 = arith.constant 3 : index
    %c0_88 = arith.constant 0 : index
    %c0_89 = arith.constant 0 : index
    %114 = vector.load %arg6[%c3_87, %c0_88, %c0_89] : memref<9x8x8xf32, #tpu.memory_space<vmem>>, vector<1x8x8xf32>
    %115 = vector.shape_cast %114 : vector<1x8x8xf32> to vector<8x8xf32>
    %cst_90 = arith.constant dense<0.000000e+00> : vector<8x192xf32>
    %116 = tpu.matmul %115, %91, %cst_90 {dimension_numbers = #tpu.dot_dimension_numbers<[1], [0], [0], [1], [0, 0, 1, 1], [], []>} : vector<8x8xf32>, vector<8x192xf32>, vector<8x192xf32> -> vector<8x192xf32>
    %c3_91 = arith.constant 3 : index
    %c0_92 = arith.constant 0 : index
    %c0_93 = arith.constant 0 : index
    %117 = vector.load %arg2[%c3_91, %c0_92, %c0_93] : memref<9x192x192xf32, #tpu.memory_space<vmem>>, vector<1x192x192xf32>
    %118 = vector.shape_cast %117 : vector<1x192x192xf32> to vector<192x192xf32>
    %cst_94 = arith.constant dense<0.000000e+00> : vector<8x192xf32>
    %119 = tpu.matmul %116, %118, %cst_94 {dimension_numbers = #tpu.dot_dimension_numbers<[1], [0], [0], [1], [0, 0, 1, 1], [], []>} : vector<8x192xf32>, vector<192x192xf32>, vector<8x192xf32> -> vector<8x192xf32>
    %120 = arith.addf %113, %119 : vector<8x192xf32>
    %c4_95 = arith.constant 4 : index
    %c0_96 = arith.constant 0 : index
    %c0_97 = arith.constant 0 : index
    %121 = vector.load %arg6[%c4_95, %c0_96, %c0_97] : memref<9x8x8xf32, #tpu.memory_space<vmem>>, vector<1x8x8xf32>
    %122 = vector.shape_cast %121 : vector<1x8x8xf32> to vector<8x8xf32>
    %cst_98 = arith.constant dense<0.000000e+00> : vector<8x192xf32>
    %123 = tpu.matmul %122, %91, %cst_98 {dimension_numbers = #tpu.dot_dimension_numbers<[1], [0], [0], [1], [0, 0, 1, 1], [], []>} : vector<8x8xf32>, vector<8x192xf32>, vector<8x192xf32> -> vector<8x192xf32>
    %c4_99 = arith.constant 4 : index
    %c0_100 = arith.constant 0 : index
    %c0_101 = arith.constant 0 : index
    %124 = vector.load %arg2[%c4_99, %c0_100, %c0_101] : memref<9x192x192xf32, #tpu.memory_space<vmem>>, vector<1x192x192xf32>
    %125 = vector.shape_cast %124 : vector<1x192x192xf32> to vector<192x192xf32>
    %cst_102 = arith.constant dense<0.000000e+00> : vector<8x192xf32>
    %126 = tpu.matmul %123, %125, %cst_102 {dimension_numbers = #tpu.dot_dimension_numbers<[1], [0], [0], [1], [0, 0, 1, 1], [], []>} : vector<8x192xf32>, vector<192x192xf32>, vector<8x192xf32> -> vector<8x192xf32>
    %127 = arith.addf %120, %126 : vector<8x192xf32>
    %c5_103 = arith.constant 5 : index
    %c0_104 = arith.constant 0 : index
    %c0_105 = arith.constant 0 : index
    %128 = vector.load %arg6[%c5_103, %c0_104, %c0_105] : memref<9x8x8xf32, #tpu.memory_space<vmem>>, vector<1x8x8xf32>
    %129 = vector.shape_cast %128 : vector<1x8x8xf32> to vector<8x8xf32>
    %cst_106 = arith.constant dense<0.000000e+00> : vector<8x192xf32>
    %130 = tpu.matmul %129, %91, %cst_106 {dimension_numbers = #tpu.dot_dimension_numbers<[1], [0], [0], [1], [0, 0, 1, 1], [], []>} : vector<8x8xf32>, vector<8x192xf32>, vector<8x192xf32> -> vector<8x192xf32>
    %c5_107 = arith.constant 5 : index
    %c0_108 = arith.constant 0 : index
    %c0_109 = arith.constant 0 : index
    %131 = vector.load %arg2[%c5_107, %c0_108, %c0_109] : memref<9x192x192xf32, #tpu.memory_space<vmem>>, vector<1x192x192xf32>
    %132 = vector.shape_cast %131 : vector<1x192x192xf32> to vector<192x192xf32>
    %cst_110 = arith.constant dense<0.000000e+00> : vector<8x192xf32>
    %133 = tpu.matmul %130, %132, %cst_110 {dimension_numbers = #tpu.dot_dimension_numbers<[1], [0], [0], [1], [0, 0, 1, 1], [], []>} : vector<8x192xf32>, vector<192x192xf32>, vector<8x192xf32> -> vector<8x192xf32>
    %134 = arith.addf %127, %133 : vector<8x192xf32>
    %c6_111 = arith.constant 6 : index
    %c0_112 = arith.constant 0 : index
    %c0_113 = arith.constant 0 : index
    %135 = vector.load %arg6[%c6_111, %c0_112, %c0_113] : memref<9x8x8xf32, #tpu.memory_space<vmem>>, vector<1x8x8xf32>
    %136 = vector.shape_cast %135 : vector<1x8x8xf32> to vector<8x8xf32>
    %cst_114 = arith.constant dense<0.000000e+00> : vector<8x192xf32>
    %137 = tpu.matmul %136, %91, %cst_114 {dimension_numbers = #tpu.dot_dimension_numbers<[1], [0], [0], [1], [0, 0, 1, 1], [], []>} : vector<8x8xf32>, vector<8x192xf32>, vector<8x192xf32> -> vector<8x192xf32>
    %c6_115 = arith.constant 6 : index
    %c0_116 = arith.constant 0 : index
    %c0_117 = arith.constant 0 : index
    %138 = vector.load %arg2[%c6_115, %c0_116, %c0_117] : memref<9x192x192xf32, #tpu.memory_space<vmem>>, vector<1x192x192xf32>
    %139 = vector.shape_cast %138 : vector<1x192x192xf32> to vector<192x192xf32>
    %cst_118 = arith.constant dense<0.000000e+00> : vector<8x192xf32>
    %140 = tpu.matmul %137, %139, %cst_118 {dimension_numbers = #tpu.dot_dimension_numbers<[1], [0], [0], [1], [0, 0, 1, 1], [], []>} : vector<8x192xf32>, vector<192x192xf32>, vector<8x192xf32> -> vector<8x192xf32>
    %141 = arith.addf %134, %140 : vector<8x192xf32>
    %c7_119 = arith.constant 7 : index
    %c0_120 = arith.constant 0 : index
    %c0_121 = arith.constant 0 : index
    %142 = vector.load %arg6[%c7_119, %c0_120, %c0_121] : memref<9x8x8xf32, #tpu.memory_space<vmem>>, vector<1x8x8xf32>
    %143 = vector.shape_cast %142 : vector<1x8x8xf32> to vector<8x8xf32>
    %cst_122 = arith.constant dense<0.000000e+00> : vector<8x192xf32>
    %144 = tpu.matmul %143, %91, %cst_122 {dimension_numbers = #tpu.dot_dimension_numbers<[1], [0], [0], [1], [0, 0, 1, 1], [], []>} : vector<8x8xf32>, vector<8x192xf32>, vector<8x192xf32> -> vector<8x192xf32>
    %c7_123 = arith.constant 7 : index
    %c0_124 = arith.constant 0 : index
    %c0_125 = arith.constant 0 : index
    %145 = vector.load %arg2[%c7_123, %c0_124, %c0_125] : memref<9x192x192xf32, #tpu.memory_space<vmem>>, vector<1x192x192xf32>
    %146 = vector.shape_cast %145 : vector<1x192x192xf32> to vector<192x192xf32>
    %cst_126 = arith.constant dense<0.000000e+00> : vector<8x192xf32>
    %147 = tpu.matmul %144, %146, %cst_126 {dimension_numbers = #tpu.dot_dimension_numbers<[1], [0], [0], [1], [0, 0, 1, 1], [], []>} : vector<8x192xf32>, vector<192x192xf32>, vector<8x192xf32> -> vector<8x192xf32>
    %148 = arith.addf %141, %147 : vector<8x192xf32>
    %c8_127 = arith.constant 8 : index
    %c0_128 = arith.constant 0 : index
    %c0_129 = arith.constant 0 : index
    %149 = vector.load %arg6[%c8_127, %c0_128, %c0_129] : memref<9x8x8xf32, #tpu.memory_space<vmem>>, vector<1x8x8xf32>
    %150 = vector.shape_cast %149 : vector<1x8x8xf32> to vector<8x8xf32>
    %cst_130 = arith.constant dense<0.000000e+00> : vector<8x192xf32>
    %151 = tpu.matmul %150, %91, %cst_130 {dimension_numbers = #tpu.dot_dimension_numbers<[1], [0], [0], [1], [0, 0, 1, 1], [], []>} : vector<8x8xf32>, vector<8x192xf32>, vector<8x192xf32> -> vector<8x192xf32>
    %c8_131 = arith.constant 8 : index
    %c0_132 = arith.constant 0 : index
    %c0_133 = arith.constant 0 : index
    %152 = vector.load %arg2[%c8_131, %c0_132, %c0_133] : memref<9x192x192xf32, #tpu.memory_space<vmem>>, vector<1x192x192xf32>
    %153 = vector.shape_cast %152 : vector<1x192x192xf32> to vector<192x192xf32>
    %cst_134 = arith.constant dense<0.000000e+00> : vector<8x192xf32>
    %154 = tpu.matmul %151, %153, %cst_134 {dimension_numbers = #tpu.dot_dimension_numbers<[1], [0], [0], [1], [0, 0, 1, 1], [], []>} : vector<8x192xf32>, vector<192x192xf32>, vector<8x192xf32> -> vector<8x192xf32>
    %155 = arith.addf %148, %154 : vector<8x192xf32>
    %c0_135 = arith.constant 0 : index
    %c0_136 = arith.constant 0 : index
    %156 = vector.load %arg7[%c0_135, %c0_136] : memref<8x1xf32, #tpu.memory_space<vmem>>, vector<8x1xf32>
    %157 = vector.broadcast %156 : vector<8x1xf32> to vector<8x192xf32>
    %158 = arith.mulf %155, %157 : vector<8x192xf32>
    %c0_137 = arith.constant 0 : index
    %c0_138 = arith.constant 0 : index
    %159 = vector.load %arg8[%c0_137, %c0_138] : memref<8x1xf32, #tpu.memory_space<vmem>>, vector<8x1xf32>
    %160 = vector.broadcast %159 : vector<8x1xf32> to vector<8x192xf32>
    %161 = arith.addf %158, %160 : vector<8x192xf32>
    %cst_139 = arith.constant 0.000000e+00 : f32
    %162 = vector.broadcast %cst_139 : f32 to vector<8x192xf32>
    %163 = arith.maximumf %161, %162 : vector<8x192xf32>
    %164 = vector.broadcast %1 : vector<1x192xf32> to vector<8x192xf32>
    %165 = arith.addf %163, %164 : vector<8x192xf32>
    %cst_140 = arith.constant dense<0.000000e+00> : vector<8xf32>
    %166 = vector.multi_reduction <add>, %165, %cst_140 [1] : vector<8x192xf32> to vector<8xf32>
    %167 = vector.shape_cast %166 : vector<8xf32> to vector<8x1xf32>
    %cst_141 = arith.constant 1.920000e+02 : f32
    %168 = vector.broadcast %cst_141 : f32 to vector<8x1xf32>
    %169 = arith.divf %167, %168 : vector<8x1xf32>
    %170 = vector.broadcast %169 : vector<8x1xf32> to vector<8x192xf32>
    %171 = arith.subf %165, %170 : vector<8x192xf32>
    %172 = arith.mulf %171, %171 : vector<8x192xf32>
    %cst_142 = arith.constant dense<0.000000e+00> : vector<8xf32>
    %173 = vector.multi_reduction <add>, %172, %cst_142 [1] : vector<8x192xf32> to vector<8xf32>
    %174 = vector.shape_cast %173 : vector<8xf32> to vector<8x1xf32>
    %cst_143 = arith.constant 1.920000e+02 : f32
    %175 = vector.broadcast %cst_143 : f32 to vector<8x1xf32>
    %176 = arith.divf %174, %175 : vector<8x1xf32>
    %177 = vector.broadcast %169 : vector<8x1xf32> to vector<8x192xf32>
    %178 = arith.subf %165, %177 : vector<8x192xf32>
    %cst_144 = arith.constant 9.99999974E-6 : f32
    %179 = vector.broadcast %cst_144 : f32 to vector<8x1xf32>
    %180 = arith.addf %176, %179 : vector<8x1xf32>
    %181 = math.rsqrt %180 : vector<8x1xf32>
    %182 = vector.broadcast %181 : vector<8x1xf32> to vector<8x192xf32>
    %183 = arith.mulf %178, %182 : vector<8x192xf32>
    %cst_145 = arith.constant 0.000000e+00 : f32
    %184 = vector.broadcast %cst_145 : f32 to vector<8x192xf32>
    %c0_146 = arith.constant 0 : index
    %c0_147 = arith.constant 0 : index
    %c0_148 = arith.constant 0 : index
    %185 = vector.load %arg9[%c0_146, %c0_147, %c0_148] : memref<9x8x8xf32, #tpu.memory_space<vmem>>, vector<1x8x8xf32>
    %186 = vector.shape_cast %185 : vector<1x8x8xf32> to vector<8x8xf32>
    %cst_149 = arith.constant dense<0.000000e+00> : vector<8x192xf32>
    %187 = tpu.matmul %186, %183, %cst_149 {dimension_numbers = #tpu.dot_dimension_numbers<[1], [0], [0], [1], [0, 0, 1, 1], [], []>} : vector<8x8xf32>, vector<8x192xf32>, vector<8x192xf32> -> vector<8x192xf32>
    %c0_150 = arith.constant 0 : index
    %c0_151 = arith.constant 0 : index
    %c0_152 = arith.constant 0 : index
    %188 = vector.load %arg2[%c0_150, %c0_151, %c0_152] : memref<9x192x192xf32, #tpu.memory_space<vmem>>, vector<1x192x192xf32>
    %189 = vector.shape_cast %188 : vector<1x192x192xf32> to vector<192x192xf32>
    %cst_153 = arith.constant dense<0.000000e+00> : vector<8x192xf32>
    %190 = tpu.matmul %187, %189, %cst_153 {dimension_numbers = #tpu.dot_dimension_numbers<[1], [0], [0], [1], [0, 0, 1, 1], [], []>} : vector<8x192xf32>, vector<192x192xf32>, vector<8x192xf32> -> vector<8x192xf32>
    %191 = arith.addf %184, %190 : vector<8x192xf32>
    %c1_154 = arith.constant 1 : index
    %c0_155 = arith.constant 0 : index
    %c0_156 = arith.constant 0 : index
    %192 = vector.load %arg9[%c1_154, %c0_155, %c0_156] : memref<9x8x8xf32, #tpu.memory_space<vmem>>, vector<1x8x8xf32>
    %193 = vector.shape_cast %192 : vector<1x8x8xf32> to vector<8x8xf32>
    %cst_157 = arith.constant dense<0.000000e+00> : vector<8x192xf32>
    %194 = tpu.matmul %193, %183, %cst_157 {dimension_numbers = #tpu.dot_dimension_numbers<[1], [0], [0], [1], [0, 0, 1, 1], [], []>} : vector<8x8xf32>, vector<8x192xf32>, vector<8x192xf32> -> vector<8x192xf32>
    %c1_158 = arith.constant 1 : index
    %c0_159 = arith.constant 0 : index
    %c0_160 = arith.constant 0 : index
    %195 = vector.load %arg2[%c1_158, %c0_159, %c0_160] : memref<9x192x192xf32, #tpu.memory_space<vmem>>, vector<1x192x192xf32>
    %196 = vector.shape_cast %195 : vector<1x192x192xf32> to vector<192x192xf32>
    %cst_161 = arith.constant dense<0.000000e+00> : vector<8x192xf32>
    %197 = tpu.matmul %194, %196, %cst_161 {dimension_numbers = #tpu.dot_dimension_numbers<[1], [0], [0], [1], [0, 0, 1, 1], [], []>} : vector<8x192xf32>, vector<192x192xf32>, vector<8x192xf32> -> vector<8x192xf32>
    %198 = arith.addf %191, %197 : vector<8x192xf32>
    %c2_162 = arith.constant 2 : index
    %c0_163 = arith.constant 0 : index
    %c0_164 = arith.constant 0 : index
    %199 = vector.load %arg9[%c2_162, %c0_163, %c0_164] : memref<9x8x8xf32, #tpu.memory_space<vmem>>, vector<1x8x8xf32>
    %200 = vector.shape_cast %199 : vector<1x8x8xf32> to vector<8x8xf32>
    %cst_165 = arith.constant dense<0.000000e+00> : vector<8x192xf32>
    %201 = tpu.matmul %200, %183, %cst_165 {dimension_numbers = #tpu.dot_dimension_numbers<[1], [0], [0], [1], [0, 0, 1, 1], [], []>} : vector<8x8xf32>, vector<8x192xf32>, vector<8x192xf32> -> vector<8x192xf32>
    %c2_166 = arith.constant 2 : index
    %c0_167 = arith.constant 0 : index
    %c0_168 = arith.constant 0 : index
    %202 = vector.load %arg2[%c2_166, %c0_167, %c0_168] : memref<9x192x192xf32, #tpu.memory_space<vmem>>, vector<1x192x192xf32>
    %203 = vector.shape_cast %202 : vector<1x192x192xf32> to vector<192x192xf32>
    %cst_169 = arith.constant dense<0.000000e+00> : vector<8x192xf32>
    %204 = tpu.matmul %201, %203, %cst_169 {dimension_numbers = #tpu.dot_dimension_numbers<[1], [0], [0], [1], [0, 0, 1, 1], [], []>} : vector<8x192xf32>, vector<192x192xf32>, vector<8x192xf32> -> vector<8x192xf32>
    %205 = arith.addf %198, %204 : vector<8x192xf32>
    %c3_170 = arith.constant 3 : index
    %c0_171 = arith.constant 0 : index
    %c0_172 = arith.constant 0 : index
    %206 = vector.load %arg9[%c3_170, %c0_171, %c0_172] : memref<9x8x8xf32, #tpu.memory_space<vmem>>, vector<1x8x8xf32>
    %207 = vector.shape_cast %206 : vector<1x8x8xf32> to vector<8x8xf32>
    %cst_173 = arith.constant dense<0.000000e+00> : vector<8x192xf32>
    %208 = tpu.matmul %207, %183, %cst_173 {dimension_numbers = #tpu.dot_dimension_numbers<[1], [0], [0], [1], [0, 0, 1, 1], [], []>} : vector<8x8xf32>, vector<8x192xf32>, vector<8x192xf32> -> vector<8x192xf32>
    %c3_174 = arith.constant 3 : index
    %c0_175 = arith.constant 0 : index
    %c0_176 = arith.constant 0 : index
    %209 = vector.load %arg2[%c3_174, %c0_175, %c0_176] : memref<9x192x192xf32, #tpu.memory_space<vmem>>, vector<1x192x192xf32>
    %210 = vector.shape_cast %209 : vector<1x192x192xf32> to vector<192x192xf32>
    %cst_177 = arith.constant dense<0.000000e+00> : vector<8x192xf32>
    %211 = tpu.matmul %208, %210, %cst_177 {dimension_numbers = #tpu.dot_dimension_numbers<[1], [0], [0], [1], [0, 0, 1, 1], [], []>} : vector<8x192xf32>, vector<192x192xf32>, vector<8x192xf32> -> vector<8x192xf32>
    %212 = arith.addf %205, %211 : vector<8x192xf32>
    %c4_178 = arith.constant 4 : index
    %c0_179 = arith.constant 0 : index
    %c0_180 = arith.constant 0 : index
    %213 = vector.load %arg9[%c4_178, %c0_179, %c0_180] : memref<9x8x8xf32, #tpu.memory_space<vmem>>, vector<1x8x8xf32>
    %214 = vector.shape_cast %213 : vector<1x8x8xf32> to vector<8x8xf32>
    %cst_181 = arith.constant dense<0.000000e+00> : vector<8x192xf32>
    %215 = tpu.matmul %214, %183, %cst_181 {dimension_numbers = #tpu.dot_dimension_numbers<[1], [0], [0], [1], [0, 0, 1, 1], [], []>} : vector<8x8xf32>, vector<8x192xf32>, vector<8x192xf32> -> vector<8x192xf32>
    %c4_182 = arith.constant 4 : index
    %c0_183 = arith.constant 0 : index
    %c0_184 = arith.constant 0 : index
    %216 = vector.load %arg2[%c4_182, %c0_183, %c0_184] : memref<9x192x192xf32, #tpu.memory_space<vmem>>, vector<1x192x192xf32>
    %217 = vector.shape_cast %216 : vector<1x192x192xf32> to vector<192x192xf32>
    %cst_185 = arith.constant dense<0.000000e+00> : vector<8x192xf32>
    %218 = tpu.matmul %215, %217, %cst_185 {dimension_numbers = #tpu.dot_dimension_numbers<[1], [0], [0], [1], [0, 0, 1, 1], [], []>} : vector<8x192xf32>, vector<192x192xf32>, vector<8x192xf32> -> vector<8x192xf32>
    %219 = arith.addf %212, %218 : vector<8x192xf32>
    %c5_186 = arith.constant 5 : index
    %c0_187 = arith.constant 0 : index
    %c0_188 = arith.constant 0 : index
    %220 = vector.load %arg9[%c5_186, %c0_187, %c0_188] : memref<9x8x8xf32, #tpu.memory_space<vmem>>, vector<1x8x8xf32>
    %221 = vector.shape_cast %220 : vector<1x8x8xf32> to vector<8x8xf32>
    %cst_189 = arith.constant dense<0.000000e+00> : vector<8x192xf32>
    %222 = tpu.matmul %221, %183, %cst_189 {dimension_numbers = #tpu.dot_dimension_numbers<[1], [0], [0], [1], [0, 0, 1, 1], [], []>} : vector<8x8xf32>, vector<8x192xf32>, vector<8x192xf32> -> vector<8x192xf32>
    %c5_190 = arith.constant 5 : index
    %c0_191 = arith.constant 0 : index
    %c0_192 = arith.constant 0 : index
    %223 = vector.load %arg2[%c5_190, %c0_191, %c0_192] : memref<9x192x192xf32, #tpu.memory_space<vmem>>, vector<1x192x192xf32>
    %224 = vector.shape_cast %223 : vector<1x192x192xf32> to vector<192x192xf32>
    %cst_193 = arith.constant dense<0.000000e+00> : vector<8x192xf32>
    %225 = tpu.matmul %222, %224, %cst_193 {dimension_numbers = #tpu.dot_dimension_numbers<[1], [0], [0], [1], [0, 0, 1, 1], [], []>} : vector<8x192xf32>, vector<192x192xf32>, vector<8x192xf32> -> vector<8x192xf32>
    %226 = arith.addf %219, %225 : vector<8x192xf32>
    %c6_194 = arith.constant 6 : index
    %c0_195 = arith.constant 0 : index
    %c0_196 = arith.constant 0 : index
    %227 = vector.load %arg9[%c6_194, %c0_195, %c0_196] : memref<9x8x8xf32, #tpu.memory_space<vmem>>, vector<1x8x8xf32>
    %228 = vector.shape_cast %227 : vector<1x8x8xf32> to vector<8x8xf32>
    %cst_197 = arith.constant dense<0.000000e+00> : vector<8x192xf32>
    %229 = tpu.matmul %228, %183, %cst_197 {dimension_numbers = #tpu.dot_dimension_numbers<[1], [0], [0], [1], [0, 0, 1, 1], [], []>} : vector<8x8xf32>, vector<8x192xf32>, vector<8x192xf32> -> vector<8x192xf32>
    %c6_198 = arith.constant 6 : index
    %c0_199 = arith.constant 0 : index
    %c0_200 = arith.constant 0 : index
    %230 = vector.load %arg2[%c6_198, %c0_199, %c0_200] : memref<9x192x192xf32, #tpu.memory_space<vmem>>, vector<1x192x192xf32>
    %231 = vector.shape_cast %230 : vector<1x192x192xf32> to vector<192x192xf32>
    %cst_201 = arith.constant dense<0.000000e+00> : vector<8x192xf32>
    %232 = tpu.matmul %229, %231, %cst_201 {dimension_numbers = #tpu.dot_dimension_numbers<[1], [0], [0], [1], [0, 0, 1, 1], [], []>} : vector<8x192xf32>, vector<192x192xf32>, vector<8x192xf32> -> vector<8x192xf32>
    %233 = arith.addf %226, %232 : vector<8x192xf32>
    %c7_202 = arith.constant 7 : index
    %c0_203 = arith.constant 0 : index
    %c0_204 = arith.constant 0 : index
    %234 = vector.load %arg9[%c7_202, %c0_203, %c0_204] : memref<9x8x8xf32, #tpu.memory_space<vmem>>, vector<1x8x8xf32>
    %235 = vector.shape_cast %234 : vector<1x8x8xf32> to vector<8x8xf32>
    %cst_205 = arith.constant dense<0.000000e+00> : vector<8x192xf32>
    %236 = tpu.matmul %235, %183, %cst_205 {dimension_numbers = #tpu.dot_dimension_numbers<[1], [0], [0], [1], [0, 0, 1, 1], [], []>} : vector<8x8xf32>, vector<8x192xf32>, vector<8x192xf32> -> vector<8x192xf32>
    %c7_206 = arith.constant 7 : index
    %c0_207 = arith.constant 0 : index
    %c0_208 = arith.constant 0 : index
    %237 = vector.load %arg2[%c7_206, %c0_207, %c0_208] : memref<9x192x192xf32, #tpu.memory_space<vmem>>, vector<1x192x192xf32>
    %238 = vector.shape_cast %237 : vector<1x192x192xf32> to vector<192x192xf32>
    %cst_209 = arith.constant dense<0.000000e+00> : vector<8x192xf32>
    %239 = tpu.matmul %236, %238, %cst_209 {dimension_numbers = #tpu.dot_dimension_numbers<[1], [0], [0], [1], [0, 0, 1, 1], [], []>} : vector<8x192xf32>, vector<192x192xf32>, vector<8x192xf32> -> vector<8x192xf32>
    %240 = arith.addf %233, %239 : vector<8x192xf32>
    %c8_210 = arith.constant 8 : index
    %c0_211 = arith.constant 0 : index
    %c0_212 = arith.constant 0 : index
    %241 = vector.load %arg9[%c8_210, %c0_211, %c0_212] : memref<9x8x8xf32, #tpu.memory_space<vmem>>, vector<1x8x8xf32>
    %242 = vector.shape_cast %241 : vector<1x8x8xf32> to vector<8x8xf32>
    %cst_213 = arith.constant dense<0.000000e+00> : vector<8x192xf32>
    %243 = tpu.matmul %242, %183, %cst_213 {dimension_numbers = #tpu.dot_dimension_numbers<[1], [0], [0], [1], [0, 0, 1, 1], [], []>} : vector<8x8xf32>, vector<8x192xf32>, vector<8x192xf32> -> vector<8x192xf32>
    %c8_214 = arith.constant 8 : index
    %c0_215 = arith.constant 0 : index
    %c0_216 = arith.constant 0 : index
    %244 = vector.load %arg2[%c8_214, %c0_215, %c0_216] : memref<9x192x192xf32, #tpu.memory_space<vmem>>, vector<1x192x192xf32>
    %245 = vector.shape_cast %244 : vector<1x192x192xf32> to vector<192x192xf32>
    %cst_217 = arith.constant dense<0.000000e+00> : vector<8x192xf32>
    %246 = tpu.matmul %243, %245, %cst_217 {dimension_numbers = #tpu.dot_dimension_numbers<[1], [0], [0], [1], [0, 0, 1, 1], [], []>} : vector<8x192xf32>, vector<192x192xf32>, vector<8x192xf32> -> vector<8x192xf32>
    %247 = arith.addf %240, %246 : vector<8x192xf32>
    %c0_218 = arith.constant 0 : index
    %c0_219 = arith.constant 0 : index
    %248 = vector.load %arg10[%c0_218, %c0_219] : memref<8x1xf32, #tpu.memory_space<vmem>>, vector<8x1xf32>
    %249 = vector.broadcast %248 : vector<8x1xf32> to vector<8x192xf32>
    %250 = arith.mulf %247, %249 : vector<8x192xf32>
    %c0_220 = arith.constant 0 : index
    %c0_221 = arith.constant 0 : index
    %251 = vector.load %arg11[%c0_220, %c0_221] : memref<8x1xf32, #tpu.memory_space<vmem>>, vector<8x1xf32>
    %252 = vector.broadcast %251 : vector<8x1xf32> to vector<8x192xf32>
    %253 = arith.addf %250, %252 : vector<8x192xf32>
    %cst_222 = arith.constant 0.000000e+00 : f32
    %254 = vector.broadcast %cst_222 : f32 to vector<8x192xf32>
    %255 = arith.maximumf %253, %254 : vector<8x192xf32>
    %cst_223 = arith.constant 0.000000e+00 : f32
    %256 = vector.broadcast %cst_223 : f32 to vector<8x192xf32>
    %c0_224 = arith.constant 0 : index
    %c0_225 = arith.constant 0 : index
    %c0_226 = arith.constant 0 : index
    %257 = vector.load %arg12[%c0_224, %c0_225, %c0_226] : memref<9x8x8xf32, #tpu.memory_space<vmem>>, vector<1x8x8xf32>
    %258 = vector.shape_cast %257 : vector<1x8x8xf32> to vector<8x8xf32>
    %cst_227 = arith.constant dense<0.000000e+00> : vector<8x192xf32>
    %259 = tpu.matmul %258, %255, %cst_227 {dimension_numbers = #tpu.dot_dimension_numbers<[1], [0], [0], [1], [0, 0, 1, 1], [], []>} : vector<8x8xf32>, vector<8x192xf32>, vector<8x192xf32> -> vector<8x192xf32>
    %c0_228 = arith.constant 0 : index
    %c0_229 = arith.constant 0 : index
    %c0_230 = arith.constant 0 : index
    %260 = vector.load %arg2[%c0_228, %c0_229, %c0_230] : memref<9x192x192xf32, #tpu.memory_space<vmem>>, vector<1x192x192xf32>
    %261 = vector.shape_cast %260 : vector<1x192x192xf32> to vector<192x192xf32>
    %cst_231 = arith.constant dense<0.000000e+00> : vector<8x192xf32>
    %262 = tpu.matmul %259, %261, %cst_231 {dimension_numbers = #tpu.dot_dimension_numbers<[1], [0], [0], [1], [0, 0, 1, 1], [], []>} : vector<8x192xf32>, vector<192x192xf32>, vector<8x192xf32> -> vector<8x192xf32>
    %263 = arith.addf %256, %262 : vector<8x192xf32>
    %c1_232 = arith.constant 1 : index
    %c0_233 = arith.constant 0 : index
    %c0_234 = arith.constant 0 : index
    %264 = vector.load %arg12[%c1_232, %c0_233, %c0_234] : memref<9x8x8xf32, #tpu.memory_space<vmem>>, vector<1x8x8xf32>
    %265 = vector.shape_cast %264 : vector<1x8x8xf32> to vector<8x8xf32>
    %cst_235 = arith.constant dense<0.000000e+00> : vector<8x192xf32>
    %266 = tpu.matmul %265, %255, %cst_235 {dimension_numbers = #tpu.dot_dimension_numbers<[1], [0], [0], [1], [0, 0, 1, 1], [], []>} : vector<8x8xf32>, vector<8x192xf32>, vector<8x192xf32> -> vector<8x192xf32>
    %c1_236 = arith.constant 1 : index
    %c0_237 = arith.constant 0 : index
    %c0_238 = arith.constant 0 : index
    %267 = vector.load %arg2[%c1_236, %c0_237, %c0_238] : memref<9x192x192xf32, #tpu.memory_space<vmem>>, vector<1x192x192xf32>
    %268 = vector.shape_cast %267 : vector<1x192x192xf32> to vector<192x192xf32>
    %cst_239 = arith.constant dense<0.000000e+00> : vector<8x192xf32>
    %269 = tpu.matmul %266, %268, %cst_239 {dimension_numbers = #tpu.dot_dimension_numbers<[1], [0], [0], [1], [0, 0, 1, 1], [], []>} : vector<8x192xf32>, vector<192x192xf32>, vector<8x192xf32> -> vector<8x192xf32>
    %270 = arith.addf %263, %269 : vector<8x192xf32>
    %c2_240 = arith.constant 2 : index
    %c0_241 = arith.constant 0 : index
    %c0_242 = arith.constant 0 : index
    %271 = vector.load %arg12[%c2_240, %c0_241, %c0_242] : memref<9x8x8xf32, #tpu.memory_space<vmem>>, vector<1x8x8xf32>
    %272 = vector.shape_cast %271 : vector<1x8x8xf32> to vector<8x8xf32>
    %cst_243 = arith.constant dense<0.000000e+00> : vector<8x192xf32>
    %273 = tpu.matmul %272, %255, %cst_243 {dimension_numbers = #tpu.dot_dimension_numbers<[1], [0], [0], [1], [0, 0, 1, 1], [], []>} : vector<8x8xf32>, vector<8x192xf32>, vector<8x192xf32> -> vector<8x192xf32>
    %c2_244 = arith.constant 2 : index
    %c0_245 = arith.constant 0 : index
    %c0_246 = arith.constant 0 : index
    %274 = vector.load %arg2[%c2_244, %c0_245, %c0_246] : memref<9x192x192xf32, #tpu.memory_space<vmem>>, vector<1x192x192xf32>
    %275 = vector.shape_cast %274 : vector<1x192x192xf32> to vector<192x192xf32>
    %cst_247 = arith.constant dense<0.000000e+00> : vector<8x192xf32>
    %276 = tpu.matmul %273, %275, %cst_247 {dimension_numbers = #tpu.dot_dimension_numbers<[1], [0], [0], [1], [0, 0, 1, 1], [], []>} : vector<8x192xf32>, vector<192x192xf32>, vector<8x192xf32> -> vector<8x192xf32>
    %277 = arith.addf %270, %276 : vector<8x192xf32>
    %c3_248 = arith.constant 3 : index
    %c0_249 = arith.constant 0 : index
    %c0_250 = arith.constant 0 : index
    %278 = vector.load %arg12[%c3_248, %c0_249, %c0_250] : memref<9x8x8xf32, #tpu.memory_space<vmem>>, vector<1x8x8xf32>
    %279 = vector.shape_cast %278 : vector<1x8x8xf32> to vector<8x8xf32>
    %cst_251 = arith.constant dense<0.000000e+00> : vector<8x192xf32>
    %280 = tpu.matmul %279, %255, %cst_251 {dimension_numbers = #tpu.dot_dimension_numbers<[1], [0], [0], [1], [0, 0, 1, 1], [], []>} : vector<8x8xf32>, vector<8x192xf32>, vector<8x192xf32> -> vector<8x192xf32>
    %c3_252 = arith.constant 3 : index
    %c0_253 = arith.constant 0 : index
    %c0_254 = arith.constant 0 : index
    %281 = vector.load %arg2[%c3_252, %c0_253, %c0_254] : memref<9x192x192xf32, #tpu.memory_space<vmem>>, vector<1x192x192xf32>
    %282 = vector.shape_cast %281 : vector<1x192x192xf32> to vector<192x192xf32>
    %cst_255 = arith.constant dense<0.000000e+00> : vector<8x192xf32>
    %283 = tpu.matmul %280, %282, %cst_255 {dimension_numbers = #tpu.dot_dimension_numbers<[1], [0], [0], [1], [0, 0, 1, 1], [], []>} : vector<8x192xf32>, vector<192x192xf32>, vector<8x192xf32> -> vector<8x192xf32>
    %284 = arith.addf %277, %283 : vector<8x192xf32>
    %c4_256 = arith.constant 4 : index
    %c0_257 = arith.constant 0 : index
    %c0_258 = arith.constant 0 : index
    %285 = vector.load %arg12[%c4_256, %c0_257, %c0_258] : memref<9x8x8xf32, #tpu.memory_space<vmem>>, vector<1x8x8xf32>
    %286 = vector.shape_cast %285 : vector<1x8x8xf32> to vector<8x8xf32>
    %cst_259 = arith.constant dense<0.000000e+00> : vector<8x192xf32>
    %287 = tpu.matmul %286, %255, %cst_259 {dimension_numbers = #tpu.dot_dimension_numbers<[1], [0], [0], [1], [0, 0, 1, 1], [], []>} : vector<8x8xf32>, vector<8x192xf32>, vector<8x192xf32> -> vector<8x192xf32>
    %c4_260 = arith.constant 4 : index
    %c0_261 = arith.constant 0 : index
    %c0_262 = arith.constant 0 : index
    %288 = vector.load %arg2[%c4_260, %c0_261, %c0_262] : memref<9x192x192xf32, #tpu.memory_space<vmem>>, vector<1x192x192xf32>
    %289 = vector.shape_cast %288 : vector<1x192x192xf32> to vector<192x192xf32>
    %cst_263 = arith.constant dense<0.000000e+00> : vector<8x192xf32>
    %290 = tpu.matmul %287, %289, %cst_263 {dimension_numbers = #tpu.dot_dimension_numbers<[1], [0], [0], [1], [0, 0, 1, 1], [], []>} : vector<8x192xf32>, vector<192x192xf32>, vector<8x192xf32> -> vector<8x192xf32>
    %291 = arith.addf %284, %290 : vector<8x192xf32>
    %c5_264 = arith.constant 5 : index
    %c0_265 = arith.constant 0 : index
    %c0_266 = arith.constant 0 : index
    %292 = vector.load %arg12[%c5_264, %c0_265, %c0_266] : memref<9x8x8xf32, #tpu.memory_space<vmem>>, vector<1x8x8xf32>
    %293 = vector.shape_cast %292 : vector<1x8x8xf32> to vector<8x8xf32>
    %cst_267 = arith.constant dense<0.000000e+00> : vector<8x192xf32>
    %294 = tpu.matmul %293, %255, %cst_267 {dimension_numbers = #tpu.dot_dimension_numbers<[1], [0], [0], [1], [0, 0, 1, 1], [], []>} : vector<8x8xf32>, vector<8x192xf32>, vector<8x192xf32> -> vector<8x192xf32>
    %c5_268 = arith.constant 5 : index
    %c0_269 = arith.constant 0 : index
    %c0_270 = arith.constant 0 : index
    %295 = vector.load %arg2[%c5_268, %c0_269, %c0_270] : memref<9x192x192xf32, #tpu.memory_space<vmem>>, vector<1x192x192xf32>
    %296 = vector.shape_cast %295 : vector<1x192x192xf32> to vector<192x192xf32>
    %cst_271 = arith.constant dense<0.000000e+00> : vector<8x192xf32>
    %297 = tpu.matmul %294, %296, %cst_271 {dimension_numbers = #tpu.dot_dimension_numbers<[1], [0], [0], [1], [0, 0, 1, 1], [], []>} : vector<8x192xf32>, vector<192x192xf32>, vector<8x192xf32> -> vector<8x192xf32>
    %298 = arith.addf %291, %297 : vector<8x192xf32>
    %c6_272 = arith.constant 6 : index
    %c0_273 = arith.constant 0 : index
    %c0_274 = arith.constant 0 : index
    %299 = vector.load %arg12[%c6_272, %c0_273, %c0_274] : memref<9x8x8xf32, #tpu.memory_space<vmem>>, vector<1x8x8xf32>
    %300 = vector.shape_cast %299 : vector<1x8x8xf32> to vector<8x8xf32>
    %cst_275 = arith.constant dense<0.000000e+00> : vector<8x192xf32>
    %301 = tpu.matmul %300, %255, %cst_275 {dimension_numbers = #tpu.dot_dimension_numbers<[1], [0], [0], [1], [0, 0, 1, 1], [], []>} : vector<8x8xf32>, vector<8x192xf32>, vector<8x192xf32> -> vector<8x192xf32>
    %c6_276 = arith.constant 6 : index
    %c0_277 = arith.constant 0 : index
    %c0_278 = arith.constant 0 : index
    %302 = vector.load %arg2[%c6_276, %c0_277, %c0_278] : memref<9x192x192xf32, #tpu.memory_space<vmem>>, vector<1x192x192xf32>
    %303 = vector.shape_cast %302 : vector<1x192x192xf32> to vector<192x192xf32>
    %cst_279 = arith.constant dense<0.000000e+00> : vector<8x192xf32>
    %304 = tpu.matmul %301, %303, %cst_279 {dimension_numbers = #tpu.dot_dimension_numbers<[1], [0], [0], [1], [0, 0, 1, 1], [], []>} : vector<8x192xf32>, vector<192x192xf32>, vector<8x192xf32> -> vector<8x192xf32>
    %305 = arith.addf %298, %304 : vector<8x192xf32>
    %c7_280 = arith.constant 7 : index
    %c0_281 = arith.constant 0 : index
    %c0_282 = arith.constant 0 : index
    %306 = vector.load %arg12[%c7_280, %c0_281, %c0_282] : memref<9x8x8xf32, #tpu.memory_space<vmem>>, vector<1x8x8xf32>
    %307 = vector.shape_cast %306 : vector<1x8x8xf32> to vector<8x8xf32>
    %cst_283 = arith.constant dense<0.000000e+00> : vector<8x192xf32>
    %308 = tpu.matmul %307, %255, %cst_283 {dimension_numbers = #tpu.dot_dimension_numbers<[1], [0], [0], [1], [0, 0, 1, 1], [], []>} : vector<8x8xf32>, vector<8x192xf32>, vector<8x192xf32> -> vector<8x192xf32>
    %c7_284 = arith.constant 7 : index
    %c0_285 = arith.constant 0 : index
    %c0_286 = arith.constant 0 : index
    %309 = vector.load %arg2[%c7_284, %c0_285, %c0_286] : memref<9x192x192xf32, #tpu.memory_space<vmem>>, vector<1x192x192xf32>
    %310 = vector.shape_cast %309 : vector<1x192x192xf32> to vector<192x192xf32>
    %cst_287 = arith.constant dense<0.000000e+00> : vector<8x192xf32>
    %311 = tpu.matmul %308, %310, %cst_287 {dimension_numbers = #tpu.dot_dimension_numbers<[1], [0], [0], [1], [0, 0, 1, 1], [], []>} : vector<8x192xf32>, vector<192x192xf32>, vector<8x192xf32> -> vector<8x192xf32>
    %312 = arith.addf %305, %311 : vector<8x192xf32>
    %c8_288 = arith.constant 8 : index
    %c0_289 = arith.constant 0 : index
    %c0_290 = arith.constant 0 : index
    %313 = vector.load %arg12[%c8_288, %c0_289, %c0_290] : memref<9x8x8xf32, #tpu.memory_space<vmem>>, vector<1x8x8xf32>
    %314 = vector.shape_cast %313 : vector<1x8x8xf32> to vector<8x8xf32>
    %cst_291 = arith.constant dense<0.000000e+00> : vector<8x192xf32>
    %315 = tpu.matmul %314, %255, %cst_291 {dimension_numbers = #tpu.dot_dimension_numbers<[1], [0], [0], [1], [0, 0, 1, 1], [], []>} : vector<8x8xf32>, vector<8x192xf32>, vector<8x192xf32> -> vector<8x192xf32>
    %c8_292 = arith.constant 8 : index
    %c0_293 = arith.constant 0 : index
    %c0_294 = arith.constant 0 : index
    %316 = vector.load %arg2[%c8_292, %c0_293, %c0_294] : memref<9x192x192xf32, #tpu.memory_space<vmem>>, vector<1x192x192xf32>
    %317 = vector.shape_cast %316 : vector<1x192x192xf32> to vector<192x192xf32>
    %cst_295 = arith.constant dense<0.000000e+00> : vector<8x192xf32>
    %318 = tpu.matmul %315, %317, %cst_295 {dimension_numbers = #tpu.dot_dimension_numbers<[1], [0], [0], [1], [0, 0, 1, 1], [], []>} : vector<8x192xf32>, vector<192x192xf32>, vector<8x192xf32> -> vector<8x192xf32>
    %319 = arith.addf %312, %318 : vector<8x192xf32>
    %c0_296 = arith.constant 0 : index
    %c0_297 = arith.constant 0 : index
    %320 = vector.load %arg13[%c0_296, %c0_297] : memref<8x1xf32, #tpu.memory_space<vmem>>, vector<8x1xf32>
    %321 = vector.broadcast %320 : vector<8x1xf32> to vector<8x192xf32>
    %322 = arith.mulf %319, %321 : vector<8x192xf32>
    %c0_298 = arith.constant 0 : index
    %c0_299 = arith.constant 0 : index
    %323 = vector.load %arg14[%c0_298, %c0_299] : memref<8x1xf32, #tpu.memory_space<vmem>>, vector<8x1xf32>
    %324 = vector.broadcast %323 : vector<8x1xf32> to vector<8x192xf32>
    %325 = arith.addf %322, %324 : vector<8x192xf32>
    %cst_300 = arith.constant 0.000000e+00 : f32
    %326 = vector.broadcast %cst_300 : f32 to vector<8x192xf32>
    %327 = arith.maximumf %325, %326 : vector<8x192xf32>
    %328 = arith.addf %327, %183 : vector<8x192xf32>
    %cst_301 = arith.constant dense<0.000000e+00> : vector<8xf32>
    %329 = vector.multi_reduction <add>, %328, %cst_301 [1] : vector<8x192xf32> to vector<8xf32>
    %330 = vector.shape_cast %329 : vector<8xf32> to vector<8x1xf32>
    %cst_302 = arith.constant 1.920000e+02 : f32
    %331 = vector.broadcast %cst_302 : f32 to vector<8x1xf32>
    %332 = arith.divf %330, %331 : vector<8x1xf32>
    %333 = vector.broadcast %332 : vector<8x1xf32> to vector<8x192xf32>
    %334 = arith.subf %328, %333 : vector<8x192xf32>
    %335 = arith.mulf %334, %334 : vector<8x192xf32>
    %cst_303 = arith.constant dense<0.000000e+00> : vector<8xf32>
    %336 = vector.multi_reduction <add>, %335, %cst_303 [1] : vector<8x192xf32> to vector<8xf32>
    %337 = vector.shape_cast %336 : vector<8xf32> to vector<8x1xf32>
    %cst_304 = arith.constant 1.920000e+02 : f32
    %338 = vector.broadcast %cst_304 : f32 to vector<8x1xf32>
    %339 = arith.divf %337, %338 : vector<8x1xf32>
    %340 = vector.broadcast %332 : vector<8x1xf32> to vector<8x192xf32>
    %341 = arith.subf %328, %340 : vector<8x192xf32>
    %cst_305 = arith.constant 9.99999974E-6 : f32
    %342 = vector.broadcast %cst_305 : f32 to vector<8x1xf32>
    %343 = arith.addf %339, %342 : vector<8x1xf32>
    %344 = math.rsqrt %343 : vector<8x1xf32>
    %345 = vector.broadcast %344 : vector<8x1xf32> to vector<8x192xf32>
    %346 = arith.mulf %341, %345 : vector<8x192xf32>
    %cst_306 = arith.constant 0.000000e+00 : f32
    %347 = vector.broadcast %cst_306 : f32 to vector<8x192xf32>
    %348 = arith.maximumf %346, %347 : vector<8x192xf32>
    %c5_307 = arith.constant 5 : index
    %c0_308 = arith.constant 0 : index
    %c0_309 = arith.constant 0 : index
    %349 = vector.load %arg2[%c5_307, %c0_308, %c0_309] : memref<9x192x192xf32, #tpu.memory_space<vmem>>, vector<1x192x192xf32>
    %350 = vector.shape_cast %349 : vector<1x192x192xf32> to vector<192x192xf32>
    %cst_310 = arith.constant dense<0.000000e+00> : vector<8x192xf32>
    %351 = tpu.matmul %348, %350, %cst_310 {dimension_numbers = #tpu.dot_dimension_numbers<[1], [0], [0], [1], [0, 0, 1, 1], [], []>} : vector<8x192xf32>, vector<192x192xf32>, vector<8x192xf32> -> vector<8x192xf32>
    %352 = arith.maximumf %348, %351 : vector<8x192xf32>
    %c7_311 = arith.constant 7 : index
    %c0_312 = arith.constant 0 : index
    %c0_313 = arith.constant 0 : index
    %353 = vector.load %arg2[%c7_311, %c0_312, %c0_313] : memref<9x192x192xf32, #tpu.memory_space<vmem>>, vector<1x192x192xf32>
    %354 = vector.shape_cast %353 : vector<1x192x192xf32> to vector<192x192xf32>
    %cst_314 = arith.constant dense<0.000000e+00> : vector<8x192xf32>
    %355 = tpu.matmul %352, %354, %cst_314 {dimension_numbers = #tpu.dot_dimension_numbers<[1], [0], [0], [1], [0, 0, 1, 1], [], []>} : vector<8x192xf32>, vector<192x192xf32>, vector<8x192xf32> -> vector<8x192xf32>
    %356 = arith.maximumf %352, %355 : vector<8x192xf32>
    %cst_315 = arith.constant 0.000000e+00 : f32
    %357 = vector.broadcast %cst_315 : f32 to vector<1x8xf32>
    %358 = tpu.iota {dimensions = array<i32: 1>} : vector<1x8xi32>
    %c0_i32 = arith.constant 0 : i32
    %359 = vector.broadcast %c0_i32 : i32 to vector<1x8xi32>
    %360 = arith.cmpi eq, %358, %359 : vector<1x8xi32>
    %361 = arith.extui %360 : vector<1x8xi1> to vector<1x8xi32>
    %362 = arith.sitofp %361 : vector<1x8xi32> to vector<1x8xf32>
    %cst_316 = arith.constant dense<0.000000e+00> : vector<1x192xf32>
    %363 = tpu.matmul %362, %356, %cst_316 {dimension_numbers = #tpu.dot_dimension_numbers<[1], [0], [0], [1], [0, 0, 1, 1], [], []>} : vector<1x8xf32>, vector<8x192xf32>, vector<1x192xf32> -> vector<1x192xf32>
    %c0_317 = arith.constant 0 : index
    %c0_318 = arith.constant 0 : index
    %c0_319 = arith.constant 0 : index
    %364 = vector.load %arg15[%c0_317, %c0_318, %c0_319] : memref<8x192x8xf32, #tpu.memory_space<vmem>>, vector<1x192x8xf32>
    %365 = vector.shape_cast %364 : vector<1x192x8xf32> to vector<192x8xf32>
    %cst_320 = arith.constant dense<0.000000e+00> : vector<1x8xf32>
    %366 = tpu.matmul %363, %365, %cst_320 {dimension_numbers = #tpu.dot_dimension_numbers<[1], [0], [0], [1], [0, 0, 1, 1], [], []>} : vector<1x192xf32>, vector<192x8xf32>, vector<1x8xf32> -> vector<1x8xf32>
    %367 = arith.addf %357, %366 : vector<1x8xf32>
    %c1_i32 = arith.constant 1 : i32
    %368 = vector.broadcast %c1_i32 : i32 to vector<1x8xi32>
    %369 = arith.cmpi eq, %358, %368 : vector<1x8xi32>
    %370 = arith.extui %369 : vector<1x8xi1> to vector<1x8xi32>
    %371 = arith.sitofp %370 : vector<1x8xi32> to vector<1x8xf32>
    %cst_321 = arith.constant dense<0.000000e+00> : vector<1x192xf32>
    %372 = tpu.matmul %371, %356, %cst_321 {dimension_numbers = #tpu.dot_dimension_numbers<[1], [0], [0], [1], [0, 0, 1, 1], [], []>} : vector<1x8xf32>, vector<8x192xf32>, vector<1x192xf32> -> vector<1x192xf32>
    %c1_322 = arith.constant 1 : index
    %c0_323 = arith.constant 0 : index
    %c0_324 = arith.constant 0 : index
    %373 = vector.load %arg15[%c1_322, %c0_323, %c0_324] : memref<8x192x8xf32, #tpu.memory_space<vmem>>, vector<1x192x8xf32>
    %374 = vector.shape_cast %373 : vector<1x192x8xf32> to vector<192x8xf32>
    %cst_325 = arith.constant dense<0.000000e+00> : vector<1x8xf32>
    %375 = tpu.matmul %372, %374, %cst_325 {dimension_numbers = #tpu.dot_dimension_numbers<[1], [0], [0], [1], [0, 0, 1, 1], [], []>} : vector<1x192xf32>, vector<192x8xf32>, vector<1x8xf32> -> vector<1x8xf32>
    %376 = arith.addf %367, %375 : vector<1x8xf32>
    %c2_i32 = arith.constant 2 : i32
    %377 = vector.broadcast %c2_i32 : i32 to vector<1x8xi32>
    %378 = arith.cmpi eq, %358, %377 : vector<1x8xi32>
    %379 = arith.extui %378 : vector<1x8xi1> to vector<1x8xi32>
    %380 = arith.sitofp %379 : vector<1x8xi32> to vector<1x8xf32>
    %cst_326 = arith.constant dense<0.000000e+00> : vector<1x192xf32>
    %381 = tpu.matmul %380, %356, %cst_326 {dimension_numbers = #tpu.dot_dimension_numbers<[1], [0], [0], [1], [0, 0, 1, 1], [], []>} : vector<1x8xf32>, vector<8x192xf32>, vector<1x192xf32> -> vector<1x192xf32>
    %c2_327 = arith.constant 2 : index
    %c0_328 = arith.constant 0 : index
    %c0_329 = arith.constant 0 : index
    %382 = vector.load %arg15[%c2_327, %c0_328, %c0_329] : memref<8x192x8xf32, #tpu.memory_space<vmem>>, vector<1x192x8xf32>
    %383 = vector.shape_cast %382 : vector<1x192x8xf32> to vector<192x8xf32>
    %cst_330 = arith.constant dense<0.000000e+00> : vector<1x8xf32>
    %384 = tpu.matmul %381, %383, %cst_330 {dimension_numbers = #tpu.dot_dimension_numbers<[1], [0], [0], [1], [0, 0, 1, 1], [], []>} : vector<1x192xf32>, vector<192x8xf32>, vector<1x8xf32> -> vector<1x8xf32>
    %385 = arith.addf %376, %384 : vector<1x8xf32>
    %c3_i32 = arith.constant 3 : i32
    %386 = vector.broadcast %c3_i32 : i32 to vector<1x8xi32>
    %387 = arith.cmpi eq, %358, %386 : vector<1x8xi32>
    %388 = arith.extui %387 : vector<1x8xi1> to vector<1x8xi32>
    %389 = arith.sitofp %388 : vector<1x8xi32> to vector<1x8xf32>
    %cst_331 = arith.constant dense<0.000000e+00> : vector<1x192xf32>
    %390 = tpu.matmul %389, %356, %cst_331 {dimension_numbers = #tpu.dot_dimension_numbers<[1], [0], [0], [1], [0, 0, 1, 1], [], []>} : vector<1x8xf32>, vector<8x192xf32>, vector<1x192xf32> -> vector<1x192xf32>
    %c3_332 = arith.constant 3 : index
    %c0_333 = arith.constant 0 : index
    %c0_334 = arith.constant 0 : index
    %391 = vector.load %arg15[%c3_332, %c0_333, %c0_334] : memref<8x192x8xf32, #tpu.memory_space<vmem>>, vector<1x192x8xf32>
    %392 = vector.shape_cast %391 : vector<1x192x8xf32> to vector<192x8xf32>
    %cst_335 = arith.constant dense<0.000000e+00> : vector<1x8xf32>
    %393 = tpu.matmul %390, %392, %cst_335 {dimension_numbers = #tpu.dot_dimension_numbers<[1], [0], [0], [1], [0, 0, 1, 1], [], []>} : vector<1x192xf32>, vector<192x8xf32>, vector<1x8xf32> -> vector<1x8xf32>
    %394 = arith.addf %385, %393 : vector<1x8xf32>
    %c4_i32 = arith.constant 4 : i32
    %395 = vector.broadcast %c4_i32 : i32 to vector<1x8xi32>
    %396 = arith.cmpi eq, %358, %395 : vector<1x8xi32>
    %397 = arith.extui %396 : vector<1x8xi1> to vector<1x8xi32>
    %398 = arith.sitofp %397 : vector<1x8xi32> to vector<1x8xf32>
    %cst_336 = arith.constant dense<0.000000e+00> : vector<1x192xf32>
    %399 = tpu.matmul %398, %356, %cst_336 {dimension_numbers = #tpu.dot_dimension_numbers<[1], [0], [0], [1], [0, 0, 1, 1], [], []>} : vector<1x8xf32>, vector<8x192xf32>, vector<1x192xf32> -> vector<1x192xf32>
    %c4_337 = arith.constant 4 : index
    %c0_338 = arith.constant 0 : index
    %c0_339 = arith.constant 0 : index
    %400 = vector.load %arg15[%c4_337, %c0_338, %c0_339] : memref<8x192x8xf32, #tpu.memory_space<vmem>>, vector<1x192x8xf32>
    %401 = vector.shape_cast %400 : vector<1x192x8xf32> to vector<192x8xf32>
    %cst_340 = arith.constant dense<0.000000e+00> : vector<1x8xf32>
    %402 = tpu.matmul %399, %401, %cst_340 {dimension_numbers = #tpu.dot_dimension_numbers<[1], [0], [0], [1], [0, 0, 1, 1], [], []>} : vector<1x192xf32>, vector<192x8xf32>, vector<1x8xf32> -> vector<1x8xf32>
    %403 = arith.addf %394, %402 : vector<1x8xf32>
    %c5_i32 = arith.constant 5 : i32
    %404 = vector.broadcast %c5_i32 : i32 to vector<1x8xi32>
    %405 = arith.cmpi eq, %358, %404 : vector<1x8xi32>
    %406 = arith.extui %405 : vector<1x8xi1> to vector<1x8xi32>
    %407 = arith.sitofp %406 : vector<1x8xi32> to vector<1x8xf32>
    %cst_341 = arith.constant dense<0.000000e+00> : vector<1x192xf32>
    %408 = tpu.matmul %407, %356, %cst_341 {dimension_numbers = #tpu.dot_dimension_numbers<[1], [0], [0], [1], [0, 0, 1, 1], [], []>} : vector<1x8xf32>, vector<8x192xf32>, vector<1x192xf32> -> vector<1x192xf32>
    %c5_342 = arith.constant 5 : index
    %c0_343 = arith.constant 0 : index
    %c0_344 = arith.constant 0 : index
    %409 = vector.load %arg15[%c5_342, %c0_343, %c0_344] : memref<8x192x8xf32, #tpu.memory_space<vmem>>, vector<1x192x8xf32>
    %410 = vector.shape_cast %409 : vector<1x192x8xf32> to vector<192x8xf32>
    %cst_345 = arith.constant dense<0.000000e+00> : vector<1x8xf32>
    %411 = tpu.matmul %408, %410, %cst_345 {dimension_numbers = #tpu.dot_dimension_numbers<[1], [0], [0], [1], [0, 0, 1, 1], [], []>} : vector<1x192xf32>, vector<192x8xf32>, vector<1x8xf32> -> vector<1x8xf32>
    %412 = arith.addf %403, %411 : vector<1x8xf32>
    %c6_i32 = arith.constant 6 : i32
    %413 = vector.broadcast %c6_i32 : i32 to vector<1x8xi32>
    %414 = arith.cmpi eq, %358, %413 : vector<1x8xi32>
    %415 = arith.extui %414 : vector<1x8xi1> to vector<1x8xi32>
    %416 = arith.sitofp %415 : vector<1x8xi32> to vector<1x8xf32>
    %cst_346 = arith.constant dense<0.000000e+00> : vector<1x192xf32>
    %417 = tpu.matmul %416, %356, %cst_346 {dimension_numbers = #tpu.dot_dimension_numbers<[1], [0], [0], [1], [0, 0, 1, 1], [], []>} : vector<1x8xf32>, vector<8x192xf32>, vector<1x192xf32> -> vector<1x192xf32>
    %c6_347 = arith.constant 6 : index
    %c0_348 = arith.constant 0 : index
    %c0_349 = arith.constant 0 : index
    %418 = vector.load %arg15[%c6_347, %c0_348, %c0_349] : memref<8x192x8xf32, #tpu.memory_space<vmem>>, vector<1x192x8xf32>
    %419 = vector.shape_cast %418 : vector<1x192x8xf32> to vector<192x8xf32>
    %cst_350 = arith.constant dense<0.000000e+00> : vector<1x8xf32>
    %420 = tpu.matmul %417, %419, %cst_350 {dimension_numbers = #tpu.dot_dimension_numbers<[1], [0], [0], [1], [0, 0, 1, 1], [], []>} : vector<1x192xf32>, vector<192x8xf32>, vector<1x8xf32> -> vector<1x8xf32>
    %421 = arith.addf %412, %420 : vector<1x8xf32>
    %c7_i32 = arith.constant 7 : i32
    %422 = vector.broadcast %c7_i32 : i32 to vector<1x8xi32>
    %423 = arith.cmpi eq, %358, %422 : vector<1x8xi32>
    %424 = arith.extui %423 : vector<1x8xi1> to vector<1x8xi32>
    %425 = arith.sitofp %424 : vector<1x8xi32> to vector<1x8xf32>
    %cst_351 = arith.constant dense<0.000000e+00> : vector<1x192xf32>
    %426 = tpu.matmul %425, %356, %cst_351 {dimension_numbers = #tpu.dot_dimension_numbers<[1], [0], [0], [1], [0, 0, 1, 1], [], []>} : vector<1x8xf32>, vector<8x192xf32>, vector<1x192xf32> -> vector<1x192xf32>
    %c7_352 = arith.constant 7 : index
    %c0_353 = arith.constant 0 : index
    %c0_354 = arith.constant 0 : index
    %427 = vector.load %arg15[%c7_352, %c0_353, %c0_354] : memref<8x192x8xf32, #tpu.memory_space<vmem>>, vector<1x192x8xf32>
    %428 = vector.shape_cast %427 : vector<1x192x8xf32> to vector<192x8xf32>
    %cst_355 = arith.constant dense<0.000000e+00> : vector<1x8xf32>
    %429 = tpu.matmul %426, %428, %cst_355 {dimension_numbers = #tpu.dot_dimension_numbers<[1], [0], [0], [1], [0, 0, 1, 1], [], []>} : vector<1x192xf32>, vector<192x8xf32>, vector<1x8xf32> -> vector<1x8xf32>
    %430 = arith.addf %421, %429 : vector<1x8xf32>
    %c0_356 = arith.constant 0 : index
    %c0_357 = arith.constant 0 : index
    %431 = vector.load %arg16[%c0_356, %c0_357] : memref<1x8xf32, #tpu.memory_space<vmem>>, vector<1x8xf32>
    %432 = arith.addf %430, %431 : vector<1x8xf32>
    %cst_358 = arith.constant 0.000000e+00 : f32
    %433 = vector.broadcast %cst_358 : f32 to vector<1x8xf32>
    %434 = arith.maximumf %432, %433 : vector<1x8xf32>
    %c0_359 = arith.constant 0 : index
    %c0_360 = arith.constant 0 : index
    %435 = vector.load %arg17[%c0_359, %c0_360] : memref<8x4xf32, #tpu.memory_space<vmem>>, vector<8x4xf32>
    %cst_361 = arith.constant dense<0.000000e+00> : vector<1x4xf32>
    %436 = tpu.matmul %434, %435, %cst_361 {dimension_numbers = #tpu.dot_dimension_numbers<[1], [0], [0], [1], [0, 0, 1, 1], [], []>} : vector<1x8xf32>, vector<8x4xf32>, vector<1x4xf32> -> vector<1x4xf32>
    %c0_362 = arith.constant 0 : index
    %c0_363 = arith.constant 0 : index
    %437 = vector.load %arg18[%c0_362, %c0_363] : memref<1x4xf32, #tpu.memory_space<vmem>>, vector<1x4xf32>
    %438 = arith.addf %436, %437 : vector<1x4xf32>
    %c0_364 = arith.constant 0 : index
    %c0_365 = arith.constant 0 : index
    %c0_366 = arith.constant 0 : index
    %439 = vector.load %arg19[%c0_364, %c0_365, %c0_366] : memref<1x1x4xf32, #tpu.memory_space<vmem>>, vector<1x1x4xf32>
    %440 = vector.shape_cast %439 : vector<1x1x4xf32> to vector<1x4xf32>
    %441 = vector.shape_cast %438 : vector<1x4xf32> to vector<1x1x4xf32>
    tpu.vector_store %arg19[%c0_364, %c0_365, %c0_366], %441 {strides = array<i32>} : memref<1x1x4xf32, #tpu.memory_space<vmem>>, vector<1x1x4xf32>,
    return
  }
  func.func @transform_0(%arg0: i32) -> (i32, i32, i32) {
    %c0_i32 = arith.constant 0 : i32
    %c0_i32_0 = arith.constant 0 : i32
    %c0_i32_1 = arith.constant 0 : i32
    return %arg0, %c0_i32, %c0_i32_0 : i32, i32, i32
  }
  func.func @transform_1(%arg0: i32) -> (i32, i32, i32) {
    %c0_i32 = arith.constant 0 : i32
    %c0_i32_0 = arith.constant 0 : i32
    %c0_i32_1 = arith.constant 0 : i32
    %c0_i32_2 = arith.constant 0 : i32
    return %c0_i32, %c0_i32_0, %c0_i32_1 : i32, i32, i32
  }
  func.func @transform_2(%arg0: i32) -> (i32, i32, i32) {
    %c0_i32 = arith.constant 0 : i32
    %c0_i32_0 = arith.constant 0 : i32
    %c0_i32_1 = arith.constant 0 : i32
    %c0_i32_2 = arith.constant 0 : i32
    return %c0_i32, %c0_i32_0, %c0_i32_1 : i32, i32, i32
  }
  func.func @transform_3(%arg0: i32) -> (i32, i32) {
    %c0_i32 = arith.constant 0 : i32
    %c0_i32_0 = arith.constant 0 : i32
    %c0_i32_1 = arith.constant 0 : i32
    return %c0_i32, %c0_i32_0 : i32, i32
  }
  func.func @transform_4(%arg0: i32) -> (i32, i32) {
    %c0_i32 = arith.constant 0 : i32
    %c0_i32_0 = arith.constant 0 : i32
    %c0_i32_1 = arith.constant 0 : i32
    return %c0_i32, %c0_i32_0 : i32, i32
  }
  func.func @transform_5(%arg0: i32) -> (i32, i32, i32) {
    %c0_i32 = arith.constant 0 : i32
    %c0_i32_0 = arith.constant 0 : i32
    %c0_i32_1 = arith.constant 0 : i32
    %c0_i32_2 = arith.constant 0 : i32
    return %c0_i32, %c0_i32_0, %c0_i32_1 : i32, i32, i32
  }
  func.func @transform_6(%arg0: i32) -> (i32, i32) {
    %c0_i32 = arith.constant 0 : i32
    %c0_i32_0 = arith.constant 0 : i32
    %c0_i32_1 = arith.constant 0 : i32
    return %c0_i32, %c0_i32_0 : i32, i32
  }
  func.func @transform_7(%arg0: i32) -> (i32, i32) {
    %c0_i32 = arith.constant 0 : i32
    %c0_i32_0 = arith.constant 0 : i32
    %c0_i32_1 = arith.constant 0 : i32
    return %c0_i32, %c0_i32_0 : i32, i32
  }
  func.func @transform_8(%arg0: i32) -> (i32, i32, i32) {
    %c0_i32 = arith.constant 0 : i32
    %c0_i32_0 = arith.constant 0 : i32
    %c0_i32_1 = arith.constant 0 : i32
    %c0_i32_2 = arith.constant 0 : i32
    return %c0_i32, %c0_i32_0, %c0_i32_1 : i32, i32, i32
  }
  func.func @transform_9(%arg0: i32) -> (i32, i32) {
    %c0_i32 = arith.constant 0 : i32
    %c0_i32_0 = arith.constant 0 : i32
    %c0_i32_1 = arith.constant 0 : i32
    return %c0_i32, %c0_i32_0 : i32, i32
  }
  func.func @transform_10(%arg0: i32) -> (i32, i32) {
    %c0_i32 = arith.constant 0 : i32
    %c0_i32_0 = arith.constant 0 : i32
    %c0_i32_1 = arith.constant 0 : i32
    return %c0_i32, %c0_i32_0 : i32, i32
  }
  func.func @transform_11(%arg0: i32) -> (i32, i32, i32) {
    %c0_i32 = arith.constant 0 : i32
    %c0_i32_0 = arith.constant 0 : i32
    %c0_i32_1 = arith.constant 0 : i32
    %c0_i32_2 = arith.constant 0 : i32
    return %c0_i32, %c0_i32_0, %c0_i32_1 : i32, i32, i32
  }
  func.func @transform_12(%arg0: i32) -> (i32, i32) {
    %c0_i32 = arith.constant 0 : i32
    %c0_i32_0 = arith.constant 0 : i32
    %c0_i32_1 = arith.constant 0 : i32
    return %c0_i32, %c0_i32_0 : i32, i32
  }
  func.func @transform_13(%arg0: i32) -> (i32, i32) {
    %c0_i32 = arith.constant 0 : i32
    %c0_i32_0 = arith.constant 0 : i32
    %c0_i32_1 = arith.constant 0 : i32
    return %c0_i32, %c0_i32_0 : i32, i32
  }
  func.func @transform_14(%arg0: i32) -> (i32, i32, i32) {
    %c0_i32 = arith.constant 0 : i32
    %c0_i32_0 = arith.constant 0 : i32
    %c0_i32_1 = arith.constant 0 : i32
    %c0_i32_2 = arith.constant 0 : i32
    return %c0_i32, %c0_i32_0, %c0_i32_1 : i32, i32, i32
  }
  func.func @transform_15(%arg0: i32) -> (i32, i32) {
    %c0_i32 = arith.constant 0 : i32
    %c0_i32_0 = arith.constant 0 : i32
    %c0_i32_1 = arith.constant 0 : i32
    return %c0_i32, %c0_i32_0 : i32, i32
  }
  func.func @transform_16(%arg0: i32) -> (i32, i32) {
    %c0_i32 = arith.constant 0 : i32
    %c0_i32_0 = arith.constant 0 : i32
    %c0_i32_1 = arith.constant 0 : i32
    return %c0_i32, %c0_i32_0 : i32, i32
  }
  func.func @transform_17(%arg0: i32) -> (i32, i32) {
    %c0_i32 = arith.constant 0 : i32
    %c0_i32_0 = arith.constant 0 : i32
    %c0_i32_1 = arith.constant 0 : i32
    return %c0_i32, %c0_i32_0 : i32, i32
  }
  func.func @transform_18(%arg0: i32) -> (i32, i32, i32) {
    %c0_i32 = arith.constant 0 : i32
    %c0_i32_0 = arith.constant 0 : i32
    %c0_i32_1 = arith.constant 0 : i32
    return %arg0, %c0_i32, %c0_i32_0 : i32, i32, i32
  }
}

</mosaic_0001>

<llo_original>
// kernel: tpu_custom_call.1
$region0: #{tpu_custom_call.1}
  #allocation0 [shape = 'u32[]', space=smem, size = 0x4, offset = 0x4, fixed_abs, tag = 'smem constant byte address 0x4 - core index']
  #allocation1 [shape = 'u32[144,128]{1,0:T(1,128)}', space=vmem, size = 0x12000, scoped, tag = 'internal scratch']
  %s0 = inlined_call_operand.hbm [shape: f32[2,1,192], index: 0, kind: input, shape index: {}]
  %s1 = inlined_call_operand.hbm [shape: f32[9,192,192], index: 1, kind: input, shape index: {}]
  %s2 = inlined_call_operand.vmem [shape: f32[9,8,1], index: 2, kind: input, shape index: {}]
  %s3 = inlined_call_operand.vmem [shape: f32[8,1], index: 3, kind: input, shape index: {}]
  %s4 = inlined_call_operand.vmem [shape: f32[8,1], index: 4, kind: input, shape index: {}]
  %s5 = inlined_call_operand.vmem [shape: f32[9,8,8], index: 5, kind: input, shape index: {}]
  %s6 = inlined_call_operand.vmem [shape: f32[8,1], index: 6, kind: input, shape index: {}]
  %s7 = inlined_call_operand.vmem [shape: f32[8,1], index: 7, kind: input, shape index: {}]
  %s8 = inlined_call_operand.vmem [shape: f32[9,8,8], index: 8, kind: input, shape index: {}]
  %s9 = inlined_call_operand.vmem [shape: f32[8,1], index: 9, kind: input, shape index: {}]
  %s10 = inlined_call_operand.vmem [shape: f32[8,1], index: 10, kind: input, shape index: {}]
  %s11 = inlined_call_operand.vmem [shape: f32[9,8,8], index: 11, kind: input, shape index: {}]
  %s12 = inlined_call_operand.vmem [shape: f32[8,1], index: 12, kind: input, shape index: {}]
  %s13 = inlined_call_operand.vmem [shape: f32[8,1], index: 13, kind: input, shape index: {}]
  %s14 = inlined_call_operand.vmem [shape: f32[8,192,8], index: 14, kind: input, shape index: {}]
  %s15 = inlined_call_operand.hbm [shape: f32[1,8], index: 15, kind: input, shape index: {}]
  %s16 = inlined_call_operand.vmem [shape: f32[8,4], index: 16, kind: input, shape index: {}]
  %s17 = inlined_call_operand.hbm [shape: f32[1,4], index: 17, kind: input, shape index: {}]
  %s18 = inlined_call_operand.hbm [shape: f32[2,1,4], index: 18, kind: output, shape index: {}]
  %s19 = sld [smem:[#allocation0]]
  $region121: #{tpu_custom_call.1} parent=0
    _
  %s21 = ssub.s32 1, %s19
  %s22 = scalar_select 0, %s21, %s19
  $region1: #{tpu_custom_call.1} parent=0
    #allocation2 [shape = 'u8[2048]{0}', space=vmem, size = 0x800, scoped, tag = 'input window, operand 0']
    #allocation3 [shape = 's32[2]{0}', space=sflag, size = 0x8, scoped, tag = 'scoped memory for tpu_custom_call.1']
    #allocation4 [shape = 's32[2]{0}', space=sflag, size = 0x8, scoped, tag = 'scoped memory for tpu_custom_call.1']
    #allocation5 [shape = 'u8[1769472]{0}', space=vmem, size = 0x1b0000, scoped, tag = 'input window, operand 1, single buffered']
    #allocation6 [shape = 's32[1]{0}', space=sflag, size = 0x4, scoped, tag = 'scoped memory for tpu_custom_call.1']
    #allocation7 [shape = 'u8[512]{0}', space=vmem, size = 0x400, scoped, tag = 'input window, operand 15, single buffered']
    #allocation8 [shape = 'u8[512]{0}', space=vmem, size = 0x400, scoped, tag = 'input window, operand 17, single buffered']
    #allocation9 [shape = 's32[1]{0}', space=sflag, size = 0x4, scoped, tag = 'scoped memory for tpu_custom_call.1']
    #allocation10 [shape = 'u8[1024]{0}', space=vmem, size = 0x400, scoped, tag = 'output window, operand 0']
    %23 = vsyncpa [#allocation3], 0
    %s24 = scalar_lea.sflag [#allocation3], 1
    %25 = vsyncpa %s24, 0
    %26 = vsyncpa [#allocation6], 0
    %27 = vsyncpa [#allocation9], 0
    %28 = vsyncpa [#allocation4], 0
    %s29 = scalar_lea.sflag [#allocation4], 1
    %30 = vsyncpa %s29, 0
    loop: start=0, step=1, limit=4
    $region2: #{tpu_custom_call.1} parent=1 // loop_pre_header
      _
    $region3: #{tpu_custom_call.1} parent=1 // loop_header
      %s32 = sphi 0, %s36
      %p33 = scmp.ge.s32.totalorder %s32, 4
      %s42 = sphi 0, %s44
      %s45 = sphi 0, %s42
      %s46 = sphi 0, %s45
      %s62 = sphi 0, %s46
      %s66 = sphi 0, %s66
      %s68 = sphi 0, %s66
      %s69 = sphi 0, %s68
      %s83 = sphi 0, %s69
      %s87 = sphi 0, %s87
      %s89 = sphi 0, %s87
      %s90 = sphi 0, %s89
      %s104 = sphi 0, %s90
      %s108 = sphi 0, %s108
      %s110 = sphi 0, %s108
      %s111 = sphi 0, %s110
      %s125 = sphi 0, %s111
      %s129 = sphi 0, %s129
      %s131 = sphi 0, %s129
      %s132 = sphi 0, %s131
      %s146 = sphi 0, %s132
      %s150 = sphi 0, %s150
      %s152 = sphi 0, %s150
      %s153 = sphi 0, %s152
      %s167 = sphi 0, %s153
      %s171 = sphi 0, %s171
      %s173 = sphi 0, %s171
      %s174 = sphi 0, %s173
      %s188 = sphi 0, %s174
      %s192 = sphi 0, %s192
      %s194 = sphi 0, %s192
      %s195 = sphi 0, %s194
      %s209 = sphi 0, %s195
      %s213 = sphi 0, %s213
      %s215 = sphi 0, %s213
      %s216 = sphi 0, %s215
      %s230 = sphi 0, %s216
      %s234 = sphi 0, %s234
      %s236 = sphi 0, %s234
      %s237 = sphi 0, %s236
      %s251 = sphi 0, %s237
      %s255 = sphi 0, %s255
      %s257 = sphi 0, %s255
      %s258 = sphi 0, %s257
      %s272 = sphi 0, %s258
      %s276 = sphi 0, %s276
      %s278 = sphi 0, %s276
      %s279 = sphi 0, %s278
      %s293 = sphi 0, %s279
      %s297 = sphi 0, %s297
      %s299 = sphi 0, %s297
      %s300 = sphi 0, %s299
      %s314 = sphi 0, %s300
      %s318 = sphi 0, %s318
      %s320 = sphi 0, %s318
      %s321 = sphi 0, %s320
      %s335 = sphi 0, %s321
      %s339 = sphi 0, %s339
      %s341 = sphi 0, %s339
      %s342 = sphi 0, %s341
      %s356 = sphi 0, %s342
      %s360 = sphi 0, %s360
      %s362 = sphi 0, %s360
      %s363 = sphi 0, %s362
      %s377 = sphi 0, %s363
      %s381 = sphi 0, %s381
      %s383 = sphi 0, %s381
      %s384 = sphi 0, %s383
      %s398 = sphi 0, %s384
      %s402 = sphi 0, %s402
      %s404 = sphi 0, %s402
      %s405 = sphi 0, %s404
      %s419 = sphi 0, %s405
      %s425 = sphi 0, %s427
      %s428 = sphi 0, %s425
      %s429 = sphi 0, %s428
      %s445 = sphi 0, %s429
    $region4: #{tpu_custom_call.1} parent=1 // loop_header_branch
      %35 = sbr.rel (%p33) target = $region8
    $region5: #{tpu_custom_call.1} parent=1 // loop_body
      %s37 = ssub.s32 %s32, 1
      %s38 = ssub.s32 %s32, 2
      %s39 = sadd.s32 %s32, 1
      %s40 = ssub.s32 %s32, %s39
      %p41 = scmp.eq.s32.totalorder %s40, 0
      %s43 = sadd.s32 %s42, 1
      %s44 = scalar_select %p41, %s42, %s43
      %p47 = pneg %p41
      %p48 = scmp.eq.s32.totalorder %s32, 1
      %p49 = por %p47, %p48
      %p50 = scmp.ne.s32.totalorder %s42, %s45
      %p51 = scmp.eq.s32.totalorder %s32, 0
      %p52 = por %p50, %p51
      %p53 = scmp.ne.s32.totalorder %s42, %s45
      %p54 = scmp.eq.s32.totalorder %s37, 1
      %p55 = por %p53, %p54
      %p56 = scmp.ne.s32.totalorder %s45, %s46
      %p57 = scmp.eq.s32.totalorder %s37, 0
      %p58 = por %p56, %p57
      %p59 = scmp.ne.s32.totalorder %s45, %s46
      %p60 = scmp.eq.s32.totalorder %s38, 1
      %p61 = por %p59, %p60
      %p63 = scmp.ne.s32.totalorder %s46, %s62
      %p64 = scmp.eq.s32.totalorder %s38, 0
      %p65 = por %p63, %p64
      %s67 = sadd.s32 %s66, 1
      %p70 = scmp.eq.s32.totalorder %s32, 1
      %p71 = scmp.ne.s32.totalorder %s66, %s68
      %p72 = scmp.eq.s32.totalorder %s32, 0
      %p73 = por %p71, %p72
      %p74 = scmp.ne.s32.totalorder %s66, %s68
      %p75 = scmp.eq.s32.totalorder %s37, 1
      %p76 = por %p74, %p75
      %p77 = scmp.ne.s32.totalorder %s68, %s69
      %p78 = scmp.eq.s32.totalorder %s37, 0
      %p79 = por %p77, %p78
      %p80 = scmp.ne.s32.totalorder %s68, %s69
      %p81 = scmp.eq.s32.totalorder %s38, 1
      %p82 = por %p80, %p81
      %p84 = scmp.ne.s32.totalorder %s69, %s83
      %p85 = scmp.eq.s32.totalorder %s38, 0
      %p86 = por %p84, %p85
      %s88 = sadd.s32 %s87, 1
      %p91 = scmp.eq.s32.totalorder %s32, 1
      %p92 = scmp.ne.s32.totalorder %s87, %s89
      %p93 = scmp.eq.s32.totalorder %s32, 0
      %p94 = por %p92, %p93
      %p95 = scmp.ne.s32.totalorder %s87, %s89
      %p96 = scmp.eq.s32.totalorder %s37, 1
      %p97 = por %p95, %p96
      %p98 = scmp.ne.s32.totalorder %s89, %s90
      %p99 = scmp.eq.s32.totalorder %s37, 0
      %p100 = por %p98, %p99
      %p101 = scmp.ne.s32.totalorder %s89, %s90
      %p102 = scmp.eq.s32.totalorder %s38, 1
      %p103 = por %p101, %p102
      %p105 = scmp.ne.s32.totalorder %s90, %s104
      %p106 = scmp.eq.s32.totalorder %s38, 0
      %p107 = por %p105, %p106
      %s109 = sadd.s32 %s108, 1
      %p112 = scmp.eq.s32.totalorder %s32, 1
      %p113 = scmp.ne.s32.totalorder %s108, %s110
      %p114 = scmp.eq.s32.totalorder %s32, 0
      %p115 = por %p113, %p114
      %p116 = scmp.ne.s32.totalorder %s108, %s110
      %p117 = scmp.eq.s32.totalorder %s37, 1
      %p118 = por %p116, %p117
      %p119 = scmp.ne.s32.totalorder %s110, %s111
      %p120 = scmp.eq.s32.totalorder %s37, 0
      %p121 = por %p119, %p120
      %p122 = scmp.ne.s32.totalorder %s110, %s111
      %p123 = scmp.eq.s32.totalorder %s38, 1
      %p124 = por %p122, %p123
      %p126 = scmp.ne.s32.totalorder %s111, %s125
      %p127 = scmp.eq.s32.totalorder %s38, 0
      %p128 = por %p126, %p127
      %s130 = sadd.s32 %s129, 1
      %p133 = scmp.eq.s32.totalorder %s32, 1
      %p134 = scmp.ne.s32.totalorder %s129, %s131
      %p135 = scmp.eq.s32.totalorder %s32, 0
      %p136 = por %p134, %p135
      %p137 = scmp.ne.s32.totalorder %s129, %s131
      %p138 = scmp.eq.s32.totalorder %s37, 1
      %p139 = por %p137, %p138
      %p140 = scmp.ne.s32.totalorder %s131, %s132
      %p141 = scmp.eq.s32.totalorder %s37, 0
      %p142 = por %p140, %p141
      %p143 = scmp.ne.s32.totalorder %s131, %s132
      %p144 = scmp.eq.s32.totalorder %s38, 1
      %p145 = por %p143, %p144
      %p147 = scmp.ne.s32.totalorder %s132, %s146
      %p148 = scmp.eq.s32.totalorder %s38, 0
      %p149 = por %p147, %p148
      %s151 = sadd.s32 %s150, 1
      %p154 = scmp.eq.s32.totalorder %s32, 1
      %p155 = scmp.ne.s32.totalorder %s150, %s152
      %p156 = scmp.eq.s32.totalorder %s32, 0
      %p157 = por %p155, %p156
      %p158 = scmp.ne.s32.totalorder %s150, %s152
      %p159 = scmp.eq.s32.totalorder %s37, 1
      %p160 = por %p158, %p159
      %p161 = scmp.ne.s32.totalorder %s152, %s153
      %p162 = scmp.eq.s32.totalorder %s37, 0
      %p163 = por %p161, %p162
      %p164 = scmp.ne.s32.totalorder %s152, %s153
      %p165 = scmp.eq.s32.totalorder %s38, 1
      %p166 = por %p164, %p165
      %p168 = scmp.ne.s32.totalorder %s153, %s167
      %p169 = scmp.eq.s32.totalorder %s38, 0
      %p170 = por %p168, %p169
      %s172 = sadd.s32 %s171, 1
      %p175 = scmp.eq.s32.totalorder %s32, 1
      %p176 = scmp.ne.s32.totalorder %s171, %s173
      %p177 = scmp.eq.s32.totalorder %s32, 0
      %p178 = por %p176, %p177
      %p179 = scmp.ne.s32.totalorder %s171, %s173
      %p180 = scmp.eq.s32.totalorder %s37, 1
      %p181 = por %p179, %p180
      %p182 = scmp.ne.s32.totalorder %s173, %s174
      %p183 = scmp.eq.s32.totalorder %s37, 0
      %p184 = por %p182, %p183
      %p185 = scmp.ne.s32.totalorder %s173, %s174
      %p186 = scmp.eq.s32.totalorder %s38, 1
      %p187 = por %p185, %p186
      %p189 = scmp.ne.s32.totalorder %s174, %s188
      %p190 = scmp.eq.s32.totalorder %s38, 0
      %p191 = por %p189, %p190
      %s193 = sadd.s32 %s192, 1
      %p196 = scmp.eq.s32.totalorder %s32, 1
      %p197 = scmp.ne.s32.totalorder %s192, %s194
      %p198 = scmp.eq.s32.totalorder %s32, 0
      %p199 = por %p197, %p198
      %p200 = scmp.ne.s32.totalorder %s192, %s194
      %p201 = scmp.eq.s32.totalorder %s37, 1
      %p202 = por %p200, %p201
      %p203 = scmp.ne.s32.totalorder %s194, %s195
      %p204 = scmp.eq.s32.totalorder %s37, 0
      %p205 = por %p203, %p204
      %p206 = scmp.ne.s32.totalorder %s194, %s195
      %p207 = scmp.eq.s32.totalorder %s38, 1
      %p208 = por %p206, %p207
      %p210 = scmp.ne.s32.totalorder %s195, %s209
      %p211 = scmp.eq.s32.totalorder %s38, 0
      %p212 = por %p210, %p211
      %s214 = sadd.s32 %s213, 1
      %p217 = scmp.eq.s32.totalorder %s32, 1
      %p218 = scmp.ne.s32.totalorder %s213, %s215
      %p219 = scmp.eq.s32.totalorder %s32, 0
      %p220 = por %p218, %p219
      %p221 = scmp.ne.s32.totalorder %s213, %s215
      %p222 = scmp.eq.s32.totalorder %s37, 1
      %p223 = por %p221, %p222
      %p224 = scmp.ne.s32.totalorder %s215, %s216
      %p225 = scmp.eq.s32.totalorder %s37, 0
      %p226 = por %p224, %p225
      %p227 = scmp.ne.s32.totalorder %s215, %s216
      %p228 = scmp.eq.s32.totalorder %s38, 1
      %p229 = por %p227, %p228
      %p231 = scmp.ne.s32.totalorder %s216, %s230
      %p232 = scmp.eq.s32.totalorder %s38, 0
      %p233 = por %p231, %p232
      %s235 = sadd.s32 %s234, 1
      %p238 = scmp.eq.s32.totalorder %s32, 1
      %p239 = scmp.ne.s32.totalorder %s234, %s236
      %p240 = scmp.eq.s32.totalorder %s32, 0
      %p241 = por %p239, %p240
      %p242 = scmp.ne.s32.totalorder %s234, %s236
      %p243 = scmp.eq.s32.totalorder %s37, 1
      %p244 = por %p242, %p243
      %p245 = scmp.ne.s32.totalorder %s236, %s237
      %p246 = scmp.eq.s32.totalorder %s37, 0
      %p247 = por %p245, %p246
      %p248 = scmp.ne.s32.totalorder %s236, %s237
      %p249 = scmp.eq.s32.totalorder %s38, 1
      %p250 = por %p248, %p249
      %p252 = scmp.ne.s32.totalorder %s237, %s251
      %p253 = scmp.eq.s32.totalorder %s38, 0
      %p254 = por %p252, %p253
      %s256 = sadd.s32 %s255, 1
      %p259 = scmp.eq.s32.totalorder %s32, 1
      %p260 = scmp.ne.s32.totalorder %s255, %s257
      %p261 = scmp.eq.s32.totalorder %s32, 0
      %p262 = por %p260, %p261
      %p263 = scmp.ne.s32.totalorder %s255, %s257
      %p264 = scmp.eq.s32.totalorder %s37, 1
      %p265 = por %p263, %p264
      %p266 = scmp.ne.s32.totalorder %s257, %s258
      %p267 = scmp.eq.s32.totalorder %s37, 0
      %p268 = por %p266, %p267
      %p269 = scmp.ne.s32.totalorder %s257, %s258
      %p270 = scmp.eq.s32.totalorder %s38, 1
      %p271 = por %p269, %p270
      %p273 = scmp.ne.s32.totalorder %s258, %s272
      %p274 = scmp.eq.s32.totalorder %s38, 0
      %p275 = por %p273, %p274
      %s277 = sadd.s32 %s276, 1
      %p280 = scmp.eq.s32.totalorder %s32, 1
      %p281 = scmp.ne.s32.totalorder %s276, %s278
      %p282 = scmp.eq.s32.totalorder %s32, 0
      %p283 = por %p281, %p282
      %p284 = scmp.ne.s32.totalorder %s276, %s278
      %p285 = scmp.eq.s32.totalorder %s37, 1
      %p286 = por %p284, %p285
      %p287 = scmp.ne.s32.totalorder %s278, %s279
      %p288 = scmp.eq.s32.totalorder %s37, 0
      %p289 = por %p287, %p288
      %p290 = scmp.ne.s32.totalorder %s278, %s279
      %p291 = scmp.eq.s32.totalorder %s38, 1
      %p292 = por %p290, %p291
      %p294 = scmp.ne.s32.totalorder %s279, %s293
      %p295 = scmp.eq.s32.totalorder %s38, 0
      %p296 = por %p294, %p295
      %s298 = sadd.s32 %s297, 1
      %p301 = scmp.eq.s32.totalorder %s32, 1
      %p302 = scmp.ne.s32.totalorder %s297, %s299
      %p303 = scmp.eq.s32.totalorder %s32, 0
      %p304 = por %p302, %p303
      %p305 = scmp.ne.s32.totalorder %s297, %s299
      %p306 = scmp.eq.s32.totalorder %s37, 1
      %p307 = por %p305, %p306
      %p308 = scmp.ne.s32.totalorder %s299, %s300
      %p309 = scmp.eq.s32.totalorder %s37, 0
      %p310 = por %p308, %p309
      %p311 = scmp.ne.s32.totalorder %s299, %s300
      %p312 = scmp.eq.s32.totalorder %s38, 1
      %p313 = por %p311, %p312
      %p315 = scmp.ne.s32.totalorder %s300, %s314
      %p316 = scmp.eq.s32.totalorder %s38, 0
      %p317 = por %p315, %p316
      %s319 = sadd.s32 %s318, 1
      %p322 = scmp.eq.s32.totalorder %s32, 1
      %p323 = scmp.ne.s32.totalorder %s318, %s320
      %p324 = scmp.eq.s32.totalorder %s32, 0
      %p325 = por %p323, %p324
      %p326 = scmp.ne.s32.totalorder %s318, %s320
      %p327 = scmp.eq.s32.totalorder %s37, 1
      %p328 = por %p326, %p327
      %p329 = scmp.ne.s32.totalorder %s320, %s321
      %p330 = scmp.eq.s32.totalorder %s37, 0
      %p331 = por %p329, %p330
      %p332 = scmp.ne.s32.totalorder %s320, %s321
      %p333 = scmp.eq.s32.totalorder %s38, 1
      %p334 = por %p332, %p333
      %p336 = scmp.ne.s32.totalorder %s321, %s335
      %p337 = scmp.eq.s32.totalorder %s38, 0
      %p338 = por %p336, %p337
      %s340 = sadd.s32 %s339, 1
      %p343 = scmp.eq.s32.totalorder %s32, 1
      %p344 = scmp.ne.s32.totalorder %s339, %s341
      %p345 = scmp.eq.s32.totalorder %s32, 0
      %p346 = por %p344, %p345
      %p347 = scmp.ne.s32.totalorder %s339, %s341
      %p348 = scmp.eq.s32.totalorder %s37, 1
      %p349 = por %p347, %p348
      %p350 = scmp.ne.s32.totalorder %s341, %s342
      %p351 = scmp.eq.s32.totalorder %s37, 0
      %p352 = por %p350, %p351
      %p353 = scmp.ne.s32.totalorder %s341, %s342
      %p354 = scmp.eq.s32.totalorder %s38, 1
      %p355 = por %p353, %p354
      %p357 = scmp.ne.s32.totalorder %s342, %s356
      %p358 = scmp.eq.s32.totalorder %s38, 0
      %p359 = por %p357, %p358
      %s361 = sadd.s32 %s360, 1
      %p364 = scmp.eq.s32.totalorder %s32, 1
      %p365 = scmp.ne.s32.totalorder %s360, %s362
      %p366 = scmp.eq.s32.totalorder %s32, 0
      %p367 = por %p365, %p366
      %p368 = scmp.ne.s32.totalorder %s360, %s362
      %p369 = scmp.eq.s32.totalorder %s37, 1
      %p370 = por %p368, %p369
      %p371 = scmp.ne.s32.totalorder %s362, %s363
      %p372 = scmp.eq.s32.totalorder %s37, 0
      %p373 = por %p371, %p372
      %p374 = scmp.ne.s32.totalorder %s362, %s363
      %p375 = scmp.eq.s32.totalorder %s38, 1
      %p376 = por %p374, %p375
      %p378 = scmp.ne.s32.totalorder %s363, %s377
      %p379 = scmp.eq.s32.totalorder %s38, 0
      %p380 = por %p378, %p379
      %s382 = sadd.s32 %s381, 1
      %p385 = scmp.eq.s32.totalorder %s32, 1
      %p386 = scmp.ne.s32.totalorder %s381, %s383
      %p387 = scmp.eq.s32.totalorder %s32, 0
      %p388 = por %p386, %p387
      %p389 = scmp.ne.s32.totalorder %s381, %s383
      %p390 = scmp.eq.s32.totalorder %s37, 1
      %p391 = por %p389, %p390
      %p392 = scmp.ne.s32.totalorder %s383, %s384
      %p393 = scmp.eq.s32.totalorder %s37, 0
      %p394 = por %p392, %p393
      %p395 = scmp.ne.s32.totalorder %s383, %s384
      %p396 = scmp.eq.s32.totalorder %s38, 1
      %p397 = por %p395, %p396
      %p399 = scmp.ne.s32.totalorder %s384, %s398
      %p400 = scmp.eq.s32.totalorder %s38, 0
      %p401 = por %p399, %p400
      %s403 = sadd.s32 %s402, 1
      %p406 = scmp.eq.s32.totalorder %s32, 1
      %p407 = scmp.ne.s32.totalorder %s402, %s404
      %p408 = scmp.eq.s32.totalorder %s32, 0
      %p409 = por %p407, %p408
      %p410 = scmp.ne.s32.totalorder %s402, %s404
      %p411 = scmp.eq.s32.totalorder %s37, 1
      %p412 = por %p410, %p411
      %p413 = scmp.ne.s32.totalorder %s404, %s405
      %p414 = scmp.eq.s32.totalorder %s37, 0
      %p415 = por %p413, %p414
      %p416 = scmp.ne.s32.totalorder %s404, %s405
      %p417 = scmp.eq.s32.totalorder %s38, 1
      %p418 = por %p416, %p417
      %p420 = scmp.ne.s32.totalorder %s405, %s419
      %p421 = scmp.eq.s32.totalorder %s38, 0
      %p422 = por %p420, %p421
      %s423 = ssub.s32 %s32, %s39
      %p424 = scmp.eq.s32.totalorder %s423, 0
      %s426 = sadd.s32 %s425, 1
      %s427 = scalar_select %p424, %s425, %s426
      %p430 = pneg %p424
      %p431 = scmp.eq.s32.totalorder %s32, 1
      %p432 = por %p430, %p431
      %p433 = scmp.ne.s32.totalorder %s425, %s428
      %p434 = scmp.eq.s32.totalorder %s32, 0
      %p435 = por %p433, %p434
      %p436 = scmp.ne.s32.totalorder %s425, %s428
      %p437 = scmp.eq.s32.totalorder %s37, 1
      %p438 = por %p436, %p437
      %p439 = scmp.ne.s32.totalorder %s428, %s429
      %p440 = scmp.eq.s32.totalorder %s37, 0
      %p441 = por %p439, %p440
      %p442 = scmp.ne.s32.totalorder %s428, %s429
      %p443 = scmp.eq.s32.totalorder %s38, 1
      %p444 = por %p442, %p443
      %p446 = scmp.ne.s32.totalorder %s429, %s445
      %p447 = scmp.eq.s32.totalorder %s38, 0
      %p448 = por %p446, %p447
      %p449 = scmp.le.s32.totalorder 1, %s32
      %p450 = scmp.lt.s32.totalorder %s32, 3
      %p451 = pnand %p449, %p450
      %p452 = pneg %p451
      // Predicated region
      $region9: #{tpu_custom_call.1} parent=5 // pred_check
        _
      $region10: #{tpu_custom_call.1} parent=5 // pred_check_branch
        %454 = sbr.rel (%p451) target = $region12
      $region11: #{tpu_custom_call.1} parent=5 // pred_region
        %s455 = ssub.s32 %s32, 1
        // Predicated region
        $region13: #{tpu_custom_call.1} parent=11 // pred_check
          %p456 = pneg %p79
        $region14: #{tpu_custom_call.1} parent=11 // pred_check_branch
          %458 = sbr.rel (%p456) target = $region16
        $region15: #{tpu_custom_call.1} parent=11 // pred_region
          %s460 = ssub.s32 55296, 55296
          %461 = vsyncadd [#allocation6], %s460
          %s462 = sshll.u32 [#allocation5], 4
          %s463 = int_to_ptr.vmem [resolvable:$true] %s462
          %468 = dma.hbm_to_vmem [thread:$0]  %s1, 55296, %s463, [#allocation6], 256, 256, 16
        $region16: #{tpu_custom_call.1} parent=11 // pred_fallthru
          _
        // Predicated region
        $region17: #{tpu_custom_call.1} parent=11 // pred_check
          %p469 = pneg %p100
        $region18: #{tpu_custom_call.1} parent=11 // pred_check_branch
          %471 = sbr.rel (%p469) target = $region20
        $region19: #{tpu_custom_call.1} parent=11 // pred_region
          _
        $region20: #{tpu_custom_call.1} parent=11 // pred_fallthru
          _
        // Predicated region
        $region21: #{tpu_custom_call.1} parent=11 // pred_check
          %p472 = pneg %p121
        $region22: #{tpu_custom_call.1} parent=11 // pred_check_branch
          %474 = sbr.rel (%p472) target = $region24
        $region23: #{tpu_custom_call.1} parent=11 // pred_region
          _
        $region24: #{tpu_custom_call.1} parent=11 // pred_fallthru
          _
        // Predicated region
        $region25: #{tpu_custom_call.1} parent=11 // pred_check
          %p475 = pneg %p142
        $region26: #{tpu_custom_call.1} parent=11 // pred_check_branch
          %477 = sbr.rel (%p475) target = $region28
        $region27: #{tpu_custom_call.1} parent=11 // pred_region
          _
        $region28: #{tpu_custom_call.1} parent=11 // pred_fallthru
          _
        // Predicated region
        $region29: #{tpu_custom_call.1} parent=11 // pred_check
          %p478 = pneg %p163
        $region30: #{tpu_custom_call.1} parent=11 // pred_check_branch
          %480 = sbr.rel (%p478) target = $region32
        $region31: #{tpu_custom_call.1} parent=11 // pred_region
          _
        $region32: #{tpu_custom_call.1} parent=11 // pred_fallthru
          _
        // Predicated region
        $region33: #{tpu_custom_call.1} parent=11 // pred_check
          %p481 = pneg %p184
        $region34: #{tpu_custom_call.1} parent=11 // pred_check_branch
          %483 = sbr.rel (%p481) target = $region36
        $region35: #{tpu_custom_call.1} parent=11 // pred_region
          _
        $region36: #{tpu_custom_call.1} parent=11 // pred_fallthru
          _
        // Predicated region
        $region37: #{tpu_custom_call.1} parent=11 // pred_check
          %p484 = pneg %p205
        $region38: #{tpu_custom_call.1} parent=11 // pred_check_branch
          %486 = sbr.rel (%p484) target = $region40
        $region39: #{tpu_custom_call.1} parent=11 // pred_region
          _
        $region40: #{tpu_custom_call.1} parent=11 // pred_fallthru
          _
        // Predicated region
        $region41: #{tpu_custom_call.1} parent=11 // pred_check
          %p487 = pneg %p226
        $region42: #{tpu_custom_call.1} parent=11 // pred_check_branch
          %489 = sbr.rel (%p487) target = $region44
        $region43: #{tpu_custom_call.1} parent=11 // pred_region
          _
        $region44: #{tpu_custom_call.1} parent=11 // pred_fallthru
          _
        // Predicated region
        $region45: #{tpu_custom_call.1} parent=11 // pred_check
          %p490 = pneg %p247
        $region46: #{tpu_custom_call.1} parent=11 // pred_check_branch
          %492 = sbr.rel (%p490) target = $region48
        $region47: #{tpu_custom_call.1} parent=11 // pred_region
          _
        $region48: #{tpu_custom_call.1} parent=11 // pred_fallthru
          _
        // Predicated region
        $region49: #{tpu_custom_call.1} parent=11 // pred_check
          %p493 = pneg %p268
        $region50: #{tpu_custom_call.1} parent=11 // pred_check_branch
          %495 = sbr.rel (%p493) target = $region52
        $region51: #{tpu_custom_call.1} parent=11 // pred_region
          _
        $region52: #{tpu_custom_call.1} parent=11 // pred_fallthru
          _
        // Predicated region
        $region53: #{tpu_custom_call.1} parent=11 // pred_check
          %p496 = pneg %p289
        $region54: #{tpu_custom_call.1} parent=11 // pred_check_branch
          %498 = sbr.rel (%p496) target = $region56
        $region55: #{tpu_custom_call.1} parent=11 // pred_region
          _
        $region56: #{tpu_custom_call.1} parent=11 // pred_fallthru
          _
        // Predicated region
        $region57: #{tpu_custom_call.1} parent=11 // pred_check
          %p499 = pneg %p310
        $region58: #{tpu_custom_call.1} parent=11 // pred_check_branch
          %501 = sbr.rel (%p499) target = $region60
        $region59: #{tpu_custom_call.1} parent=11 // pred_region
          _
        $region60: #{tpu_custom_call.1} parent=11 // pred_fallthru
          _
        // Predicated region
        $region61: #{tpu_custom_call.1} parent=11 // pred_check
          %p502 = pneg %p331
        $region62: #{tpu_custom_call.1} parent=11 // pred_check_branch
          %504 = sbr.rel (%p502) target = $region64
        $region63: #{tpu_custom_call.1} parent=11 // pred_region
          _
        $region64: #{tpu_custom_call.1} parent=11 // pred_fallthru
          _
        // Predicated region
        $region65: #{tpu_custom_call.1} parent=11 // pred_check
          %p505 = pneg %p352
        $region66: #{tpu_custom_call.1} parent=11 // pred_check_branch
          %507 = sbr.rel (%p505) target = $region68
        $region67: #{tpu_custom_call.1} parent=11 // pred_region
          _
        $region68: #{tpu_custom_call.1} parent=11 // pred_fallthru
          _
        // Predicated region
        $region69: #{tpu_custom_call.1} parent=11 // pred_check
          %p508 = pneg %p373
        $region70: #{tpu_custom_call.1} parent=11 // pred_check_branch
          %510 = sbr.rel (%p508) target = $region72
        $region71: #{tpu_custom_call.1} parent=11 // pred_region
          %s512 = ssub.s32 16, 16
          %513 = vsyncadd [#allocation6], %s512
          %s515 = sshll.u32 [#allocation7], 4
          %s516 = int_to_ptr.vmem [resolvable:$true] %s515
          %518 = dma.hbm_to_vmem [thread:$0]  %s15, 16, %s516, [#allocation6]
        $region72: #{tpu_custom_call.1} parent=11 // pred_fallthru
          _
        // Predicated region
        $region73: #{tpu_custom_call.1} parent=11 // pred_check
          %p519 = pneg %p394
        $region74: #{tpu_custom_call.1} parent=11 // pred_check_branch
          %521 = sbr.rel (%p519) target = $region76
        $region75: #{tpu_custom_call.1} parent=11 // pred_region
          _
        $region76: #{tpu_custom_call.1} parent=11 // pred_fallthru
          _
        // Predicated region
        $region77: #{tpu_custom_call.1} parent=11 // pred_check
          %p522 = pneg %p415
        $region78: #{tpu_custom_call.1} parent=11 // pred_check_branch
          %524 = sbr.rel (%p522) target = $region80
        $region79: #{tpu_custom_call.1} parent=11 // pred_region
          %s526 = ssub.s32 16, 16
          %527 = vsyncadd [#allocation9], %s526
          %s529 = sshll.u32 [#allocation8], 4
          %s530 = int_to_ptr.vmem [resolvable:$true] %s529
          %532 = dma.hbm_to_vmem [thread:$0]  %s17, 16, %s530, [#allocation9]
        $region80: #{tpu_custom_call.1} parent=11 // pred_fallthru
          _
      $region12: #{tpu_custom_call.1} parent=5 // pred_fallthru
        _
      %p533 = scmp.lt.s32.totalorder %s32, 2
      // Predicated region
      $region81: #{tpu_custom_call.1} parent=5 // pred_check
        %p534 = pneg %p533
      $region82: #{tpu_custom_call.1} parent=5 // pred_check_branch
        %536 = sbr.rel (%p534) target = $region84
      $region83: #{tpu_custom_call.1} parent=5 // pred_region
        // Predicated region
        $region85: #{tpu_custom_call.1} parent=83 // pred_check
          %p537 = pneg %p52
        $region86: #{tpu_custom_call.1} parent=83 // pred_check_branch
          %539 = sbr.rel (%p537) target = $region88
        $region87: #{tpu_custom_call.1} parent=83 // pred_region
          %s540 = sand.u32 %s42, 1
          %s541 = scalar_lea.sflag [#allocation3], %s540
          %s542 = sand.u32 %s42, 1
          %s543 = smul.addr %s542, 2
          %s544 = scalar_lea.vmem [#allocation2], %s543
          %s546 = ssub.s32 32, 32
          %547 = vsyncadd %s541, %s546
          %s548 = smul.addr %s32, 2
          %s549 = smul.addr %s548, 16
          %s550 = scalar_lea.hbm %s0, %s549
          %s552 = sshll.u32 %s544, 4
          %s553 = int_to_ptr.vmem [resolvable:$true] %s552
          %555 = dma.hbm_to_vmem [thread:$0]  %s550, 32, %s553, %s541
        $region88: #{tpu_custom_call.1} parent=83 // pred_fallthru
          _
      $region84: #{tpu_custom_call.1} parent=5 // pred_fallthru
        _
      %p556 = scmp.le.s32.totalorder 1, %s32
      %p557 = scmp.lt.s32.totalorder %s32, 3
      %p558 = pnand %p556, %p557
      %p559 = pneg %p558
      // Predicated region
      $region89: #{tpu_custom_call.1} parent=5 // pred_check
        _
      $region90: #{tpu_custom_call.1} parent=5 // pred_check_branch
        %561 = sbr.rel (%p558) target = $region92
      $region91: #{tpu_custom_call.1} parent=5 // pred_region
        %s562 = ssub.s32 %s32, 1
        %s563 = sand.u32 %s45, 1
        %s564 = scalar_lea.sflag [#allocation3], %s563
        %s565 = sand.u32 %s45, 1
        %s566 = smul.addr %s565, 2
        %s567 = scalar_lea.vmem [#allocation2], %s566
        // Predicated region
        $region93: #{tpu_custom_call.1} parent=91 // pred_check
          %p568 = pneg %p58
        $region94: #{tpu_custom_call.1} parent=91 // pred_check_branch
          %570 = sbr.rel (%p568) target = $region96
        $region95: #{tpu_custom_call.1} parent=91 // pred_region
          %571 = dma.done %s564, 32
        $region96: #{tpu_custom_call.1} parent=91 // pred_fallthru
          _
        // Predicated region
        $region97: #{tpu_custom_call.1} parent=91 // pred_check
          %p572 = pneg %p79
        $region98: #{tpu_custom_call.1} parent=91 // pred_check_branch
          %574 = sbr.rel (%p572) target = $region100
        $region99: #{tpu_custom_call.1} parent=91 // pred_region
          %575 = dma.done [#allocation6], 55296
        $region100: #{tpu_custom_call.1} parent=91 // pred_fallthru
          _
        // Predicated region
        $region101: #{tpu_custom_call.1} parent=91 // pred_check
          %p576 = pneg %p373
        $region102: #{tpu_custom_call.1} parent=91 // pred_check_branch
          %578 = sbr.rel (%p576) target = $region104
        $region103: #{tpu_custom_call.1} parent=91 // pred_region
          %579 = dma.done [#allocation6], 16
        $region104: #{tpu_custom_call.1} parent=91 // pred_fallthru
          _
        // Predicated region
        $region105: #{tpu_custom_call.1} parent=91 // pred_check
          %p580 = pneg %p415
        $region106: #{tpu_custom_call.1} parent=91 // pred_check_branch
          %582 = sbr.rel (%p580) target = $region108
        $region107: #{tpu_custom_call.1} parent=91 // pred_region
          %583 = dma.done [#allocation9], 16
        $region108: #{tpu_custom_call.1} parent=91 // pred_fallthru
          _
        %s584 = sand.u32 %s45, 1
        %s585 = scalar_lea.sflag [#allocation3], %s584
        %s586 = sand.u32 %s45, 1
        %s587 = smul.addr %s586, 2
        %s588 = scalar_lea.vmem [#allocation2], %s587
        %p589 = pneg %p58
        %p590 = pneg %p55
        %p591 = pneg %p79
        %p592 = pneg %p76
        %p593 = pneg %p100
        %p594 = pneg %p97
        %p595 = pneg %p121
        %p596 = pneg %p118
        %p597 = pneg %p142
        %p598 = pneg %p139
        %p599 = pneg %p163
        %p600 = pneg %p160
        %p601 = pneg %p184
        %p602 = pneg %p181
        %p603 = pneg %p205
        %p604 = pneg %p202
        %p605 = pneg %p226
        %p606 = pneg %p223
        %p607 = pneg %p247
        %p608 = pneg %p244
        %p609 = pneg %p268
        %p610 = pneg %p265
        %p611 = pneg %p289
        %p612 = pneg %p286
        %p613 = pneg %p310
        %p614 = pneg %p307
        %p615 = pneg %p331
        %p616 = pneg %p328
        %p617 = pneg %p352
        %p618 = pneg %p349
        %p619 = pneg %p373
        %p620 = pneg %p370
        %p621 = pneg %p394
        %p622 = pneg %p391
        %p623 = pneg %p415
        %p624 = pneg %p412
        %p625 = pneg %p441
        %p626 = pneg %p438
        %s627 = sand.u32 %s428, 1
        %s628 = scalar_lea.sflag [#allocation4], %s627
        %s629 = sand.u32 %s428, 1
        %s630 = scalar_lea.vmem [#allocation10], %s629
        %v631 = vld [vmem:[%s567] sm:$0x3]
        %v632 = vld [vmem:[%s2] sm:$0xff]
        %634 = vset.pattern.permute.xlu0 0
        %635 = vperm.xlu0 %634, %v632
        %v636 = vpop.permute.xlu0 %635
        %v639 = vlaneseq
        %v640 = vshrl.u32 %v639, 7
        %v641 = vsub.s32 0, %v640
        %v642 = vrot.slane %v631, %v641
        %v643 = vlaneseq
        %v644 = vshrl.u32 %v643, 7
        %v645 = vsub.s32 1, %v644
        %v646 = vrot.slane %v631, %v645
        %v649 = vmul.f32 %v636, %v642
        %v650 = vmul.f32 %v636, %v646
        %v651 = vld [vmem:[#allocation5] sm:$0xff]
        %v652 = vld [vmem:[#allocation5 + $0x8] sm:$0xff]
        %v653 = vld [vmem:[#allocation5 + $0x10] sm:$0xff]
        %v654 = vld [vmem:[#allocation5 + $0x18] sm:$0xff]
        %v655 = vld [vmem:[#allocation5 + $0x20] sm:$0xff]
        %v656 = vld [vmem:[#allocation5 + $0x28] sm:$0xff]
        %v657 = vld [vmem:[#allocation5 + $0x30] sm:$0xff]
        %v658 = vld [vmem:[#allocation5 + $0x38] sm:$0xff]
        %v659 = vld [vmem:[#allocation5 + $0x40] sm:$0xff]
        %v660 = vld [vmem:[#allocation5 + $0x48] sm:$0xff]
        %v661 = vld [vmem:[#allocation5 + $0x50] sm:$0xff]
        %v662 = vld [vmem:[#allocation5 + $0x58] sm:$0xff]
        %v663 = vld [vmem:[#allocation5 + $0x60] sm:$0xff]
        %v664 = vld [vmem:[#allocation5 + $0x68] sm:$0xff]
        %v665 = vld [vmem:[#allocation5 + $0x70] sm:$0xff]
        %v666 = vld [vmem:[#allocation5 + $0x78] sm:$0xff]
        %v667 = vld [vmem:[#allocation5 + $0x80] sm:$0xff]
        %v668 = vld [vmem:[#allocation5 + $0x88] sm:$0xff]
        %v669 = vld [vmem:[#allocation5 + $0x90] sm:$0xff]
        %v670 = vld [vmem:[#allocation5 + $0x98] sm:$0xff]
        %v671 = vld [vmem:[#allocation5 + $0xa0] sm:$0xff]
        %v672 = vld [vmem:[#allocation5 + $0xa8] sm:$0xff]
        %v673 = vld [vmem:[#allocation5 + $0xb0] sm:$0xff]
        %v674 = vld [vmem:[#allocation5 + $0xb8] sm:$0xff]
        %v675 = vld [vmem:[#allocation5 + $0xc0] sm:$0xff]
        %v676 = vld [vmem:[#allocation5 + $0xc8] sm:$0xff]
        %v677 = vld [vmem:[#allocation5 + $0xd0] sm:$0xff]
        %v678 = vld [vmem:[#allocation5 + $0xd8] sm:$0xff]
        %v679 = vld [vmem:[#allocation5 + $0xe0] sm:$0xff]
        %v680 = vld [vmem:[#allocation5 + $0xe8] sm:$0xff]
        %v681 = vld [vmem:[#allocation5 + $0xf0] sm:$0xff]
        %v682 = vld [vmem:[#allocation5 + $0xf8] sm:$0xff]
        %v683 = vld [vmem:[#allocation5 + $0x100] sm:$0xff]
        %v684 = vld [vmem:[#allocation5 + $0x108] sm:$0xff]
        %v685 = vld [vmem:[#allocation5 + $0x110] sm:$0xff]
        %v686 = vld [vmem:[#allocation5 + $0x118] sm:$0xff]
        %v687 = vld [vmem:[#allocation5 + $0x120] sm:$0xff]
        %v688 = vld [vmem:[#allocation5 + $0x128] sm:$0xff]
        %v689 = vld [vmem:[#allocation5 + $0x130] sm:$0xff]
        %v690 = vld [vmem:[#allocation5 + $0x138] sm:$0xff]
        %v691 = vld [vmem:[#allocation5 + $0x140] sm:$0xff]
        %v692 = vld [vmem:[#allocation5 + $0x148] sm:$0xff]
        %v693 = vld [vmem:[#allocation5 + $0x150] sm:$0xff]
        %v694 = vld [vmem:[#allocation5 + $0x158] sm:$0xff]
        %v695 = vld [vmem:[#allocation5 + $0x160] sm:$0xff]
        %v696 = vld [vmem:[#allocation5 + $0x168] sm:$0xff]
        %v697 = vld [vmem:[#allocation5 + $0x170] sm:$0xff]
        %v698 = vld [vmem:[#allocation5 + $0x178] sm:$0xff]
        %s699 = scalar_lea.vmem %s2, 8
        %v700 = vld [vmem:[%s699] sm:$0xff]
        %702 = vset.pattern.permute.xlu0 0
        %703 = vperm.xlu0 %702, %v700
        %v704 = vpop.permute.xlu0 %703
        %v706 = vmul.f32 %v704, %v642
        %v707 = vmul.f32 %v704, %v646
        %s708 = scalar_lea.vmem [#allocation5], 384
        %v709 = vld [vmem:[%s708] sm:$0xff]
        %v710 = vld [vmem:[%s708 + $0x8] sm:$0xff]
        %v711 = vld [vmem:[%s708 + $0x10] sm:$0xff]
        %v712 = vld [vmem:[%s708 + $0x18] sm:$0xff]
        %v713 = vld [vmem:[%s708 + $0x20] sm:$0xff]
        %v714 = vld [vmem:[%s708 + $0x28] sm:$0xff]
        %v715 = vld [vmem:[%s708 + $0x30] sm:$0xff]
        %v716 = vld [vmem:[%s708 + $0x38] sm:$0xff]
        %v717 = vld [vmem:[%s708 + $0x40] sm:$0xff]
        %v718 = vld [vmem:[%s708 + $0x48] sm:$0xff]
        %v719 = vld [vmem:[%s708 + $0x50] sm:$0xff]
        %v720 = vld [vmem:[%s708 + $0x58] sm:$0xff]
        %v721 = vld [vmem:[%s708 + $0x60] sm:$0xff]
        %v722 = vld [vmem:[%s708 + $0x68] sm:$0xff]
        %v723 = vld [vmem:[%s708 + $0x70] sm:$0xff]
        %v724 = vld [vmem:[%s708 + $0x78] sm:$0xff]
        %v725 = vld [vmem:[%s708 + $0x80] sm:$0xff]
        %v726 = vld [vmem:[%s708 + $0x88] sm:$0xff]
        %v727 = vld [vmem:[%s708 + $0x90] sm:$0xff]
        %v728 = vld [vmem:[%s708 + $0x98] sm:$0xff]
        %v729 = vld [vmem:[%s708 + $0xa0] sm:$0xff]
        %v730 = vld [vmem:[%s708 + $0xa8] sm:$0xff]
        %v731 = vld [vmem:[%s708 + $0xb0] sm:$0xff]
        %v732 = vld [vmem:[%s708 + $0xb8] sm:$0xff]
        %v733 = vld [vmem:[%s708 + $0xc0] sm:$0xff]
        %v734 = vld [vmem:[%s708 + $0xc8] sm:$0xff]
        %v735 = vld [vmem:[%s708 + $0xd0] sm:$0xff]
        %v736 = vld [vmem:[%s708 + $0xd8] sm:$0xff]
        %v737 = vld [vmem:[%s708 + $0xe0] sm:$0xff]
        %v738 = vld [vmem:[%s708 + $0xe8] sm:$0xff]
        %v739 = vld [vmem:[%s708 + $0xf0] sm:$0xff]
        %v740 = vld [vmem:[%s708 + $0xf8] sm:$0xff]
        %v741 = vld [vmem:[%s708 + $0x100] sm:$0xff]
        %v742 = vld [vmem:[%s708 + $0x108] sm:$0xff]
        %v743 = vld [vmem:[%s708 + $0x110] sm:$0xff]
        %v744 = vld [vmem:[%s708 + $0x118] sm:$0xff]
        %v745 = vld [vmem:[%s708 + $0x120] sm:$0xff]
        %v746 = vld [vmem:[%s708 + $0x128] sm:$0xff]
        %v747 = vld [vmem:[%s708 + $0x130] sm:$0xff]
        %v748 = vld [vmem:[%s708 + $0x138] sm:$0xff]
        %v749 = vld [vmem:[%s708 + $0x140] sm:$0xff]
        %v750 = vld [vmem:[%s708 + $0x148] sm:$0xff]
        %v751 = vld [vmem:[%s708 + $0x150] sm:$0xff]
        %v752 = vld [vmem:[%s708 + $0x158] sm:$0xff]
        %v753 = vld [vmem:[%s708 + $0x160] sm:$0xff]
        %v754 = vld [vmem:[%s708 + $0x168] sm:$0xff]
        %v755 = vld [vmem:[%s708 + $0x170] sm:$0xff]
        %v756 = vld [vmem:[%s708 + $0x178] sm:$0xff]
        %vm757 = vcmask 523264
        %v759 = vsel %vm757, %v707, 0
        %761 = vmatprep.subr.mxu0 %v710
        %762 = vmatpush1.msra.mxu0 %v709
        %763 = vmatprep.subr.mxu0 %v712
        %764 = vmatpush1.msra.mxu0 %v711
        %765 = vmatprep.subr.mxu0 %v714
        %766 = vmatpush1.msra.mxu0 %v713
        %767 = vmatprep.subr.mxu0 %v716
        %768 = vmatpush1.msra.mxu0 %v715
        %769 = vmatprep.subr.mxu0 %v718
        %770 = vmatpush1.msra.mxu0 %v717
        %771 = vmatprep.subr.mxu0 %v720
        %772 = vmatpush1.msra.mxu0 %v719
        %773 = vmatprep.subr.mxu0 %v722
        %774 = vmatpush1.msra.mxu0 %v721
        %775 = vmatprep.subr.mxu0 %v724
        %776 = vmatpush1.msra.mxu0 %v723
        %777 = vmatprep.subr.mxu0 %v726
        %778 = vmatpush1.msra.mxu0 %v725
        %779 = vmatprep.subr.mxu0 %v728
        %780 = vmatpush1.msra.mxu0 %v727
        %781 = vmatprep.subr.mxu0 %v730
        %782 = vmatpush1.msra.mxu0 %v729
        %783 = vmatprep.subr.mxu0 %v732
        %784 = vmatpush1.msra.mxu0 %v731
        %785 = vmatprep.subr.mxu0 %v734
        %786 = vmatpush1.msra.mxu0 %v733
        %787 = vmatprep.subr.mxu0 %v736
        %788 = vmatpush1.msra.mxu0 %v735
        %789 = vmatprep.subr.mxu0 %v738
        %790 = vmatpush1.msra.mxu0 %v737
        %791 = vmatprep.subr.mxu0 %v740
        %792 = vmatpush1.msra.mxu0 %v739
        %793 = vmatprep.subr.mxu0 %v742
        %794 = vmatpush1.msra.mxu0 %v741
        %795 = vmatprep.subr.mxu0 %v744
        %796 = vmatpush1.msra.mxu0 %v743
        %797 = vmatprep.subr.mxu0 %v746
        %798 = vmatpush1.msra.mxu0 %v745
        %799 = vmatprep.subr.mxu0 %v748
        %800 = vmatpush1.msra.mxu0 %v747
        %801 = vmatprep.subr.mxu0 %v750
        %802 = vmatpush1.msra.mxu0 %v749
        %803 = vmatprep.subr.mxu0 %v752
        %804 = vmatpush1.msra.mxu0 %v751
        %805 = vmatprep.subr.mxu0 %v754
        %806 = vmatpush1.msra.mxu0 %v753
        %807 = vmatprep.subr.mxu0 %v756
        %808 = vmatpush1.msra.mxu0 %v755
        %809 = vmatprep.subr.mxu0 0.0
        %810 = vmatpush1.msra.mxu0 0.0
        %811 = vmatprep.subr.mxu0 0.0
        %812 = vmatpush1.msra.mxu0 0.0
        %813 = vmatprep.subr.mxu0 0.0
        %814 = vmatpush1.msra.mxu0 0.0
        %815 = vmatprep.subr.mxu0 0.0
        %816 = vmatpush1.msra.mxu0 0.0
        %817 = vmatprep.subr.mxu0 0.0
        %818 = vmatpush1.msra.mxu0 0.0
        %819 = vmatprep.subr.mxu0 0.0
        %820 = vmatpush1.msra.mxu0 0.0
        %821 = vmatprep.subr.mxu0 0.0
        %822 = vmatpush1.msra.mxu0 0.0
        %823 = vmatprep.subr.mxu0 0.0
        %824 = vmatpush1.msra.mxu0 0.0
        %825 = vmatprep.mubr.f32.mxu0 %v759
        %826 = vmatmul.mubr.f32.gmra.mrb[0].mxu0 %v706
        %v827 = vpop.f32.mrb[0].mxu0
        %v828 = vadd.f32 0.0, %v827
        %v829 = vpop.f32.mrb[0].mxu0
        %v830 = vadd.f32 0.0, %v829
        %831 = vdwg.mxu0
        %v833 = vsel %vm757, %v650, 0
        %835 = vmatprep.subr.mxu0 %v652
        %836 = vmatpush1.msra.mxu0 %v651
        %837 = vmatprep.subr.mxu0 %v654
        %838 = vmatpush1.msra.mxu0 %v653
        %839 = vmatprep.subr.mxu0 %v656
        %840 = vmatpush1.msra.mxu0 %v655
        %841 = vmatprep.subr.mxu0 %v658
        %842 = vmatpush1.msra.mxu0 %v657
        %843 = vmatprep.subr.mxu0 %v660
        %844 = vmatpush1.msra.mxu0 %v659
        %845 = vmatprep.subr.mxu0 %v662
        %846 = vmatpush1.msra.mxu0 %v661
        %847 = vmatprep.subr.mxu0 %v664
        %848 = vmatpush1.msra.mxu0 %v663
        %849 = vmatprep.subr.mxu0 %v666
        %850 = vmatpush1.msra.mxu0 %v665
        %851 = vmatprep.subr.mxu0 %v668
        %852 = vmatpush1.msra.mxu0 %v667
        %853 = vmatprep.subr.mxu0 %v670
        %854 = vmatpush1.msra.mxu0 %v669
        %855 = vmatprep.subr.mxu0 %v672
        %856 = vmatpush1.msra.mxu0 %v671
        %857 = vmatprep.subr.mxu0 %v674
        %858 = vmatpush1.msra.mxu0 %v673
        %859 = vmatprep.subr.mxu0 %v676
        %860 = vmatpush1.msra.mxu0 %v675
        %861 = vmatprep.subr.mxu0 %v678
        %862 = vmatpush1.msra.mxu0 %v677
        %863 = vmatprep.subr.mxu0 %v680
        %864 = vmatpush1.msra.mxu0 %v679
        %865 = vmatprep.subr.mxu0 %v682
        %866 = vmatpush1.msra.mxu0 %v681
        %867 = vmatprep.subr.mxu0 %v684
        %868 = vmatpush1.msra.mxu0 %v683
        %869 = vmatprep.subr.mxu0 %v686
        %870 = vmatpush1.msra.mxu0 %v685
        %871 = vmatprep.subr.mxu0 %v688
        %872 = vmatpush1.msra.mxu0 %v687
        %873 = vmatprep.subr.mxu0 %v690
        %874 = vmatpush1.msra.mxu0 %v689
        %875 = vmatprep.subr.mxu0 %v692
        %876 = vmatpush1.msra.mxu0 %v691
        %877 = vmatprep.subr.mxu0 %v694
        %878 = vmatpush1.msra.mxu0 %v693
        %879 = vmatprep.subr.mxu0 %v696
        %880 = vmatpush1.msra.mxu0 %v695
        %881 = vmatprep.subr.mxu0 %v698
        %882 = vmatpush1.msra.mxu0 %v697
        %883 = vmatprep.subr.mxu0 0.0
        %884 = vmatpush1.msra.mxu0 0.0
        %885 = vmatprep.subr.mxu0 0.0
        %886 = vmatpush1.msra.mxu0 0.0
        %887 = vmatprep.subr.mxu0 0.0
        %888 = vmatpush1.msra.mxu0 0.0
        %889 = vmatprep.subr.mxu0 0.0
        %890 = vmatpush1.msra.mxu0 0.0
        %891 = vmatprep.subr.mxu0 0.0
        %892 = vmatpush1.msra.mxu0 0.0
        %893 = vmatprep.subr.mxu0 0.0
        %894 = vmatpush1.msra.mxu0 0.0
        %895 = vmatprep.subr.mxu0 0.0
        %896 = vmatpush1.msra.mxu0 0.0
        %897 = vmatprep.subr.mxu0 0.0
        %898 = vmatpush1.msra.mxu0 0.0
        %899 = vmatprep.mubr.f32.mxu0 %v833
        %900 = vmatmul.mubr.f32.gmra.mrb[0].mxu0 %v649
        %v901 = vpop.f32.mrb[0].mxu0
        %v902 = vadd.f32 %v828, %v901
        %v903 = vpop.f32.mrb[0].mxu0
        %v904 = vadd.f32 %v830, %v903
        %905 = vdwg.mxu0
        %s906 = scalar_lea.vmem %s2, 16
        %v907 = vld [vmem:[%s906] sm:$0xff]
        %909 = vset.pattern.permute.xlu0 0
        %910 = vperm.xlu0 %909, %v907
        %v911 = vpop.permute.xlu0 %910
        %v913 = vmul.f32 %v911, %v642
        %v914 = vmul.f32 %v911, %v646
        %s915 = scalar_lea.vmem [#allocation5], 768
        %v916 = vld [vmem:[%s915] sm:$0xff]
        %v917 = vld [vmem:[%s915 + $0x8] sm:$0xff]
        %v918 = vld [vmem:[%s915 + $0x10] sm:$0xff]
        %v919 = vld [vmem:[%s915 + $0x18] sm:$0xff]
        %v920 = vld [vmem:[%s915 + $0x20] sm:$0xff]
        %v921 = vld [vmem:[%s915 + $0x28] sm:$0xff]
        %v922 = vld [vmem:[%s915 + $0x30] sm:$0xff]
        %v923 = vld [vmem:[%s915 + $0x38] sm:$0xff]
        %v924 = vld [vmem:[%s915 + $0x40] sm:$0xff]
        %v925 = vld [vmem:[%s915 + $0x48] sm:$0xff]
        %v926 = vld [vmem:[%s915 + $0x50] sm:$0xff]
        %v927 = vld [vmem:[%s915 + $0x58] sm:$0xff]
        %v928 = vld [vmem:[%s915 + $0x60] sm:$0xff]
        %v929 = vld [vmem:[%s915 + $0x68] sm:$0xff]
        %v930 = vld [vmem:[%s915 + $0x70] sm:$0xff]
        %v931 = vld [vmem:[%s915 + $0x78] sm:$0xff]
        %v932 = vld [vmem:[%s915 + $0x80] sm:$0xff]
        %v933 = vld [vmem:[%s915 + $0x88] sm:$0xff]
        %v934 = vld [vmem:[%s915 + $0x90] sm:$0xff]
        %v935 = vld [vmem:[%s915 + $0x98] sm:$0xff]
        %v936 = vld [vmem:[%s915 + $0xa0] sm:$0xff]
        %v937 = vld [vmem:[%s915 + $0xa8] sm:$0xff]
        %v938 = vld [vmem:[%s915 + $0xb0] sm:$0xff]
        %v939 = vld [vmem:[%s915 + $0xb8] sm:$0xff]
        %v940 = vld [vmem:[%s915 + $0xc0] sm:$0xff]
        %v941 = vld [vmem:[%s915 + $0xc8] sm:$0xff]
        %v942 = vld [vmem:[%s915 + $0xd0] sm:$0xff]
        %v943 = vld [vmem:[%s915 + $0xd8] sm:$0xff]
        %v944 = vld [vmem:[%s915 + $0xe0] sm:$0xff]
        %v945 = vld [vmem:[%s915 + $0xe8] sm:$0xff]
        %v946 = vld [vmem:[%s915 + $0xf0] sm:$0xff]
        %v947 = vld [vmem:[%s915 + $0xf8] sm:$0xff]
        %v948 = vld [vmem:[%s915 + $0x100] sm:$0xff]
        %v949 = vld [vmem:[%s915 + $0x108] sm:$0xff]
        %v950 = vld [vmem:[%s915 + $0x110] sm:$0xff]
        %v951 = vld [vmem:[%s915 + $0x118] sm:$0xff]
        %v952 = vld [vmem:[%s915 + $0x120] sm:$0xff]
        %v953 = vld [vmem:[%s915 + $0x128] sm:$0xff]
        %v954 = vld [vmem:[%s915 + $0x130] sm:$0xff]
        %v955 = vld [vmem:[%s915 + $0x138] sm:$0xff]
        %v956 = vld [vmem:[%s915 + $0x140] sm:$0xff]
        %v957 = vld [vmem:[%s915 + $0x148] sm:$0xff]
        %v958 = vld [vmem:[%s915 + $0x150] sm:$0xff]
        %v959 = vld [vmem:[%s915 + $0x158] sm:$0xff]
        %v960 = vld [vmem:[%s915 + $0x160] sm:$0xff]
        %v961 = vld [vmem:[%s915 + $0x168] sm:$0xff]
        %v962 = vld [vmem:[%s915 + $0x170] sm:$0xff]
        %v963 = vld [vmem:[%s915 + $0x178] sm:$0xff]
        %v965 = vsel %vm757, %v914, 0
        %967 = vmatprep.subr.mxu0 %v917
        %968 = vmatpush1.msra.mxu0 %v916
        %969 = vmatprep.subr.mxu0 %v919
        %970 = vmatpush1.msra.mxu0 %v918
        %971 = vmatprep.subr.mxu0 %v921
        %972 = vmatpush1.msra.mxu0 %v920
        %973 = vmatprep.subr.mxu0 %v923
        %974 = vmatpush1.msra.mxu0 %v922
        %975 = vmatprep.subr.mxu0 %v925
        %976 = vmatpush1.msra.mxu0 %v924
        %977 = vmatprep.subr.mxu0 %v927
        %978 = vmatpush1.msra.mxu0 %v926
        %979 = vmatprep.subr.mxu0 %v929
        %980 = vmatpush1.msra.mxu0 %v928
        %981 = vmatprep.subr.mxu0 %v931
        %982 = vmatpush1.msra.mxu0 %v930
        %983 = vmatprep.subr.mxu0 %v933
        %984 = vmatpush1.msra.mxu0 %v932
        %985 = vmatprep.subr.mxu0 %v935
        %986 = vmatpush1.msra.mxu0 %v934
        %987 = vmatprep.subr.mxu0 %v937
        %988 = vmatpush1.msra.mxu0 %v936
        %989 = vmatprep.subr.mxu0 %v939
        %990 = vmatpush1.msra.mxu0 %v938
        %991 = vmatprep.subr.mxu0 %v941
        %992 = vmatpush1.msra.mxu0 %v940
        %993 = vmatprep.subr.mxu0 %v943
        %994 = vmatpush1.msra.mxu0 %v942
        %995 = vmatprep.subr.mxu0 %v945
        %996 = vmatpush1.msra.mxu0 %v944
        %997 = vmatprep.subr.mxu0 %v947
        %998 = vmatpush1.msra.mxu0 %v946
        %999 = vmatprep.subr.mxu0 %v949
        %1000 = vmatpush1.msra.mxu0 %v948
        %1001 = vmatprep.subr.mxu0 %v951
        %1002 = vmatpush1.msra.mxu0 %v950
        %1003 = vmatprep.subr.mxu0 %v953
        %1004 = vmatpush1.msra.mxu0 %v952
        %1005 = vmatprep.subr.mxu0 %v955
        %1006 = vmatpush1.msra.mxu0 %v954
        %1007 = vmatprep.subr.mxu0 %v957
        %1008 = vmatpush1.msra.mxu0 %v956
        %1009 = vmatprep.subr.mxu0 %v959
        %1010 = vmatpush1.msra.mxu0 %v958
        %1011 = vmatprep.subr.mxu0 %v961
        %1012 = vmatpush1.msra.mxu0 %v960
        %1013 = vmatprep.subr.mxu0 %v963
        %1014 = vmatpush1.msra.mxu0 %v962
        %1015 = vmatprep.subr.mxu0 0.0
        %1016 = vmatpush1.msra.mxu0 0.0
        %1017 = vmatprep.subr.mxu0 0.0
        %1018 = vmatpush1.msra.mxu0 0.0
        %1019 = vmatprep.subr.mxu0 0.0
        %1020 = vmatpush1.msra.mxu0 0.0
        %1021 = vmatprep.subr.mxu0 0.0
        %1022 = vmatpush1.msra.mxu0 0.0
        %1023 = vmatprep.subr.mxu0 0.0
        %1024 = vmatpush1.msra.mxu0 0.0
        %1025 = vmatprep.subr.mxu0 0.0
        %1026 = vmatpush1.msra.mxu0 0.0
        %1027 = vmatprep.subr.mxu0 0.0
        %1028 = vmatpush1.msra.mxu0 0.0
        %1029 = vmatprep.subr.mxu0 0.0
        %1030 = vmatpush1.msra.mxu0 0.0
        %1031 = vmatprep.mubr.f32.mxu0 %v965
        %1032 = vmatmul.mubr.f32.gmra.mrb[0].mxu0 %v913
        %v1033 = vpop.f32.mrb[0].mxu0
        %v1034 = vadd.f32 0.0, %v1033
        %v1035 = vpop.f32.mrb[0].mxu0
        %v1036 = vadd.f32 0.0, %v1035
        %1037 = vdwg.mxu0
        %v1038 = vadd.f32 %v902, %v1034
        %v1039 = vadd.f32 %v904, %v1036
        %s1040 = scalar_lea.vmem %s2, 24
        %v1041 = vld [vmem:[%s1040] sm:$0xff]
        %1043 = vset.pattern.permute.xlu0 0
        %1044 = vperm.xlu0 %1043, %v1041
        %v1045 = vpop.permute.xlu0 %1044
        %v1047 = vmul.f32 %v1045, %v642
        %v1048 = vmul.f32 %v1045, %v646
        %s1049 = scalar_lea.vmem [#allocation5], 1152
        %v1050 = vld [vmem:[%s1049] sm:$0xff]
        %v1051 = vld [vmem:[%s1049 + $0x8] sm:$0xff]
        %v1052 = vld [vmem:[%s1049 + $0x10] sm:$0xff]
        %v1053 = vld [vmem:[%s1049 + $0x18] sm:$0xff]
        %v1054 = vld [vmem:[%s1049 + $0x20] sm:$0xff]
        %v1055 = vld [vmem:[%s1049 + $0x28] sm:$0xff]
        %v1056 = vld [vmem:[%s1049 + $0x30] sm:$0xff]
        %v1057 = vld [vmem:[%s1049 + $0x38] sm:$0xff]
        %v1058 = vld [vmem:[%s1049 + $0x40] sm:$0xff]
        %v1059 = vld [vmem:[%s1049 + $0x48] sm:$0xff]
        %v1060 = vld [vmem:[%s1049 + $0x50] sm:$0xff]
        %v1061 = vld [vmem:[%s1049 + $0x58] sm:$0xff]
        %v1062 = vld [vmem:[%s1049 + $0x60] sm:$0xff]
        %v1063 = vld [vmem:[%s1049 + $0x68] sm:$0xff]
        %v1064 = vld [vmem:[%s1049 + $0x70] sm:$0xff]
        %v1065 = vld [vmem:[%s1049 + $0x78] sm:$0xff]
        %v1066 = vld [vmem:[%s1049 + $0x80] sm:$0xff]
        %v1067 = vld [vmem:[%s1049 + $0x88] sm:$0xff]
        %v1068 = vld [vmem:[%s1049 + $0x90] sm:$0xff]
        %v1069 = vld [vmem:[%s1049 + $0x98] sm:$0xff]
        %v1070 = vld [vmem:[%s1049 + $0xa0] sm:$0xff]
        %v1071 = vld [vmem:[%s1049 + $0xa8] sm:$0xff]
        %v1072 = vld [vmem:[%s1049 + $0xb0] sm:$0xff]
        %v1073 = vld [vmem:[%s1049 + $0xb8] sm:$0xff]
        %v1074 = vld [vmem:[%s1049 + $0xc0] sm:$0xff]
        %v1075 = vld [vmem:[%s1049 + $0xc8] sm:$0xff]
        %v1076 = vld [vmem:[%s1049 + $0xd0] sm:$0xff]
        %v1077 = vld [vmem:[%s1049 + $0xd8] sm:$0xff]
        %v1078 = vld [vmem:[%s1049 + $0xe0] sm:$0xff]
        %v1079 = vld [vmem:[%s1049 + $0xe8] sm:$0xff]
        %v1080 = vld [vmem:[%s1049 + $0xf0] sm:$0xff]
        %v1081 = vld [vmem:[%s1049 + $0xf8] sm:$0xff]
        %v1082 = vld [vmem:[%s1049 + $0x100] sm:$0xff]
        %v1083 = vld [vmem:[%s1049 + $0x108] sm:$0xff]
        %v1084 = vld [vmem:[%s1049 + $0x110] sm:$0xff]
        %v1085 = vld [vmem:[%s1049 + $0x118] sm:$0xff]
        %v1086 = vld [vmem:[%s1049 + $0x120] sm:$0xff]
        %v1087 = vld [vmem:[%s1049 + $0x128] sm:$0xff]
        %v1088 = vld [vmem:[%s1049 + $0x130] sm:$0xff]
        %v1089 = vld [vmem:[%s1049 + $0x138] sm:$0xff]
        %v1090 = vld [vmem:[%s1049 + $0x140] sm:$0xff]
        %v1091 = vld [vmem:[%s1049 + $0x148] sm:$0xff]
        %v1092 = vld [vmem:[%s1049 + $0x150] sm:$0xff]
        %v1093 = vld [vmem:[%s1049 + $0x158] sm:$0xff]
        %v1094 = vld [vmem:[%s1049 + $0x160] sm:$0xff]
        %v1095 = vld [vmem:[%s1049 + $0x168] sm:$0xff]
        %v1096 = vld [vmem:[%s1049 + $0x170] sm:$0xff]
        %v1097 = vld [vmem:[%s1049 + $0x178] sm:$0xff]
        %v1099 = vsel %vm757, %v1048, 0
        %1101 = vmatprep.subr.mxu0 %v1051
        %1102 = vmatpush1.msra.mxu0 %v1050
        %1103 = vmatprep.subr.mxu0 %v1053
        %1104 = vmatpush1.msra.mxu0 %v1052
        %1105 = vmatprep.subr.mxu0 %v1055
        %1106 = vmatpush1.msra.mxu0 %v1054
        %1107 = vmatprep.subr.mxu0 %v1057
        %1108 = vmatpush1.msra.mxu0 %v1056
        %1109 = vmatprep.subr.mxu0 %v1059
        %1110 = vmatpush1.msra.mxu0 %v1058
        %1111 = vmatprep.subr.mxu0 %v1061
        %1112 = vmatpush1.msra.mxu0 %v1060
        %1113 = vmatprep.subr.mxu0 %v1063
        %1114 = vmatpush1.msra.mxu0 %v1062
        %1115 = vmatprep.subr.mxu0 %v1065
        %1116 = vmatpush1.msra.mxu0 %v1064
        %1117 = vmatprep.subr.mxu0 %v1067
        %1118 = vmatpush1.msra.mxu0 %v1066
        %1119 = vmatprep.subr.mxu0 %v1069
        %1120 = vmatpush1.msra.mxu0 %v1068
        %1121 = vmatprep.subr.mxu0 %v1071
        %1122 = vmatpush1.msra.mxu0 %v1070
        %1123 = vmatprep.subr.mxu0 %v1073
        %1124 = vmatpush1.msra.mxu0 %v1072
        %1125 = vmatprep.subr.mxu0 %v1075
        %1126 = vmatpush1.msra.mxu0 %v1074
        %1127 = vmatprep.subr.mxu0 %v1077
        %1128 = vmatpush1.msra.mxu0 %v1076
        %1129 = vmatprep.subr.mxu0 %v1079
        %1130 = vmatpush1.msra.mxu0 %v1078
        %1131 = vmatprep.subr.mxu0 %v1081
        %1132 = vmatpush1.msra.mxu0 %v1080
        %1133 = vmatprep.subr.mxu0 %v1083
        %1134 = vmatpush1.msra.mxu0 %v1082
        %1135 = vmatprep.subr.mxu0 %v1085
        %1136 = vmatpush1.msra.mxu0 %v1084
        %1137 = vmatprep.subr.mxu0 %v1087
        %1138 = vmatpush1.msra.mxu0 %v1086
        %1139 = vmatprep.subr.mxu0 %v1089
        %1140 = vmatpush1.msra.mxu0 %v1088
        %1141 = vmatprep.subr.mxu0 %v1091
        %1142 = vmatpush1.msra.mxu0 %v1090
        %1143 = vmatprep.subr.mxu0 %v1093
        %1144 = vmatpush1.msra.mxu0 %v1092
        %1145 = vmatprep.subr.mxu0 %v1095
        %1146 = vmatpush1.msra.mxu0 %v1094
        %1147 = vmatprep.subr.mxu0 %v1097
        %1148 = vmatpush1.msra.mxu0 %v1096
        %1149 = vmatprep.subr.mxu0 0.0
        %1150 = vmatpush1.msra.mxu0 0.0
        %1151 = vmatprep.subr.mxu0 0.0
        %1152 = vmatpush1.msra.mxu0 0.0
        %1153 = vmatprep.subr.mxu0 0.0
        %1154 = vmatpush1.msra.mxu0 0.0
        %1155 = vmatprep.subr.mxu0 0.0
        %1156 = vmatpush1.msra.mxu0 0.0
        %1157 = vmatprep.subr.mxu0 0.0
        %1158 = vmatpush1.msra.mxu0 0.0
        %1159 = vmatprep.subr.mxu0 0.0
        %1160 = vmatpush1.msra.mxu0 0.0
        %1161 = vmatprep.subr.mxu0 0.0
        %1162 = vmatpush1.msra.mxu0 0.0
        %1163 = vmatprep.subr.mxu0 0.0
        %1164 = vmatpush1.msra.mxu0 0.0
        %1165 = vmatprep.mubr.f32.mxu0 %v1099
        %1166 = vmatmul.mubr.f32.gmra.mrb[0].mxu0 %v1047
        %v1167 = vpop.f32.mrb[0].mxu0
        %v1168 = vadd.f32 0.0, %v1167
        %v1169 = vpop.f32.mrb[0].mxu0
        %v1170 = vadd.f32 0.0, %v1169
        %1171 = vdwg.mxu0
        %v1172 = vadd.f32 %v1038, %v1168
        %v1173 = vadd.f32 %v1039, %v1170
        %s1174 = scalar_lea.vmem %s2, 32
        %v1175 = vld [vmem:[%s1174] sm:$0xff]
        %1177 = vset.pattern.permute.xlu0 0
        %1178 = vperm.xlu0 %1177, %v1175
        %v1179 = vpop.permute.xlu0 %1178
        %v1181 = vmul.f32 %v1179, %v642
        %v1182 = vmul.f32 %v1179, %v646
        %s1183 = scalar_lea.vmem [#allocation5], 1536
        %v1184 = vld [vmem:[%s1183] sm:$0xff]
        %v1185 = vld [vmem:[%s1183 + $0x8] sm:$0xff]
        %v1186 = vld [vmem:[%s1183 + $0x10] sm:$0xff]
        %v1187 = vld [vmem:[%s1183 + $0x18] sm:$0xff]
        %v1188 = vld [vmem:[%s1183 + $0x20] sm:$0xff]
        %v1189 = vld [vmem:[%s1183 + $0x28] sm:$0xff]
        %v1190 = vld [vmem:[%s1183 + $0x30] sm:$0xff]
        %v1191 = vld [vmem:[%s1183 + $0x38] sm:$0xff]
        %v1192 = vld [vmem:[%s1183 + $0x40] sm:$0xff]
        %v1193 = vld [vmem:[%s1183 + $0x48] sm:$0xff]
        %v1194 = vld [vmem:[%s1183 + $0x50] sm:$0xff]
        %v1195 = vld [vmem:[%s1183 + $0x58] sm:$0xff]
        %v1196 = vld [vmem:[%s1183 + $0x60] sm:$0xff]
        %v1197 = vld [vmem:[%s1183 + $0x68] sm:$0xff]
        %v1198 = vld [vmem:[%s1183 + $0x70] sm:$0xff]
        %v1199 = vld [vmem:[%s1183 + $0x78] sm:$0xff]
        %v1200 = vld [vmem:[%s1183 + $0x80] sm:$0xff]
        %v1201 = vld [vmem:[%s1183 + $0x88] sm:$0xff]
        %v1202 = vld [vmem:[%s1183 + $0x90] sm:$0xff]
        %v1203 = vld [vmem:[%s1183 + $0x98] sm:$0xff]
        %v1204 = vld [vmem:[%s1183 + $0xa0] sm:$0xff]
        %v1205 = vld [vmem:[%s1183 + $0xa8] sm:$0xff]
        %v1206 = vld [vmem:[%s1183 + $0xb0] sm:$0xff]
        %v1207 = vld [vmem:[%s1183 + $0xb8] sm:$0xff]
        %v1208 = vld [vmem:[%s1183 + $0xc0] sm:$0xff]
        %v1209 = vld [vmem:[%s1183 + $0xc8] sm:$0xff]
        %v1210 = vld [vmem:[%s1183 + $0xd0] sm:$0xff]
        %v1211 = vld [vmem:[%s1183 + $0xd8] sm:$0xff]
        %v1212 = vld [vmem:[%s1183 + $0xe0] sm:$0xff]
        %v1213 = vld [vmem:[%s1183 + $0xe8] sm:$0xff]
        %v1214 = vld [vmem:[%s1183 + $0xf0] sm:$0xff]
        %v1215 = vld [vmem:[%s1183 + $0xf8] sm:$0xff]
        %v1216 = vld [vmem:[%s1183 + $0x100] sm:$0xff]
        %v1217 = vld [vmem:[%s1183 + $0x108] sm:$0xff]
        %v1218 = vld [vmem:[%s1183 + $0x110] sm:$0xff]
        %v1219 = vld [vmem:[%s1183 + $0x118] sm:$0xff]
        %v1220 = vld [vmem:[%s1183 + $0x120] sm:$0xff]
        %v1221 = vld [vmem:[%s1183 + $0x128] sm:$0xff]
        %v1222 = vld [vmem:[%s1183 + $0x130] sm:$0xff]
        %v1223 = vld [vmem:[%s1183 + $0x138] sm:$0xff]
        %v1224 = vld [vmem:[%s1183 + $0x140] sm:$0xff]
        %v1225 = vld [vmem:[%s1183 + $0x148] sm:$0xff]
        %v1226 = vld [vmem:[%s1183 + $0x150] sm:$0xff]
        %v1227 = vld [vmem:[%s1183 + $0x158] sm:$0xff]
        %v1228 = vld [vmem:[%s1183 + $0x160] sm:$0xff]
        %v1229 = vld [vmem:[%s1183 + $0x168] sm:$0xff]
        %v1230 = vld [vmem:[%s1183 + $0x170] sm:$0xff]
        %v1231 = vld [vmem:[%s1183 + $0x178] sm:$0xff]
        %v1233 = vsel %vm757, %v1182, 0
        %1235 = vmatprep.subr.mxu0 %v1185
        %1236 = vmatpush1.msra.mxu0 %v1184
        %1237 = vmatprep.subr.mxu0 %v1187
        %1238 = vmatpush1.msra.mxu0 %v1186
        %1239 = vmatprep.subr.mxu0 %v1189
        %1240 = vmatpush1.msra.mxu0 %v1188
        %1241 = vmatprep.subr.mxu0 %v1191
        %1242 = vmatpush1.msra.mxu0 %v1190
        %1243 = vmatprep.subr.mxu0 %v1193
        %1244 = vmatpush1.msra.mxu0 %v1192
        %1245 = vmatprep.subr.mxu0 %v1195
        %1246 = vmatpush1.msra.mxu0 %v1194
        %1247 = vmatprep.subr.mxu0 %v1197
        %1248 = vmatpush1.msra.mxu0 %v1196
        %1249 = vmatprep.subr.mxu0 %v1199
        %1250 = vmatpush1.msra.mxu0 %v1198
        %1251 = vmatprep.subr.mxu0 %v1201
        %1252 = vmatpush1.msra.mxu0 %v1200
        %1253 = vmatprep.subr.mxu0 %v1203
        %1254 = vmatpush1.msra.mxu0 %v1202
        %1255 = vmatprep.subr.mxu0 %v1205
        %1256 = vmatpush1.msra.mxu0 %v1204
        %1257 = vmatprep.subr.mxu0 %v1207
        %1258 = vmatpush1.msra.mxu0 %v1206
        %1259 = vmatprep.subr.mxu0 %v1209
        %1260 = vmatpush1.msra.mxu0 %v1208
        %1261 = vmatprep.subr.mxu0 %v1211
        %1262 = vmatpush1.msra.mxu0 %v1210
        %1263 = vmatprep.subr.mxu0 %v1213
        %1264 = vmatpush1.msra.mxu0 %v1212
        %1265 = vmatprep.subr.mxu0 %v1215
        %1266 = vmatpush1.msra.mxu0 %v1214
        %1267 = vmatprep.subr.mxu0 %v1217
        %1268 = vmatpush1.msra.mxu0 %v1216
        %1269 = vmatprep.subr.mxu0 %v1219
        %1270 = vmatpush1.msra.mxu0 %v1218
        %1271 = vmatprep.subr.mxu0 %v1221
        %1272 = vmatpush1.msra.mxu0 %v1220
        %1273 = vmatprep.subr.mxu0 %v1223
        %1274 = vmatpush1.msra.mxu0 %v1222
        %1275 = vmatprep.subr.mxu0 %v1225
        %1276 = vmatpush1.msra.mxu0 %v1224
        %1277 = vmatprep.subr.mxu0 %v1227
        %1278 = vmatpush1.msra.mxu0 %v1226
        %1279 = vmatprep.subr.mxu0 %v1229
        %1280 = vmatpush1.msra.mxu0 %v1228
        %1281 = vmatprep.subr.mxu0 %v1231
        %1282 = vmatpush1.msra.mxu0 %v1230
        %1283 = vmatprep.subr.mxu0 0.0
        %1284 = vmatpush1.msra.mxu0 0.0
        %1285 = vmatprep.subr.mxu0 0.0
        %1286 = vmatpush1.msra.mxu0 0.0
        %1287 = vmatprep.subr.mxu0 0.0
        %1288 = vmatpush1.msra.mxu0 0.0
        %1289 = vmatprep.subr.mxu0 0.0
        %1290 = vmatpush1.msra.mxu0 0.0
        %1291 = vmatprep.subr.mxu0 0.0
        %1292 = vmatpush1.msra.mxu0 0.0
        %1293 = vmatprep.subr.mxu0 0.0
        %1294 = vmatpush1.msra.mxu0 0.0
        %1295 = vmatprep.subr.mxu0 0.0
        %1296 = vmatpush1.msra.mxu0 0.0
        %1297 = vmatprep.subr.mxu0 0.0
        %1298 = vmatpush1.msra.mxu0 0.0
        %1299 = vmatprep.mubr.f32.mxu0 %v1233
        %1300 = vmatmul.mubr.f32.gmra.mrb[0].mxu0 %v1181
        %v1301 = vpop.f32.mrb[0].mxu0
        %v1302 = vadd.f32 0.0, %v1301
        %v1303 = vpop.f32.mrb[0].mxu0
        %v1304 = vadd.f32 0.0, %v1303
        %1305 = vdwg.mxu0
        %v1306 = vadd.f32 %v1172, %v1302
        %v1307 = vadd.f32 %v1173, %v1304
        %s1308 = scalar_lea.vmem %s2, 40
        %v1309 = vld [vmem:[%s1308] sm:$0xff]
        %1311 = vset.pattern.permute.xlu0 0
        %1312 = vperm.xlu0 %1311, %v1309
        %v1313 = vpop.permute.xlu0 %1312
        %v1315 = vmul.f32 %v1313, %v642
        %v1316 = vmul.f32 %v1313, %v646
        %s1317 = scalar_lea.vmem [#allocation5], 1920
        %v1318 = vld [vmem:[%s1317] sm:$0xff]
        %v1319 = vld [vmem:[%s1317 + $0x8] sm:$0xff]
        %v1320 = vld [vmem:[%s1317 + $0x10] sm:$0xff]
        %v1321 = vld [vmem:[%s1317 + $0x18] sm:$0xff]
        %v1322 = vld [vmem:[%s1317 + $0x20] sm:$0xff]
        %v1323 = vld [vmem:[%s1317 + $0x28] sm:$0xff]
        %v1324 = vld [vmem:[%s1317 + $0x30] sm:$0xff]
        %v1325 = vld [vmem:[%s1317 + $0x38] sm:$0xff]
        %v1326 = vld [vmem:[%s1317 + $0x40] sm:$0xff]
        %v1327 = vld [vmem:[%s1317 + $0x48] sm:$0xff]
        %v1328 = vld [vmem:[%s1317 + $0x50] sm:$0xff]
        %v1329 = vld [vmem:[%s1317 + $0x58] sm:$0xff]
        %v1330 = vld [vmem:[%s1317 + $0x60] sm:$0xff]
        %v1331 = vld [vmem:[%s1317 + $0x68] sm:$0xff]
        %v1332 = vld [vmem:[%s1317 + $0x70] sm:$0xff]
        %v1333 = vld [vmem:[%s1317 + $0x78] sm:$0xff]
        %v1334 = vld [vmem:[%s1317 + $0x80] sm:$0xff]
        %v1335 = vld [vmem:[%s1317 + $0x88] sm:$0xff]
        %v1336 = vld [vmem:[%s1317 + $0x90] sm:$0xff]
        %v1337 = vld [vmem:[%s1317 + $0x98] sm:$0xff]
        %v1338 = vld [vmem:[%s1317 + $0xa0] sm:$0xff]
        %v1339 = vld [vmem:[%s1317 + $0xa8] sm:$0xff]
        %v1340 = vld [vmem:[%s1317 + $0xb0] sm:$0xff]
        %v1341 = vld [vmem:[%s1317 + $0xb8] sm:$0xff]
        %v1342 = vld [vmem:[%s1317 + $0xc0] sm:$0xff]
        %v1343 = vld [vmem:[%s1317 + $0xc8] sm:$0xff]
        %v1344 = vld [vmem:[%s1317 + $0xd0] sm:$0xff]
        %v1345 = vld [vmem:[%s1317 + $0xd8] sm:$0xff]
        %v1346 = vld [vmem:[%s1317 + $0xe0] sm:$0xff]
        %v1347 = vld [vmem:[%s1317 + $0xe8] sm:$0xff]
        %v1348 = vld [vmem:[%s1317 + $0xf0] sm:$0xff]
        %v1349 = vld [vmem:[%s1317 + $0xf8] sm:$0xff]
        %v1350 = vld [vmem:[%s1317 + $0x100] sm:$0xff]
        %v1351 = vld [vmem:[%s1317 + $0x108] sm:$0xff]
        %v1352 = vld [vmem:[%s1317 + $0x110] sm:$0xff]
        %v1353 = vld [vmem:[%s1317 + $0x118] sm:$0xff]
        %v1354 = vld [vmem:[%s1317 + $0x120] sm:$0xff]
        %v1355 = vld [vmem:[%s1317 + $0x128] sm:$0xff]
        %v1356 = vld [vmem:[%s1317 + $0x130] sm:$0xff]
        %v1357 = vld [vmem:[%s1317 + $0x138] sm:$0xff]
        %v1358 = vld [vmem:[%s1317 + $0x140] sm:$0xff]
        %v1359 = vld [vmem:[%s1317 + $0x148] sm:$0xff]
        %v1360 = vld [vmem:[%s1317 + $0x150] sm:$0xff]
        %v1361 = vld [vmem:[%s1317 + $0x158] sm:$0xff]
        %v1362 = vld [vmem:[%s1317 + $0x160] sm:$0xff]
        %v1363 = vld [vmem:[%s1317 + $0x168] sm:$0xff]
        %v1364 = vld [vmem:[%s1317 + $0x170] sm:$0xff]
        %v1365 = vld [vmem:[%s1317 + $0x178] sm:$0xff]
        %v1367 = vsel %vm757, %v1316, 0
        %1369 = vmatprep.subr.mxu0 %v1319
        %1370 = vmatpush1.msra.mxu0 %v1318
        %1371 = vmatprep.subr.mxu0 %v1321
        %1372 = vmatpush1.msra.mxu0 %v1320
        %1373 = vmatprep.subr.mxu0 %v1323
        %1374 = vmatpush1.msra.mxu0 %v1322
        %1375 = vmatprep.subr.mxu0 %v1325
        %1376 = vmatpush1.msra.mxu0 %v1324
        %1377 = vmatprep.subr.mxu0 %v1327
        %1378 = vmatpush1.msra.mxu0 %v1326
        %1379 = vmatprep.subr.mxu0 %v1329
        %1380 = vmatpush1.msra.mxu0 %v1328
        %1381 = vmatprep.subr.mxu0 %v1331
        %1382 = vmatpush1.msra.mxu0 %v1330
        %1383 = vmatprep.subr.mxu0 %v1333
        %1384 = vmatpush1.msra.mxu0 %v1332
        %1385 = vmatprep.subr.mxu0 %v1335
        %1386 = vmatpush1.msra.mxu0 %v1334
        %1387 = vmatprep.subr.mxu0 %v1337
        %1388 = vmatpush1.msra.mxu0 %v1336
        %1389 = vmatprep.subr.mxu0 %v1339
        %1390 = vmatpush1.msra.mxu0 %v1338
        %1391 = vmatprep.subr.mxu0 %v1341
        %1392 = vmatpush1.msra.mxu0 %v1340
        %1393 = vmatprep.subr.mxu0 %v1343
        %1394 = vmatpush1.msra.mxu0 %v1342
        %1395 = vmatprep.subr.mxu0 %v1345
        %1396 = vmatpush1.msra.mxu0 %v1344
        %1397 = vmatprep.subr.mxu0 %v1347
        %1398 = vmatpush1.msra.mxu0 %v1346
        %1399 = vmatprep.subr.mxu0 %v1349
        %1400 = vmatpush1.msra.mxu0 %v1348
        %1401 = vmatprep.subr.mxu0 %v1351
        %1402 = vmatpush1.msra.mxu0 %v1350
        %1403 = vmatprep.subr.mxu0 %v1353
        %1404 = vmatpush1.msra.mxu0 %v1352
        %1405 = vmatprep.subr.mxu0 %v1355
        %1406 = vmatpush1.msra.mxu0 %v1354
        %1407 = vmatprep.subr.mxu0 %v1357
        %1408 = vmatpush1.msra.mxu0 %v1356
        %1409 = vmatprep.subr.mxu0 %v1359
        %1410 = vmatpush1.msra.mxu0 %v1358
        %1411 = vmatprep.subr.mxu0 %v1361
        %1412 = vmatpush1.msra.mxu0 %v1360
        %1413 = vmatprep.subr.mxu0 %v1363
        %1414 = vmatpush1.msra.mxu0 %v1362
        %1415 = vmatprep.subr.mxu0 %v1365
        %1416 = vmatpush1.msra.mxu0 %v1364
        %1417 = vmatprep.subr.mxu0 0.0
        %1418 = vmatpush1.msra.mxu0 0.0
        %1419 = vmatprep.subr.mxu0 0.0
        %1420 = vmatpush1.msra.mxu0 0.0
        %1421 = vmatprep.subr.mxu0 0.0
        %1422 = vmatpush1.msra.mxu0 0.0
        %1423 = vmatprep.subr.mxu0 0.0
        %1424 = vmatpush1.msra.mxu0 0.0
        %1425 = vmatprep.subr.mxu0 0.0
        %1426 = vmatpush1.msra.mxu0 0.0
        %1427 = vmatprep.subr.mxu0 0.0
        %1428 = vmatpush1.msra.mxu0 0.0
        %1429 = vmatprep.subr.mxu0 0.0
        %1430 = vmatpush1.msra.mxu0 0.0
        %1431 = vmatprep.subr.mxu0 0.0
        %1432 = vmatpush1.msra.mxu0 0.0
        %1433 = vmatprep.mubr.f32.mxu0 %v1367
        %1434 = vmatmul.mubr.f32.gmra.mrb[0].mxu0 %v1315
        %v1435 = vpop.f32.mrb[0].mxu0
        %v1436 = vadd.f32 0.0, %v1435
        %v1437 = vpop.f32.mrb[0].mxu0
        %v1438 = vadd.f32 0.0, %v1437
        %1439 = vdwg.mxu0
        %v1440 = vadd.f32 %v1306, %v1436
        %v1441 = vadd.f32 %v1307, %v1438
        %s1442 = scalar_lea.vmem %s2, 48
        %v1443 = vld [vmem:[%s1442] sm:$0xff]
        %1445 = vset.pattern.permute.xlu0 0
        %1446 = vperm.xlu0 %1445, %v1443
        %v1447 = vpop.permute.xlu0 %1446
        %v1449 = vmul.f32 %v1447, %v642
        %v1450 = vmul.f32 %v1447, %v646
        %s1451 = scalar_lea.vmem [#allocation5], 2304
        %v1452 = vld [vmem:[%s1451] sm:$0xff]
        %v1453 = vld [vmem:[%s1451 + $0x8] sm:$0xff]
        %v1454 = vld [vmem:[%s1451 + $0x10] sm:$0xff]
        %v1455 = vld [vmem:[%s1451 + $0x18] sm:$0xff]
        %v1456 = vld [vmem:[%s1451 + $0x20] sm:$0xff]
        %v1457 = vld [vmem:[%s1451 + $0x28] sm:$0xff]
        %v1458 = vld [vmem:[%s1451 + $0x30] sm:$0xff]
        %v1459 = vld [vmem:[%s1451 + $0x38] sm:$0xff]
        %v1460 = vld [vmem:[%s1451 + $0x40] sm:$0xff]
        %v1461 = vld [vmem:[%s1451 + $0x48] sm:$0xff]
        %v1462 = vld [vmem:[%s1451 + $0x50] sm:$0xff]
        %v1463 = vld [vmem:[%s1451 + $0x58] sm:$0xff]
        %v1464 = vld [vmem:[%s1451 + $0x60] sm:$0xff]
        %v1465 = vld [vmem:[%s1451 + $0x68] sm:$0xff]
        %v1466 = vld [vmem:[%s1451 + $0x70] sm:$0xff]
        %v1467 = vld [vmem:[%s1451 + $0x78] sm:$0xff]
        %v1468 = vld [vmem:[%s1451 + $0x80] sm:$0xff]
        %v1469 = vld [vmem:[%s1451 + $0x88] sm:$0xff]
        %v1470 = vld [vmem:[%s1451 + $0x90] sm:$0xff]
        %v1471 = vld [vmem:[%s1451 + $0x98] sm:$0xff]
        %v1472 = vld [vmem:[%s1451 + $0xa0] sm:$0xff]
        %v1473 = vld [vmem:[%s1451 + $0xa8] sm:$0xff]
        %v1474 = vld [vmem:[%s1451 + $0xb0] sm:$0xff]
        %v1475 = vld [vmem:[%s1451 + $0xb8] sm:$0xff]
        %v1476 = vld [vmem:[%s1451 + $0xc0] sm:$0xff]
        %v1477 = vld [vmem:[%s1451 + $0xc8] sm:$0xff]
        %v1478 = vld [vmem:[%s1451 + $0xd0] sm:$0xff]
        %v1479 = vld [vmem:[%s1451 + $0xd8] sm:$0xff]
        %v1480 = vld [vmem:[%s1451 + $0xe0] sm:$0xff]
        %v1481 = vld [vmem:[%s1451 + $0xe8] sm:$0xff]
        %v1482 = vld [vmem:[%s1451 + $0xf0] sm:$0xff]
        %v1483 = vld [vmem:[%s1451 + $0xf8] sm:$0xff]
        %v1484 = vld [vmem:[%s1451 + $0x100] sm:$0xff]
        %v1485 = vld [vmem:[%s1451 + $0x108] sm:$0xff]
        %v1486 = vld [vmem:[%s1451 + $0x110] sm:$0xff]
        %v1487 = vld [vmem:[%s1451 + $0x118] sm:$0xff]
        %v1488 = vld [vmem:[%s1451 + $0x120] sm:$0xff]
        %v1489 = vld [vmem:[%s1451 + $0x128] sm:$0xff]
        %v1490 = vld [vmem:[%s1451 + $0x130] sm:$0xff]
        %v1491 = vld [vmem:[%s1451 + $0x138] sm:$0xff]
        %v1492 = vld [vmem:[%s1451 + $0x140] sm:$0xff]
        %v1493 = vld [vmem:[%s1451 + $0x148] sm:$0xff]
        %v1494 = vld [vmem:[%s1451 + $0x150] sm:$0xff]
        %v1495 = vld [vmem:[%s1451 + $0x158] sm:$0xff]
        %v1496 = vld [vmem:[%s1451 + $0x160] sm:$0xff]
        %v1497 = vld [vmem:[%s1451 + $0x168] sm:$0xff]
        %v1498 = vld [vmem:[%s1451 + $0x170] sm:$0xff]
        %v1499 = vld [vmem:[%s1451 + $0x178] sm:$0xff]
        %v1501 = vsel %vm757, %v1450, 0
        %1503 = vmatprep.subr.mxu0 %v1453
        %1504 = vmatpush1.msra.mxu0 %v1452
        %1505 = vmatprep.subr.mxu0 %v1455
        %1506 = vmatpush1.msra.mxu0 %v1454
        %1507 = vmatprep.subr.mxu0 %v1457
        %1508 = vmatpush1.msra.mxu0 %v1456
        %1509 = vmatprep.subr.mxu0 %v1459
        %1510 = vmatpush1.msra.mxu0 %v1458
        %1511 = vmatprep.subr.mxu0 %v1461
        %1512 = vmatpush1.msra.mxu0 %v1460
        %1513 = vmatprep.subr.mxu0 %v1463
        %1514 = vmatpush1.msra.mxu0 %v1462
        %1515 = vmatprep.subr.mxu0 %v1465
        %1516 = vmatpush1.msra.mxu0 %v1464
        %1517 = vmatprep.subr.mxu0 %v1467
        %1518 = vmatpush1.msra.mxu0 %v1466
        %1519 = vmatprep.subr.mxu0 %v1469
        %1520 = vmatpush1.msra.mxu0 %v1468
        %1521 = vmatprep.subr.mxu0 %v1471
        %1522 = vmatpush1.msra.mxu0 %v1470
        %1523 = vmatprep.subr.mxu0 %v1473
        %1524 = vmatpush1.msra.mxu0 %v1472
        %1525 = vmatprep.subr.mxu0 %v1475
        %1526 = vmatpush1.msra.mxu0 %v1474
        %1527 = vmatprep.subr.mxu0 %v1477
        %1528 = vmatpush1.msra.mxu0 %v1476
        %1529 = vmatprep.subr.mxu0 %v1479
        %1530 = vmatpush1.msra.mxu0 %v1478
        %1531 = vmatprep.subr.mxu0 %v1481
        %1532 = vmatpush1.msra.mxu0 %v1480
        %1533 = vmatprep.subr.mxu0 %v1483
        %1534 = vmatpush1.msra.mxu0 %v1482
        %1535 = vmatprep.subr.mxu0 %v1485
        %1536 = vmatpush1.msra.mxu0 %v1484
        %1537 = vmatprep.subr.mxu0 %v1487
        %1538 = vmatpush1.msra.mxu0 %v1486
        %1539 = vmatprep.subr.mxu0 %v1489
        %1540 = vmatpush1.msra.mxu0 %v1488
        %1541 = vmatprep.subr.mxu0 %v1491
        %1542 = vmatpush1.msra.mxu0 %v1490
        %1543 = vmatprep.subr.mxu0 %v1493
        %1544 = vmatpush1.msra.mxu0 %v1492
        %1545 = vmatprep.subr.mxu0 %v1495
        %1546 = vmatpush1.msra.mxu0 %v1494
        %1547 = vmatprep.subr.mxu0 %v1497
        %1548 = vmatpush1.msra.mxu0 %v1496
        %1549 = vmatprep.subr.mxu0 %v1499
        %1550 = vmatpush1.msra.mxu0 %v1498
        %1551 = vmatprep.subr.mxu0 0.0
        %1552 = vmatpush1.msra.mxu0 0.0
        %1553 = vmatprep.subr.mxu0 0.0
        %1554 = vmatpush1.msra.mxu0 0.0
        %1555 = vmatprep.subr.mxu0 0.0
        %1556 = vmatpush1.msra.mxu0 0.0
        %1557 = vmatprep.subr.mxu0 0.0
        %1558 = vmatpush1.msra.mxu0 0.0
        %1559 = vmatprep.subr.mxu0 0.0
        %1560 = vmatpush1.msra.mxu0 0.0
        %1561 = vmatprep.subr.mxu0 0.0
        %1562 = vmatpush1.msra.mxu0 0.0
        %1563 = vmatprep.subr.mxu0 0.0
        %1564 = vmatpush1.msra.mxu0 0.0
        %1565 = vmatprep.subr.mxu0 0.0
        %1566 = vmatpush1.msra.mxu0 0.0
        %1567 = vmatprep.mubr.f32.mxu0 %v1501
        %1568 = vmatmul.mubr.f32.gmra.mrb[0].mxu0 %v1449
        %v1569 = vpop.f32.mrb[0].mxu0
        %v1570 = vadd.f32 0.0, %v1569
        %v1571 = vpop.f32.mrb[0].mxu0
        %v1572 = vadd.f32 0.0, %v1571
        %1573 = vdwg.mxu0
        %v1574 = vadd.f32 %v1440, %v1570
        %v1575 = vadd.f32 %v1441, %v1572
        %s1576 = scalar_lea.vmem %s2, 56
        %v1577 = vld [vmem:[%s1576] sm:$0xff]
        %1579 = vset.pattern.permute.xlu0 0
        %1580 = vperm.xlu0 %1579, %v1577
        %v1581 = vpop.permute.xlu0 %1580
        %v1583 = vmul.f32 %v1581, %v642
        %v1584 = vmul.f32 %v1581, %v646
        %s1585 = scalar_lea.vmem [#allocation5], 2688
        %v1586 = vld [vmem:[%s1585] sm:$0xff]
        %v1587 = vld [vmem:[%s1585 + $0x8] sm:$0xff]
        %v1588 = vld [vmem:[%s1585 + $0x10] sm:$0xff]
        %v1589 = vld [vmem:[%s1585 + $0x18] sm:$0xff]
        %v1590 = vld [vmem:[%s1585 + $0x20] sm:$0xff]
        %v1591 = vld [vmem:[%s1585 + $0x28] sm:$0xff]
        %v1592 = vld [vmem:[%s1585 + $0x30] sm:$0xff]
        %v1593 = vld [vmem:[%s1585 + $0x38] sm:$0xff]
        %v1594 = vld [vmem:[%s1585 + $0x40] sm:$0xff]
        %v1595 = vld [vmem:[%s1585 + $0x48] sm:$0xff]
        %v1596 = vld [vmem:[%s1585 + $0x50] sm:$0xff]
        %v1597 = vld [vmem:[%s1585 + $0x58] sm:$0xff]
        %v1598 = vld [vmem:[%s1585 + $0x60] sm:$0xff]
        %v1599 = vld [vmem:[%s1585 + $0x68] sm:$0xff]
        %v1600 = vld [vmem:[%s1585 + $0x70] sm:$0xff]
        %v1601 = vld [vmem:[%s1585 + $0x78] sm:$0xff]
        %v1602 = vld [vmem:[%s1585 + $0x80] sm:$0xff]
        %v1603 = vld [vmem:[%s1585 + $0x88] sm:$0xff]
        %v1604 = vld [vmem:[%s1585 + $0x90] sm:$0xff]
        %v1605 = vld [vmem:[%s1585 + $0x98] sm:$0xff]
        %v1606 = vld [vmem:[%s1585 + $0xa0] sm:$0xff]
        %v1607 = vld [vmem:[%s1585 + $0xa8] sm:$0xff]
        %v1608 = vld [vmem:[%s1585 + $0xb0] sm:$0xff]
        %v1609 = vld [vmem:[%s1585 + $0xb8] sm:$0xff]
        %v1610 = vld [vmem:[%s1585 + $0xc0] sm:$0xff]
        %v1611 = vld [vmem:[%s1585 + $0xc8] sm:$0xff]
        %v1612 = vld [vmem:[%s1585 + $0xd0] sm:$0xff]
        %v1613 = vld [vmem:[%s1585 + $0xd8] sm:$0xff]
        %v1614 = vld [vmem:[%s1585 + $0xe0] sm:$0xff]
        %v1615 = vld [vmem:[%s1585 + $0xe8] sm:$0xff]
        %v1616 = vld [vmem:[%s1585 + $0xf0] sm:$0xff]
        %v1617 = vld [vmem:[%s1585 + $0xf8] sm:$0xff]
        %v1618 = vld [vmem:[%s1585 + $0x100] sm:$0xff]
        %v1619 = vld [vmem:[%s1585 + $0x108] sm:$0xff]
        %v1620 = vld [vmem:[%s1585 + $0x110] sm:$0xff]
        %v1621 = vld [vmem:[%s1585 + $0x118] sm:$0xff]
        %v1622 = vld [vmem:[%s1585 + $0x120] sm:$0xff]
        %v1623 = vld [vmem:[%s1585 + $0x128] sm:$0xff]
        %v1624 = vld [vmem:[%s1585 + $0x130] sm:$0xff]
        %v1625 = vld [vmem:[%s1585 + $0x138] sm:$0xff]
        %v1626 = vld [vmem:[%s1585 + $0x140] sm:$0xff]
        %v1627 = vld [vmem:[%s1585 + $0x148] sm:$0xff]
        %v1628 = vld [vmem:[%s1585 + $0x150] sm:$0xff]
        %v1629 = vld [vmem:[%s1585 + $0x158] sm:$0xff]
        %v1630 = vld [vmem:[%s1585 + $0x160] sm:$0xff]
        %v1631 = vld [vmem:[%s1585 + $0x168] sm:$0xff]
        %v1632 = vld [vmem:[%s1585 + $0x170] sm:$0xff]
        %v1633 = vld [vmem:[%s1585 + $0x178] sm:$0xff]
        %v1635 = vsel %vm757, %v1584, 0
        %1637 = vmatprep.subr.mxu0 %v1587
        %1638 = vmatpush1.msra.mxu0 %v1586
        %1639 = vmatprep.subr.mxu0 %v1589
        %1640 = vmatpush1.msra.mxu0 %v1588
        %1641 = vmatprep.subr.mxu0 %v1591
        %1642 = vmatpush1.msra.mxu0 %v1590
        %1643 = vmatprep.subr.mxu0 %v1593
        %1644 = vmatpush1.msra.mxu0 %v1592
        %1645 = vmatprep.subr.mxu0 %v1595
        %1646 = vmatpush1.msra.mxu0 %v1594
        %1647 = vmatprep.subr.mxu0 %v1597
        %1648 = vmatpush1.msra.mxu0 %v1596
        %1649 = vmatprep.subr.mxu0 %v1599
        %1650 = vmatpush1.msra.mxu0 %v1598
        %1651 = vmatprep.subr.mxu0 %v1601
        %1652 = vmatpush1.msra.mxu0 %v1600
        %1653 = vmatprep.subr.mxu0 %v1603
        %1654 = vmatpush1.msra.mxu0 %v1602
        %1655 = vmatprep.subr.mxu0 %v1605
        %1656 = vmatpush1.msra.mxu0 %v1604
        %1657 = vmatprep.subr.mxu0 %v1607
        %1658 = vmatpush1.msra.mxu0 %v1606
        %1659 = vmatprep.subr.mxu0 %v1609
        %1660 = vmatpush1.msra.mxu0 %v1608
        %1661 = vmatprep.subr.mxu0 %v1611
        %1662 = vmatpush1.msra.mxu0 %v1610
        %1663 = vmatprep.subr.mxu0 %v1613
        %1664 = vmatpush1.msra.mxu0 %v1612
        %1665 = vmatprep.subr.mxu0 %v1615
        %1666 = vmatpush1.msra.mxu0 %v1614
        %1667 = vmatprep.subr.mxu0 %v1617
        %1668 = vmatpush1.msra.mxu0 %v1616
        %1669 = vmatprep.subr.mxu0 %v1619
        %1670 = vmatpush1.msra.mxu0 %v1618
        %1671 = vmatprep.subr.mxu0 %v1621
        %1672 = vmatpush1.msra.mxu0 %v1620
        %1673 = vmatprep.subr.mxu0 %v1623
        %1674 = vmatpush1.msra.mxu0 %v1622
        %1675 = vmatprep.subr.mxu0 %v1625
        %1676 = vmatpush1.msra.mxu0 %v1624
        %1677 = vmatprep.subr.mxu0 %v1627
        %1678 = vmatpush1.msra.mxu0 %v1626
        %1679 = vmatprep.subr.mxu0 %v1629
        %1680 = vmatpush1.msra.mxu0 %v1628
        %1681 = vmatprep.subr.mxu0 %v1631
        %1682 = vmatpush1.msra.mxu0 %v1630
        %1683 = vmatprep.subr.mxu0 %v1633
        %1684 = vmatpush1.msra.mxu0 %v1632
        %1685 = vmatprep.subr.mxu0 0.0
        %1686 = vmatpush1.msra.mxu0 0.0
        %1687 = vmatprep.subr.mxu0 0.0
        %1688 = vmatpush1.msra.mxu0 0.0
        %1689 = vmatprep.subr.mxu0 0.0
        %1690 = vmatpush1.msra.mxu0 0.0
        %1691 = vmatprep.subr.mxu0 0.0
        %1692 = vmatpush1.msra.mxu0 0.0
        %1693 = vmatprep.subr.mxu0 0.0
        %1694 = vmatpush1.msra.mxu0 0.0
        %1695 = vmatprep.subr.mxu0 0.0
        %1696 = vmatpush1.msra.mxu0 0.0
        %1697 = vmatprep.subr.mxu0 0.0
        %1698 = vmatpush1.msra.mxu0 0.0
        %1699 = vmatprep.subr.mxu0 0.0
        %1700 = vmatpush1.msra.mxu0 0.0
        %1701 = vmatprep.mubr.f32.mxu0 %v1635
        %1702 = vmatmul.mubr.f32.gmra.mrb[0].mxu0 %v1583
        %v1703 = vpop.f32.mrb[0].mxu0
        %v1704 = vadd.f32 0.0, %v1703
        %v1705 = vpop.f32.mrb[0].mxu0
        %v1706 = vadd.f32 0.0, %v1705
        %1707 = vdwg.mxu0
        %v1708 = vadd.f32 %v1574, %v1704
        %v1709 = vadd.f32 %v1575, %v1706
        %s1710 = scalar_lea.vmem %s2, 64
        %v1711 = vld [vmem:[%s1710] sm:$0xff]
        %1713 = vset.pattern.permute.xlu0 0
        %1714 = vperm.xlu0 %1713, %v1711
        %v1715 = vpop.permute.xlu0 %1714
        %v1717 = vmul.f32 %v1715, %v642
        %v1718 = vmul.f32 %v1715, %v646
        %s1719 = scalar_lea.vmem [#allocation5], 3072
        %v1720 = vld [vmem:[%s1719] sm:$0xff]
        %v1721 = vld [vmem:[%s1719 + $0x8] sm:$0xff]
        %v1722 = vld [vmem:[%s1719 + $0x10] sm:$0xff]
        %v1723 = vld [vmem:[%s1719 + $0x18] sm:$0xff]
        %v1724 = vld [vmem:[%s1719 + $0x20] sm:$0xff]
        %v1725 = vld [vmem:[%s1719 + $0x28] sm:$0xff]
        %v1726 = vld [vmem:[%s1719 + $0x30] sm:$0xff]
        %v1727 = vld [vmem:[%s1719 + $0x38] sm:$0xff]
        %v1728 = vld [vmem:[%s1719 + $0x40] sm:$0xff]
        %v1729 = vld [vmem:[%s1719 + $0x48] sm:$0xff]
        %v1730 = vld [vmem:[%s1719 + $0x50] sm:$0xff]
        %v1731 = vld [vmem:[%s1719 + $0x58] sm:$0xff]
        %v1732 = vld [vmem:[%s1719 + $0x60] sm:$0xff]
        %v1733 = vld [vmem:[%s1719 + $0x68] sm:$0xff]
        %v1734 = vld [vmem:[%s1719 + $0x70] sm:$0xff]
        %v1735 = vld [vmem:[%s1719 + $0x78] sm:$0xff]
        %v1736 = vld [vmem:[%s1719 + $0x80] sm:$0xff]
        %v1737 = vld [vmem:[%s1719 + $0x88] sm:$0xff]
        %v1738 = vld [vmem:[%s1719 + $0x90] sm:$0xff]
        %v1739 = vld [vmem:[%s1719 + $0x98] sm:$0xff]
        %v1740 = vld [vmem:[%s1719 + $0xa0] sm:$0xff]
        %v1741 = vld [vmem:[%s1719 + $0xa8] sm:$0xff]
        %v1742 = vld [vmem:[%s1719 + $0xb0] sm:$0xff]
        %v1743 = vld [vmem:[%s1719 + $0xb8] sm:$0xff]
        %v1744 = vld [vmem:[%s1719 + $0xc0] sm:$0xff]
        %v1745 = vld [vmem:[%s1719 + $0xc8] sm:$0xff]
        %v1746 = vld [vmem:[%s1719 + $0xd0] sm:$0xff]
        %v1747 = vld [vmem:[%s1719 + $0xd8] sm:$0xff]
        %v1748 = vld [vmem:[%s1719 + $0xe0] sm:$0xff]
        %v1749 = vld [vmem:[%s1719 + $0xe8] sm:$0xff]
        %v1750 = vld [vmem:[%s1719 + $0xf0] sm:$0xff]
        %v1751 = vld [vmem:[%s1719 + $0xf8] sm:$0xff]
        %v1752 = vld [vmem:[%s1719 + $0x100] sm:$0xff]
        %v1753 = vld [vmem:[%s1719 + $0x108] sm:$0xff]
        %v1754 = vld [vmem:[%s1719 + $0x110] sm:$0xff]
        %v1755 = vld [vmem:[%s1719 + $0x118] sm:$0xff]
        %v1756 = vld [vmem:[%s1719 + $0x120] sm:$0xff]
        %v1757 = vld [vmem:[%s1719 + $0x128] sm:$0xff]
        %v1758 = vld [vmem:[%s1719 + $0x130] sm:$0xff]
        %v1759 = vld [vmem:[%s1719 + $0x138] sm:$0xff]
        %v1760 = vld [vmem:[%s1719 + $0x140] sm:$0xff]
        %v1761 = vld [vmem:[%s1719 + $0x148] sm:$0xff]
        %v1762 = vld [vmem:[%s1719 + $0x150] sm:$0xff]
        %v1763 = vld [vmem:[%s1719 + $0x158] sm:$0xff]
        %v1764 = vld [vmem:[%s1719 + $0x160] sm:$0xff]
        %v1765 = vld [vmem:[%s1719 + $0x168] sm:$0xff]
        %v1766 = vld [vmem:[%s1719 + $0x170] sm:$0xff]
        %v1767 = vld [vmem:[%s1719 + $0x178] sm:$0xff]
        %v1769 = vsel %vm757, %v1718, 0
        %1771 = vmatprep.subr.mxu0 %v1721
        %1772 = vmatpush1.msra.mxu0 %v1720
        %1773 = vmatprep.subr.mxu0 %v1723
        %1774 = vmatpush1.msra.mxu0 %v1722
        %1775 = vmatprep.subr.mxu0 %v1725
        %1776 = vmatpush1.msra.mxu0 %v1724
        %1777 = vmatprep.subr.mxu0 %v1727
        %1778 = vmatpush1.msra.mxu0 %v1726
        %1779 = vmatprep.subr.mxu0 %v1729
        %1780 = vmatpush1.msra.mxu0 %v1728
        %1781 = vmatprep.subr.mxu0 %v1731
        %1782 = vmatpush1.msra.mxu0 %v1730
        %1783 = vmatprep.subr.mxu0 %v1733
        %1784 = vmatpush1.msra.mxu0 %v1732
        %1785 = vmatprep.subr.mxu0 %v1735
        %1786 = vmatpush1.msra.mxu0 %v1734
        %1787 = vmatprep.subr.mxu0 %v1737
        %1788 = vmatpush1.msra.mxu0 %v1736
        %1789 = vmatprep.subr.mxu0 %v1739
        %1790 = vmatpush1.msra.mxu0 %v1738
        %1791 = vmatprep.subr.mxu0 %v1741
        %1792 = vmatpush1.msra.mxu0 %v1740
        %1793 = vmatprep.subr.mxu0 %v1743
        %1794 = vmatpush1.msra.mxu0 %v1742
        %1795 = vmatprep.subr.mxu0 %v1745
        %1796 = vmatpush1.msra.mxu0 %v1744
        %1797 = vmatprep.subr.mxu0 %v1747
        %1798 = vmatpush1.msra.mxu0 %v1746
        %1799 = vmatprep.subr.mxu0 %v1749
        %1800 = vmatpush1.msra.mxu0 %v1748
        %1801 = vmatprep.subr.mxu0 %v1751
        %1802 = vmatpush1.msra.mxu0 %v1750
        %1803 = vmatprep.subr.mxu0 %v1753
        %1804 = vmatpush1.msra.mxu0 %v1752
        %1805 = vmatprep.subr.mxu0 %v1755
        %1806 = vmatpush1.msra.mxu0 %v1754
        %1807 = vmatprep.subr.mxu0 %v1757
        %1808 = vmatpush1.msra.mxu0 %v1756
        %1809 = vmatprep.subr.mxu0 %v1759
        %1810 = vmatpush1.msra.mxu0 %v1758
        %1811 = vmatprep.subr.mxu0 %v1761
        %1812 = vmatpush1.msra.mxu0 %v1760
        %1813 = vmatprep.subr.mxu0 %v1763
        %1814 = vmatpush1.msra.mxu0 %v1762
        %1815 = vmatprep.subr.mxu0 %v1765
        %1816 = vmatpush1.msra.mxu0 %v1764
        %1817 = vmatprep.subr.mxu0 %v1767
        %1818 = vmatpush1.msra.mxu0 %v1766
        %1819 = vmatprep.subr.mxu0 0.0
        %1820 = vmatpush1.msra.mxu0 0.0
        %1821 = vmatprep.subr.mxu0 0.0
        %1822 = vmatpush1.msra.mxu0 0.0
        %1823 = vmatprep.subr.mxu0 0.0
        %1824 = vmatpush1.msra.mxu0 0.0
        %1825 = vmatprep.subr.mxu0 0.0
        %1826 = vmatpush1.msra.mxu0 0.0
        %1827 = vmatprep.subr.mxu0 0.0
        %1828 = vmatpush1.msra.mxu0 0.0
        %1829 = vmatprep.subr.mxu0 0.0
        %1830 = vmatpush1.msra.mxu0 0.0
        %1831 = vmatprep.subr.mxu0 0.0
        %1832 = vmatpush1.msra.mxu0 0.0
        %1833 = vmatprep.subr.mxu0 0.0
        %1834 = vmatpush1.msra.mxu0 0.0
        %1835 = vmatprep.mubr.f32.mxu0 %v1769
        %1836 = vmatmul.mubr.f32.gmra.mrb[0].mxu0 %v1717
        %v1837 = vpop.f32.mrb[0].mxu0
        %v1838 = vadd.f32 0.0, %v1837
        %v1839 = vpop.f32.mrb[0].mxu0
        %v1840 = vadd.f32 0.0, %v1839
        %1841 = vdwg.mxu0
        %v1842 = vadd.f32 %v1708, %v1838
        %v1843 = vadd.f32 %v1709, %v1840
        %v1844 = vld [vmem:[%s3] sm:$0xff]
        %1846 = vset.pattern.permute.xlu0 0
        %1847 = vperm.xlu0 %1846, %v1844
        %v1848 = vpop.permute.xlu0 %1847
        %v1850 = vmul.f32 %v1842, %v1848
        %v1851 = vmul.f32 %v1843, %v1848
        %v1852 = vld [vmem:[%s4] sm:$0xff]
        %1854 = vset.pattern.permute.xlu0 0
        %1855 = vperm.xlu0 %1854, %v1852
        %v1856 = vpop.permute.xlu0 %1855
        %v1858 = vadd.f32 %v1850, %v1856
        %v1859 = vadd.f32 %v1851, %v1856
        %v1860 = vmax.f32 %v1858, 0.0
        %v1861 = vmax.f32 %v1859, 0.0
        %v1862 = vld [vmem:[%s5] sm:$0xff]
        %vm1863 = vcmask 64512
        %v1865 = vsel %vm1863, %v1862, 0
        %1867 = vmatprep.subr.mxu0 %v1861
        %1868 = vmatpush1.msra.mxu0 %v1860
        %1869 = vmatprep.subr.mxu0 0.0
        %1870 = vmatpush1.msra.mxu0 0.0
        %1871 = vmatprep.subr.mxu0 0.0
        %1872 = vmatpush1.msra.mxu0 0.0
        %1873 = vmatprep.subr.mxu0 0.0
        %1874 = vmatpush1.msra.mxu0 0.0
        %1875 = vmatprep.subr.mxu0 0.0
        %1876 = vmatpush1.msra.mxu0 0.0
        %1877 = vmatprep.subr.mxu0 0.0
        %1878 = vmatpush1.msra.mxu0 0.0
        %1879 = vmatprep.subr.mxu0 0.0
        %1880 = vmatpush1.msra.mxu0 0.0
        %1881 = vmatprep.subr.mxu0 0.0
        %1882 = vmatpush1.msra.mxu0 0.0
        %1883 = vmatprep.subr.mxu0 0.0
        %1884 = vmatpush1.msra.mxu0 0.0
        %1885 = vmatprep.subr.mxu0 0.0
        %1886 = vmatpush1.msra.mxu0 0.0
        %1887 = vmatprep.subr.mxu0 0.0
        %1888 = vmatpush1.msra.mxu0 0.0
        %1889 = vmatprep.subr.mxu0 0.0
        %1890 = vmatpush1.msra.mxu0 0.0
        %1891 = vmatprep.subr.mxu0 0.0
        %1892 = vmatpush1.msra.mxu0 0.0
        %1893 = vmatprep.subr.mxu0 0.0
        %1894 = vmatpush1.msra.mxu0 0.0
        %1895 = vmatprep.subr.mxu0 0.0
        %1896 = vmatpush1.msra.mxu0 0.0
        %1897 = vmatprep.subr.mxu0 0.0
        %1898 = vmatpush1.msra.mxu0 0.0
        %1899 = vmatprep.subr.mxu0 0.0
        %1900 = vmatpush1.msra.mxu0 0.0
        %1901 = vmatprep.subr.mxu0 0.0
        %1902 = vmatpush1.msra.mxu0 0.0
        %1903 = vmatprep.subr.mxu0 0.0
        %1904 = vmatpush1.msra.mxu0 0.0
        %1905 = vmatprep.subr.mxu0 0.0
        %1906 = vmatpush1.msra.mxu0 0.0
        %1907 = vmatprep.subr.mxu0 0.0
        %1908 = vmatpush1.msra.mxu0 0.0
        %1909 = vmatprep.subr.mxu0 0.0
        %1910 = vmatpush1.msra.mxu0 0.0
        %1911 = vmatprep.subr.mxu0 0.0
        %1912 = vmatpush1.msra.mxu0 0.0
        %1913 = vmatprep.subr.mxu0 0.0
        %1914 = vmatpush1.msra.mxu0 0.0
        %1915 = vmatprep.subr.mxu0 0.0
        %1916 = vmatpush1.msra.mxu0 0.0
        %1917 = vmatprep.subr.mxu0 0.0
        %1918 = vmatpush1.msra.mxu0 0.0
        %1919 = vmatprep.subr.mxu0 0.0
        %1920 = vmatpush1.msra.mxu0 0.0
        %1921 = vmatprep.subr.mxu0 0.0
        %1922 = vmatpush1.msra.mxu0 0.0
        %1923 = vmatprep.subr.mxu0 0.0
        %1924 = vmatpush1.msra.mxu0 0.0
        %1925 = vmatprep.subr.mxu0 0.0
        %1926 = vmatpush1.msra.mxu0 0.0
        %1927 = vmatprep.subr.mxu0 0.0
        %1928 = vmatpush1.msra.mxu0 0.0
        %1929 = vmatprep.subr.mxu0 0.0
        %1930 = vmatpush1.msra.mxu0 0.0
        %1931 = vmatprep.mubr.f32.mxu0 0.0
        %1932 = vmatmul.mubr.f32.gmra.mrb[0].mxu0 %v1865
        %v1933 = vpop.f32.mrb[0].mxu0
        %v1934 = vadd.f32 0.0, %v1933
        %v1935 = vpop.f32.mrb[0].mxu0
        %v1936 = vadd.f32 0.0, %v1935
        %1937 = vdwg.mxu0
        %s1938 = scalar_lea.vmem %s5, 8
        %v1939 = vld [vmem:[%s1938] sm:$0xff]
        %v1941 = vsel %vm1863, %v1939, 0
        %1943 = vmatprep.subr.mxu0 %v1861
        %1944 = vmatpush1.msra.mxu0 %v1860
        %1945 = vmatprep.subr.mxu0 0.0
        %1946 = vmatpush1.msra.mxu0 0.0
        %1947 = vmatprep.subr.mxu0 0.0
        %1948 = vmatpush1.msra.mxu0 0.0
        %1949 = vmatprep.subr.mxu0 0.0
        %1950 = vmatpush1.msra.mxu0 0.0
        %1951 = vmatprep.subr.mxu0 0.0
        %1952 = vmatpush1.msra.mxu0 0.0
        %1953 = vmatprep.subr.mxu0 0.0
        %1954 = vmatpush1.msra.mxu0 0.0
        %1955 = vmatprep.subr.mxu0 0.0
        %1956 = vmatpush1.msra.mxu0 0.0
        %1957 = vmatprep.subr.mxu0 0.0
        %1958 = vmatpush1.msra.mxu0 0.0
        %1959 = vmatprep.subr.mxu0 0.0
        %1960 = vmatpush1.msra.mxu0 0.0
        %1961 = vmatprep.subr.mxu0 0.0
        %1962 = vmatpush1.msra.mxu0 0.0
        %1963 = vmatprep.subr.mxu0 0.0
        %1964 = vmatpush1.msra.mxu0 0.0
        %1965 = vmatprep.subr.mxu0 0.0
        %1966 = vmatpush1.msra.mxu0 0.0
        %1967 = vmatprep.subr.mxu0 0.0
        %1968 = vmatpush1.msra.mxu0 0.0
        %1969 = vmatprep.subr.mxu0 0.0
        %1970 = vmatpush1.msra.mxu0 0.0
        %1971 = vmatprep.subr.mxu0 0.0
        %1972 = vmatpush1.msra.mxu0 0.0
        %1973 = vmatprep.subr.mxu0 0.0
        %1974 = vmatpush1.msra.mxu0 0.0
        %1975 = vmatprep.subr.mxu0 0.0
        %1976 = vmatpush1.msra.mxu0 0.0
        %1977 = vmatprep.subr.mxu0 0.0
        %1978 = vmatpush1.msra.mxu0 0.0
        %1979 = vmatprep.subr.mxu0 0.0
        %1980 = vmatpush1.msra.mxu0 0.0
        %1981 = vmatprep.subr.mxu0 0.0
        %1982 = vmatpush1.msra.mxu0 0.0
        %1983 = vmatprep.subr.mxu0 0.0
        %1984 = vmatpush1.msra.mxu0 0.0
        %1985 = vmatprep.subr.mxu0 0.0
        %1986 = vmatpush1.msra.mxu0 0.0
        %1987 = vmatprep.subr.mxu0 0.0
        %1988 = vmatpush1.msra.mxu0 0.0
        %1989 = vmatprep.subr.mxu0 0.0
        %1990 = vmatpush1.msra.mxu0 0.0
        %1991 = vmatprep.subr.mxu0 0.0
        %1992 = vmatpush1.msra.mxu0 0.0
        %1993 = vmatprep.subr.mxu0 0.0
        %1994 = vmatpush1.msra.mxu0 0.0
        %1995 = vmatprep.subr.mxu0 0.0
        %1996 = vmatpush1.msra.mxu0 0.0
        %1997 = vmatprep.subr.mxu0 0.0
        %1998 = vmatpush1.msra.mxu0 0.0
        %1999 = vmatprep.subr.mxu0 0.0
        %2000 = vmatpush1.msra.mxu0 0.0
        %2001 = vmatprep.subr.mxu0 0.0
        %2002 = vmatpush1.msra.mxu0 0.0
        %2003 = vmatprep.subr.mxu0 0.0
        %2004 = vmatpush1.msra.mxu0 0.0
        %2005 = vmatprep.subr.mxu0 0.0
        %2006 = vmatpush1.msra.mxu0 0.0
        %2007 = vmatprep.mubr.f32.mxu0 0.0
        %2008 = vmatmul.mubr.f32.gmra.mrb[0].mxu0 %v1941
        %v2009 = vpop.f32.mrb[0].mxu0
        %v2010 = vadd.f32 0.0, %v2009
        %v2011 = vpop.f32.mrb[0].mxu0
        %v2012 = vadd.f32 0.0, %v2011
        %2013 = vdwg.mxu0
        %v2015 = vsel %vm757, %v2012, 0
        %2017 = vmatprep.subr.mxu0 %v710
        %2018 = vmatpush1.msra.mxu0 %v709
        %2019 = vmatprep.subr.mxu0 %v712
        %2020 = vmatpush1.msra.mxu0 %v711
        %2021 = vmatprep.subr.mxu0 %v714
        %2022 = vmatpush1.msra.mxu0 %v713
        %2023 = vmatprep.subr.mxu0 %v716
        %2024 = vmatpush1.msra.mxu0 %v715
        %2025 = vmatprep.subr.mxu0 %v718
        %2026 = vmatpush1.msra.mxu0 %v717
        %2027 = vmatprep.subr.mxu0 %v720
        %2028 = vmatpush1.msra.mxu0 %v719
        %2029 = vmatprep.subr.mxu0 %v722
        %2030 = vmatpush1.msra.mxu0 %v721
        %2031 = vmatprep.subr.mxu0 %v724
        %2032 = vmatpush1.msra.mxu0 %v723
        %2033 = vmatprep.subr.mxu0 %v726
        %2034 = vmatpush1.msra.mxu0 %v725
        %2035 = vmatprep.subr.mxu0 %v728
        %2036 = vmatpush1.msra.mxu0 %v727
        %2037 = vmatprep.subr.mxu0 %v730
        %2038 = vmatpush1.msra.mxu0 %v729
        %2039 = vmatprep.subr.mxu0 %v732
        %2040 = vmatpush1.msra.mxu0 %v731
        %2041 = vmatprep.subr.mxu0 %v734
        %2042 = vmatpush1.msra.mxu0 %v733
        %2043 = vmatprep.subr.mxu0 %v736
        %2044 = vmatpush1.msra.mxu0 %v735
        %2045 = vmatprep.subr.mxu0 %v738
        %2046 = vmatpush1.msra.mxu0 %v737
        %2047 = vmatprep.subr.mxu0 %v740
        %2048 = vmatpush1.msra.mxu0 %v739
        %2049 = vmatprep.subr.mxu0 %v742
        %2050 = vmatpush1.msra.mxu0 %v741
        %2051 = vmatprep.subr.mxu0 %v744
        %2052 = vmatpush1.msra.mxu0 %v743
        %2053 = vmatprep.subr.mxu0 %v746
        %2054 = vmatpush1.msra.mxu0 %v745
        %2055 = vmatprep.subr.mxu0 %v748
        %2056 = vmatpush1.msra.mxu0 %v747
        %2057 = vmatprep.subr.mxu0 %v750
        %2058 = vmatpush1.msra.mxu0 %v749
        %2059 = vmatprep.subr.mxu0 %v752
        %2060 = vmatpush1.msra.mxu0 %v751
        %2061 = vmatprep.subr.mxu0 %v754
        %2062 = vmatpush1.msra.mxu0 %v753
        %2063 = vmatprep.subr.mxu0 %v756
        %2064 = vmatpush1.msra.mxu0 %v755
        %2065 = vmatprep.subr.mxu0 0.0
        %2066 = vmatpush1.msra.mxu0 0.0
        %2067 = vmatprep.subr.mxu0 0.0
        %2068 = vmatpush1.msra.mxu0 0.0
        %2069 = vmatprep.subr.mxu0 0.0
        %2070 = vmatpush1.msra.mxu0 0.0
        %2071 = vmatprep.subr.mxu0 0.0
        %2072 = vmatpush1.msra.mxu0 0.0
        %2073 = vmatprep.subr.mxu0 0.0
        %2074 = vmatpush1.msra.mxu0 0.0
        %2075 = vmatprep.subr.mxu0 0.0
        %2076 = vmatpush1.msra.mxu0 0.0
        %2077 = vmatprep.subr.mxu0 0.0
        %2078 = vmatpush1.msra.mxu0 0.0
        %2079 = vmatprep.subr.mxu0 0.0
        %2080 = vmatpush1.msra.mxu0 0.0
        %2081 = vmatprep.mubr.f32.mxu0 %v2015
        %2082 = vmatmul.mubr.f32.gmra.mrb[0].mxu0 %v2010
        %v2083 = vpop.f32.mrb[0].mxu0
        %v2084 = vadd.f32 0.0, %v2083
        %v2085 = vpop.f32.mrb[0].mxu0
        %v2086 = vadd.f32 0.0, %v2085
        %2087 = vdwg.mxu0
        %v2089 = vsel %vm757, %v1936, 0
        %2091 = vmatprep.subr.mxu0 %v652
        %2092 = vmatpush1.msra.mxu0 %v651
        %2093 = vmatprep.subr.mxu0 %v654
        %2094 = vmatpush1.msra.mxu0 %v653
        %2095 = vmatprep.subr.mxu0 %v656
        %2096 = vmatpush1.msra.mxu0 %v655
        %2097 = vmatprep.subr.mxu0 %v658
        %2098 = vmatpush1.msra.mxu0 %v657
        %2099 = vmatprep.subr.mxu0 %v660
        %2100 = vmatpush1.msra.mxu0 %v659
        %2101 = vmatprep.subr.mxu0 %v662
        %2102 = vmatpush1.msra.mxu0 %v661
        %2103 = vmatprep.subr.mxu0 %v664
        %2104 = vmatpush1.msra.mxu0 %v663
        %2105 = vmatprep.subr.mxu0 %v666
        %2106 = vmatpush1.msra.mxu0 %v665
        %2107 = vmatprep.subr.mxu0 %v668
        %2108 = vmatpush1.msra.mxu0 %v667
        %2109 = vmatprep.subr.mxu0 %v670
        %2110 = vmatpush1.msra.mxu0 %v669
        %2111 = vmatprep.subr.mxu0 %v672
        %2112 = vmatpush1.msra.mxu0 %v671
        %2113 = vmatprep.subr.mxu0 %v674
        %2114 = vmatpush1.msra.mxu0 %v673
        %2115 = vmatprep.subr.mxu0 %v676
        %2116 = vmatpush1.msra.mxu0 %v675
        %2117 = vmatprep.subr.mxu0 %v678
        %2118 = vmatpush1.msra.mxu0 %v677
        %2119 = vmatprep.subr.mxu0 %v680
        %2120 = vmatpush1.msra.mxu0 %v679
        %2121 = vmatprep.subr.mxu0 %v682
        %2122 = vmatpush1.msra.mxu0 %v681
        %2123 = vmatprep.subr.mxu0 %v684
        %2124 = vmatpush1.msra.mxu0 %v683
        %2125 = vmatprep.subr.mxu0 %v686
        %2126 = vmatpush1.msra.mxu0 %v685
        %2127 = vmatprep.subr.mxu0 %v688
        %2128 = vmatpush1.msra.mxu0 %v687
        %2129 = vmatprep.subr.mxu0 %v690
        %2130 = vmatpush1.msra.mxu0 %v689
        %2131 = vmatprep.subr.mxu0 %v692
        %2132 = vmatpush1.msra.mxu0 %v691
        %2133 = vmatprep.subr.mxu0 %v694
        %2134 = vmatpush1.msra.mxu0 %v693
        %2135 = vmatprep.subr.mxu0 %v696
        %2136 = vmatpush1.msra.mxu0 %v695
        %2137 = vmatprep.subr.mxu0 %v698
        %2138 = vmatpush1.msra.mxu0 %v697
        %2139 = vmatprep.subr.mxu0 0.0
        %2140 = vmatpush1.msra.mxu0 0.0
        %2141 = vmatprep.subr.mxu0 0.0
        %2142 = vmatpush1.msra.mxu0 0.0
        %2143 = vmatprep.subr.mxu0 0.0
        %2144 = vmatpush1.msra.mxu0 0.0
        %2145 = vmatprep.subr.mxu0 0.0
        %2146 = vmatpush1.msra.mxu0 0.0
        %2147 = vmatprep.subr.mxu0 0.0
        %2148 = vmatpush1.msra.mxu0 0.0
        %2149 = vmatprep.subr.mxu0 0.0
        %2150 = vmatpush1.msra.mxu0 0.0
        %2151 = vmatprep.subr.mxu0 0.0
        %2152 = vmatpush1.msra.mxu0 0.0
        %2153 = vmatprep.subr.mxu0 0.0
        %2154 = vmatpush1.msra.mxu0 0.0
        %2155 = vmatprep.mubr.f32.mxu0 %v2089
        %2156 = vmatmul.mubr.f32.gmra.mrb[0].mxu0 %v1934
        %v2157 = vpop.f32.mrb[0].mxu0
        %v2158 = vadd.f32 %v2084, %v2157
        %v2159 = vpop.f32.mrb[0].mxu0
        %v2160 = vadd.f32 %v2086, %v2159
        %2161 = vdwg.mxu0
        %s2162 = scalar_lea.vmem %s5, 16
        %v2163 = vld [vmem:[%s2162] sm:$0xff]
        %v2165 = vsel %vm1863, %v2163, 0
        %2167 = vmatprep.subr.mxu0 %v1861
        %2168 = vmatpush1.msra.mxu0 %v1860
        %2169 = vmatprep.subr.mxu0 0.0
        %2170 = vmatpush1.msra.mxu0 0.0
        %2171 = vmatprep.subr.mxu0 0.0
        %2172 = vmatpush1.msra.mxu0 0.0
        %2173 = vmatprep.subr.mxu0 0.0
        %2174 = vmatpush1.msra.mxu0 0.0
        %2175 = vmatprep.subr.mxu0 0.0
        %2176 = vmatpush1.msra.mxu0 0.0
        %2177 = vmatprep.subr.mxu0 0.0
        %2178 = vmatpush1.msra.mxu0 0.0
        %2179 = vmatprep.subr.mxu0 0.0
        %2180 = vmatpush1.msra.mxu0 0.0
        %2181 = vmatprep.subr.mxu0 0.0
        %2182 = vmatpush1.msra.mxu0 0.0
        %2183 = vmatprep.subr.mxu0 0.0
        %2184 = vmatpush1.msra.mxu0 0.0
        %2185 = vmatprep.subr.mxu0 0.0
        %2186 = vmatpush1.msra.mxu0 0.0
        %2187 = vmatprep.subr.mxu0 0.0
        %2188 = vmatpush1.msra.mxu0 0.0
        %2189 = vmatprep.subr.mxu0 0.0
        %2190 = vmatpush1.msra.mxu0 0.0
        %2191 = vmatprep.subr.mxu0 0.0
        %2192 = vmatpush1.msra.mxu0 0.0
        %2193 = vmatprep.subr.mxu0 0.0
        %2194 = vmatpush1.msra.mxu0 0.0
        %2195 = vmatprep.subr.mxu0 0.0
        %2196 = vmatpush1.msra.mxu0 0.0
        %2197 = vmatprep.subr.mxu0 0.0
        %2198 = vmatpush1.msra.mxu0 0.0
        %2199 = vmatprep.subr.mxu0 0.0
        %2200 = vmatpush1.msra.mxu0 0.0
        %2201 = vmatprep.subr.mxu0 0.0
        %2202 = vmatpush1.msra.mxu0 0.0
        %2203 = vmatprep.subr.mxu0 0.0
        %2204 = vmatpush1.msra.mxu0 0.0
        %2205 = vmatprep.subr.mxu0 0.0
        %2206 = vmatpush1.msra.mxu0 0.0
        %2207 = vmatprep.subr.mxu0 0.0
        %2208 = vmatpush1.msra.mxu0 0.0
        %2209 = vmatprep.subr.mxu0 0.0
        %2210 = vmatpush1.msra.mxu0 0.0
        %2211 = vmatprep.subr.mxu0 0.0
        %2212 = vmatpush1.msra.mxu0 0.0
        %2213 = vmatprep.subr.mxu0 0.0
        %2214 = vmatpush1.msra.mxu0 0.0
        %2215 = vmatprep.subr.mxu0 0.0
        %2216 = vmatpush1.msra.mxu0 0.0
        %2217 = vmatprep.subr.mxu0 0.0
        %2218 = vmatpush1.msra.mxu0 0.0
        %2219 = vmatprep.subr.mxu0 0.0
        %2220 = vmatpush1.msra.mxu0 0.0
        %2221 = vmatprep.subr.mxu0 0.0
        %2222 = vmatpush1.msra.mxu0 0.0
        %2223 = vmatprep.subr.mxu0 0.0
        %2224 = vmatpush1.msra.mxu0 0.0
        %2225 = vmatprep.subr.mxu0 0.0
        %2226 = vmatpush1.msra.mxu0 0.0
        %2227 = vmatprep.subr.mxu0 0.0
        %2228 = vmatpush1.msra.mxu0 0.0
        %2229 = vmatprep.subr.mxu0 0.0
        %2230 = vmatpush1.msra.mxu0 0.0
        %2231 = vmatprep.mubr.f32.mxu0 0.0
        %2232 = vmatmul.mubr.f32.gmra.mrb[0].mxu0 %v2165
        %v2233 = vpop.f32.mrb[0].mxu0
        %v2234 = vadd.f32 0.0, %v2233
        %v2235 = vpop.f32.mrb[0].mxu0
        %v2236 = vadd.f32 0.0, %v2235
        %2237 = vdwg.mxu0
        %v2239 = vsel %vm757, %v2236, 0
        %2241 = vmatprep.subr.mxu0 %v917
        %2242 = vmatpush1.msra.mxu0 %v916
        %2243 = vmatprep.subr.mxu0 %v919
        %2244 = vmatpush1.msra.mxu0 %v918
        %2245 = vmatprep.subr.mxu0 %v921
        %2246 = vmatpush1.msra.mxu0 %v920
        %2247 = vmatprep.subr.mxu0 %v923
        %2248 = vmatpush1.msra.mxu0 %v922
        %2249 = vmatprep.subr.mxu0 %v925
        %2250 = vmatpush1.msra.mxu0 %v924
        %2251 = vmatprep.subr.mxu0 %v927
        %2252 = vmatpush1.msra.mxu0 %v926
        %2253 = vmatprep.subr.mxu0 %v929
        %2254 = vmatpush1.msra.mxu0 %v928
        %2255 = vmatprep.subr.mxu0 %v931
        %2256 = vmatpush1.msra.mxu0 %v930
        %2257 = vmatprep.subr.mxu0 %v933
        %2258 = vmatpush1.msra.mxu0 %v932
        %2259 = vmatprep.subr.mxu0 %v935
        %2260 = vmatpush1.msra.mxu0 %v934
        %2261 = vmatprep.subr.mxu0 %v937
        %2262 = vmatpush1.msra.mxu0 %v936
        %2263 = vmatprep.subr.mxu0 %v939
        %2264 = vmatpush1.msra.mxu0 %v938
        %2265 = vmatprep.subr.mxu0 %v941
        %2266 = vmatpush1.msra.mxu0 %v940
        %2267 = vmatprep.subr.mxu0 %v943
        %2268 = vmatpush1.msra.mxu0 %v942
        %2269 = vmatprep.subr.mxu0 %v945
        %2270 = vmatpush1.msra.mxu0 %v944
        %2271 = vmatprep.subr.mxu0 %v947
        %2272 = vmatpush1.msra.mxu0 %v946
        %2273 = vmatprep.subr.mxu0 %v949
        %2274 = vmatpush1.msra.mxu0 %v948
        %2275 = vmatprep.subr.mxu0 %v951
        %2276 = vmatpush1.msra.mxu0 %v950
        %2277 = vmatprep.subr.mxu0 %v953
        %2278 = vmatpush1.msra.mxu0 %v952
        %2279 = vmatprep.subr.mxu0 %v955
        %2280 = vmatpush1.msra.mxu0 %v954
        %2281 = vmatprep.subr.mxu0 %v957
        %2282 = vmatpush1.msra.mxu0 %v956
        %2283 = vmatprep.subr.mxu0 %v959
        %2284 = vmatpush1.msra.mxu0 %v958
        %2285 = vmatprep.subr.mxu0 %v961
        %2286 = vmatpush1.msra.mxu0 %v960
        %2287 = vmatprep.subr.mxu0 %v963
        %2288 = vmatpush1.msra.mxu0 %v962
        %2289 = vmatprep.subr.mxu0 0.0
        %2290 = vmatpush1.msra.mxu0 0.0
        %2291 = vmatprep.subr.mxu0 0.0
        %2292 = vmatpush1.msra.mxu0 0.0
        %2293 = vmatprep.subr.mxu0 0.0
        %2294 = vmatpush1.msra.mxu0 0.0
        %2295 = vmatprep.subr.mxu0 0.0
        %2296 = vmatpush1.msra.mxu0 0.0
        %2297 = vmatprep.subr.mxu0 0.0
        %2298 = vmatpush1.msra.mxu0 0.0
        %2299 = vmatprep.subr.mxu0 0.0
        %2300 = vmatpush1.msra.mxu0 0.0
        %2301 = vmatprep.subr.mxu0 0.0
        %2302 = vmatpush1.msra.mxu0 0.0
        %2303 = vmatprep.subr.mxu0 0.0
        %2304 = vmatpush1.msra.mxu0 0.0
        %2305 = vmatprep.mubr.f32.mxu0 %v2239
        %2306 = vmatmul.mubr.f32.gmra.mrb[0].mxu0 %v2234
        %v2307 = vpop.f32.mrb[0].mxu0
        %v2308 = vadd.f32 0.0, %v2307
        %v2309 = vpop.f32.mrb[0].mxu0
        %v2310 = vadd.f32 0.0, %v2309
        %2311 = vdwg.mxu0
        %v2312 = vadd.f32 %v2158, %v2308
        %v2313 = vadd.f32 %v2160, %v2310
        %s2314 = scalar_lea.vmem %s5, 24
        %v2315 = vld [vmem:[%s2314] sm:$0xff]
        %v2317 = vsel %vm1863, %v2315, 0
        %2319 = vmatprep.subr.mxu0 %v1861
        %2320 = vmatpush1.msra.mxu0 %v1860
        %2321 = vmatprep.subr.mxu0 0.0
        %2322 = vmatpush1.msra.mxu0 0.0
        %2323 = vmatprep.subr.mxu0 0.0
        %2324 = vmatpush1.msra.mxu0 0.0
        %2325 = vmatprep.subr.mxu0 0.0
        %2326 = vmatpush1.msra.mxu0 0.0
        %2327 = vmatprep.subr.mxu0 0.0
        %2328 = vmatpush1.msra.mxu0 0.0
        %2329 = vmatprep.subr.mxu0 0.0
        %2330 = vmatpush1.msra.mxu0 0.0
        %2331 = vmatprep.subr.mxu0 0.0
        %2332 = vmatpush1.msra.mxu0 0.0
        %2333 = vmatprep.subr.mxu0 0.0
        %2334 = vmatpush1.msra.mxu0 0.0
        %2335 = vmatprep.subr.mxu0 0.0
        %2336 = vmatpush1.msra.mxu0 0.0
        %2337 = vmatprep.subr.mxu0 0.0
        %2338 = vmatpush1.msra.mxu0 0.0
        %2339 = vmatprep.subr.mxu0 0.0
        %2340 = vmatpush1.msra.mxu0 0.0
        %2341 = vmatprep.subr.mxu0 0.0
        %2342 = vmatpush1.msra.mxu0 0.0
        %2343 = vmatprep.subr.mxu0 0.0
        %2344 = vmatpush1.msra.mxu0 0.0
        %2345 = vmatprep.subr.mxu0 0.0
        %2346 = vmatpush1.msra.mxu0 0.0
        %2347 = vmatprep.subr.mxu0 0.0
        %2348 = vmatpush1.msra.mxu0 0.0
        %2349 = vmatprep.subr.mxu0 0.0
        %2350 = vmatpush1.msra.mxu0 0.0
        %2351 = vmatprep.subr.mxu0 0.0
        %2352 = vmatpush1.msra.mxu0 0.0
        %2353 = vmatprep.subr.mxu0 0.0
        %2354 = vmatpush1.msra.mxu0 0.0
        %2355 = vmatprep.subr.mxu0 0.0
        %2356 = vmatpush1.msra.mxu0 0.0
        %2357 = vmatprep.subr.mxu0 0.0
        %2358 = vmatpush1.msra.mxu0 0.0
        %2359 = vmatprep.subr.mxu0 0.0
        %2360 = vmatpush1.msra.mxu0 0.0
        %2361 = vmatprep.subr.mxu0 0.0
        %2362 = vmatpush1.msra.mxu0 0.0
        %2363 = vmatprep.subr.mxu0 0.0
        %2364 = vmatpush1.msra.mxu0 0.0
        %2365 = vmatprep.subr.mxu0 0.0
        %2366 = vmatpush1.msra.mxu0 0.0
        %2367 = vmatprep.subr.mxu0 0.0
        %2368 = vmatpush1.msra.mxu0 0.0
        %2369 = vmatprep.subr.mxu0 0.0
        %2370 = vmatpush1.msra.mxu0 0.0
        %2371 = vmatprep.subr.mxu0 0.0
        %2372 = vmatpush1.msra.mxu0 0.0
        %2373 = vmatprep.subr.mxu0 0.0
        %2374 = vmatpush1.msra.mxu0 0.0
        %2375 = vmatprep.subr.mxu0 0.0
        %2376 = vmatpush1.msra.mxu0 0.0
        %2377 = vmatprep.subr.mxu0 0.0
        %2378 = vmatpush1.msra.mxu0 0.0
        %2379 = vmatprep.subr.mxu0 0.0
        %2380 = vmatpush1.msra.mxu0 0.0
        %2381 = vmatprep.subr.mxu0 0.0
        %2382 = vmatpush1.msra.mxu0 0.0
        %2383 = vmatprep.mubr.f32.mxu0 0.0
        %2384 = vmatmul.mubr.f32.gmra.mrb[0].mxu0 %v2317
        %v2385 = vpop.f32.mrb[0].mxu0
        %v2386 = vadd.f32 0.0, %v2385
        %v2387 = vpop.f32.mrb[0].mxu0
        %v2388 = vadd.f32 0.0, %v2387
        %2389 = vdwg.mxu0
        %v2391 = vsel %vm757, %v2388, 0
        %2393 = vmatprep.subr.mxu0 %v1051
        %2394 = vmatpush1.msra.mxu0 %v1050
        %2395 = vmatprep.subr.mxu0 %v1053
        %2396 = vmatpush1.msra.mxu0 %v1052
        %2397 = vmatprep.subr.mxu0 %v1055
        %2398 = vmatpush1.msra.mxu0 %v1054
        %2399 = vmatprep.subr.mxu0 %v1057
        %2400 = vmatpush1.msra.mxu0 %v1056
        %2401 = vmatprep.subr.mxu0 %v1059
        %2402 = vmatpush1.msra.mxu0 %v1058
        %2403 = vmatprep.subr.mxu0 %v1061
        %2404 = vmatpush1.msra.mxu0 %v1060
        %2405 = vmatprep.subr.mxu0 %v1063
        %2406 = vmatpush1.msra.mxu0 %v1062
        %2407 = vmatprep.subr.mxu0 %v1065
        %2408 = vmatpush1.msra.mxu0 %v1064
        %2409 = vmatprep.subr.mxu0 %v1067
        %2410 = vmatpush1.msra.mxu0 %v1066
        %2411 = vmatprep.subr.mxu0 %v1069
        %2412 = vmatpush1.msra.mxu0 %v1068
        %2413 = vmatprep.subr.mxu0 %v1071
        %2414 = vmatpush1.msra.mxu0 %v1070
        %2415 = vmatprep.subr.mxu0 %v1073
        %2416 = vmatpush1.msra.mxu0 %v1072
        %2417 = vmatprep.subr.mxu0 %v1075
        %2418 = vmatpush1.msra.mxu0 %v1074
        %2419 = vmatprep.subr.mxu0 %v1077
        %2420 = vmatpush1.msra.mxu0 %v1076
        %2421 = vmatprep.subr.mxu0 %v1079
        %2422 = vmatpush1.msra.mxu0 %v1078
        %2423 = vmatprep.subr.mxu0 %v1081
        %2424 = vmatpush1.msra.mxu0 %v1080
        %2425 = vmatprep.subr.mxu0 %v1083
        %2426 = vmatpush1.msra.mxu0 %v1082
        %2427 = vmatprep.subr.mxu0 %v1085
        %2428 = vmatpush1.msra.mxu0 %v1084
        %2429 = vmatprep.subr.mxu0 %v1087
        %2430 = vmatpush1.msra.mxu0 %v1086
        %2431 = vmatprep.subr.mxu0 %v1089
        %2432 = vmatpush1.msra.mxu0 %v1088
        %2433 = vmatprep.subr.mxu0 %v1091
        %2434 = vmatpush1.msra.mxu0 %v1090
        %2435 = vmatprep.subr.mxu0 %v1093
        %2436 = vmatpush1.msra.mxu0 %v1092
        %2437 = vmatprep.subr.mxu0 %v1095
        %2438 = vmatpush1.msra.mxu0 %v1094
        %2439 = vmatprep.subr.mxu0 %v1097
        %2440 = vmatpush1.msra.mxu0 %v1096
        %2441 = vmatprep.subr.mxu0 0.0
        %2442 = vmatpush1.msra.mxu0 0.0
        %2443 = vmatprep.subr.mxu0 0.0
        %2444 = vmatpush1.msra.mxu0 0.0
        %2445 = vmatprep.subr.mxu0 0.0
        %2446 = vmatpush1.msra.mxu0 0.0
        %2447 = vmatprep.subr.mxu0 0.0
        %2448 = vmatpush1.msra.mxu0 0.0
        %2449 = vmatprep.subr.mxu0 0.0
        %2450 = vmatpush1.msra.mxu0 0.0
        %2451 = vmatprep.subr.mxu0 0.0
        %2452 = vmatpush1.msra.mxu0 0.0
        %2453 = vmatprep.subr.mxu0 0.0
        %2454 = vmatpush1.msra.mxu0 0.0
        %2455 = vmatprep.subr.mxu0 0.0
        %2456 = vmatpush1.msra.mxu0 0.0
        %2457 = vmatprep.mubr.f32.mxu0 %v2391
        %2458 = vmatmul.mubr.f32.gmra.mrb[0].mxu0 %v2386
        %v2459 = vpop.f32.mrb[0].mxu0
        %v2460 = vadd.f32 0.0, %v2459
        %v2461 = vpop.f32.mrb[0].mxu0
        %v2462 = vadd.f32 0.0, %v2461
        %2463 = vdwg.mxu0
        %v2464 = vadd.f32 %v2312, %v2460
        %v2465 = vadd.f32 %v2313, %v2462
        %s2466 = scalar_lea.vmem %s5, 32
        %v2467 = vld [vmem:[%s2466] sm:$0xff]
        %v2469 = vsel %vm1863, %v2467, 0
        %2471 = vmatprep.subr.mxu0 %v1861
        %2472 = vmatpush1.msra.mxu0 %v1860
        %2473 = vmatprep.subr.mxu0 0.0
        %2474 = vmatpush1.msra.mxu0 0.0
        %2475 = vmatprep.subr.mxu0 0.0
        %2476 = vmatpush1.msra.mxu0 0.0
        %2477 = vmatprep.subr.mxu0 0.0
        %2478 = vmatpush1.msra.mxu0 0.0
        %2479 = vmatprep.subr.mxu0 0.0
        %2480 = vmatpush1.msra.mxu0 0.0
        %2481 = vmatprep.subr.mxu0 0.0
        %2482 = vmatpush1.msra.mxu0 0.0
        %2483 = vmatprep.subr.mxu0 0.0
        %2484 = vmatpush1.msra.mxu0 0.0
        %2485 = vmatprep.subr.mxu0 0.0
        %2486 = vmatpush1.msra.mxu0 0.0
        %2487 = vmatprep.subr.mxu0 0.0
        %2488 = vmatpush1.msra.mxu0 0.0
        %2489 = vmatprep.subr.mxu0 0.0
        %2490 = vmatpush1.msra.mxu0 0.0
        %2491 = vmatprep.subr.mxu0 0.0
        %2492 = vmatpush1.msra.mxu0 0.0
        %2493 = vmatprep.subr.mxu0 0.0
        %2494 = vmatpush1.msra.mxu0 0.0
        %2495 = vmatprep.subr.mxu0 0.0
        %2496 = vmatpush1.msra.mxu0 0.0
        %2497 = vmatprep.subr.mxu0 0.0
        %2498 = vmatpush1.msra.mxu0 0.0
        %2499 = vmatprep.subr.mxu0 0.0
        %2500 = vmatpush1.msra.mxu0 0.0
        %2501 = vmatprep.subr.mxu0 0.0
        %2502 = vmatpush1.msra.mxu0 0.0
        %2503 = vmatprep.subr.mxu0 0.0
        %2504 = vmatpush1.msra.mxu0 0.0
        %2505 = vmatprep.subr.mxu0 0.0
        %2506 = vmatpush1.msra.mxu0 0.0
        %2507 = vmatprep.subr.mxu0 0.0
        %2508 = vmatpush1.msra.mxu0 0.0
        %2509 = vmatprep.subr.mxu0 0.0
        %2510 = vmatpush1.msra.mxu0 0.0
        %2511 = vmatprep.subr.mxu0 0.0
        %2512 = vmatpush1.msra.mxu0 0.0
        %2513 = vmatprep.subr.mxu0 0.0
        %2514 = vmatpush1.msra.mxu0 0.0
        %2515 = vmatprep.subr.mxu0 0.0
        %2516 = vmatpush1.msra.mxu0 0.0
        %2517 = vmatprep.subr.mxu0 0.0
        %2518 = vmatpush1.msra.mxu0 0.0
        %2519 = vmatprep.subr.mxu0 0.0
        %2520 = vmatpush1.msra.mxu0 0.0
        %2521 = vmatprep.subr.mxu0 0.0
        %2522 = vmatpush1.msra.mxu0 0.0
        %2523 = vmatprep.subr.mxu0 0.0
        %2524 = vmatpush1.msra.mxu0 0.0
        %2525 = vmatprep.subr.mxu0 0.0
        %2526 = vmatpush1.msra.mxu0 0.0
        %2527 = vmatprep.subr.mxu0 0.0
        %2528 = vmatpush1.msra.mxu0 0.0
        %2529 = vmatprep.subr.mxu0 0.0
        %2530 = vmatpush1.msra.mxu0 0.0
        %2531 = vmatprep.subr.mxu0 0.0
        %2532 = vmatpush1.msra.mxu0 0.0
        %2533 = vmatprep.subr.mxu0 0.0
        %2534 = vmatpush1.msra.mxu0 0.0
        %2535 = vmatprep.mubr.f32.mxu0 0.0
        %2536 = vmatmul.mubr.f32.gmra.mrb[0].mxu0 %v2469
        %v2537 = vpop.f32.mrb[0].mxu0
        %v2538 = vadd.f32 0.0, %v2537
        %v2539 = vpop.f32.mrb[0].mxu0
        %v2540 = vadd.f32 0.0, %v2539
        %2541 = vdwg.mxu0
        %v2543 = vsel %vm757, %v2540, 0
        %2545 = vmatprep.subr.mxu0 %v1185
        %2546 = vmatpush1.msra.mxu0 %v1184
        %2547 = vmatprep.subr.mxu0 %v1187
        %2548 = vmatpush1.msra.mxu0 %v1186
        %2549 = vmatprep.subr.mxu0 %v1189
        %2550 = vmatpush1.msra.mxu0 %v1188
        %2551 = vmatprep.subr.mxu0 %v1191
        %2552 = vmatpush1.msra.mxu0 %v1190
        %2553 = vmatprep.subr.mxu0 %v1193
        %2554 = vmatpush1.msra.mxu0 %v1192
        %2555 = vmatprep.subr.mxu0 %v1195
        %2556 = vmatpush1.msra.mxu0 %v1194
        %2557 = vmatprep.subr.mxu0 %v1197
        %2558 = vmatpush1.msra.mxu0 %v1196
        %2559 = vmatprep.subr.mxu0 %v1199
        %2560 = vmatpush1.msra.mxu0 %v1198
        %2561 = vmatprep.subr.mxu0 %v1201
        %2562 = vmatpush1.msra.mxu0 %v1200
        %2563 = vmatprep.subr.mxu0 %v1203
        %2564 = vmatpush1.msra.mxu0 %v1202
        %2565 = vmatprep.subr.mxu0 %v1205
        %2566 = vmatpush1.msra.mxu0 %v1204
        %2567 = vmatprep.subr.mxu0 %v1207
        %2568 = vmatpush1.msra.mxu0 %v1206
        %2569 = vmatprep.subr.mxu0 %v1209
        %2570 = vmatpush1.msra.mxu0 %v1208
        %2571 = vmatprep.subr.mxu0 %v1211
        %2572 = vmatpush1.msra.mxu0 %v1210
        %2573 = vmatprep.subr.mxu0 %v1213
        %2574 = vmatpush1.msra.mxu0 %v1212
        %2575 = vmatprep.subr.mxu0 %v1215
        %2576 = vmatpush1.msra.mxu0 %v1214
        %2577 = vmatprep.subr.mxu0 %v1217
        %2578 = vmatpush1.msra.mxu0 %v1216
        %2579 = vmatprep.subr.mxu0 %v1219
        %2580 = vmatpush1.msra.mxu0 %v1218
        %2581 = vmatprep.subr.mxu0 %v1221
        %2582 = vmatpush1.msra.mxu0 %v1220
        %2583 = vmatprep.subr.mxu0 %v1223
        %2584 = vmatpush1.msra.mxu0 %v1222
        %2585 = vmatprep.subr.mxu0 %v1225
        %2586 = vmatpush1.msra.mxu0 %v1224
        %2587 = vmatprep.subr.mxu0 %v1227
        %2588 = vmatpush1.msra.mxu0 %v1226
        %2589 = vmatprep.subr.mxu0 %v1229
        %2590 = vmatpush1.msra.mxu0 %v1228
        %2591 = vmatprep.subr.mxu0 %v1231
        %2592 = vmatpush1.msra.mxu0 %v1230
        %2593 = vmatprep.subr.mxu0 0.0
        %2594 = vmatpush1.msra.mxu0 0.0
        %2595 = vmatprep.subr.mxu0 0.0
        %2596 = vmatpush1.msra.mxu0 0.0
        %2597 = vmatprep.subr.mxu0 0.0
        %2598 = vmatpush1.msra.mxu0 0.0
        %2599 = vmatprep.subr.mxu0 0.0
        %2600 = vmatpush1.msra.mxu0 0.0
        %2601 = vmatprep.subr.mxu0 0.0
        %2602 = vmatpush1.msra.mxu0 0.0
        %2603 = vmatprep.subr.mxu0 0.0
        %2604 = vmatpush1.msra.mxu0 0.0
        %2605 = vmatprep.subr.mxu0 0.0
        %2606 = vmatpush1.msra.mxu0 0.0
        %2607 = vmatprep.subr.mxu0 0.0
        %2608 = vmatpush1.msra.mxu0 0.0
        %2609 = vmatprep.mubr.f32.mxu0 %v2543
        %2610 = vmatmul.mubr.f32.gmra.mrb[0].mxu0 %v2538
        %v2611 = vpop.f32.mrb[0].mxu0
        %v2612 = vadd.f32 0.0, %v2611
        %v2613 = vpop.f32.mrb[0].mxu0
        %v2614 = vadd.f32 0.0, %v2613
        %2615 = vdwg.mxu0
        %v2616 = vadd.f32 %v2464, %v2612
        %v2617 = vadd.f32 %v2465, %v2614
        %s2618 = scalar_lea.vmem %s5, 40
        %v2619 = vld [vmem:[%s2618] sm:$0xff]
        %v2621 = vsel %vm1863, %v2619, 0
        %2623 = vmatprep.subr.mxu0 %v1861
        %2624 = vmatpush1.msra.mxu0 %v1860
        %2625 = vmatprep.subr.mxu0 0.0
        %2626 = vmatpush1.msra.mxu0 0.0
        %2627 = vmatprep.subr.mxu0 0.0
        %2628 = vmatpush1.msra.mxu0 0.0
        %2629 = vmatprep.subr.mxu0 0.0
        %2630 = vmatpush1.msra.mxu0 0.0
        %2631 = vmatprep.subr.mxu0 0.0
        %2632 = vmatpush1.msra.mxu0 0.0
        %2633 = vmatprep.subr.mxu0 0.0
        %2634 = vmatpush1.msra.mxu0 0.0
        %2635 = vmatprep.subr.mxu0 0.0
        %2636 = vmatpush1.msra.mxu0 0.0
        %2637 = vmatprep.subr.mxu0 0.0
        %2638 = vmatpush1.msra.mxu0 0.0
        %2639 = vmatprep.subr.mxu0 0.0
        %2640 = vmatpush1.msra.mxu0 0.0
        %2641 = vmatprep.subr.mxu0 0.0
        %2642 = vmatpush1.msra.mxu0 0.0
        %2643 = vmatprep.subr.mxu0 0.0
        %2644 = vmatpush1.msra.mxu0 0.0
        %2645 = vmatprep.subr.mxu0 0.0
        %2646 = vmatpush1.msra.mxu0 0.0
        %2647 = vmatprep.subr.mxu0 0.0
        %2648 = vmatpush1.msra.mxu0 0.0
        %2649 = vmatprep.subr.mxu0 0.0
        %2650 = vmatpush1.msra.mxu0 0.0
        %2651 = vmatprep.subr.mxu0 0.0
        %2652 = vmatpush1.msra.mxu0 0.0
        %2653 = vmatprep.subr.mxu0 0.0
        %2654 = vmatpush1.msra.mxu0 0.0
        %2655 = vmatprep.subr.mxu0 0.0
        %2656 = vmatpush1.msra.mxu0 0.0
        %2657 = vmatprep.subr.mxu0 0.0
        %2658 = vmatpush1.msra.mxu0 0.0
        %2659 = vmatprep.subr.mxu0 0.0
        %2660 = vmatpush1.msra.mxu0 0.0
        %2661 = vmatprep.subr.mxu0 0.0
        %2662 = vmatpush1.msra.mxu0 0.0
        %2663 = vmatprep.subr.mxu0 0.0
        %2664 = vmatpush1.msra.mxu0 0.0
        %2665 = vmatprep.subr.mxu0 0.0
        %2666 = vmatpush1.msra.mxu0 0.0
        %2667 = vmatprep.subr.mxu0 0.0
        %2668 = vmatpush1.msra.mxu0 0.0
        %2669 = vmatprep.subr.mxu0 0.0
        %2670 = vmatpush1.msra.mxu0 0.0
        %2671 = vmatprep.subr.mxu0 0.0
        %2672 = vmatpush1.msra.mxu0 0.0
        %2673 = vmatprep.subr.mxu0 0.0
        %2674 = vmatpush1.msra.mxu0 0.0
        %2675 = vmatprep.subr.mxu0 0.0
        %2676 = vmatpush1.msra.mxu0 0.0
        %2677 = vmatprep.subr.mxu0 0.0
        %2678 = vmatpush1.msra.mxu0 0.0
        %2679 = vmatprep.subr.mxu0 0.0
        %2680 = vmatpush1.msra.mxu0 0.0
        %2681 = vmatprep.subr.mxu0 0.0
        %2682 = vmatpush1.msra.mxu0 0.0
        %2683 = vmatprep.subr.mxu0 0.0
        %2684 = vmatpush1.msra.mxu0 0.0
        %2685 = vmatprep.subr.mxu0 0.0
        %2686 = vmatpush1.msra.mxu0 0.0
        %2687 = vmatprep.mubr.f32.mxu0 0.0
        %2688 = vmatmul.mubr.f32.gmra.mrb[0].mxu0 %v2621
        %v2689 = vpop.f32.mrb[0].mxu0
        %v2690 = vadd.f32 0.0, %v2689
        %v2691 = vpop.f32.mrb[0].mxu0
        %v2692 = vadd.f32 0.0, %v2691
        %2693 = vdwg.mxu0
        %v2695 = vsel %vm757, %v2692, 0
        %2697 = vmatprep.subr.mxu0 %v1319
        %2698 = vmatpush1.msra.mxu0 %v1318
        %2699 = vmatprep.subr.mxu0 %v1321
        %2700 = vmatpush1.msra.mxu0 %v1320
        %2701 = vmatprep.subr.mxu0 %v1323
        %2702 = vmatpush1.msra.mxu0 %v1322
        %2703 = vmatprep.subr.mxu0 %v1325
        %2704 = vmatpush1.msra.mxu0 %v1324
        %2705 = vmatprep.subr.mxu0 %v1327
        %2706 = vmatpush1.msra.mxu0 %v1326
        %2707 = vmatprep.subr.mxu0 %v1329
        %2708 = vmatpush1.msra.mxu0 %v1328
        %2709 = vmatprep.subr.mxu0 %v1331
        %2710 = vmatpush1.msra.mxu0 %v1330
        %2711 = vmatprep.subr.mxu0 %v1333
        %2712 = vmatpush1.msra.mxu0 %v1332
        %2713 = vmatprep.subr.mxu0 %v1335
        %2714 = vmatpush1.msra.mxu0 %v1334
        %2715 = vmatprep.subr.mxu0 %v1337
        %2716 = vmatpush1.msra.mxu0 %v1336
        %2717 = vmatprep.subr.mxu0 %v1339
        %2718 = vmatpush1.msra.mxu0 %v1338
        %2719 = vmatprep.subr.mxu0 %v1341
        %2720 = vmatpush1.msra.mxu0 %v1340
        %2721 = vmatprep.subr.mxu0 %v1343
        %2722 = vmatpush1.msra.mxu0 %v1342
        %2723 = vmatprep.subr.mxu0 %v1345
        %2724 = vmatpush1.msra.mxu0 %v1344
        %2725 = vmatprep.subr.mxu0 %v1347
        %2726 = vmatpush1.msra.mxu0 %v1346
        %2727 = vmatprep.subr.mxu0 %v1349
        %2728 = vmatpush1.msra.mxu0 %v1348
        %2729 = vmatprep.subr.mxu0 %v1351
        %2730 = vmatpush1.msra.mxu0 %v1350
        %2731 = vmatprep.subr.mxu0 %v1353
        %2732 = vmatpush1.msra.mxu0 %v1352
        %2733 = vmatprep.subr.mxu0 %v1355
        %2734 = vmatpush1.msra.mxu0 %v1354
        %2735 = vmatprep.subr.mxu0 %v1357
        %2736 = vmatpush1.msra.mxu0 %v1356
        %2737 = vmatprep.subr.mxu0 %v1359
        %2738 = vmatpush1.msra.mxu0 %v1358
        %2739 = vmatprep.subr.mxu0 %v1361
        %2740 = vmatpush1.msra.mxu0 %v1360
        %2741 = vmatprep.subr.mxu0 %v1363
        %2742 = vmatpush1.msra.mxu0 %v1362
        %2743 = vmatprep.subr.mxu0 %v1365
        %2744 = vmatpush1.msra.mxu0 %v1364
        %2745 = vmatprep.subr.mxu0 0.0
        %2746 = vmatpush1.msra.mxu0 0.0
        %2747 = vmatprep.subr.mxu0 0.0
        %2748 = vmatpush1.msra.mxu0 0.0
        %2749 = vmatprep.subr.mxu0 0.0
        %2750 = vmatpush1.msra.mxu0 0.0
        %2751 = vmatprep.subr.mxu0 0.0
        %2752 = vmatpush1.msra.mxu0 0.0
        %2753 = vmatprep.subr.mxu0 0.0
        %2754 = vmatpush1.msra.mxu0 0.0
        %2755 = vmatprep.subr.mxu0 0.0
        %2756 = vmatpush1.msra.mxu0 0.0
        %2757 = vmatprep.subr.mxu0 0.0
        %2758 = vmatpush1.msra.mxu0 0.0
        %2759 = vmatprep.subr.mxu0 0.0
        %2760 = vmatpush1.msra.mxu0 0.0
        %2761 = vmatprep.mubr.f32.mxu0 %v2695
        %2762 = vmatmul.mubr.f32.gmra.mrb[0].mxu0 %v2690
        %v2763 = vpop.f32.mrb[0].mxu0
        %v2764 = vadd.f32 0.0, %v2763
        %v2765 = vpop.f32.mrb[0].mxu0
        %v2766 = vadd.f32 0.0, %v2765
        %2767 = vdwg.mxu0
        %v2768 = vadd.f32 %v2616, %v2764
        %v2769 = vadd.f32 %v2617, %v2766
        %s2770 = scalar_lea.vmem %s5, 48
        %v2771 = vld [vmem:[%s2770] sm:$0xff]
        %v2773 = vsel %vm1863, %v2771, 0
        %2775 = vmatprep.subr.mxu0 %v1861
        %2776 = vmatpush1.msra.mxu0 %v1860
        %2777 = vmatprep.subr.mxu0 0.0
        %2778 = vmatpush1.msra.mxu0 0.0
        %2779 = vmatprep.subr.mxu0 0.0
        %2780 = vmatpush1.msra.mxu0 0.0
        %2781 = vmatprep.subr.mxu0 0.0
        %2782 = vmatpush1.msra.mxu0 0.0
        %2783 = vmatprep.subr.mxu0 0.0
        %2784 = vmatpush1.msra.mxu0 0.0
        %2785 = vmatprep.subr.mxu0 0.0
        %2786 = vmatpush1.msra.mxu0 0.0
        %2787 = vmatprep.subr.mxu0 0.0
        %2788 = vmatpush1.msra.mxu0 0.0
        %2789 = vmatprep.subr.mxu0 0.0
        %2790 = vmatpush1.msra.mxu0 0.0
        %2791 = vmatprep.subr.mxu0 0.0
        %2792 = vmatpush1.msra.mxu0 0.0
        %2793 = vmatprep.subr.mxu0 0.0
        %2794 = vmatpush1.msra.mxu0 0.0
        %2795 = vmatprep.subr.mxu0 0.0
        %2796 = vmatpush1.msra.mxu0 0.0
        %2797 = vmatprep.subr.mxu0 0.0
        %2798 = vmatpush1.msra.mxu0 0.0
        %2799 = vmatprep.subr.mxu0 0.0
        %2800 = vmatpush1.msra.mxu0 0.0
        %2801 = vmatprep.subr.mxu0 0.0
        %2802 = vmatpush1.msra.mxu0 0.0
        %2803 = vmatprep.subr.mxu0 0.0
        %2804 = vmatpush1.msra.mxu0 0.0
        %2805 = vmatprep.subr.mxu0 0.0
        %2806 = vmatpush1.msra.mxu0 0.0
        %2807 = vmatprep.subr.mxu0 0.0
        %2808 = vmatpush1.msra.mxu0 0.0
        %2809 = vmatprep.subr.mxu0 0.0
        %2810 = vmatpush1.msra.mxu0 0.0
        %2811 = vmatprep.subr.mxu0 0.0
        %2812 = vmatpush1.msra.mxu0 0.0
        %2813 = vmatprep.subr.mxu0 0.0
        %2814 = vmatpush1.msra.mxu0 0.0
        %2815 = vmatprep.subr.mxu0 0.0
        %2816 = vmatpush1.msra.mxu0 0.0
        %2817 = vmatprep.subr.mxu0 0.0
        %2818 = vmatpush1.msra.mxu0 0.0
        %2819 = vmatprep.subr.mxu0 0.0
        %2820 = vmatpush1.msra.mxu0 0.0
        %2821 = vmatprep.subr.mxu0 0.0
        %2822 = vmatpush1.msra.mxu0 0.0
        %2823 = vmatprep.subr.mxu0 0.0
        %2824 = vmatpush1.msra.mxu0 0.0
        %2825 = vmatprep.subr.mxu0 0.0
        %2826 = vmatpush1.msra.mxu0 0.0
        %2827 = vmatprep.subr.mxu0 0.0
        %2828 = vmatpush1.msra.mxu0 0.0
        %2829 = vmatprep.subr.mxu0 0.0
        %2830 = vmatpush1.msra.mxu0 0.0
        %2831 = vmatprep.subr.mxu0 0.0
        %2832 = vmatpush1.msra.mxu0 0.0
        %2833 = vmatprep.subr.mxu0 0.0
        %2834 = vmatpush1.msra.mxu0 0.0
        %2835 = vmatprep.subr.mxu0 0.0
        %2836 = vmatpush1.msra.mxu0 0.0
        %2837 = vmatprep.subr.mxu0 0.0
        %2838 = vmatpush1.msra.mxu0 0.0
        %2839 = vmatprep.mubr.f32.mxu0 0.0
        %2840 = vmatmul.mubr.f32.gmra.mrb[0].mxu0 %v2773
        %v2841 = vpop.f32.mrb[0].mxu0
        %v2842 = vadd.f32 0.0, %v2841
        %v2843 = vpop.f32.mrb[0].mxu0
        %v2844 = vadd.f32 0.0, %v2843
        %2845 = vdwg.mxu0
        %v2847 = vsel %vm757, %v2844, 0
        %2849 = vmatprep.subr.mxu0 %v1453
        %2850 = vmatpush1.msra.mxu0 %v1452
        %2851 = vmatprep.subr.mxu0 %v1455
        %2852 = vmatpush1.msra.mxu0 %v1454
        %2853 = vmatprep.subr.mxu0 %v1457
        %2854 = vmatpush1.msra.mxu0 %v1456
        %2855 = vmatprep.subr.mxu0 %v1459
        %2856 = vmatpush1.msra.mxu0 %v1458
        %2857 = vmatprep.subr.mxu0 %v1461
        %2858 = vmatpush1.msra.mxu0 %v1460
        %2859 = vmatprep.subr.mxu0 %v1463
        %2860 = vmatpush1.msra.mxu0 %v1462
        %2861 = vmatprep.subr.mxu0 %v1465
        %2862 = vmatpush1.msra.mxu0 %v1464
        %2863 = vmatprep.subr.mxu0 %v1467
        %2864 = vmatpush1.msra.mxu0 %v1466
        %2865 = vmatprep.subr.mxu0 %v1469
        %2866 = vmatpush1.msra.mxu0 %v1468
        %2867 = vmatprep.subr.mxu0 %v1471
        %2868 = vmatpush1.msra.mxu0 %v1470
        %2869 = vmatprep.subr.mxu0 %v1473
        %2870 = vmatpush1.msra.mxu0 %v1472
        %2871 = vmatprep.subr.mxu0 %v1475
        %2872 = vmatpush1.msra.mxu0 %v1474
        %2873 = vmatprep.subr.mxu0 %v1477
        %2874 = vmatpush1.msra.mxu0 %v1476
        %2875 = vmatprep.subr.mxu0 %v1479
        %2876 = vmatpush1.msra.mxu0 %v1478
        %2877 = vmatprep.subr.mxu0 %v1481
        %2878 = vmatpush1.msra.mxu0 %v1480
        %2879 = vmatprep.subr.mxu0 %v1483
        %2880 = vmatpush1.msra.mxu0 %v1482
        %2881 = vmatprep.subr.mxu0 %v1485
        %2882 = vmatpush1.msra.mxu0 %v1484
        %2883 = vmatprep.subr.mxu0 %v1487
        %2884 = vmatpush1.msra.mxu0 %v1486
        %2885 = vmatprep.subr.mxu0 %v1489
        %2886 = vmatpush1.msra.mxu0 %v1488
        %2887 = vmatprep.subr.mxu0 %v1491
        %2888 = vmatpush1.msra.mxu0 %v1490
        %2889 = vmatprep.subr.mxu0 %v1493
        %2890 = vmatpush1.msra.mxu0 %v1492
        %2891 = vmatprep.subr.mxu0 %v1495
        %2892 = vmatpush1.msra.mxu0 %v1494
        %2893 = vmatprep.subr.mxu0 %v1497
        %2894 = vmatpush1.msra.mxu0 %v1496
        %2895 = vmatprep.subr.mxu0 %v1499
        %2896 = vmatpush1.msra.mxu0 %v1498
        %2897 = vmatprep.subr.mxu0 0.0
        %2898 = vmatpush1.msra.mxu0 0.0
        %2899 = vmatprep.subr.mxu0 0.0
        %2900 = vmatpush1.msra.mxu0 0.0
        %2901 = vmatprep.subr.mxu0 0.0
        %2902 = vmatpush1.msra.mxu0 0.0
        %2903 = vmatprep.subr.mxu0 0.0
        %2904 = vmatpush1.msra.mxu0 0.0
        %2905 = vmatprep.subr.mxu0 0.0
        %2906 = vmatpush1.msra.mxu0 0.0
        %2907 = vmatprep.subr.mxu0 0.0
        %2908 = vmatpush1.msra.mxu0 0.0
        %2909 = vmatprep.subr.mxu0 0.0
        %2910 = vmatpush1.msra.mxu0 0.0
        %2911 = vmatprep.subr.mxu0 0.0
        %2912 = vmatpush1.msra.mxu0 0.0
        %2913 = vmatprep.mubr.f32.mxu0 %v2847
        %2914 = vmatmul.mubr.f32.gmra.mrb[0].mxu0 %v2842
        %v2915 = vpop.f32.mrb[0].mxu0
        %v2916 = vadd.f32 0.0, %v2915
        %v2917 = vpop.f32.mrb[0].mxu0
        %v2918 = vadd.f32 0.0, %v2917
        %2919 = vdwg.mxu0
        %v2920 = vadd.f32 %v2768, %v2916
        %v2921 = vadd.f32 %v2769, %v2918
        %s2922 = scalar_lea.vmem %s5, 56
        %v2923 = vld [vmem:[%s2922] sm:$0xff]
        %v2925 = vsel %vm1863, %v2923, 0
        %2927 = vmatprep.subr.mxu0 %v1861
        %2928 = vmatpush1.msra.mxu0 %v1860
        %2929 = vmatprep.subr.mxu0 0.0
        %2930 = vmatpush1.msra.mxu0 0.0
        %2931 = vmatprep.subr.mxu0 0.0
        %2932 = vmatpush1.msra.mxu0 0.0
        %2933 = vmatprep.subr.mxu0 0.0
        %2934 = vmatpush1.msra.mxu0 0.0
        %2935 = vmatprep.subr.mxu0 0.0
        %2936 = vmatpush1.msra.mxu0 0.0
        %2937 = vmatprep.subr.mxu0 0.0
        %2938 = vmatpush1.msra.mxu0 0.0
        %2939 = vmatprep.subr.mxu0 0.0
        %2940 = vmatpush1.msra.mxu0 0.0
        %2941 = vmatprep.subr.mxu0 0.0
        %2942 = vmatpush1.msra.mxu0 0.0
        %2943 = vmatprep.subr.mxu0 0.0
        %2944 = vmatpush1.msra.mxu0 0.0
        %2945 = vmatprep.subr.mxu0 0.0
        %2946 = vmatpush1.msra.mxu0 0.0
        %2947 = vmatprep.subr.mxu0 0.0
        %2948 = vmatpush1.msra.mxu0 0.0
        %2949 = vmatprep.subr.mxu0 0.0
        %2950 = vmatpush1.msra.mxu0 0.0
        %2951 = vmatprep.subr.mxu0 0.0
        %2952 = vmatpush1.msra.mxu0 0.0
        %2953 = vmatprep.subr.mxu0 0.0
        %2954 = vmatpush1.msra.mxu0 0.0
        %2955 = vmatprep.subr.mxu0 0.0
        %2956 = vmatpush1.msra.mxu0 0.0
        %2957 = vmatprep.subr.mxu0 0.0
        %2958 = vmatpush1.msra.mxu0 0.0
        %2959 = vmatprep.subr.mxu0 0.0
        %2960 = vmatpush1.msra.mxu0 0.0
        %2961 = vmatprep.subr.mxu0 0.0
        %2962 = vmatpush1.msra.mxu0 0.0
        %2963 = vmatprep.subr.mxu0 0.0
        %2964 = vmatpush1.msra.mxu0 0.0
        %2965 = vmatprep.subr.mxu0 0.0
        %2966 = vmatpush1.msra.mxu0 0.0
        %2967 = vmatprep.subr.mxu0 0.0
        %2968 = vmatpush1.msra.mxu0 0.0
        %2969 = vmatprep.subr.mxu0 0.0
        %2970 = vmatpush1.msra.mxu0 0.0
        %2971 = vmatprep.subr.mxu0 0.0
        %2972 = vmatpush1.msra.mxu0 0.0
        %2973 = vmatprep.subr.mxu0 0.0
        %2974 = vmatpush1.msra.mxu0 0.0
        %2975 = vmatprep.subr.mxu0 0.0
        %2976 = vmatpush1.msra.mxu0 0.0
        %2977 = vmatprep.subr.mxu0 0.0
        %2978 = vmatpush1.msra.mxu0 0.0
        %2979 = vmatprep.subr.mxu0 0.0
        %2980 = vmatpush1.msra.mxu0 0.0
        %2981 = vmatprep.subr.mxu0 0.0
        %2982 = vmatpush1.msra.mxu0 0.0
        %2983 = vmatprep.subr.mxu0 0.0
        %2984 = vmatpush1.msra.mxu0 0.0
        %2985 = vmatprep.subr.mxu0 0.0
        %2986 = vmatpush1.msra.mxu0 0.0
        %2987 = vmatprep.subr.mxu0 0.0
        %2988 = vmatpush1.msra.mxu0 0.0
        %2989 = vmatprep.subr.mxu0 0.0
        %2990 = vmatpush1.msra.mxu0 0.0
        %2991 = vmatprep.mubr.f32.mxu0 0.0
        %2992 = vmatmul.mubr.f32.gmra.mrb[0].mxu0 %v2925
        %v2993 = vpop.f32.mrb[0].mxu0
        %v2994 = vadd.f32 0.0, %v2993
        %v2995 = vpop.f32.mrb[0].mxu0
        %v2996 = vadd.f32 0.0, %v2995
        %2997 = vdwg.mxu0
        %v2999 = vsel %vm757, %v2996, 0
        %3001 = vmatprep.subr.mxu0 %v1587
        %3002 = vmatpush1.msra.mxu0 %v1586
        %3003 = vmatprep.subr.mxu0 %v1589
        %3004 = vmatpush1.msra.mxu0 %v1588
        %3005 = vmatprep.subr.mxu0 %v1591
        %3006 = vmatpush1.msra.mxu0 %v1590
        %3007 = vmatprep.subr.mxu0 %v1593
        %3008 = vmatpush1.msra.mxu0 %v1592
        %3009 = vmatprep.subr.mxu0 %v1595
        %3010 = vmatpush1.msra.mxu0 %v1594
        %3011 = vmatprep.subr.mxu0 %v1597
        %3012 = vmatpush1.msra.mxu0 %v1596
        %3013 = vmatprep.subr.mxu0 %v1599
        %3014 = vmatpush1.msra.mxu0 %v1598
        %3015 = vmatprep.subr.mxu0 %v1601
        %3016 = vmatpush1.msra.mxu0 %v1600
        %3017 = vmatprep.subr.mxu0 %v1603
        %3018 = vmatpush1.msra.mxu0 %v1602
        %3019 = vmatprep.subr.mxu0 %v1605
        %3020 = vmatpush1.msra.mxu0 %v1604
        %3021 = vmatprep.subr.mxu0 %v1607
        %3022 = vmatpush1.msra.mxu0 %v1606
        %3023 = vmatprep.subr.mxu0 %v1609
        %3024 = vmatpush1.msra.mxu0 %v1608
        %3025 = vmatprep.subr.mxu0 %v1611
        %3026 = vmatpush1.msra.mxu0 %v1610
        %3027 = vmatprep.subr.mxu0 %v1613
        %3028 = vmatpush1.msra.mxu0 %v1612
        %3029 = vmatprep.subr.mxu0 %v1615
        %3030 = vmatpush1.msra.mxu0 %v1614
        %3031 = vmatprep.subr.mxu0 %v1617
        %3032 = vmatpush1.msra.mxu0 %v1616
        %3033 = vmatprep.subr.mxu0 %v1619
        %3034 = vmatpush1.msra.mxu0 %v1618
        %3035 = vmatprep.subr.mxu0 %v1621
        %3036 = vmatpush1.msra.mxu0 %v1620
        %3037 = vmatprep.subr.mxu0 %v1623
        %3038 = vmatpush1.msra.mxu0 %v1622
        %3039 = vmatprep.subr.mxu0 %v1625
        %3040 = vmatpush1.msra.mxu0 %v1624
        %3041 = vmatprep.subr.mxu0 %v1627
        %3042 = vmatpush1.msra.mxu0 %v1626
        %3043 = vmatprep.subr.mxu0 %v1629
        %3044 = vmatpush1.msra.mxu0 %v1628
        %3045 = vmatprep.subr.mxu0 %v1631
        %3046 = vmatpush1.msra.mxu0 %v1630
        %3047 = vmatprep.subr.mxu0 %v1633
        %3048 = vmatpush1.msra.mxu0 %v1632
        %3049 = vmatprep.subr.mxu0 0.0
        %3050 = vmatpush1.msra.mxu0 0.0
        %3051 = vmatprep.subr.mxu0 0.0
        %3052 = vmatpush1.msra.mxu0 0.0
        %3053 = vmatprep.subr.mxu0 0.0
        %3054 = vmatpush1.msra.mxu0 0.0
        %3055 = vmatprep.subr.mxu0 0.0
        %3056 = vmatpush1.msra.mxu0 0.0
        %3057 = vmatprep.subr.mxu0 0.0
        %3058 = vmatpush1.msra.mxu0 0.0
        %3059 = vmatprep.subr.mxu0 0.0
        %3060 = vmatpush1.msra.mxu0 0.0
        %3061 = vmatprep.subr.mxu0 0.0
        %3062 = vmatpush1.msra.mxu0 0.0
        %3063 = vmatprep.subr.mxu0 0.0
        %3064 = vmatpush1.msra.mxu0 0.0
        %3065 = vmatprep.mubr.f32.mxu0 %v2999
        %3066 = vmatmul.mubr.f32.gmra.mrb[0].mxu0 %v2994
        %v3067 = vpop.f32.mrb[0].mxu0
        %v3068 = vadd.f32 0.0, %v3067
        %v3069 = vpop.f32.mrb[0].mxu0
        %v3070 = vadd.f32 0.0, %v3069
        %3071 = vdwg.mxu0
        %v3072 = vadd.f32 %v2920, %v3068
        %v3073 = vadd.f32 %v2921, %v3070
        %s3074 = scalar_lea.vmem %s5, 64
        %v3075 = vld [vmem:[%s3074] sm:$0xff]
        %v3077 = vsel %vm1863, %v3075, 0
        %3079 = vmatprep.subr.mxu0 %v1861
        %3080 = vmatpush1.msra.mxu0 %v1860
        %3081 = vmatprep.subr.mxu0 0.0
        %3082 = vmatpush1.msra.mxu0 0.0
        %3083 = vmatprep.subr.mxu0 0.0
        %3084 = vmatpush1.msra.mxu0 0.0
        %3085 = vmatprep.subr.mxu0 0.0
        %3086 = vmatpush1.msra.mxu0 0.0
        %3087 = vmatprep.subr.mxu0 0.0
        %3088 = vmatpush1.msra.mxu0 0.0
        %3089 = vmatprep.subr.mxu0 0.0
        %3090 = vmatpush1.msra.mxu0 0.0
        %3091 = vmatprep.subr.mxu0 0.0
        %3092 = vmatpush1.msra.mxu0 0.0
        %3093 = vmatprep.subr.mxu0 0.0
        %3094 = vmatpush1.msra.mxu0 0.0
        %3095 = vmatprep.subr.mxu0 0.0
        %3096 = vmatpush1.msra.mxu0 0.0
        %3097 = vmatprep.subr.mxu0 0.0
        %3098 = vmatpush1.msra.mxu0 0.0
        %3099 = vmatprep.subr.mxu0 0.0
        %3100 = vmatpush1.msra.mxu0 0.0
        %3101 = vmatprep.subr.mxu0 0.0
        %3102 = vmatpush1.msra.mxu0 0.0
        %3103 = vmatprep.subr.mxu0 0.0
        %3104 = vmatpush1.msra.mxu0 0.0
        %3105 = vmatprep.subr.mxu0 0.0
        %3106 = vmatpush1.msra.mxu0 0.0
        %3107 = vmatprep.subr.mxu0 0.0
        %3108 = vmatpush1.msra.mxu0 0.0
        %3109 = vmatprep.subr.mxu0 0.0
        %3110 = vmatpush1.msra.mxu0 0.0
        %3111 = vmatprep.subr.mxu0 0.0
        %3112 = vmatpush1.msra.mxu0 0.0
        %3113 = vmatprep.subr.mxu0 0.0
        %3114 = vmatpush1.msra.mxu0 0.0
        %3115 = vmatprep.subr.mxu0 0.0
        %3116 = vmatpush1.msra.mxu0 0.0
        %3117 = vmatprep.subr.mxu0 0.0
        %3118 = vmatpush1.msra.mxu0 0.0
        %3119 = vmatprep.subr.mxu0 0.0
        %3120 = vmatpush1.msra.mxu0 0.0
        %3121 = vmatprep.subr.mxu0 0.0
        %3122 = vmatpush1.msra.mxu0 0.0
        %3123 = vmatprep.subr.mxu0 0.0
        %3124 = vmatpush1.msra.mxu0 0.0
        %3125 = vmatprep.subr.mxu0 0.0
        %3126 = vmatpush1.msra.mxu0 0.0
        %3127 = vmatprep.subr.mxu0 0.0
        %3128 = vmatpush1.msra.mxu0 0.0
        %3129 = vmatprep.subr.mxu0 0.0
        %3130 = vmatpush1.msra.mxu0 0.0
        %3131 = vmatprep.subr.mxu0 0.0
        %3132 = vmatpush1.msra.mxu0 0.0
        %3133 = vmatprep.subr.mxu0 0.0
        %3134 = vmatpush1.msra.mxu0 0.0
        %3135 = vmatprep.subr.mxu0 0.0
        %3136 = vmatpush1.msra.mxu0 0.0
        %3137 = vmatprep.subr.mxu0 0.0
        %3138 = vmatpush1.msra.mxu0 0.0
        %3139 = vmatprep.subr.mxu0 0.0
        %3140 = vmatpush1.msra.mxu0 0.0
        %3141 = vmatprep.subr.mxu0 0.0
        %3142 = vmatpush1.msra.mxu0 0.0
        %3143 = vmatprep.mubr.f32.mxu0 0.0
        %3144 = vmatmul.mubr.f32.gmra.mrb[0].mxu0 %v3077
        %v3145 = vpop.f32.mrb[0].mxu0
        %v3146 = vadd.f32 0.0, %v3145
        %v3147 = vpop.f32.mrb[0].mxu0
        %v3148 = vadd.f32 0.0, %v3147
        %3149 = vdwg.mxu0
        %v3151 = vsel %vm757, %v3148, 0
        %3153 = vmatprep.subr.mxu0 %v1721
        %3154 = vmatpush1.msra.mxu0 %v1720
        %3155 = vmatprep.subr.mxu0 %v1723
        %3156 = vmatpush1.msra.mxu0 %v1722
        %3157 = vmatprep.subr.mxu0 %v1725
        %3158 = vmatpush1.msra.mxu0 %v1724
        %3159 = vmatprep.subr.mxu0 %v1727
        %3160 = vmatpush1.msra.mxu0 %v1726
        %3161 = vmatprep.subr.mxu0 %v1729
        %3162 = vmatpush1.msra.mxu0 %v1728
        %3163 = vmatprep.subr.mxu0 %v1731
        %3164 = vmatpush1.msra.mxu0 %v1730
        %3165 = vmatprep.subr.mxu0 %v1733
        %3166 = vmatpush1.msra.mxu0 %v1732
        %3167 = vmatprep.subr.mxu0 %v1735
        %3168 = vmatpush1.msra.mxu0 %v1734
        %3169 = vmatprep.subr.mxu0 %v1737
        %3170 = vmatpush1.msra.mxu0 %v1736
        %3171 = vmatprep.subr.mxu0 %v1739
        %3172 = vmatpush1.msra.mxu0 %v1738
        %3173 = vmatprep.subr.mxu0 %v1741
        %3174 = vmatpush1.msra.mxu0 %v1740
        %3175 = vmatprep.subr.mxu0 %v1743
        %3176 = vmatpush1.msra.mxu0 %v1742
        %3177 = vmatprep.subr.mxu0 %v1745
        %3178 = vmatpush1.msra.mxu0 %v1744
        %3179 = vmatprep.subr.mxu0 %v1747
        %3180 = vmatpush1.msra.mxu0 %v1746
        %3181 = vmatprep.subr.mxu0 %v1749
        %3182 = vmatpush1.msra.mxu0 %v1748
        %3183 = vmatprep.subr.mxu0 %v1751
        %3184 = vmatpush1.msra.mxu0 %v1750
        %3185 = vmatprep.subr.mxu0 %v1753
        %3186 = vmatpush1.msra.mxu0 %v1752
        %3187 = vmatprep.subr.mxu0 %v1755
        %3188 = vmatpush1.msra.mxu0 %v1754
        %3189 = vmatprep.subr.mxu0 %v1757
        %3190 = vmatpush1.msra.mxu0 %v1756
        %3191 = vmatprep.subr.mxu0 %v1759
        %3192 = vmatpush1.msra.mxu0 %v1758
        %3193 = vmatprep.subr.mxu0 %v1761
        %3194 = vmatpush1.msra.mxu0 %v1760
        %3195 = vmatprep.subr.mxu0 %v1763
        %3196 = vmatpush1.msra.mxu0 %v1762
        %3197 = vmatprep.subr.mxu0 %v1765
        %3198 = vmatpush1.msra.mxu0 %v1764
        %3199 = vmatprep.subr.mxu0 %v1767
        %3200 = vmatpush1.msra.mxu0 %v1766
        %3201 = vmatprep.subr.mxu0 0.0
        %3202 = vmatpush1.msra.mxu0 0.0
        %3203 = vmatprep.subr.mxu0 0.0
        %3204 = vmatpush1.msra.mxu0 0.0
        %3205 = vmatprep.subr.mxu0 0.0
        %3206 = vmatpush1.msra.mxu0 0.0
        %3207 = vmatprep.subr.mxu0 0.0
        %3208 = vmatpush1.msra.mxu0 0.0
        %3209 = vmatprep.subr.mxu0 0.0
        %3210 = vmatpush1.msra.mxu0 0.0
        %3211 = vmatprep.subr.mxu0 0.0
        %3212 = vmatpush1.msra.mxu0 0.0
        %3213 = vmatprep.subr.mxu0 0.0
        %3214 = vmatpush1.msra.mxu0 0.0
        %3215 = vmatprep.subr.mxu0 0.0
        %3216 = vmatpush1.msra.mxu0 0.0
        %3217 = vmatprep.mubr.f32.mxu0 %v3151
        %3218 = vmatmul.mubr.f32.gmra.mrb[0].mxu0 %v3146
        %v3219 = vpop.f32.mrb[0].mxu0
        %v3220 = vadd.f32 0.0, %v3219
        %v3221 = vpop.f32.mrb[0].mxu0
        %v3222 = vadd.f32 0.0, %v3221
        %3223 = vdwg.mxu0
        %v3224 = vadd.f32 %v3072, %v3220
        %v3225 = vadd.f32 %v3073, %v3222
        %v3226 = vld [vmem:[%s6] sm:$0xff]
        %3228 = vset.pattern.permute.xlu0 0
        %3229 = vperm.xlu0 %3228, %v3226
        %v3230 = vpop.permute.xlu0 %3229
        %v3232 = vmul.f32 %v3224, %v3230
        %v3233 = vmul.f32 %v3225, %v3230
        %v3234 = vld [vmem:[%s7] sm:$0xff]
        %3236 = vset.pattern.permute.xlu0 0
        %3237 = vperm.xlu0 %3236, %v3234
        %v3238 = vpop.permute.xlu0 %3237
        %v3240 = vadd.f32 %v3232, %v3238
        %v3241 = vadd.f32 %v3233, %v3238
        %v3242 = vmax.f32 %v3240, 0.0
        %v3243 = vmax.f32 %v3241, 0.0
        %v3244 = vadd.f32 %v3242, %v642
        %v3245 = vadd.f32 %v3243, %v646
        %v3246 = vsel %vm757, %v3245, 0.0
        %v3247 = vadd.f32 %v3244, %v3246
        %3248 = vadd.xlane.f32.xlu0 %v3247
        %v3249 = vpop.xlane.xlu0 %3248
        %v3250 = vrcp.pop 192.0
        %v3251 = vmul.f32 %v3249, %v3250
        %v3252 = vsub.f32 %v3244, %v3251
        %v3253 = vsub.f32 %v3245, %v3251
        %v3254 = vmul.f32 %v3252, %v3252
        %v3255 = vmul.f32 %v3253, %v3253
        %v3256 = vsel %vm757, %v3255, 0.0
        %v3257 = vadd.f32 %v3254, %v3256
        %3258 = vadd.xlane.f32.xlu0 %v3257
        %v3259 = vpop.xlane.xlu0 %3258
        %v3260 = vmul.f32 %v3259, %v3250
        %v3261 = vadd.f32 %v3260, 1e-05
        %v3262 = vrsqrt.pop %v3261
        %v3263 = vmul.f32 %v3252, %v3262
        %v3264 = vmul.f32 %v3253, %v3262
        %v3265 = vld [vmem:[%s8] sm:$0xff]
        %v3267 = vsel %vm1863, %v3265, 0
        %3269 = vmatprep.subr.mxu0 %v3264
        %3270 = vmatpush1.msra.mxu0 %v3263
        %3271 = vmatprep.subr.mxu0 0.0
        %3272 = vmatpush1.msra.mxu0 0.0
        %3273 = vmatprep.subr.mxu0 0.0
        %3274 = vmatpush1.msra.mxu0 0.0
        %3275 = vmatprep.subr.mxu0 0.0
        %3276 = vmatpush1.msra.mxu0 0.0
        %3277 = vmatprep.subr.mxu0 0.0
        %3278 = vmatpush1.msra.mxu0 0.0
        %3279 = vmatprep.subr.mxu0 0.0
        %3280 = vmatpush1.msra.mxu0 0.0
        %3281 = vmatprep.subr.mxu0 0.0
        %3282 = vmatpush1.msra.mxu0 0.0
        %3283 = vmatprep.subr.mxu0 0.0
        %3284 = vmatpush1.msra.mxu0 0.0
        %3285 = vmatprep.subr.mxu0 0.0
        %3286 = vmatpush1.msra.mxu0 0.0
        %3287 = vmatprep.subr.mxu0 0.0
        %3288 = vmatpush1.msra.mxu0 0.0
        %3289 = vmatprep.subr.mxu0 0.0
        %3290 = vmatpush1.msra.mxu0 0.0
        %3291 = vmatprep.subr.mxu0 0.0
        %3292 = vmatpush1.msra.mxu0 0.0
        %3293 = vmatprep.subr.mxu0 0.0
        %3294 = vmatpush1.msra.mxu0 0.0
        %3295 = vmatprep.subr.mxu0 0.0
        %3296 = vmatpush1.msra.mxu0 0.0
        %3297 = vmatprep.subr.mxu0 0.0
        %3298 = vmatpush1.msra.mxu0 0.0
        %3299 = vmatprep.subr.mxu0 0.0
        %3300 = vmatpush1.msra.mxu0 0.0
        %3301 = vmatprep.subr.mxu0 0.0
        %3302 = vmatpush1.msra.mxu0 0.0
        %3303 = vmatprep.subr.mxu0 0.0
        %3304 = vmatpush1.msra.mxu0 0.0
        %3305 = vmatprep.subr.mxu0 0.0
        %3306 = vmatpush1.msra.mxu0 0.0
        %3307 = vmatprep.subr.mxu0 0.0
        %3308 = vmatpush1.msra.mxu0 0.0
        %3309 = vmatprep.subr.mxu0 0.0
        %3310 = vmatpush1.msra.mxu0 0.0
        %3311 = vmatprep.subr.mxu0 0.0
        %3312 = vmatpush1.msra.mxu0 0.0
        %3313 = vmatprep.subr.mxu0 0.0
        %3314 = vmatpush1.msra.mxu0 0.0
        %3315 = vmatprep.subr.mxu0 0.0
        %3316 = vmatpush1.msra.mxu0 0.0
        %3317 = vmatprep.subr.mxu0 0.0
        %3318 = vmatpush1.msra.mxu0 0.0
        %3319 = vmatprep.subr.mxu0 0.0
        %3320 = vmatpush1.msra.mxu0 0.0
        %3321 = vmatprep.subr.mxu0 0.0
        %3322 = vmatpush1.msra.mxu0 0.0
        %3323 = vmatprep.subr.mxu0 0.0
        %3324 = vmatpush1.msra.mxu0 0.0
        %3325 = vmatprep.subr.mxu0 0.0
        %3326 = vmatpush1.msra.mxu0 0.0
        %3327 = vmatprep.subr.mxu0 0.0
        %3328 = vmatpush1.msra.mxu0 0.0
        %3329 = vmatprep.subr.mxu0 0.0
        %3330 = vmatpush1.msra.mxu0 0.0
        %3331 = vmatprep.subr.mxu0 0.0
        %3332 = vmatpush1.msra.mxu0 0.0
        %3333 = vmatprep.mubr.f32.mxu0 0.0
        %3334 = vmatmul.mubr.f32.gmra.mrb[0].mxu0 %v3267
        %v3335 = vpop.f32.mrb[0].mxu0
        %v3336 = vadd.f32 0.0, %v3335
        %v3337 = vpop.f32.mrb[0].mxu0
        %v3338 = vadd.f32 0.0, %v3337
        %3339 = vdwg.mxu0
        %s3340 = scalar_lea.vmem %s8, 8
        %v3341 = vld [vmem:[%s3340] sm:$0xff]
        %v3343 = vsel %vm1863, %v3341, 0
        %3345 = vmatprep.subr.mxu0 %v3264
        %3346 = vmatpush1.msra.mxu0 %v3263
        %3347 = vmatprep.subr.mxu0 0.0
        %3348 = vmatpush1.msra.mxu0 0.0
        %3349 = vmatprep.subr.mxu0 0.0
        %3350 = vmatpush1.msra.mxu0 0.0
        %3351 = vmatprep.subr.mxu0 0.0
        %3352 = vmatpush1.msra.mxu0 0.0
        %3353 = vmatprep.subr.mxu0 0.0
        %3354 = vmatpush1.msra.mxu0 0.0
        %3355 = vmatprep.subr.mxu0 0.0
        %3356 = vmatpush1.msra.mxu0 0.0
        %3357 = vmatprep.subr.mxu0 0.0
        %3358 = vmatpush1.msra.mxu0 0.0
        %3359 = vmatprep.subr.mxu0 0.0
        %3360 = vmatpush1.msra.mxu0 0.0
        %3361 = vmatprep.subr.mxu0 0.0
        %3362 = vmatpush1.msra.mxu0 0.0
        %3363 = vmatprep.subr.mxu0 0.0
        %3364 = vmatpush1.msra.mxu0 0.0
        %3365 = vmatprep.subr.mxu0 0.0
        %3366 = vmatpush1.msra.mxu0 0.0
        %3367 = vmatprep.subr.mxu0 0.0
        %3368 = vmatpush1.msra.mxu0 0.0
        %3369 = vmatprep.subr.mxu0 0.0
        %3370 = vmatpush1.msra.mxu0 0.0
        %3371 = vmatprep.subr.mxu0 0.0
        %3372 = vmatpush1.msra.mxu0 0.0
        %3373 = vmatprep.subr.mxu0 0.0
        %3374 = vmatpush1.msra.mxu0 0.0
        %3375 = vmatprep.subr.mxu0 0.0
        %3376 = vmatpush1.msra.mxu0 0.0
        %3377 = vmatprep.subr.mxu0 0.0
        %3378 = vmatpush1.msra.mxu0 0.0
        %3379 = vmatprep.subr.mxu0 0.0
        %3380 = vmatpush1.msra.mxu0 0.0
        %3381 = vmatprep.subr.mxu0 0.0
        %3382 = vmatpush1.msra.mxu0 0.0
        %3383 = vmatprep.subr.mxu0 0.0
        %3384 = vmatpush1.msra.mxu0 0.0
        %3385 = vmatprep.subr.mxu0 0.0
        %3386 = vmatpush1.msra.mxu0 0.0
        %3387 = vmatprep.subr.mxu0 0.0
        %3388 = vmatpush1.msra.mxu0 0.0
        %3389 = vmatprep.subr.mxu0 0.0
        %3390 = vmatpush1.msra.mxu0 0.0
        %3391 = vmatprep.subr.mxu0 0.0
        %3392 = vmatpush1.msra.mxu0 0.0
        %3393 = vmatprep.subr.mxu0 0.0
        %3394 = vmatpush1.msra.mxu0 0.0
        %3395 = vmatprep.subr.mxu0 0.0
        %3396 = vmatpush1.msra.mxu0 0.0
        %3397 = vmatprep.subr.mxu0 0.0
        %3398 = vmatpush1.msra.mxu0 0.0
        %3399 = vmatprep.subr.mxu0 0.0
        %3400 = vmatpush1.msra.mxu0 0.0
        %3401 = vmatprep.subr.mxu0 0.0
        %3402 = vmatpush1.msra.mxu0 0.0
        %3403 = vmatprep.subr.mxu0 0.0
        %3404 = vmatpush1.msra.mxu0 0.0
        %3405 = vmatprep.subr.mxu0 0.0
        %3406 = vmatpush1.msra.mxu0 0.0
        %3407 = vmatprep.subr.mxu0 0.0
        %3408 = vmatpush1.msra.mxu0 0.0
        %3409 = vmatprep.mubr.f32.mxu0 0.0
        %3410 = vmatmul.mubr.f32.gmra.mrb[0].mxu0 %v3343
        %v3411 = vpop.f32.mrb[0].mxu0
        %v3412 = vadd.f32 0.0, %v3411
        %v3413 = vpop.f32.mrb[0].mxu0
        %v3414 = vadd.f32 0.0, %v3413
        %3415 = vdwg.mxu0
        %v3417 = vsel %vm757, %v3414, 0
        %3419 = vmatprep.subr.mxu0 %v710
        %3420 = vmatpush1.msra.mxu0 %v709
        %3421 = vmatprep.subr.mxu0 %v712
        %3422 = vmatpush1.msra.mxu0 %v711
        %3423 = vmatprep.subr.mxu0 %v714
        %3424 = vmatpush1.msra.mxu0 %v713
        %3425 = vmatprep.subr.mxu0 %v716
        %3426 = vmatpush1.msra.mxu0 %v715
        %3427 = vmatprep.subr.mxu0 %v718
        %3428 = vmatpush1.msra.mxu0 %v717
        %3429 = vmatprep.subr.mxu0 %v720
        %3430 = vmatpush1.msra.mxu0 %v719
        %3431 = vmatprep.subr.mxu0 %v722
        %3432 = vmatpush1.msra.mxu0 %v721
        %3433 = vmatprep.subr.mxu0 %v724
        %3434 = vmatpush1.msra.mxu0 %v723
        %3435 = vmatprep.subr.mxu0 %v726
        %3436 = vmatpush1.msra.mxu0 %v725
        %3437 = vmatprep.subr.mxu0 %v728
        %3438 = vmatpush1.msra.mxu0 %v727
        %3439 = vmatprep.subr.mxu0 %v730
        %3440 = vmatpush1.msra.mxu0 %v729
        %3441 = vmatprep.subr.mxu0 %v732
        %3442 = vmatpush1.msra.mxu0 %v731
        %3443 = vmatprep.subr.mxu0 %v734
        %3444 = vmatpush1.msra.mxu0 %v733
        %3445 = vmatprep.subr.mxu0 %v736
        %3446 = vmatpush1.msra.mxu0 %v735
        %3447 = vmatprep.subr.mxu0 %v738
        %3448 = vmatpush1.msra.mxu0 %v737
        %3449 = vmatprep.subr.mxu0 %v740
        %3450 = vmatpush1.msra.mxu0 %v739
        %3451 = vmatprep.subr.mxu0 %v742
        %3452 = vmatpush1.msra.mxu0 %v741
        %3453 = vmatprep.subr.mxu0 %v744
        %3454 = vmatpush1.msra.mxu0 %v743
        %3455 = vmatprep.subr.mxu0 %v746
        %3456 = vmatpush1.msra.mxu0 %v745
        %3457 = vmatprep.subr.mxu0 %v748
        %3458 = vmatpush1.msra.mxu0 %v747
        %3459 = vmatprep.subr.mxu0 %v750
        %3460 = vmatpush1.msra.mxu0 %v749
        %3461 = vmatprep.subr.mxu0 %v752
        %3462 = vmatpush1.msra.mxu0 %v751
        %3463 = vmatprep.subr.mxu0 %v754
        %3464 = vmatpush1.msra.mxu0 %v753
        %3465 = vmatprep.subr.mxu0 %v756
        %3466 = vmatpush1.msra.mxu0 %v755
        %3467 = vmatprep.subr.mxu0 0.0
        %3468 = vmatpush1.msra.mxu0 0.0
        %3469 = vmatprep.subr.mxu0 0.0
        %3470 = vmatpush1.msra.mxu0 0.0
        %3471 = vmatprep.subr.mxu0 0.0
        %3472 = vmatpush1.msra.mxu0 0.0
        %3473 = vmatprep.subr.mxu0 0.0
        %3474 = vmatpush1.msra.mxu0 0.0
        %3475 = vmatprep.subr.mxu0 0.0
        %3476 = vmatpush1.msra.mxu0 0.0
        %3477 = vmatprep.subr.mxu0 0.0
        %3478 = vmatpush1.msra.mxu0 0.0
        %3479 = vmatprep.subr.mxu0 0.0
        %3480 = vmatpush1.msra.mxu0 0.0
        %3481 = vmatprep.subr.mxu0 0.0
        %3482 = vmatpush1.msra.mxu0 0.0
        %3483 = vmatprep.mubr.f32.mxu0 %v3417
        %3484 = vmatmul.mubr.f32.gmra.mrb[0].mxu0 %v3412
        %v3485 = vpop.f32.mrb[0].mxu0
        %v3486 = vadd.f32 0.0, %v3485
        %v3487 = vpop.f32.mrb[0].mxu0
        %v3488 = vadd.f32 0.0, %v3487
        %3489 = vdwg.mxu0
        %v3491 = vsel %vm757, %v3338, 0
        %3493 = vmatprep.subr.mxu0 %v652
        %3494 = vmatpush1.msra.mxu0 %v651
        %3495 = vmatprep.subr.mxu0 %v654
        %3496 = vmatpush1.msra.mxu0 %v653
        %3497 = vmatprep.subr.mxu0 %v656
        %3498 = vmatpush1.msra.mxu0 %v655
        %3499 = vmatprep.subr.mxu0 %v658
        %3500 = vmatpush1.msra.mxu0 %v657
        %3501 = vmatprep.subr.mxu0 %v660
        %3502 = vmatpush1.msra.mxu0 %v659
        %3503 = vmatprep.subr.mxu0 %v662
        %3504 = vmatpush1.msra.mxu0 %v661
        %3505 = vmatprep.subr.mxu0 %v664
        %3506 = vmatpush1.msra.mxu0 %v663
        %3507 = vmatprep.subr.mxu0 %v666
        %3508 = vmatpush1.msra.mxu0 %v665
        %3509 = vmatprep.subr.mxu0 %v668
        %3510 = vmatpush1.msra.mxu0 %v667
        %3511 = vmatprep.subr.mxu0 %v670
        %3512 = vmatpush1.msra.mxu0 %v669
        %3513 = vmatprep.subr.mxu0 %v672
        %3514 = vmatpush1.msra.mxu0 %v671
        %3515 = vmatprep.subr.mxu0 %v674
        %3516 = vmatpush1.msra.mxu0 %v673
        %3517 = vmatprep.subr.mxu0 %v676
        %3518 = vmatpush1.msra.mxu0 %v675
        %3519 = vmatprep.subr.mxu0 %v678
        %3520 = vmatpush1.msra.mxu0 %v677
        %3521 = vmatprep.subr.mxu0 %v680
        %3522 = vmatpush1.msra.mxu0 %v679
        %3523 = vmatprep.subr.mxu0 %v682
        %3524 = vmatpush1.msra.mxu0 %v681
        %3525 = vmatprep.subr.mxu0 %v684
        %3526 = vmatpush1.msra.mxu0 %v683
        %3527 = vmatprep.subr.mxu0 %v686
        %3528 = vmatpush1.msra.mxu0 %v685
        %3529 = vmatprep.subr.mxu0 %v688
        %3530 = vmatpush1.msra.mxu0 %v687
        %3531 = vmatprep.subr.mxu0 %v690
        %3532 = vmatpush1.msra.mxu0 %v689
        %3533 = vmatprep.subr.mxu0 %v692
        %3534 = vmatpush1.msra.mxu0 %v691
        %3535 = vmatprep.subr.mxu0 %v694
        %3536 = vmatpush1.msra.mxu0 %v693
        %3537 = vmatprep.subr.mxu0 %v696
        %3538 = vmatpush1.msra.mxu0 %v695
        %3539 = vmatprep.subr.mxu0 %v698
        %3540 = vmatpush1.msra.mxu0 %v697
        %3541 = vmatprep.subr.mxu0 0.0
        %3542 = vmatpush1.msra.mxu0 0.0
        %3543 = vmatprep.subr.mxu0 0.0
        %3544 = vmatpush1.msra.mxu0 0.0
        %3545 = vmatprep.subr.mxu0 0.0
        %3546 = vmatpush1.msra.mxu0 0.0
        %3547 = vmatprep.subr.mxu0 0.0
        %3548 = vmatpush1.msra.mxu0 0.0
        %3549 = vmatprep.subr.mxu0 0.0
        %3550 = vmatpush1.msra.mxu0 0.0
        %3551 = vmatprep.subr.mxu0 0.0
        %3552 = vmatpush1.msra.mxu0 0.0
        %3553 = vmatprep.subr.mxu0 0.0
        %3554 = vmatpush1.msra.mxu0 0.0
        %3555 = vmatprep.subr.mxu0 0.0
        %3556 = vmatpush1.msra.mxu0 0.0
        %3557 = vmatprep.mubr.f32.mxu0 %v3491
        %3558 = vmatmul.mubr.f32.gmra.mrb[0].mxu0 %v3336
        %v3559 = vpop.f32.mrb[0].mxu0
        %v3560 = vadd.f32 %v3486, %v3559
        %v3561 = vpop.f32.mrb[0].mxu0
        %v3562 = vadd.f32 %v3488, %v3561
        %3563 = vdwg.mxu0
        %s3564 = scalar_lea.vmem %s8, 16
        %v3565 = vld [vmem:[%s3564] sm:$0xff]
        %v3567 = vsel %vm1863, %v3565, 0
        %3569 = vmatprep.subr.mxu0 %v3264
        %3570 = vmatpush1.msra.mxu0 %v3263
        %3571 = vmatprep.subr.mxu0 0.0
        %3572 = vmatpush1.msra.mxu0 0.0
        %3573 = vmatprep.subr.mxu0 0.0
        %3574 = vmatpush1.msra.mxu0 0.0
        %3575 = vmatprep.subr.mxu0 0.0
        %3576 = vmatpush1.msra.mxu0 0.0
        %3577 = vmatprep.subr.mxu0 0.0
        %3578 = vmatpush1.msra.mxu0 0.0
        %3579 = vmatprep.subr.mxu0 0.0
        %3580 = vmatpush1.msra.mxu0 0.0
        %3581 = vmatprep.subr.mxu0 0.0
        %3582 = vmatpush1.msra.mxu0 0.0
        %3583 = vmatprep.subr.mxu0 0.0
        %3584 = vmatpush1.msra.mxu0 0.0
        %3585 = vmatprep.subr.mxu0 0.0
        %3586 = vmatpush1.msra.mxu0 0.0
        %3587 = vmatprep.subr.mxu0 0.0
        %3588 = vmatpush1.msra.mxu0 0.0
        %3589 = vmatprep.subr.mxu0 0.0
        %3590 = vmatpush1.msra.mxu0 0.0
        %3591 = vmatprep.subr.mxu0 0.0
        %3592 = vmatpush1.msra.mxu0 0.0
        %3593 = vmatprep.subr.mxu0 0.0
        %3594 = vmatpush1.msra.mxu0 0.0
        %3595 = vmatprep.subr.mxu0 0.0
        %3596 = vmatpush1.msra.mxu0 0.0
        %3597 = vmatprep.subr.mxu0 0.0
        %3598 = vmatpush1.msra.mxu0 0.0
        %3599 = vmatprep.subr.mxu0 0.0
        %3600 = vmatpush1.msra.mxu0 0.0
        %3601 = vmatprep.subr.mxu0 0.0
        %3602 = vmatpush1.msra.mxu0 0.0
        %3603 = vmatprep.subr.mxu0 0.0
        %3604 = vmatpush1.msra.mxu0 0.0
        %3605 = vmatprep.subr.mxu0 0.0
        %3606 = vmatpush1.msra.mxu0 0.0
        %3607 = vmatprep.subr.mxu0 0.0
        %3608 = vmatpush1.msra.mxu0 0.0
        %3609 = vmatprep.subr.mxu0 0.0
        %3610 = vmatpush1.msra.mxu0 0.0
        %3611 = vmatprep.subr.mxu0 0.0
        %3612 = vmatpush1.msra.mxu0 0.0
        %3613 = vmatprep.subr.mxu0 0.0
        %3614 = vmatpush1.msra.mxu0 0.0
        %3615 = vmatprep.subr.mxu0 0.0
        %3616 = vmatpush1.msra.mxu0 0.0
        %3617 = vmatprep.subr.mxu0 0.0
        %3618 = vmatpush1.msra.mxu0 0.0
        %3619 = vmatprep.subr.mxu0 0.0
        %3620 = vmatpush1.msra.mxu0 0.0
        %3621 = vmatprep.subr.mxu0 0.0
        %3622 = vmatpush1.msra.mxu0 0.0
        %3623 = vmatprep.subr.mxu0 0.0
        %3624 = vmatpush1.msra.mxu0 0.0
        %3625 = vmatprep.subr.mxu0 0.0
        %3626 = vmatpush1.msra.mxu0 0.0
        %3627 = vmatprep.subr.mxu0 0.0
        %3628 = vmatpush1.msra.mxu0 0.0
        %3629 = vmatprep.subr.mxu0 0.0
        %3630 = vmatpush1.msra.mxu0 0.0
        %3631 = vmatprep.subr.mxu0 0.0
        %3632 = vmatpush1.msra.mxu0 0.0
        %3633 = vmatprep.mubr.f32.mxu0 0.0
        %3634 = vmatmul.mubr.f32.gmra.mrb[0].mxu0 %v3567
        %v3635 = vpop.f32.mrb[0].mxu0
        %v3636 = vadd.f32 0.0, %v3635
        %v3637 = vpop.f32.mrb[0].mxu0
        %v3638 = vadd.f32 0.0, %v3637
        %3639 = vdwg.mxu0
        %v3641 = vsel %vm757, %v3638, 0
        %3643 = vmatprep.subr.mxu0 %v917
        %3644 = vmatpush1.msra.mxu0 %v916
        %3645 = vmatprep.subr.mxu0 %v919
        %3646 = vmatpush1.msra.mxu0 %v918
        %3647 = vmatprep.subr.mxu0 %v921
        %3648 = vmatpush1.msra.mxu0 %v920
        %3649 = vmatprep.subr.mxu0 %v923
        %3650 = vmatpush1.msra.mxu0 %v922
        %3651 = vmatprep.subr.mxu0 %v925
        %3652 = vmatpush1.msra.mxu0 %v924
        %3653 = vmatprep.subr.mxu0 %v927
        %3654 = vmatpush1.msra.mxu0 %v926
        %3655 = vmatprep.subr.mxu0 %v929
        %3656 = vmatpush1.msra.mxu0 %v928
        %3657 = vmatprep.subr.mxu0 %v931
        %3658 = vmatpush1.msra.mxu0 %v930
        %3659 = vmatprep.subr.mxu0 %v933
        %3660 = vmatpush1.msra.mxu0 %v932
        %3661 = vmatprep.subr.mxu0 %v935
        %3662 = vmatpush1.msra.mxu0 %v934
        %3663 = vmatprep.subr.mxu0 %v937
        %3664 = vmatpush1.msra.mxu0 %v936
        %3665 = vmatprep.subr.mxu0 %v939
        %3666 = vmatpush1.msra.mxu0 %v938
        %3667 = vmatprep.subr.mxu0 %v941
        %3668 = vmatpush1.msra.mxu0 %v940
        %3669 = vmatprep.subr.mxu0 %v943
        %3670 = vmatpush1.msra.mxu0 %v942
        %3671 = vmatprep.subr.mxu0 %v945
        %3672 = vmatpush1.msra.mxu0 %v944
        %3673 = vmatprep.subr.mxu0 %v947
        %3674 = vmatpush1.msra.mxu0 %v946
        %3675 = vmatprep.subr.mxu0 %v949
        %3676 = vmatpush1.msra.mxu0 %v948
        %3677 = vmatprep.subr.mxu0 %v951
        %3678 = vmatpush1.msra.mxu0 %v950
        %3679 = vmatprep.subr.mxu0 %v953
        %3680 = vmatpush1.msra.mxu0 %v952
        %3681 = vmatprep.subr.mxu0 %v955
        %3682 = vmatpush1.msra.mxu0 %v954
        %3683 = vmatprep.subr.mxu0 %v957
        %3684 = vmatpush1.msra.mxu0 %v956
        %3685 = vmatprep.subr.mxu0 %v959
        %3686 = vmatpush1.msra.mxu0 %v958
        %3687 = vmatprep.subr.mxu0 %v961
        %3688 = vmatpush1.msra.mxu0 %v960
        %3689 = vmatprep.subr.mxu0 %v963
        %3690 = vmatpush1.msra.mxu0 %v962
        %3691 = vmatprep.subr.mxu0 0.0
        %3692 = vmatpush1.msra.mxu0 0.0
        %3693 = vmatprep.subr.mxu0 0.0
        %3694 = vmatpush1.msra.mxu0 0.0
        %3695 = vmatprep.subr.mxu0 0.0
        %3696 = vmatpush1.msra.mxu0 0.0
        %3697 = vmatprep.subr.mxu0 0.0
        %3698 = vmatpush1.msra.mxu0 0.0
        %3699 = vmatprep.subr.mxu0 0.0
        %3700 = vmatpush1.msra.mxu0 0.0
        %3701 = vmatprep.subr.mxu0 0.0
        %3702 = vmatpush1.msra.mxu0 0.0
        %3703 = vmatprep.subr.mxu0 0.0
        %3704 = vmatpush1.msra.mxu0 0.0
        %3705 = vmatprep.subr.mxu0 0.0
        %3706 = vmatpush1.msra.mxu0 0.0
        %3707 = vmatprep.mubr.f32.mxu0 %v3641
        %3708 = vmatmul.mubr.f32.gmra.mrb[0].mxu0 %v3636
        %v3709 = vpop.f32.mrb[0].mxu0
        %v3710 = vadd.f32 0.0, %v3709
        %v3711 = vpop.f32.mrb[0].mxu0
        %v3712 = vadd.f32 0.0, %v3711
        %3713 = vdwg.mxu0
        %v3714 = vadd.f32 %v3560, %v3710
        %v3715 = vadd.f32 %v3562, %v3712
        %s3716 = scalar_lea.vmem %s8, 24
        %v3717 = vld [vmem:[%s3716] sm:$0xff]
        %v3719 = vsel %vm1863, %v3717, 0
        %3721 = vmatprep.subr.mxu0 %v3264
        %3722 = vmatpush1.msra.mxu0 %v3263
        %3723 = vmatprep.subr.mxu0 0.0
        %3724 = vmatpush1.msra.mxu0 0.0
        %3725 = vmatprep.subr.mxu0 0.0
        %3726 = vmatpush1.msra.mxu0 0.0
        %3727 = vmatprep.subr.mxu0 0.0
        %3728 = vmatpush1.msra.mxu0 0.0
        %3729 = vmatprep.subr.mxu0 0.0
        %3730 = vmatpush1.msra.mxu0 0.0
        %3731 = vmatprep.subr.mxu0 0.0
        %3732 = vmatpush1.msra.mxu0 0.0
        %3733 = vmatprep.subr.mxu0 0.0
        %3734 = vmatpush1.msra.mxu0 0.0
        %3735 = vmatprep.subr.mxu0 0.0
        %3736 = vmatpush1.msra.mxu0 0.0
        %3737 = vmatprep.subr.mxu0 0.0
        %3738 = vmatpush1.msra.mxu0 0.0
        %3739 = vmatprep.subr.mxu0 0.0
        %3740 = vmatpush1.msra.mxu0 0.0
        %3741 = vmatprep.subr.mxu0 0.0
        %3742 = vmatpush1.msra.mxu0 0.0
        %3743 = vmatprep.subr.mxu0 0.0
        %3744 = vmatpush1.msra.mxu0 0.0
        %3745 = vmatprep.subr.mxu0 0.0
        %3746 = vmatpush1.msra.mxu0 0.0
        %3747 = vmatprep.subr.mxu0 0.0
        %3748 = vmatpush1.msra.mxu0 0.0
        %3749 = vmatprep.subr.mxu0 0.0
        %3750 = vmatpush1.msra.mxu0 0.0
        %3751 = vmatprep.subr.mxu0 0.0
        %3752 = vmatpush1.msra.mxu0 0.0
        %3753 = vmatprep.subr.mxu0 0.0
        %3754 = vmatpush1.msra.mxu0 0.0
        %3755 = vmatprep.subr.mxu0 0.0
        %3756 = vmatpush1.msra.mxu0 0.0
        %3757 = vmatprep.subr.mxu0 0.0
        %3758 = vmatpush1.msra.mxu0 0.0
        %3759 = vmatprep.subr.mxu0 0.0
        %3760 = vmatpush1.msra.mxu0 0.0
        %3761 = vmatprep.subr.mxu0 0.0
        %3762 = vmatpush1.msra.mxu0 0.0
        %3763 = vmatprep.subr.mxu0 0.0
        %3764 = vmatpush1.msra.mxu0 0.0
        %3765 = vmatprep.subr.mxu0 0.0
        %3766 = vmatpush1.msra.mxu0 0.0
        %3767 = vmatprep.subr.mxu0 0.0
        %3768 = vmatpush1.msra.mxu0 0.0
        %3769 = vmatprep.subr.mxu0 0.0
        %3770 = vmatpush1.msra.mxu0 0.0
        %3771 = vmatprep.subr.mxu0 0.0
        %3772 = vmatpush1.msra.mxu0 0.0
        %3773 = vmatprep.subr.mxu0 0.0
        %3774 = vmatpush1.msra.mxu0 0.0
        %3775 = vmatprep.subr.mxu0 0.0
        %3776 = vmatpush1.msra.mxu0 0.0
        %3777 = vmatprep.subr.mxu0 0.0
        %3778 = vmatpush1.msra.mxu0 0.0
        %3779 = vmatprep.subr.mxu0 0.0
        %3780 = vmatpush1.msra.mxu0 0.0
        %3781 = vmatprep.subr.mxu0 0.0
        %3782 = vmatpush1.msra.mxu0 0.0
        %3783 = vmatprep.subr.mxu0 0.0
        %3784 = vmatpush1.msra.mxu0 0.0
        %3785 = vmatprep.mubr.f32.mxu0 0.0
        %3786 = vmatmul.mubr.f32.gmra.mrb[0].mxu0 %v3719
        %v3787 = vpop.f32.mrb[0].mxu0
        %v3788 = vadd.f32 0.0, %v3787
        %v3789 = vpop.f32.mrb[0].mxu0
        %v3790 = vadd.f32 0.0, %v3789
        %3791 = vdwg.mxu0
        %v3793 = vsel %vm757, %v3790, 0
        %3795 = vmatprep.subr.mxu0 %v1051
        %3796 = vmatpush1.msra.mxu0 %v1050
        %3797 = vmatprep.subr.mxu0 %v1053
        %3798 = vmatpush1.msra.mxu0 %v1052
        %3799 = vmatprep.subr.mxu0 %v1055
        %3800 = vmatpush1.msra.mxu0 %v1054
        %3801 = vmatprep.subr.mxu0 %v1057
        %3802 = vmatpush1.msra.mxu0 %v1056
        %3803 = vmatprep.subr.mxu0 %v1059
        %3804 = vmatpush1.msra.mxu0 %v1058
        %3805 = vmatprep.subr.mxu0 %v1061
        %3806 = vmatpush1.msra.mxu0 %v1060
        %3807 = vmatprep.subr.mxu0 %v1063
        %3808 = vmatpush1.msra.mxu0 %v1062
        %3809 = vmatprep.subr.mxu0 %v1065
        %3810 = vmatpush1.msra.mxu0 %v1064
        %3811 = vmatprep.subr.mxu0 %v1067
        %3812 = vmatpush1.msra.mxu0 %v1066
        %3813 = vmatprep.subr.mxu0 %v1069
        %3814 = vmatpush1.msra.mxu0 %v1068
        %3815 = vmatprep.subr.mxu0 %v1071
        %3816 = vmatpush1.msra.mxu0 %v1070
        %3817 = vmatprep.subr.mxu0 %v1073
        %3818 = vmatpush1.msra.mxu0 %v1072
        %3819 = vmatprep.subr.mxu0 %v1075
        %3820 = vmatpush1.msra.mxu0 %v1074
        %3821 = vmatprep.subr.mxu0 %v1077
        %3822 = vmatpush1.msra.mxu0 %v1076
        %3823 = vmatprep.subr.mxu0 %v1079
        %3824 = vmatpush1.msra.mxu0 %v1078
        %3825 = vmatprep.subr.mxu0 %v1081
        %3826 = vmatpush1.msra.mxu0 %v1080
        %3827 = vmatprep.subr.mxu0 %v1083
        %3828 = vmatpush1.msra.mxu0 %v1082
        %3829 = vmatprep.subr.mxu0 %v1085
        %3830 = vmatpush1.msra.mxu0 %v1084
        %3831 = vmatprep.subr.mxu0 %v1087
        %3832 = vmatpush1.msra.mxu0 %v1086
        %3833 = vmatprep.subr.mxu0 %v1089
        %3834 = vmatpush1.msra.mxu0 %v1088
        %3835 = vmatprep.subr.mxu0 %v1091
        %3836 = vmatpush1.msra.mxu0 %v1090
        %3837 = vmatprep.subr.mxu0 %v1093
        %3838 = vmatpush1.msra.mxu0 %v1092
        %3839 = vmatprep.subr.mxu0 %v1095
        %3840 = vmatpush1.msra.mxu0 %v1094
        %3841 = vmatprep.subr.mxu0 %v1097
        %3842 = vmatpush1.msra.mxu0 %v1096
        %3843 = vmatprep.subr.mxu0 0.0
        %3844 = vmatpush1.msra.mxu0 0.0
        %3845 = vmatprep.subr.mxu0 0.0
        %3846 = vmatpush1.msra.mxu0 0.0
        %3847 = vmatprep.subr.mxu0 0.0
        %3848 = vmatpush1.msra.mxu0 0.0
        %3849 = vmatprep.subr.mxu0 0.0
        %3850 = vmatpush1.msra.mxu0 0.0
        %3851 = vmatprep.subr.mxu0 0.0
        %3852 = vmatpush1.msra.mxu0 0.0
        %3853 = vmatprep.subr.mxu0 0.0
        %3854 = vmatpush1.msra.mxu0 0.0
        %3855 = vmatprep.subr.mxu0 0.0
        %3856 = vmatpush1.msra.mxu0 0.0
        %3857 = vmatprep.subr.mxu0 0.0
        %3858 = vmatpush1.msra.mxu0 0.0
        %3859 = vmatprep.mubr.f32.mxu0 %v3793
        %3860 = vmatmul.mubr.f32.gmra.mrb[0].mxu0 %v3788
        %v3861 = vpop.f32.mrb[0].mxu0
        %v3862 = vadd.f32 0.0, %v3861
        %v3863 = vpop.f32.mrb[0].mxu0
        %v3864 = vadd.f32 0.0, %v3863
        %3865 = vdwg.mxu0
        %v3866 = vadd.f32 %v3714, %v3862
        %v3867 = vadd.f32 %v3715, %v3864
        %s3868 = scalar_lea.vmem %s8, 32
        %v3869 = vld [vmem:[%s3868] sm:$0xff]
        %v3871 = vsel %vm1863, %v3869, 0
        %3873 = vmatprep.subr.mxu0 %v3264
        %3874 = vmatpush1.msra.mxu0 %v3263
        %3875 = vmatprep.subr.mxu0 0.0
        %3876 = vmatpush1.msra.mxu0 0.0
        %3877 = vmatprep.subr.mxu0 0.0
        %3878 = vmatpush1.msra.mxu0 0.0
        %3879 = vmatprep.subr.mxu0 0.0
        %3880 = vmatpush1.msra.mxu0 0.0
        %3881 = vmatprep.subr.mxu0 0.0
        %3882 = vmatpush1.msra.mxu0 0.0
        %3883 = vmatprep.subr.mxu0 0.0
        %3884 = vmatpush1.msra.mxu0 0.0
        %3885 = vmatprep.subr.mxu0 0.0
        %3886 = vmatpush1.msra.mxu0 0.0
        %3887 = vmatprep.subr.mxu0 0.0
        %3888 = vmatpush1.msra.mxu0 0.0
        %3889 = vmatprep.subr.mxu0 0.0
        %3890 = vmatpush1.msra.mxu0 0.0
        %3891 = vmatprep.subr.mxu0 0.0
        %3892 = vmatpush1.msra.mxu0 0.0
        %3893 = vmatprep.subr.mxu0 0.0
        %3894 = vmatpush1.msra.mxu0 0.0
        %3895 = vmatprep.subr.mxu0 0.0
        %3896 = vmatpush1.msra.mxu0 0.0
        %3897 = vmatprep.subr.mxu0 0.0
        %3898 = vmatpush1.msra.mxu0 0.0
        %3899 = vmatprep.subr.mxu0 0.0
        %3900 = vmatpush1.msra.mxu0 0.0
        %3901 = vmatprep.subr.mxu0 0.0
        %3902 = vmatpush1.msra.mxu0 0.0
        %3903 = vmatprep.subr.mxu0 0.0
        %3904 = vmatpush1.msra.mxu0 0.0
        %3905 = vmatprep.subr.mxu0 0.0
        %3906 = vmatpush1.msra.mxu0 0.0
        %3907 = vmatprep.subr.mxu0 0.0
        %3908 = vmatpush1.msra.mxu0 0.0
        %3909 = vmatprep.subr.mxu0 0.0
        %3910 = vmatpush1.msra.mxu0 0.0
        %3911 = vmatprep.subr.mxu0 0.0
        %3912 = vmatpush1.msra.mxu0 0.0
        %3913 = vmatprep.subr.mxu0 0.0
        %3914 = vmatpush1.msra.mxu0 0.0
        %3915 = vmatprep.subr.mxu0 0.0
        %3916 = vmatpush1.msra.mxu0 0.0
        %3917 = vmatprep.subr.mxu0 0.0
        %3918 = vmatpush1.msra.mxu0 0.0
        %3919 = vmatprep.subr.mxu0 0.0
        %3920 = vmatpush1.msra.mxu0 0.0
        %3921 = vmatprep.subr.mxu0 0.0
        %3922 = vmatpush1.msra.mxu0 0.0
        %3923 = vmatprep.subr.mxu0 0.0
        %3924 = vmatpush1.msra.mxu0 0.0
        %3925 = vmatprep.subr.mxu0 0.0
        %3926 = vmatpush1.msra.mxu0 0.0
        %3927 = vmatprep.subr.mxu0 0.0
        %3928 = vmatpush1.msra.mxu0 0.0
        %3929 = vmatprep.subr.mxu0 0.0
        %3930 = vmatpush1.msra.mxu0 0.0
        %3931 = vmatprep.subr.mxu0 0.0
        %3932 = vmatpush1.msra.mxu0 0.0
        %3933 = vmatprep.subr.mxu0 0.0
        %3934 = vmatpush1.msra.mxu0 0.0
        %3935 = vmatprep.subr.mxu0 0.0
        %3936 = vmatpush1.msra.mxu0 0.0
        %3937 = vmatprep.mubr.f32.mxu0 0.0
        %3938 = vmatmul.mubr.f32.gmra.mrb[0].mxu0 %v3871
        %v3939 = vpop.f32.mrb[0].mxu0
        %v3940 = vadd.f32 0.0, %v3939
        %v3941 = vpop.f32.mrb[0].mxu0
        %v3942 = vadd.f32 0.0, %v3941
        %3943 = vdwg.mxu0
        %v3945 = vsel %vm757, %v3942, 0
        %3947 = vmatprep.subr.mxu0 %v1185
        %3948 = vmatpush1.msra.mxu0 %v1184
        %3949 = vmatprep.subr.mxu0 %v1187
        %3950 = vmatpush1.msra.mxu0 %v1186
        %3951 = vmatprep.subr.mxu0 %v1189
        %3952 = vmatpush1.msra.mxu0 %v1188
        %3953 = vmatprep.subr.mxu0 %v1191
        %3954 = vmatpush1.msra.mxu0 %v1190
        %3955 = vmatprep.subr.mxu0 %v1193
        %3956 = vmatpush1.msra.mxu0 %v1192
        %3957 = vmatprep.subr.mxu0 %v1195
        %3958 = vmatpush1.msra.mxu0 %v1194
        %3959 = vmatprep.subr.mxu0 %v1197
        %3960 = vmatpush1.msra.mxu0 %v1196
        %3961 = vmatprep.subr.mxu0 %v1199
        %3962 = vmatpush1.msra.mxu0 %v1198
        %3963 = vmatprep.subr.mxu0 %v1201
        %3964 = vmatpush1.msra.mxu0 %v1200
        %3965 = vmatprep.subr.mxu0 %v1203
        %3966 = vmatpush1.msra.mxu0 %v1202
        %3967 = vmatprep.subr.mxu0 %v1205
        %3968 = vmatpush1.msra.mxu0 %v1204
        %3969 = vmatprep.subr.mxu0 %v1207
        %3970 = vmatpush1.msra.mxu0 %v1206
        %3971 = vmatprep.subr.mxu0 %v1209
        %3972 = vmatpush1.msra.mxu0 %v1208
        %3973 = vmatprep.subr.mxu0 %v1211
        %3974 = vmatpush1.msra.mxu0 %v1210
        %3975 = vmatprep.subr.mxu0 %v1213
        %3976 = vmatpush1.msra.mxu0 %v1212
        %3977 = vmatprep.subr.mxu0 %v1215
        %3978 = vmatpush1.msra.mxu0 %v1214
        %3979 = vmatprep.subr.mxu0 %v1217
        %3980 = vmatpush1.msra.mxu0 %v1216
        %3981 = vmatprep.subr.mxu0 %v1219
        %3982 = vmatpush1.msra.mxu0 %v1218
        %3983 = vmatprep.subr.mxu0 %v1221
        %3984 = vmatpush1.msra.mxu0 %v1220
        %3985 = vmatprep.subr.mxu0 %v1223
        %3986 = vmatpush1.msra.mxu0 %v1222
        %3987 = vmatprep.subr.mxu0 %v1225
        %3988 = vmatpush1.msra.mxu0 %v1224
        %3989 = vmatprep.subr.mxu0 %v1227
        %3990 = vmatpush1.msra.mxu0 %v1226
        %3991 = vmatprep.subr.mxu0 %v1229
        %3992 = vmatpush1.msra.mxu0 %v1228
        %3993 = vmatprep.subr.mxu0 %v1231
        %3994 = vmatpush1.msra.mxu0 %v1230
        %3995 = vmatprep.subr.mxu0 0.0
        %3996 = vmatpush1.msra.mxu0 0.0
        %3997 = vmatprep.subr.mxu0 0.0
        %3998 = vmatpush1.msra.mxu0 0.0
        %3999 = vmatprep.subr.mxu0 0.0
        %4000 = vmatpush1.msra.mxu0 0.0
        %4001 = vmatprep.subr.mxu0 0.0
        %4002 = vmatpush1.msra.mxu0 0.0
        %4003 = vmatprep.subr.mxu0 0.0
        %4004 = vmatpush1.msra.mxu0 0.0
        %4005 = vmatprep.subr.mxu0 0.0
        %4006 = vmatpush1.msra.mxu0 0.0
        %4007 = vmatprep.subr.mxu0 0.0
        %4008 = vmatpush1.msra.mxu0 0.0
        %4009 = vmatprep.subr.mxu0 0.0
        %4010 = vmatpush1.msra.mxu0 0.0
        %4011 = vmatprep.mubr.f32.mxu0 %v3945
        %4012 = vmatmul.mubr.f32.gmra.mrb[0].mxu0 %v3940
        %v4013 = vpop.f32.mrb[0].mxu0
        %v4014 = vadd.f32 0.0, %v4013
        %v4015 = vpop.f32.mrb[0].mxu0
        %v4016 = vadd.f32 0.0, %v4015
        %4017 = vdwg.mxu0
        %v4018 = vadd.f32 %v3866, %v4014
        %v4019 = vadd.f32 %v3867, %v4016
        %s4020 = scalar_lea.vmem %s8, 40
        %v4021 = vld [vmem:[%s4020] sm:$0xff]
        %v4023 = vsel %vm1863, %v4021, 0
        %4025 = vmatprep.subr.mxu0 %v3264
        %4026 = vmatpush1.msra.mxu0 %v3263
        %4027 = vmatprep.subr.mxu0 0.0
        %4028 = vmatpush1.msra.mxu0 0.0
        %4029 = vmatprep.subr.mxu0 0.0
        %4030 = vmatpush1.msra.mxu0 0.0
        %4031 = vmatprep.subr.mxu0 0.0
        %4032 = vmatpush1.msra.mxu0 0.0
        %4033 = vmatprep.subr.mxu0 0.0
        %4034 = vmatpush1.msra.mxu0 0.0
        %4035 = vmatprep.subr.mxu0 0.0
        %4036 = vmatpush1.msra.mxu0 0.0
        %4037 = vmatprep.subr.mxu0 0.0
        %4038 = vmatpush1.msra.mxu0 0.0
        %4039 = vmatprep.subr.mxu0 0.0
        %4040 = vmatpush1.msra.mxu0 0.0
        %4041 = vmatprep.subr.mxu0 0.0
        %4042 = vmatpush1.msra.mxu0 0.0
        %4043 = vmatprep.subr.mxu0 0.0
        %4044 = vmatpush1.msra.mxu0 0.0
        %4045 = vmatprep.subr.mxu0 0.0
        %4046 = vmatpush1.msra.mxu0 0.0
        %4047 = vmatprep.subr.mxu0 0.0
        %4048 = vmatpush1.msra.mxu0 0.0
        %4049 = vmatprep.subr.mxu0 0.0
        %4050 = vmatpush1.msra.mxu0 0.0
        %4051 = vmatprep.subr.mxu0 0.0
        %4052 = vmatpush1.msra.mxu0 0.0
        %4053 = vmatprep.subr.mxu0 0.0
        %4054 = vmatpush1.msra.mxu0 0.0
        %4055 = vmatprep.subr.mxu0 0.0
        %4056 = vmatpush1.msra.mxu0 0.0
        %4057 = vmatprep.subr.mxu0 0.0
        %4058 = vmatpush1.msra.mxu0 0.0
        %4059 = vmatprep.subr.mxu0 0.0
        %4060 = vmatpush1.msra.mxu0 0.0
        %4061 = vmatprep.subr.mxu0 0.0
        %4062 = vmatpush1.msra.mxu0 0.0
        %4063 = vmatprep.subr.mxu0 0.0
        %4064 = vmatpush1.msra.mxu0 0.0
        %4065 = vmatprep.subr.mxu0 0.0
        %4066 = vmatpush1.msra.mxu0 0.0
        %4067 = vmatprep.subr.mxu0 0.0
        %4068 = vmatpush1.msra.mxu0 0.0
        %4069 = vmatprep.subr.mxu0 0.0
        %4070 = vmatpush1.msra.mxu0 0.0
        %4071 = vmatprep.subr.mxu0 0.0
        %4072 = vmatpush1.msra.mxu0 0.0
        %4073 = vmatprep.subr.mxu0 0.0
        %4074 = vmatpush1.msra.mxu0 0.0
        %4075 = vmatprep.subr.mxu0 0.0
        %4076 = vmatpush1.msra.mxu0 0.0
        %4077 = vmatprep.subr.mxu0 0.0
        %4078 = vmatpush1.msra.mxu0 0.0
        %4079 = vmatprep.subr.mxu0 0.0
        %4080 = vmatpush1.msra.mxu0 0.0
        %4081 = vmatprep.subr.mxu0 0.0
        %4082 = vmatpush1.msra.mxu0 0.0
        %4083 = vmatprep.subr.mxu0 0.0
        %4084 = vmatpush1.msra.mxu0 0.0
        %4085 = vmatprep.subr.mxu0 0.0
        %4086 = vmatpush1.msra.mxu0 0.0
        %4087 = vmatprep.subr.mxu0 0.0
        %4088 = vmatpush1.msra.mxu0 0.0
        %4089 = vmatprep.mubr.f32.mxu0 0.0
        %4090 = vmatmul.mubr.f32.gmra.mrb[0].mxu0 %v4023
        %v4091 = vpop.f32.mrb[0].mxu0
        %v4092 = vadd.f32 0.0, %v4091
        %v4093 = vpop.f32.mrb[0].mxu0
        %v4094 = vadd.f32 0.0, %v4093
        %4095 = vdwg.mxu0
        %v4097 = vsel %vm757, %v4094, 0
        %4099 = vmatprep.subr.mxu0 %v1319
        %4100 = vmatpush1.msra.mxu0 %v1318
        %4101 = vmatprep.subr.mxu0 %v1321
        %4102 = vmatpush1.msra.mxu0 %v1320
        %4103 = vmatprep.subr.mxu0 %v1323
        %4104 = vmatpush1.msra.mxu0 %v1322
        %4105 = vmatprep.subr.mxu0 %v1325
        %4106 = vmatpush1.msra.mxu0 %v1324
        %4107 = vmatprep.subr.mxu0 %v1327
        %4108 = vmatpush1.msra.mxu0 %v1326
        %4109 = vmatprep.subr.mxu0 %v1329
        %4110 = vmatpush1.msra.mxu0 %v1328
        %4111 = vmatprep.subr.mxu0 %v1331
        %4112 = vmatpush1.msra.mxu0 %v1330
        %4113 = vmatprep.subr.mxu0 %v1333
        %4114 = vmatpush1.msra.mxu0 %v1332
        %4115 = vmatprep.subr.mxu0 %v1335
        %4116 = vmatpush1.msra.mxu0 %v1334
        %4117 = vmatprep.subr.mxu0 %v1337
        %4118 = vmatpush1.msra.mxu0 %v1336
        %4119 = vmatprep.subr.mxu0 %v1339
        %4120 = vmatpush1.msra.mxu0 %v1338
        %4121 = vmatprep.subr.mxu0 %v1341
        %4122 = vmatpush1.msra.mxu0 %v1340
        %4123 = vmatprep.subr.mxu0 %v1343
        %4124 = vmatpush1.msra.mxu0 %v1342
        %4125 = vmatprep.subr.mxu0 %v1345
        %4126 = vmatpush1.msra.mxu0 %v1344
        %4127 = vmatprep.subr.mxu0 %v1347
        %4128 = vmatpush1.msra.mxu0 %v1346
        %4129 = vmatprep.subr.mxu0 %v1349
        %4130 = vmatpush1.msra.mxu0 %v1348
        %4131 = vmatprep.subr.mxu0 %v1351
        %4132 = vmatpush1.msra.mxu0 %v1350
        %4133 = vmatprep.subr.mxu0 %v1353
        %4134 = vmatpush1.msra.mxu0 %v1352
        %4135 = vmatprep.subr.mxu0 %v1355
        %4136 = vmatpush1.msra.mxu0 %v1354
        %4137 = vmatprep.subr.mxu0 %v1357
        %4138 = vmatpush1.msra.mxu0 %v1356
        %4139 = vmatprep.subr.mxu0 %v1359
        %4140 = vmatpush1.msra.mxu0 %v1358
        %4141 = vmatprep.subr.mxu0 %v1361
        %4142 = vmatpush1.msra.mxu0 %v1360
        %4143 = vmatprep.subr.mxu0 %v1363
        %4144 = vmatpush1.msra.mxu0 %v1362
        %4145 = vmatprep.subr.mxu0 %v1365
        %4146 = vmatpush1.msra.mxu0 %v1364
        %4147 = vmatprep.subr.mxu0 0.0
        %4148 = vmatpush1.msra.mxu0 0.0
        %4149 = vmatprep.subr.mxu0 0.0
        %4150 = vmatpush1.msra.mxu0 0.0
        %4151 = vmatprep.subr.mxu0 0.0
        %4152 = vmatpush1.msra.mxu0 0.0
        %4153 = vmatprep.subr.mxu0 0.0
        %4154 = vmatpush1.msra.mxu0 0.0
        %4155 = vmatprep.subr.mxu0 0.0
        %4156 = vmatpush1.msra.mxu0 0.0
        %4157 = vmatprep.subr.mxu0 0.0
        %4158 = vmatpush1.msra.mxu0 0.0
        %4159 = vmatprep.subr.mxu0 0.0
        %4160 = vmatpush1.msra.mxu0 0.0
        %4161 = vmatprep.subr.mxu0 0.0
        %4162 = vmatpush1.msra.mxu0 0.0
        %4163 = vmatprep.mubr.f32.mxu0 %v4097
        %4164 = vmatmul.mubr.f32.gmra.mrb[0].mxu0 %v4092
        %v4165 = vpop.f32.mrb[0].mxu0
        %v4166 = vadd.f32 0.0, %v4165
        %v4167 = vpop.f32.mrb[0].mxu0
        %v4168 = vadd.f32 0.0, %v4167
        %4169 = vdwg.mxu0
        %v4170 = vadd.f32 %v4018, %v4166
        %v4171 = vadd.f32 %v4019, %v4168
        %s4172 = scalar_lea.vmem %s8, 48
        %v4173 = vld [vmem:[%s4172] sm:$0xff]
        %v4175 = vsel %vm1863, %v4173, 0
        %4177 = vmatprep.subr.mxu0 %v3264
        %4178 = vmatpush1.msra.mxu0 %v3263
        %4179 = vmatprep.subr.mxu0 0.0
        %4180 = vmatpush1.msra.mxu0 0.0
        %4181 = vmatprep.subr.mxu0 0.0
        %4182 = vmatpush1.msra.mxu0 0.0
        %4183 = vmatprep.subr.mxu0 0.0
        %4184 = vmatpush1.msra.mxu0 0.0
        %4185 = vmatprep.subr.mxu0 0.0
        %4186 = vmatpush1.msra.mxu0 0.0
        %4187 = vmatprep.subr.mxu0 0.0
        %4188 = vmatpush1.msra.mxu0 0.0
        %4189 = vmatprep.subr.mxu0 0.0
        %4190 = vmatpush1.msra.mxu0 0.0
        %4191 = vmatprep.subr.mxu0 0.0
        %4192 = vmatpush1.msra.mxu0 0.0
        %4193 = vmatprep.subr.mxu0 0.0
        %4194 = vmatpush1.msra.mxu0 0.0
        %4195 = vmatprep.subr.mxu0 0.0
        %4196 = vmatpush1.msra.mxu0 0.0
        %4197 = vmatprep.subr.mxu0 0.0
        %4198 = vmatpush1.msra.mxu0 0.0
        %4199 = vmatprep.subr.mxu0 0.0
        %4200 = vmatpush1.msra.mxu0 0.0
        %4201 = vmatprep.subr.mxu0 0.0
        %4202 = vmatpush1.msra.mxu0 0.0
        %4203 = vmatprep.subr.mxu0 0.0
        %4204 = vmatpush1.msra.mxu0 0.0
        %4205 = vmatprep.subr.mxu0 0.0
        %4206 = vmatpush1.msra.mxu0 0.0
        %4207 = vmatprep.subr.mxu0 0.0
        %4208 = vmatpush1.msra.mxu0 0.0
        %4209 = vmatprep.subr.mxu0 0.0
        %4210 = vmatpush1.msra.mxu0 0.0
        %4211 = vmatprep.subr.mxu0 0.0
        %4212 = vmatpush1.msra.mxu0 0.0
        %4213 = vmatprep.subr.mxu0 0.0
        %4214 = vmatpush1.msra.mxu0 0.0
        %4215 = vmatprep.subr.mxu0 0.0
        %4216 = vmatpush1.msra.mxu0 0.0
        %4217 = vmatprep.subr.mxu0 0.0
        %4218 = vmatpush1.msra.mxu0 0.0
        %4219 = vmatprep.subr.mxu0 0.0
        %4220 = vmatpush1.msra.mxu0 0.0
        %4221 = vmatprep.subr.mxu0 0.0
        %4222 = vmatpush1.msra.mxu0 0.0
        %4223 = vmatprep.subr.mxu0 0.0
        %4224 = vmatpush1.msra.mxu0 0.0
        %4225 = vmatprep.subr.mxu0 0.0
        %4226 = vmatpush1.msra.mxu0 0.0
        %4227 = vmatprep.subr.mxu0 0.0
        %4228 = vmatpush1.msra.mxu0 0.0
        %4229 = vmatprep.subr.mxu0 0.0
        %4230 = vmatpush1.msra.mxu0 0.0
        %4231 = vmatprep.subr.mxu0 0.0
        %4232 = vmatpush1.msra.mxu0 0.0
        %4233 = vmatprep.subr.mxu0 0.0
        %4234 = vmatpush1.msra.mxu0 0.0
        %4235 = vmatprep.subr.mxu0 0.0
        %4236 = vmatpush1.msra.mxu0 0.0
        %4237 = vmatprep.subr.mxu0 0.0
        %4238 = vmatpush1.msra.mxu0 0.0
        %4239 = vmatprep.subr.mxu0 0.0
        %4240 = vmatpush1.msra.mxu0 0.0
        %4241 = vmatprep.mubr.f32.mxu0 0.0
        %4242 = vmatmul.mubr.f32.gmra.mrb[0].mxu0 %v4175
        %v4243 = vpop.f32.mrb[0].mxu0
        %v4244 = vadd.f32 0.0, %v4243
        %v4245 = vpop.f32.mrb[0].mxu0
        %v4246 = vadd.f32 0.0, %v4245
        %4247 = vdwg.mxu0
        %v4249 = vsel %vm757, %v4246, 0
        %4251 = vmatprep.subr.mxu0 %v1453
        %4252 = vmatpush1.msra.mxu0 %v1452
        %4253 = vmatprep.subr.mxu0 %v1455
        %4254 = vmatpush1.msra.mxu0 %v1454
        %4255 = vmatprep.subr.mxu0 %v1457
        %4256 = vmatpush1.msra.mxu0 %v1456
        %4257 = vmatprep.subr.mxu0 %v1459
        %4258 = vmatpush1.msra.mxu0 %v1458
        %4259 = vmatprep.subr.mxu0 %v1461
        %4260 = vmatpush1.msra.mxu0 %v1460
        %4261 = vmatprep.subr.mxu0 %v1463
        %4262 = vmatpush1.msra.mxu0 %v1462
        %4263 = vmatprep.subr.mxu0 %v1465
        %4264 = vmatpush1.msra.mxu0 %v1464
        %4265 = vmatprep.subr.mxu0 %v1467
        %4266 = vmatpush1.msra.mxu0 %v1466
        %4267 = vmatprep.subr.mxu0 %v1469
        %4268 = vmatpush1.msra.mxu0 %v1468
        %4269 = vmatprep.subr.mxu0 %v1471
        %4270 = vmatpush1.msra.mxu0 %v1470
        %4271 = vmatprep.subr.mxu0 %v1473
        %4272 = vmatpush1.msra.mxu0 %v1472
        %4273 = vmatprep.subr.mxu0 %v1475
        %4274 = vmatpush1.msra.mxu0 %v1474
        %4275 = vmatprep.subr.mxu0 %v1477
        %4276 = vmatpush1.msra.mxu0 %v1476
        %4277 = vmatprep.subr.mxu0 %v1479
        %4278 = vmatpush1.msra.mxu0 %v1478
        %4279 = vmatprep.subr.mxu0 %v1481
        %4280 = vmatpush1.msra.mxu0 %v1480
        %4281 = vmatprep.subr.mxu0 %v1483
        %4282 = vmatpush1.msra.mxu0 %v1482
        %4283 = vmatprep.subr.mxu0 %v1485
        %4284 = vmatpush1.msra.mxu0 %v1484
        %4285 = vmatprep.subr.mxu0 %v1487
        %4286 = vmatpush1.msra.mxu0 %v1486
        %4287 = vmatprep.subr.mxu0 %v1489
        %4288 = vmatpush1.msra.mxu0 %v1488
        %4289 = vmatprep.subr.mxu0 %v1491
        %4290 = vmatpush1.msra.mxu0 %v1490
        %4291 = vmatprep.subr.mxu0 %v1493
        %4292 = vmatpush1.msra.mxu0 %v1492
        %4293 = vmatprep.subr.mxu0 %v1495
        %4294 = vmatpush1.msra.mxu0 %v1494
        %4295 = vmatprep.subr.mxu0 %v1497
        %4296 = vmatpush1.msra.mxu0 %v1496
        %4297 = vmatprep.subr.mxu0 %v1499
        %4298 = vmatpush1.msra.mxu0 %v1498
        %4299 = vmatprep.subr.mxu0 0.0
        %4300 = vmatpush1.msra.mxu0 0.0
        %4301 = vmatprep.subr.mxu0 0.0
        %4302 = vmatpush1.msra.mxu0 0.0
        %4303 = vmatprep.subr.mxu0 0.0
        %4304 = vmatpush1.msra.mxu0 0.0
        %4305 = vmatprep.subr.mxu0 0.0
        %4306 = vmatpush1.msra.mxu0 0.0
        %4307 = vmatprep.subr.mxu0 0.0
        %4308 = vmatpush1.msra.mxu0 0.0
        %4309 = vmatprep.subr.mxu0 0.0
        %4310 = vmatpush1.msra.mxu0 0.0
        %4311 = vmatprep.subr.mxu0 0.0
        %4312 = vmatpush1.msra.mxu0 0.0
        %4313 = vmatprep.subr.mxu0 0.0
        %4314 = vmatpush1.msra.mxu0 0.0
        %4315 = vmatprep.mubr.f32.mxu0 %v4249
        %4316 = vmatmul.mubr.f32.gmra.mrb[0].mxu0 %v4244
        %v4317 = vpop.f32.mrb[0].mxu0
        %v4318 = vadd.f32 0.0, %v4317
        %v4319 = vpop.f32.mrb[0].mxu0
        %v4320 = vadd.f32 0.0, %v4319
        %4321 = vdwg.mxu0
        %v4322 = vadd.f32 %v4170, %v4318
        %v4323 = vadd.f32 %v4171, %v4320
        %s4324 = scalar_lea.vmem %s8, 56
        %v4325 = vld [vmem:[%s4324] sm:$0xff]
        %v4327 = vsel %vm1863, %v4325, 0
        %4329 = vmatprep.subr.mxu0 %v3264
        %4330 = vmatpush1.msra.mxu0 %v3263
        %4331 = vmatprep.subr.mxu0 0.0
        %4332 = vmatpush1.msra.mxu0 0.0
        %4333 = vmatprep.subr.mxu0 0.0
        %4334 = vmatpush1.msra.mxu0 0.0
        %4335 = vmatprep.subr.mxu0 0.0
        %4336 = vmatpush1.msra.mxu0 0.0
        %4337 = vmatprep.subr.mxu0 0.0
        %4338 = vmatpush1.msra.mxu0 0.0
        %4339 = vmatprep.subr.mxu0 0.0
        %4340 = vmatpush1.msra.mxu0 0.0
        %4341 = vmatprep.subr.mxu0 0.0
        %4342 = vmatpush1.msra.mxu0 0.0
        %4343 = vmatprep.subr.mxu0 0.0
        %4344 = vmatpush1.msra.mxu0 0.0
        %4345 = vmatprep.subr.mxu0 0.0
        %4346 = vmatpush1.msra.mxu0 0.0
        %4347 = vmatprep.subr.mxu0 0.0
        %4348 = vmatpush1.msra.mxu0 0.0
        %4349 = vmatprep.subr.mxu0 0.0
        %4350 = vmatpush1.msra.mxu0 0.0
        %4351 = vmatprep.subr.mxu0 0.0
        %4352 = vmatpush1.msra.mxu0 0.0
        %4353 = vmatprep.subr.mxu0 0.0
        %4354 = vmatpush1.msra.mxu0 0.0
        %4355 = vmatprep.subr.mxu0 0.0
        %4356 = vmatpush1.msra.mxu0 0.0
        %4357 = vmatprep.subr.mxu0 0.0
        %4358 = vmatpush1.msra.mxu0 0.0
        %4359 = vmatprep.subr.mxu0 0.0
        %4360 = vmatpush1.msra.mxu0 0.0
        %4361 = vmatprep.subr.mxu0 0.0
        %4362 = vmatpush1.msra.mxu0 0.0
        %4363 = vmatprep.subr.mxu0 0.0
        %4364 = vmatpush1.msra.mxu0 0.0
        %4365 = vmatprep.subr.mxu0 0.0
        %4366 = vmatpush1.msra.mxu0 0.0
        %4367 = vmatprep.subr.mxu0 0.0
        %4368 = vmatpush1.msra.mxu0 0.0
        %4369 = vmatprep.subr.mxu0 0.0
        %4370 = vmatpush1.msra.mxu0 0.0
        %4371 = vmatprep.subr.mxu0 0.0
        %4372 = vmatpush1.msra.mxu0 0.0
        %4373 = vmatprep.subr.mxu0 0.0
        %4374 = vmatpush1.msra.mxu0 0.0
        %4375 = vmatprep.subr.mxu0 0.0
        %4376 = vmatpush1.msra.mxu0 0.0
        %4377 = vmatprep.subr.mxu0 0.0
        %4378 = vmatpush1.msra.mxu0 0.0
        %4379 = vmatprep.subr.mxu0 0.0
        %4380 = vmatpush1.msra.mxu0 0.0
        %4381 = vmatprep.subr.mxu0 0.0
        %4382 = vmatpush1.msra.mxu0 0.0
        %4383 = vmatprep.subr.mxu0 0.0
        %4384 = vmatpush1.msra.mxu0 0.0
        %4385 = vmatprep.subr.mxu0 0.0
        %4386 = vmatpush1.msra.mxu0 0.0
        %4387 = vmatprep.subr.mxu0 0.0
        %4388 = vmatpush1.msra.mxu0 0.0
        %4389 = vmatprep.subr.mxu0 0.0
        %4390 = vmatpush1.msra.mxu0 0.0
        %4391 = vmatprep.subr.mxu0 0.0
        %4392 = vmatpush1.msra.mxu0 0.0
        %4393 = vmatprep.mubr.f32.mxu0 0.0
        %4394 = vmatmul.mubr.f32.gmra.mrb[0].mxu0 %v4327
        %v4395 = vpop.f32.mrb[0].mxu0
        %v4396 = vadd.f32 0.0, %v4395
        %v4397 = vpop.f32.mrb[0].mxu0
        %v4398 = vadd.f32 0.0, %v4397
        %4399 = vdwg.mxu0
        %v4401 = vsel %vm757, %v4398, 0
        %4403 = vmatprep.subr.mxu0 %v1587
        %4404 = vmatpush1.msra.mxu0 %v1586
        %4405 = vmatprep.subr.mxu0 %v1589
        %4406 = vmatpush1.msra.mxu0 %v1588
        %4407 = vmatprep.subr.mxu0 %v1591
        %4408 = vmatpush1.msra.mxu0 %v1590
        %4409 = vmatprep.subr.mxu0 %v1593
        %4410 = vmatpush1.msra.mxu0 %v1592
        %4411 = vmatprep.subr.mxu0 %v1595
        %4412 = vmatpush1.msra.mxu0 %v1594
        %4413 = vmatprep.subr.mxu0 %v1597
        %4414 = vmatpush1.msra.mxu0 %v1596
        %4415 = vmatprep.subr.mxu0 %v1599
        %4416 = vmatpush1.msra.mxu0 %v1598
        %4417 = vmatprep.subr.mxu0 %v1601
        %4418 = vmatpush1.msra.mxu0 %v1600
        %4419 = vmatprep.subr.mxu0 %v1603
        %4420 = vmatpush1.msra.mxu0 %v1602
        %4421 = vmatprep.subr.mxu0 %v1605
        %4422 = vmatpush1.msra.mxu0 %v1604
        %4423 = vmatprep.subr.mxu0 %v1607
        %4424 = vmatpush1.msra.mxu0 %v1606
        %4425 = vmatprep.subr.mxu0 %v1609
        %4426 = vmatpush1.msra.mxu0 %v1608
        %4427 = vmatprep.subr.mxu0 %v1611
        %4428 = vmatpush1.msra.mxu0 %v1610
        %4429 = vmatprep.subr.mxu0 %v1613
        %4430 = vmatpush1.msra.mxu0 %v1612
        %4431 = vmatprep.subr.mxu0 %v1615
        %4432 = vmatpush1.msra.mxu0 %v1614
        %4433 = vmatprep.subr.mxu0 %v1617
        %4434 = vmatpush1.msra.mxu0 %v1616
        %4435 = vmatprep.subr.mxu0 %v1619
        %4436 = vmatpush1.msra.mxu0 %v1618
        %4437 = vmatprep.subr.mxu0 %v1621
        %4438 = vmatpush1.msra.mxu0 %v1620
        %4439 = vmatprep.subr.mxu0 %v1623
        %4440 = vmatpush1.msra.mxu0 %v1622
        %4441 = vmatprep.subr.mxu0 %v1625
        %4442 = vmatpush1.msra.mxu0 %v1624
        %4443 = vmatprep.subr.mxu0 %v1627
        %4444 = vmatpush1.msra.mxu0 %v1626
        %4445 = vmatprep.subr.mxu0 %v1629
        %4446 = vmatpush1.msra.mxu0 %v1628
        %4447 = vmatprep.subr.mxu0 %v1631
        %4448 = vmatpush1.msra.mxu0 %v1630
        %4449 = vmatprep.subr.mxu0 %v1633
        %4450 = vmatpush1.msra.mxu0 %v1632
        %4451 = vmatprep.subr.mxu0 0.0
        %4452 = vmatpush1.msra.mxu0 0.0
        %4453 = vmatprep.subr.mxu0 0.0
        %4454 = vmatpush1.msra.mxu0 0.0
        %4455 = vmatprep.subr.mxu0 0.0
        %4456 = vmatpush1.msra.mxu0 0.0
        %4457 = vmatprep.subr.mxu0 0.0
        %4458 = vmatpush1.msra.mxu0 0.0
        %4459 = vmatprep.subr.mxu0 0.0
        %4460 = vmatpush1.msra.mxu0 0.0
        %4461 = vmatprep.subr.mxu0 0.0
        %4462 = vmatpush1.msra.mxu0 0.0
        %4463 = vmatprep.subr.mxu0 0.0
        %4464 = vmatpush1.msra.mxu0 0.0
        %4465 = vmatprep.subr.mxu0 0.0
        %4466 = vmatpush1.msra.mxu0 0.0
        %4467 = vmatprep.mubr.f32.mxu0 %v4401
        %4468 = vmatmul.mubr.f32.gmra.mrb[0].mxu0 %v4396
        %v4469 = vpop.f32.mrb[0].mxu0
        %v4470 = vadd.f32 0.0, %v4469
        %v4471 = vpop.f32.mrb[0].mxu0
        %v4472 = vadd.f32 0.0, %v4471
        %4473 = vdwg.mxu0
        %v4474 = vadd.f32 %v4322, %v4470
        %v4475 = vadd.f32 %v4323, %v4472
        %s4476 = scalar_lea.vmem %s8, 64
        %v4477 = vld [vmem:[%s4476] sm:$0xff]
        %v4479 = vsel %vm1863, %v4477, 0
        %4481 = vmatprep.subr.mxu0 %v3264
        %4482 = vmatpush1.msra.mxu0 %v3263
        %4483 = vmatprep.subr.mxu0 0.0
        %4484 = vmatpush1.msra.mxu0 0.0
        %4485 = vmatprep.subr.mxu0 0.0
        %4486 = vmatpush1.msra.mxu0 0.0
        %4487 = vmatprep.subr.mxu0 0.0
        %4488 = vmatpush1.msra.mxu0 0.0
        %4489 = vmatprep.subr.mxu0 0.0
        %4490 = vmatpush1.msra.mxu0 0.0
        %4491 = vmatprep.subr.mxu0 0.0
        %4492 = vmatpush1.msra.mxu0 0.0
        %4493 = vmatprep.subr.mxu0 0.0
        %4494 = vmatpush1.msra.mxu0 0.0
        %4495 = vmatprep.subr.mxu0 0.0
        %4496 = vmatpush1.msra.mxu0 0.0
        %4497 = vmatprep.subr.mxu0 0.0
        %4498 = vmatpush1.msra.mxu0 0.0
        %4499 = vmatprep.subr.mxu0 0.0
        %4500 = vmatpush1.msra.mxu0 0.0
        %4501 = vmatprep.subr.mxu0 0.0
        %4502 = vmatpush1.msra.mxu0 0.0
        %4503 = vmatprep.subr.mxu0 0.0
        %4504 = vmatpush1.msra.mxu0 0.0
        %4505 = vmatprep.subr.mxu0 0.0
        %4506 = vmatpush1.msra.mxu0 0.0
        %4507 = vmatprep.subr.mxu0 0.0
        %4508 = vmatpush1.msra.mxu0 0.0
        %4509 = vmatprep.subr.mxu0 0.0
        %4510 = vmatpush1.msra.mxu0 0.0
        %4511 = vmatprep.subr.mxu0 0.0
        %4512 = vmatpush1.msra.mxu0 0.0
        %4513 = vmatprep.subr.mxu0 0.0
        %4514 = vmatpush1.msra.mxu0 0.0
        %4515 = vmatprep.subr.mxu0 0.0
        %4516 = vmatpush1.msra.mxu0 0.0
        %4517 = vmatprep.subr.mxu0 0.0
        %4518 = vmatpush1.msra.mxu0 0.0
        %4519 = vmatprep.subr.mxu0 0.0
        %4520 = vmatpush1.msra.mxu0 0.0
        %4521 = vmatprep.subr.mxu0 0.0
        %4522 = vmatpush1.msra.mxu0 0.0
        %4523 = vmatprep.subr.mxu0 0.0
        %4524 = vmatpush1.msra.mxu0 0.0
        %4525 = vmatprep.subr.mxu0 0.0
        %4526 = vmatpush1.msra.mxu0 0.0
        %4527 = vmatprep.subr.mxu0 0.0
        %4528 = vmatpush1.msra.mxu0 0.0
        %4529 = vmatprep.subr.mxu0 0.0
        %4530 = vmatpush1.msra.mxu0 0.0
        %4531 = vmatprep.subr.mxu0 0.0
        %4532 = vmatpush1.msra.mxu0 0.0
        %4533 = vmatprep.subr.mxu0 0.0
        %4534 = vmatpush1.msra.mxu0 0.0
        %4535 = vmatprep.subr.mxu0 0.0
        %4536 = vmatpush1.msra.mxu0 0.0
        %4537 = vmatprep.subr.mxu0 0.0
        %4538 = vmatpush1.msra.mxu0 0.0
        %4539 = vmatprep.subr.mxu0 0.0
        %4540 = vmatpush1.msra.mxu0 0.0
        %4541 = vmatprep.subr.mxu0 0.0
        %4542 = vmatpush1.msra.mxu0 0.0
        %4543 = vmatprep.subr.mxu0 0.0
        %4544 = vmatpush1.msra.mxu0 0.0
        %4545 = vmatprep.mubr.f32.mxu0 0.0
        %4546 = vmatmul.mubr.f32.gmra.mrb[0].mxu0 %v4479
        %v4547 = vpop.f32.mrb[0].mxu0
        %v4548 = vadd.f32 0.0, %v4547
        %v4549 = vpop.f32.mrb[0].mxu0
        %v4550 = vadd.f32 0.0, %v4549
        %4551 = vdwg.mxu0
        %v4553 = vsel %vm757, %v4550, 0
        %4555 = vmatprep.subr.mxu0 %v1721
        %4556 = vmatpush1.msra.mxu0 %v1720
        %4557 = vmatprep.subr.mxu0 %v1723
        %4558 = vmatpush1.msra.mxu0 %v1722
        %4559 = vmatprep.subr.mxu0 %v1725
        %4560 = vmatpush1.msra.mxu0 %v1724
        %4561 = vmatprep.subr.mxu0 %v1727
        %4562 = vmatpush1.msra.mxu0 %v1726
        %4563 = vmatprep.subr.mxu0 %v1729
        %4564 = vmatpush1.msra.mxu0 %v1728
        %4565 = vmatprep.subr.mxu0 %v1731
        %4566 = vmatpush1.msra.mxu0 %v1730
        %4567 = vmatprep.subr.mxu0 %v1733
        %4568 = vmatpush1.msra.mxu0 %v1732
        %4569 = vmatprep.subr.mxu0 %v1735
        %4570 = vmatpush1.msra.mxu0 %v1734
        %4571 = vmatprep.subr.mxu0 %v1737
        %4572 = vmatpush1.msra.mxu0 %v1736
        %4573 = vmatprep.subr.mxu0 %v1739
        %4574 = vmatpush1.msra.mxu0 %v1738
        %4575 = vmatprep.subr.mxu0 %v1741
        %4576 = vmatpush1.msra.mxu0 %v1740
        %4577 = vmatprep.subr.mxu0 %v1743
        %4578 = vmatpush1.msra.mxu0 %v1742
        %4579 = vmatprep.subr.mxu0 %v1745
        %4580 = vmatpush1.msra.mxu0 %v1744
        %4581 = vmatprep.subr.mxu0 %v1747
        %4582 = vmatpush1.msra.mxu0 %v1746
        %4583 = vmatprep.subr.mxu0 %v1749
        %4584 = vmatpush1.msra.mxu0 %v1748
        %4585 = vmatprep.subr.mxu0 %v1751
        %4586 = vmatpush1.msra.mxu0 %v1750
        %4587 = vmatprep.subr.mxu0 %v1753
        %4588 = vmatpush1.msra.mxu0 %v1752
        %4589 = vmatprep.subr.mxu0 %v1755
        %4590 = vmatpush1.msra.mxu0 %v1754
        %4591 = vmatprep.subr.mxu0 %v1757
        %4592 = vmatpush1.msra.mxu0 %v1756
        %4593 = vmatprep.subr.mxu0 %v1759
        %4594 = vmatpush1.msra.mxu0 %v1758
        %4595 = vmatprep.subr.mxu0 %v1761
        %4596 = vmatpush1.msra.mxu0 %v1760
        %4597 = vmatprep.subr.mxu0 %v1763
        %4598 = vmatpush1.msra.mxu0 %v1762
        %4599 = vmatprep.subr.mxu0 %v1765
        %4600 = vmatpush1.msra.mxu0 %v1764
        %4601 = vmatprep.subr.mxu0 %v1767
        %4602 = vmatpush1.msra.mxu0 %v1766
        %4603 = vmatprep.subr.mxu0 0.0
        %4604 = vmatpush1.msra.mxu0 0.0
        %4605 = vmatprep.subr.mxu0 0.0
        %4606 = vmatpush1.msra.mxu0 0.0
        %4607 = vmatprep.subr.mxu0 0.0
        %4608 = vmatpush1.msra.mxu0 0.0
        %4609 = vmatprep.subr.mxu0 0.0
        %4610 = vmatpush1.msra.mxu0 0.0
        %4611 = vmatprep.subr.mxu0 0.0
        %4612 = vmatpush1.msra.mxu0 0.0
        %4613 = vmatprep.subr.mxu0 0.0
        %4614 = vmatpush1.msra.mxu0 0.0
        %4615 = vmatprep.subr.mxu0 0.0
        %4616 = vmatpush1.msra.mxu0 0.0
        %4617 = vmatprep.subr.mxu0 0.0
        %4618 = vmatpush1.msra.mxu0 0.0
        %4619 = vmatprep.mubr.f32.mxu0 %v4553
        %4620 = vmatmul.mubr.f32.gmra.mrb[0].mxu0 %v4548
        %v4621 = vpop.f32.mrb[0].mxu0
        %v4622 = vadd.f32 0.0, %v4621
        %v4623 = vpop.f32.mrb[0].mxu0
        %v4624 = vadd.f32 0.0, %v4623
        %4625 = vdwg.mxu0
        %v4626 = vadd.f32 %v4474, %v4622
        %v4627 = vadd.f32 %v4475, %v4624
        %v4628 = vld [vmem:[%s9] sm:$0xff]
        %4630 = vset.pattern.permute.xlu0 0
        %4631 = vperm.xlu0 %4630, %v4628
        %v4632 = vpop.permute.xlu0 %4631
        %v4634 = vmul.f32 %v4626, %v4632
        %v4635 = vmul.f32 %v4627, %v4632
        %v4636 = vld [vmem:[%s10] sm:$0xff]
        %4638 = vset.pattern.permute.xlu0 0
        %4639 = vperm.xlu0 %4638, %v4636
        %v4640 = vpop.permute.xlu0 %4639
        %v4642 = vadd.f32 %v4634, %v4640
        %v4643 = vadd.f32 %v4635, %v4640
        %v4644 = vmax.f32 %v4642, 0.0
        %v4645 = vmax.f32 %v4643, 0.0
        %v4646 = vld [vmem:[%s11] sm:$0xff]
        %v4648 = vsel %vm1863, %v4646, 0
        %4650 = vmatprep.subr.mxu0 %v4645
        %4651 = vmatpush1.msra.mxu0 %v4644
        %4652 = vmatprep.subr.mxu0 0.0
        %4653 = vmatpush1.msra.mxu0 0.0
        %4654 = vmatprep.subr.mxu0 0.0
        %4655 = vmatpush1.msra.mxu0 0.0
        %4656 = vmatprep.subr.mxu0 0.0
        %4657 = vmatpush1.msra.mxu0 0.0
        %4658 = vmatprep.subr.mxu0 0.0
        %4659 = vmatpush1.msra.mxu0 0.0
        %4660 = vmatprep.subr.mxu0 0.0
        %4661 = vmatpush1.msra.mxu0 0.0
        %4662 = vmatprep.subr.mxu0 0.0
        %4663 = vmatpush1.msra.mxu0 0.0
        %4664 = vmatprep.subr.mxu0 0.0
        %4665 = vmatpush1.msra.mxu0 0.0
        %4666 = vmatprep.subr.mxu0 0.0
        %4667 = vmatpush1.msra.mxu0 0.0
        %4668 = vmatprep.subr.mxu0 0.0
        %4669 = vmatpush1.msra.mxu0 0.0
        %4670 = vmatprep.subr.mxu0 0.0
        %4671 = vmatpush1.msra.mxu0 0.0
        %4672 = vmatprep.subr.mxu0 0.0
        %4673 = vmatpush1.msra.mxu0 0.0
        %4674 = vmatprep.subr.mxu0 0.0
        %4675 = vmatpush1.msra.mxu0 0.0
        %4676 = vmatprep.subr.mxu0 0.0
        %4677 = vmatpush1.msra.mxu0 0.0
        %4678 = vmatprep.subr.mxu0 0.0
        %4679 = vmatpush1.msra.mxu0 0.0
        %4680 = vmatprep.subr.mxu0 0.0
        %4681 = vmatpush1.msra.mxu0 0.0
        %4682 = vmatprep.subr.mxu0 0.0
        %4683 = vmatpush1.msra.mxu0 0.0
        %4684 = vmatprep.subr.mxu0 0.0
        %4685 = vmatpush1.msra.mxu0 0.0
        %4686 = vmatprep.subr.mxu0 0.0
        %4687 = vmatpush1.msra.mxu0 0.0
        %4688 = vmatprep.subr.mxu0 0.0
        %4689 = vmatpush1.msra.mxu0 0.0
        %4690 = vmatprep.subr.mxu0 0.0
        %4691 = vmatpush1.msra.mxu0 0.0
        %4692 = vmatprep.subr.mxu0 0.0
        %4693 = vmatpush1.msra.mxu0 0.0
        %4694 = vmatprep.subr.mxu0 0.0
        %4695 = vmatpush1.msra.mxu0 0.0
        %4696 = vmatprep.subr.mxu0 0.0
        %4697 = vmatpush1.msra.mxu0 0.0
        %4698 = vmatprep.subr.mxu0 0.0
        %4699 = vmatpush1.msra.mxu0 0.0
        %4700 = vmatprep.subr.mxu0 0.0
        %4701 = vmatpush1.msra.mxu0 0.0
        %4702 = vmatprep.subr.mxu0 0.0
        %4703 = vmatpush1.msra.mxu0 0.0
        %4704 = vmatprep.subr.mxu0 0.0
        %4705 = vmatpush1.msra.mxu0 0.0
        %4706 = vmatprep.subr.mxu0 0.0
        %4707 = vmatpush1.msra.mxu0 0.0
        %4708 = vmatprep.subr.mxu0 0.0
        %4709 = vmatpush1.msra.mxu0 0.0
        %4710 = vmatprep.subr.mxu0 0.0
        %4711 = vmatpush1.msra.mxu0 0.0
        %4712 = vmatprep.subr.mxu0 0.0
        %4713 = vmatpush1.msra.mxu0 0.0
        %4714 = vmatprep.mubr.f32.mxu0 0.0
        %4715 = vmatmul.mubr.f32.gmra.mrb[0].mxu0 %v4648
        %v4716 = vpop.f32.mrb[0].mxu0
        %v4717 = vadd.f32 0.0, %v4716
        %v4718 = vpop.f32.mrb[0].mxu0
        %v4719 = vadd.f32 0.0, %v4718
        %4720 = vdwg.mxu0
        %s4721 = scalar_lea.vmem %s11, 8
        %v4722 = vld [vmem:[%s4721] sm:$0xff]
        %v4724 = vsel %vm1863, %v4722, 0
        %4726 = vmatprep.subr.mxu0 %v4645
        %4727 = vmatpush1.msra.mxu0 %v4644
        %4728 = vmatprep.subr.mxu0 0.0
        %4729 = vmatpush1.msra.mxu0 0.0
        %4730 = vmatprep.subr.mxu0 0.0
        %4731 = vmatpush1.msra.mxu0 0.0
        %4732 = vmatprep.subr.mxu0 0.0
        %4733 = vmatpush1.msra.mxu0 0.0
        %4734 = vmatprep.subr.mxu0 0.0
        %4735 = vmatpush1.msra.mxu0 0.0
        %4736 = vmatprep.subr.mxu0 0.0
        %4737 = vmatpush1.msra.mxu0 0.0
        %4738 = vmatprep.subr.mxu0 0.0
        %4739 = vmatpush1.msra.mxu0 0.0
        %4740 = vmatprep.subr.mxu0 0.0
        %4741 = vmatpush1.msra.mxu0 0.0
        %4742 = vmatprep.subr.mxu0 0.0
        %4743 = vmatpush1.msra.mxu0 0.0
        %4744 = vmatprep.subr.mxu0 0.0
        %4745 = vmatpush1.msra.mxu0 0.0
        %4746 = vmatprep.subr.mxu0 0.0
        %4747 = vmatpush1.msra.mxu0 0.0
        %4748 = vmatprep.subr.mxu0 0.0
        %4749 = vmatpush1.msra.mxu0 0.0
        %4750 = vmatprep.subr.mxu0 0.0
        %4751 = vmatpush1.msra.mxu0 0.0
        %4752 = vmatprep.subr.mxu0 0.0
        %4753 = vmatpush1.msra.mxu0 0.0
        %4754 = vmatprep.subr.mxu0 0.0
        %4755 = vmatpush1.msra.mxu0 0.0
        %4756 = vmatprep.subr.mxu0 0.0
        %4757 = vmatpush1.msra.mxu0 0.0
        %4758 = vmatprep.subr.mxu0 0.0
        %4759 = vmatpush1.msra.mxu0 0.0
        %4760 = vmatprep.subr.mxu0 0.0
        %4761 = vmatpush1.msra.mxu0 0.0
        %4762 = vmatprep.subr.mxu0 0.0
        %4763 = vmatpush1.msra.mxu0 0.0
        %4764 = vmatprep.subr.mxu0 0.0
        %4765 = vmatpush1.msra.mxu0 0.0
        %4766 = vmatprep.subr.mxu0 0.0
        %4767 = vmatpush1.msra.mxu0 0.0
        %4768 = vmatprep.subr.mxu0 0.0
        %4769 = vmatpush1.msra.mxu0 0.0
        %4770 = vmatprep.subr.mxu0 0.0
        %4771 = vmatpush1.msra.mxu0 0.0
        %4772 = vmatprep.subr.mxu0 0.0
        %4773 = vmatpush1.msra.mxu0 0.0
        %4774 = vmatprep.subr.mxu0 0.0
        %4775 = vmatpush1.msra.mxu0 0.0
        %4776 = vmatprep.subr.mxu0 0.0
        %4777 = vmatpush1.msra.mxu0 0.0
        %4778 = vmatprep.subr.mxu0 0.0
        %4779 = vmatpush1.msra.mxu0 0.0
        %4780 = vmatprep.subr.mxu0 0.0
        %4781 = vmatpush1.msra.mxu0 0.0
        %4782 = vmatprep.subr.mxu0 0.0
        %4783 = vmatpush1.msra.mxu0 0.0
        %4784 = vmatprep.subr.mxu0 0.0
        %4785 = vmatpush1.msra.mxu0 0.0
        %4786 = vmatprep.subr.mxu0 0.0
        %4787 = vmatpush1.msra.mxu0 0.0
        %4788 = vmatprep.subr.mxu0 0.0
        %4789 = vmatpush1.msra.mxu0 0.0
        %4790 = vmatprep.mubr.f32.mxu0 0.0
        %4791 = vmatmul.mubr.f32.gmra.mrb[0].mxu0 %v4724
        %v4792 = vpop.f32.mrb[0].mxu0
        %v4793 = vadd.f32 0.0, %v4792
        %v4794 = vpop.f32.mrb[0].mxu0
        %v4795 = vadd.f32 0.0, %v4794
        %4796 = vdwg.mxu0
        %v4798 = vsel %vm757, %v4795, 0
        %4800 = vmatprep.subr.mxu0 %v710
        %4801 = vmatpush1.msra.mxu0 %v709
        %4802 = vmatprep.subr.mxu0 %v712
        %4803 = vmatpush1.msra.mxu0 %v711
        %4804 = vmatprep.subr.mxu0 %v714
        %4805 = vmatpush1.msra.mxu0 %v713
        %4806 = vmatprep.subr.mxu0 %v716
        %4807 = vmatpush1.msra.mxu0 %v715
        %4808 = vmatprep.subr.mxu0 %v718
        %4809 = vmatpush1.msra.mxu0 %v717
        %4810 = vmatprep.subr.mxu0 %v720
        %4811 = vmatpush1.msra.mxu0 %v719
        %4812 = vmatprep.subr.mxu0 %v722
        %4813 = vmatpush1.msra.mxu0 %v721
        %4814 = vmatprep.subr.mxu0 %v724
        %4815 = vmatpush1.msra.mxu0 %v723
        %4816 = vmatprep.subr.mxu0 %v726
        %4817 = vmatpush1.msra.mxu0 %v725
        %4818 = vmatprep.subr.mxu0 %v728
        %4819 = vmatpush1.msra.mxu0 %v727
        %4820 = vmatprep.subr.mxu0 %v730
        %4821 = vmatpush1.msra.mxu0 %v729
        %4822 = vmatprep.subr.mxu0 %v732
        %4823 = vmatpush1.msra.mxu0 %v731
        %4824 = vmatprep.subr.mxu0 %v734
        %4825 = vmatpush1.msra.mxu0 %v733
        %4826 = vmatprep.subr.mxu0 %v736
        %4827 = vmatpush1.msra.mxu0 %v735
        %4828 = vmatprep.subr.mxu0 %v738
        %4829 = vmatpush1.msra.mxu0 %v737
        %4830 = vmatprep.subr.mxu0 %v740
        %4831 = vmatpush1.msra.mxu0 %v739
        %4832 = vmatprep.subr.mxu0 %v742
        %4833 = vmatpush1.msra.mxu0 %v741
        %4834 = vmatprep.subr.mxu0 %v744
        %4835 = vmatpush1.msra.mxu0 %v743
        %4836 = vmatprep.subr.mxu0 %v746
        %4837 = vmatpush1.msra.mxu0 %v745
        %4838 = vmatprep.subr.mxu0 %v748
        %4839 = vmatpush1.msra.mxu0 %v747
        %4840 = vmatprep.subr.mxu0 %v750
        %4841 = vmatpush1.msra.mxu0 %v749
        %4842 = vmatprep.subr.mxu0 %v752
        %4843 = vmatpush1.msra.mxu0 %v751
        %4844 = vmatprep.subr.mxu0 %v754
        %4845 = vmatpush1.msra.mxu0 %v753
        %4846 = vmatprep.subr.mxu0 %v756
        %4847 = vmatpush1.msra.mxu0 %v755
        %4848 = vmatprep.subr.mxu0 0.0
        %4849 = vmatpush1.msra.mxu0 0.0
        %4850 = vmatprep.subr.mxu0 0.0
        %4851 = vmatpush1.msra.mxu0 0.0
        %4852 = vmatprep.subr.mxu0 0.0
        %4853 = vmatpush1.msra.mxu0 0.0
        %4854 = vmatprep.subr.mxu0 0.0
        %4855 = vmatpush1.msra.mxu0 0.0
        %4856 = vmatprep.subr.mxu0 0.0
        %4857 = vmatpush1.msra.mxu0 0.0
        %4858 = vmatprep.subr.mxu0 0.0
        %4859 = vmatpush1.msra.mxu0 0.0
        %4860 = vmatprep.subr.mxu0 0.0
        %4861 = vmatpush1.msra.mxu0 0.0
        %4862 = vmatprep.subr.mxu0 0.0
        %4863 = vmatpush1.msra.mxu0 0.0
        %4864 = vmatprep.mubr.f32.mxu0 %v4798
        %4865 = vmatmul.mubr.f32.gmra.mrb[0].mxu0 %v4793
        %v4866 = vpop.f32.mrb[0].mxu0
        %v4867 = vadd.f32 0.0, %v4866
        %v4868 = vpop.f32.mrb[0].mxu0
        %v4869 = vadd.f32 0.0, %v4868
        %4870 = vdwg.mxu0
        %v4872 = vsel %vm757, %v4719, 0
        %4874 = vmatprep.subr.mxu0 %v652
        %4875 = vmatpush1.msra.mxu0 %v651
        %4876 = vmatprep.subr.mxu0 %v654
        %4877 = vmatpush1.msra.mxu0 %v653
        %4878 = vmatprep.subr.mxu0 %v656
        %4879 = vmatpush1.msra.mxu0 %v655
        %4880 = vmatprep.subr.mxu0 %v658
        %4881 = vmatpush1.msra.mxu0 %v657
        %4882 = vmatprep.subr.mxu0 %v660
        %4883 = vmatpush1.msra.mxu0 %v659
        %4884 = vmatprep.subr.mxu0 %v662
        %4885 = vmatpush1.msra.mxu0 %v661
        %4886 = vmatprep.subr.mxu0 %v664
        %4887 = vmatpush1.msra.mxu0 %v663
        %4888 = vmatprep.subr.mxu0 %v666
        %4889 = vmatpush1.msra.mxu0 %v665
        %4890 = vmatprep.subr.mxu0 %v668
        %4891 = vmatpush1.msra.mxu0 %v667
        %4892 = vmatprep.subr.mxu0 %v670
        %4893 = vmatpush1.msra.mxu0 %v669
        %4894 = vmatprep.subr.mxu0 %v672
        %4895 = vmatpush1.msra.mxu0 %v671
        %4896 = vmatprep.subr.mxu0 %v674
        %4897 = vmatpush1.msra.mxu0 %v673
        %4898 = vmatprep.subr.mxu0 %v676
        %4899 = vmatpush1.msra.mxu0 %v675
        %4900 = vmatprep.subr.mxu0 %v678
        %4901 = vmatpush1.msra.mxu0 %v677
        %4902 = vmatprep.subr.mxu0 %v680
        %4903 = vmatpush1.msra.mxu0 %v679
        %4904 = vmatprep.subr.mxu0 %v682
        %4905 = vmatpush1.msra.mxu0 %v681
        %4906 = vmatprep.subr.mxu0 %v684
        %4907 = vmatpush1.msra.mxu0 %v683
        %4908 = vmatprep.subr.mxu0 %v686
        %4909 = vmatpush1.msra.mxu0 %v685
        %4910 = vmatprep.subr.mxu0 %v688
        %4911 = vmatpush1.msra.mxu0 %v687
        %4912 = vmatprep.subr.mxu0 %v690
        %4913 = vmatpush1.msra.mxu0 %v689
        %4914 = vmatprep.subr.mxu0 %v692
        %4915 = vmatpush1.msra.mxu0 %v691
        %4916 = vmatprep.subr.mxu0 %v694
        %4917 = vmatpush1.msra.mxu0 %v693
        %4918 = vmatprep.subr.mxu0 %v696
        %4919 = vmatpush1.msra.mxu0 %v695
        %4920 = vmatprep.subr.mxu0 %v698
        %4921 = vmatpush1.msra.mxu0 %v697
        %4922 = vmatprep.subr.mxu0 0.0
        %4923 = vmatpush1.msra.mxu0 0.0
        %4924 = vmatprep.subr.mxu0 0.0
        %4925 = vmatpush1.msra.mxu0 0.0
        %4926 = vmatprep.subr.mxu0 0.0
        %4927 = vmatpush1.msra.mxu0 0.0
        %4928 = vmatprep.subr.mxu0 0.0
        %4929 = vmatpush1.msra.mxu0 0.0
        %4930 = vmatprep.subr.mxu0 0.0
        %4931 = vmatpush1.msra.mxu0 0.0
        %4932 = vmatprep.subr.mxu0 0.0
        %4933 = vmatpush1.msra.mxu0 0.0
        %4934 = vmatprep.subr.mxu0 0.0
        %4935 = vmatpush1.msra.mxu0 0.0
        %4936 = vmatprep.subr.mxu0 0.0
        %4937 = vmatpush1.msra.mxu0 0.0
        %4938 = vmatprep.mubr.f32.mxu0 %v4872
        %4939 = vmatmul.mubr.f32.gmra.mrb[0].mxu0 %v4717
        %v4940 = vpop.f32.mrb[0].mxu0
        %v4941 = vadd.f32 %v4867, %v4940
        %v4942 = vpop.f32.mrb[0].mxu0
        %v4943 = vadd.f32 %v4869, %v4942
        %4944 = vdwg.mxu0
        %s4945 = scalar_lea.vmem %s11, 16
        %v4946 = vld [vmem:[%s4945] sm:$0xff]
        %v4948 = vsel %vm1863, %v4946, 0
        %4950 = vmatprep.subr.mxu0 %v4645
        %4951 = vmatpush1.msra.mxu0 %v4644
        %4952 = vmatprep.subr.mxu0 0.0
        %4953 = vmatpush1.msra.mxu0 0.0
        %4954 = vmatprep.subr.mxu0 0.0
        %4955 = vmatpush1.msra.mxu0 0.0
        %4956 = vmatprep.subr.mxu0 0.0
        %4957 = vmatpush1.msra.mxu0 0.0
        %4958 = vmatprep.subr.mxu0 0.0
        %4959 = vmatpush1.msra.mxu0 0.0
        %4960 = vmatprep.subr.mxu0 0.0
        %4961 = vmatpush1.msra.mxu0 0.0
        %4962 = vmatprep.subr.mxu0 0.0
        %4963 = vmatpush1.msra.mxu0 0.0
        %4964 = vmatprep.subr.mxu0 0.0
        %4965 = vmatpush1.msra.mxu0 0.0
        %4966 = vmatprep.subr.mxu0 0.0
        %4967 = vmatpush1.msra.mxu0 0.0
        %4968 = vmatprep.subr.mxu0 0.0
        %4969 = vmatpush1.msra.mxu0 0.0
        %4970 = vmatprep.subr.mxu0 0.0
        %4971 = vmatpush1.msra.mxu0 0.0
        %4972 = vmatprep.subr.mxu0 0.0
        %4973 = vmatpush1.msra.mxu0 0.0
        %4974 = vmatprep.subr.mxu0 0.0
        %4975 = vmatpush1.msra.mxu0 0.0
        %4976 = vmatprep.subr.mxu0 0.0
        %4977 = vmatpush1.msra.mxu0 0.0
        %4978 = vmatprep.subr.mxu0 0.0
        %4979 = vmatpush1.msra.mxu0 0.0
        %4980 = vmatprep.subr.mxu0 0.0
        %4981 = vmatpush1.msra.mxu0 0.0
        %4982 = vmatprep.subr.mxu0 0.0
        %4983 = vmatpush1.msra.mxu0 0.0
        %4984 = vmatprep.subr.mxu0 0.0
        %4985 = vmatpush1.msra.mxu0 0.0
        %4986 = vmatprep.subr.mxu0 0.0
        %4987 = vmatpush1.msra.mxu0 0.0
        %4988 = vmatprep.subr.mxu0 0.0
        %4989 = vmatpush1.msra.mxu0 0.0
        %4990 = vmatprep.subr.mxu0 0.0
        %4991 = vmatpush1.msra.mxu0 0.0
        %4992 = vmatprep.subr.mxu0 0.0
        %4993 = vmatpush1.msra.mxu0 0.0
        %4994 = vmatprep.subr.mxu0 0.0
        %4995 = vmatpush1.msra.mxu0 0.0
        %4996 = vmatprep.subr.mxu0 0.0
        %4997 = vmatpush1.msra.mxu0 0.0
        %4998 = vmatprep.subr.mxu0 0.0
        %4999 = vmatpush1.msra.mxu0 0.0
        %5000 = vmatprep.subr.mxu0 0.0
        %5001 = vmatpush1.msra.mxu0 0.0
        %5002 = vmatprep.subr.mxu0 0.0
        %5003 = vmatpush1.msra.mxu0 0.0
        %5004 = vmatprep.subr.mxu0 0.0
        %5005 = vmatpush1.msra.mxu0 0.0
        %5006 = vmatprep.subr.mxu0 0.0
        %5007 = vmatpush1.msra.mxu0 0.0
        %5008 = vmatprep.subr.mxu0 0.0
        %5009 = vmatpush1.msra.mxu0 0.0
        %5010 = vmatprep.subr.mxu0 0.0
        %5011 = vmatpush1.msra.mxu0 0.0
        %5012 = vmatprep.subr.mxu0 0.0
        %5013 = vmatpush1.msra.mxu0 0.0
        %5014 = vmatprep.mubr.f32.mxu0 0.0
        %5015 = vmatmul.mubr.f32.gmra.mrb[0].mxu0 %v4948
        %v5016 = vpop.f32.mrb[0].mxu0
        %v5017 = vadd.f32 0.0, %v5016
        %v5018 = vpop.f32.mrb[0].mxu0
        %v5019 = vadd.f32 0.0, %v5018
        %5020 = vdwg.mxu0
        %v5022 = vsel %vm757, %v5019, 0
        %5024 = vmatprep.subr.mxu0 %v917
        %5025 = vmatpush1.msra.mxu0 %v916
        %5026 = vmatprep.subr.mxu0 %v919
        %5027 = vmatpush1.msra.mxu0 %v918
        %5028 = vmatprep.subr.mxu0 %v921
        %5029 = vmatpush1.msra.mxu0 %v920
        %5030 = vmatprep.subr.mxu0 %v923
        %5031 = vmatpush1.msra.mxu0 %v922
        %5032 = vmatprep.subr.mxu0 %v925
        %5033 = vmatpush1.msra.mxu0 %v924
        %5034 = vmatprep.subr.mxu0 %v927
        %5035 = vmatpush1.msra.mxu0 %v926
        %5036 = vmatprep.subr.mxu0 %v929
        %5037 = vmatpush1.msra.mxu0 %v928
        %5038 = vmatprep.subr.mxu0 %v931
        %5039 = vmatpush1.msra.mxu0 %v930
        %5040 = vmatprep.subr.mxu0 %v933
        %5041 = vmatpush1.msra.mxu0 %v932
        %5042 = vmatprep.subr.mxu0 %v935
        %5043 = vmatpush1.msra.mxu0 %v934
        %5044 = vmatprep.subr.mxu0 %v937
        %5045 = vmatpush1.msra.mxu0 %v936
        %5046 = vmatprep.subr.mxu0 %v939
        %5047 = vmatpush1.msra.mxu0 %v938
        %5048 = vmatprep.subr.mxu0 %v941
        %5049 = vmatpush1.msra.mxu0 %v940
        %5050 = vmatprep.subr.mxu0 %v943
        %5051 = vmatpush1.msra.mxu0 %v942
        %5052 = vmatprep.subr.mxu0 %v945
        %5053 = vmatpush1.msra.mxu0 %v944
        %5054 = vmatprep.subr.mxu0 %v947
        %5055 = vmatpush1.msra.mxu0 %v946
        %5056 = vmatprep.subr.mxu0 %v949
        %5057 = vmatpush1.msra.mxu0 %v948
        %5058 = vmatprep.subr.mxu0 %v951
        %5059 = vmatpush1.msra.mxu0 %v950
        %5060 = vmatprep.subr.mxu0 %v953
        %5061 = vmatpush1.msra.mxu0 %v952
        %5062 = vmatprep.subr.mxu0 %v955
        %5063 = vmatpush1.msra.mxu0 %v954
        %5064 = vmatprep.subr.mxu0 %v957
        %5065 = vmatpush1.msra.mxu0 %v956
        %5066 = vmatprep.subr.mxu0 %v959
        %5067 = vmatpush1.msra.mxu0 %v958
        %5068 = vmatprep.subr.mxu0 %v961
        %5069 = vmatpush1.msra.mxu0 %v960
        %5070 = vmatprep.subr.mxu0 %v963
        %5071 = vmatpush1.msra.mxu0 %v962
        %5072 = vmatprep.subr.mxu0 0.0
        %5073 = vmatpush1.msra.mxu0 0.0
        %5074 = vmatprep.subr.mxu0 0.0
        %5075 = vmatpush1.msra.mxu0 0.0
        %5076 = vmatprep.subr.mxu0 0.0
        %5077 = vmatpush1.msra.mxu0 0.0
        %5078 = vmatprep.subr.mxu0 0.0
        %5079 = vmatpush1.msra.mxu0 0.0
        %5080 = vmatprep.subr.mxu0 0.0
        %5081 = vmatpush1.msra.mxu0 0.0
        %5082 = vmatprep.subr.mxu0 0.0
        %5083 = vmatpush1.msra.mxu0 0.0
        %5084 = vmatprep.subr.mxu0 0.0
        %5085 = vmatpush1.msra.mxu0 0.0
        %5086 = vmatprep.subr.mxu0 0.0
        %5087 = vmatpush1.msra.mxu0 0.0
        %5088 = vmatprep.mubr.f32.mxu0 %v5022
        %5089 = vmatmul.mubr.f32.gmra.mrb[0].mxu0 %v5017
        %v5090 = vpop.f32.mrb[0].mxu0
        %v5091 = vadd.f32 0.0, %v5090
        %v5092 = vpop.f32.mrb[0].mxu0
        %v5093 = vadd.f32 0.0, %v5092
        %5094 = vdwg.mxu0
        %v5095 = vadd.f32 %v4941, %v5091
        %v5096 = vadd.f32 %v4943, %v5093
        %s5097 = scalar_lea.vmem %s11, 24
        %v5098 = vld [vmem:[%s5097] sm:$0xff]
        %v5100 = vsel %vm1863, %v5098, 0
        %5102 = vmatprep.subr.mxu0 %v4645
        %5103 = vmatpush1.msra.mxu0 %v4644
        %5104 = vmatprep.subr.mxu0 0.0
        %5105 = vmatpush1.msra.mxu0 0.0
        %5106 = vmatprep.subr.mxu0 0.0
        %5107 = vmatpush1.msra.mxu0 0.0
        %5108 = vmatprep.subr.mxu0 0.0
        %5109 = vmatpush1.msra.mxu0 0.0
        %5110 = vmatprep.subr.mxu0 0.0
        %5111 = vmatpush1.msra.mxu0 0.0
        %5112 = vmatprep.subr.mxu0 0.0
        %5113 = vmatpush1.msra.mxu0 0.0
        %5114 = vmatprep.subr.mxu0 0.0
        %5115 = vmatpush1.msra.mxu0 0.0
        %5116 = vmatprep.subr.mxu0 0.0
        %5117 = vmatpush1.msra.mxu0 0.0
        %5118 = vmatprep.subr.mxu0 0.0
        %5119 = vmatpush1.msra.mxu0 0.0
        %5120 = vmatprep.subr.mxu0 0.0
        %5121 = vmatpush1.msra.mxu0 0.0
        %5122 = vmatprep.subr.mxu0 0.0
        %5123 = vmatpush1.msra.mxu0 0.0
        %5124 = vmatprep.subr.mxu0 0.0
        %5125 = vmatpush1.msra.mxu0 0.0
        %5126 = vmatprep.subr.mxu0 0.0
        %5127 = vmatpush1.msra.mxu0 0.0
        %5128 = vmatprep.subr.mxu0 0.0
        %5129 = vmatpush1.msra.mxu0 0.0
        %5130 = vmatprep.subr.mxu0 0.0
        %5131 = vmatpush1.msra.mxu0 0.0
        %5132 = vmatprep.subr.mxu0 0.0
        %5133 = vmatpush1.msra.mxu0 0.0
        %5134 = vmatprep.subr.mxu0 0.0
        %5135 = vmatpush1.msra.mxu0 0.0
        %5136 = vmatprep.subr.mxu0 0.0
        %5137 = vmatpush1.msra.mxu0 0.0
        %5138 = vmatprep.subr.mxu0 0.0
        %5139 = vmatpush1.msra.mxu0 0.0
        %5140 = vmatprep.subr.mxu0 0.0
        %5141 = vmatpush1.msra.mxu0 0.0
        %5142 = vmatprep.subr.mxu0 0.0
        %5143 = vmatpush1.msra.mxu0 0.0
        %5144 = vmatprep.subr.mxu0 0.0
        %5145 = vmatpush1.msra.mxu0 0.0
        %5146 = vmatprep.subr.mxu0 0.0
        %5147 = vmatpush1.msra.mxu0 0.0
        %5148 = vmatprep.subr.mxu0 0.0
        %5149 = vmatpush1.msra.mxu0 0.0
        %5150 = vmatprep.subr.mxu0 0.0
        %5151 = vmatpush1.msra.mxu0 0.0
        %5152 = vmatprep.subr.mxu0 0.0
        %5153 = vmatpush1.msra.mxu0 0.0
        %5154 = vmatprep.subr.mxu0 0.0
        %5155 = vmatpush1.msra.mxu0 0.0
        %5156 = vmatprep.subr.mxu0 0.0
        %5157 = vmatpush1.msra.mxu0 0.0
        %5158 = vmatprep.subr.mxu0 0.0
        %5159 = vmatpush1.msra.mxu0 0.0
        %5160 = vmatprep.subr.mxu0 0.0
        %5161 = vmatpush1.msra.mxu0 0.0
        %5162 = vmatprep.subr.mxu0 0.0
        %5163 = vmatpush1.msra.mxu0 0.0
        %5164 = vmatprep.subr.mxu0 0.0
        %5165 = vmatpush1.msra.mxu0 0.0
        %5166 = vmatprep.mubr.f32.mxu0 0.0
        %5167 = vmatmul.mubr.f32.gmra.mrb[0].mxu0 %v5100
        %v5168 = vpop.f32.mrb[0].mxu0
        %v5169 = vadd.f32 0.0, %v5168
        %v5170 = vpop.f32.mrb[0].mxu0
        %v5171 = vadd.f32 0.0, %v5170
        %5172 = vdwg.mxu0
        %v5174 = vsel %vm757, %v5171, 0
        %5176 = vmatprep.subr.mxu0 %v1051
        %5177 = vmatpush1.msra.mxu0 %v1050
        %5178 = vmatprep.subr.mxu0 %v1053
        %5179 = vmatpush1.msra.mxu0 %v1052
        %5180 = vmatprep.subr.mxu0 %v1055
        %5181 = vmatpush1.msra.mxu0 %v1054
        %5182 = vmatprep.subr.mxu0 %v1057
        %5183 = vmatpush1.msra.mxu0 %v1056
        %5184 = vmatprep.subr.mxu0 %v1059
        %5185 = vmatpush1.msra.mxu0 %v1058
        %5186 = vmatprep.subr.mxu0 %v1061
        %5187 = vmatpush1.msra.mxu0 %v1060
        %5188 = vmatprep.subr.mxu0 %v1063
        %5189 = vmatpush1.msra.mxu0 %v1062
        %5190 = vmatprep.subr.mxu0 %v1065
        %5191 = vmatpush1.msra.mxu0 %v1064
        %5192 = vmatprep.subr.mxu0 %v1067
        %5193 = vmatpush1.msra.mxu0 %v1066
        %5194 = vmatprep.subr.mxu0 %v1069
        %5195 = vmatpush1.msra.mxu0 %v1068
        %5196 = vmatprep.subr.mxu0 %v1071
        %5197 = vmatpush1.msra.mxu0 %v1070
        %5198 = vmatprep.subr.mxu0 %v1073
        %5199 = vmatpush1.msra.mxu0 %v1072
        %5200 = vmatprep.subr.mxu0 %v1075
        %5201 = vmatpush1.msra.mxu0 %v1074
        %5202 = vmatprep.subr.mxu0 %v1077
        %5203 = vmatpush1.msra.mxu0 %v1076
        %5204 = vmatprep.subr.mxu0 %v1079
        %5205 = vmatpush1.msra.mxu0 %v1078
        %5206 = vmatprep.subr.mxu0 %v1081
        %5207 = vmatpush1.msra.mxu0 %v1080
        %5208 = vmatprep.subr.mxu0 %v1083
        %5209 = vmatpush1.msra.mxu0 %v1082
        %5210 = vmatprep.subr.mxu0 %v1085
        %5211 = vmatpush1.msra.mxu0 %v1084
        %5212 = vmatprep.subr.mxu0 %v1087
        %5213 = vmatpush1.msra.mxu0 %v1086
        %5214 = vmatprep.subr.mxu0 %v1089
        %5215 = vmatpush1.msra.mxu0 %v1088
        %5216 = vmatprep.subr.mxu0 %v1091
        %5217 = vmatpush1.msra.mxu0 %v1090
        %5218 = vmatprep.subr.mxu0 %v1093
        %5219 = vmatpush1.msra.mxu0 %v1092
        %5220 = vmatprep.subr.mxu0 %v1095
        %5221 = vmatpush1.msra.mxu0 %v1094
        %5222 = vmatprep.subr.mxu0 %v1097
        %5223 = vmatpush1.msra.mxu0 %v1096
        %5224 = vmatprep.subr.mxu0 0.0
        %5225 = vmatpush1.msra.mxu0 0.0
        %5226 = vmatprep.subr.mxu0 0.0
        %5227 = vmatpush1.msra.mxu0 0.0
        %5228 = vmatprep.subr.mxu0 0.0
        %5229 = vmatpush1.msra.mxu0 0.0
        %5230 = vmatprep.subr.mxu0 0.0
        %5231 = vmatpush1.msra.mxu0 0.0
        %5232 = vmatprep.subr.mxu0 0.0
        %5233 = vmatpush1.msra.mxu0 0.0
        %5234 = vmatprep.subr.mxu0 0.0
        %5235 = vmatpush1.msra.mxu0 0.0
        %5236 = vmatprep.subr.mxu0 0.0
        %5237 = vmatpush1.msra.mxu0 0.0
        %5238 = vmatprep.subr.mxu0 0.0
        %5239 = vmatpush1.msra.mxu0 0.0
        %5240 = vmatprep.mubr.f32.mxu0 %v5174
        %5241 = vmatmul.mubr.f32.gmra.mrb[0].mxu0 %v5169
        %v5242 = vpop.f32.mrb[0].mxu0
        %v5243 = vadd.f32 0.0, %v5242
        %v5244 = vpop.f32.mrb[0].mxu0
        %v5245 = vadd.f32 0.0, %v5244
        %5246 = vdwg.mxu0
        %v5247 = vadd.f32 %v5095, %v5243
        %v5248 = vadd.f32 %v5096, %v5245
        %s5249 = scalar_lea.vmem %s11, 32
        %v5250 = vld [vmem:[%s5249] sm:$0xff]
        %v5252 = vsel %vm1863, %v5250, 0
        %5254 = vmatprep.subr.mxu0 %v4645
        %5255 = vmatpush1.msra.mxu0 %v4644
        %5256 = vmatprep.subr.mxu0 0.0
        %5257 = vmatpush1.msra.mxu0 0.0
        %5258 = vmatprep.subr.mxu0 0.0
        %5259 = vmatpush1.msra.mxu0 0.0
        %5260 = vmatprep.subr.mxu0 0.0
        %5261 = vmatpush1.msra.mxu0 0.0
        %5262 = vmatprep.subr.mxu0 0.0
        %5263 = vmatpush1.msra.mxu0 0.0
        %5264 = vmatprep.subr.mxu0 0.0
        %5265 = vmatpush1.msra.mxu0 0.0
        %5266 = vmatprep.subr.mxu0 0.0
        %5267 = vmatpush1.msra.mxu0 0.0
        %5268 = vmatprep.subr.mxu0 0.0
        %5269 = vmatpush1.msra.mxu0 0.0
        %5270 = vmatprep.subr.mxu0 0.0
        %5271 = vmatpush1.msra.mxu0 0.0
        %5272 = vmatprep.subr.mxu0 0.0
        %5273 = vmatpush1.msra.mxu0 0.0
        %5274 = vmatprep.subr.mxu0 0.0
        %5275 = vmatpush1.msra.mxu0 0.0
        %5276 = vmatprep.subr.mxu0 0.0
        %5277 = vmatpush1.msra.mxu0 0.0
        %5278 = vmatprep.subr.mxu0 0.0
        %5279 = vmatpush1.msra.mxu0 0.0
        %5280 = vmatprep.subr.mxu0 0.0
        %5281 = vmatpush1.msra.mxu0 0.0
        %5282 = vmatprep.subr.mxu0 0.0
        %5283 = vmatpush1.msra.mxu0 0.0
        %5284 = vmatprep.subr.mxu0 0.0
        %5285 = vmatpush1.msra.mxu0 0.0
        %5286 = vmatprep.subr.mxu0 0.0
        %5287 = vmatpush1.msra.mxu0 0.0
        %5288 = vmatprep.subr.mxu0 0.0
        %5289 = vmatpush1.msra.mxu0 0.0
        %5290 = vmatprep.subr.mxu0 0.0
        %5291 = vmatpush1.msra.mxu0 0.0
        %5292 = vmatprep.subr.mxu0 0.0
        %5293 = vmatpush1.msra.mxu0 0.0
        %5294 = vmatprep.subr.mxu0 0.0
        %5295 = vmatpush1.msra.mxu0 0.0
        %5296 = vmatprep.subr.mxu0 0.0
        %5297 = vmatpush1.msra.mxu0 0.0
        %5298 = vmatprep.subr.mxu0 0.0
        %5299 = vmatpush1.msra.mxu0 0.0
        %5300 = vmatprep.subr.mxu0 0.0
        %5301 = vmatpush1.msra.mxu0 0.0
        %5302 = vmatprep.subr.mxu0 0.0
        %5303 = vmatpush1.msra.mxu0 0.0
        %5304 = vmatprep.subr.mxu0 0.0
        %5305 = vmatpush1.msra.mxu0 0.0
        %5306 = vmatprep.subr.mxu0 0.0
        %5307 = vmatpush1.msra.mxu0 0.0
        %5308 = vmatprep.subr.mxu0 0.0
        %5309 = vmatpush1.msra.mxu0 0.0
        %5310 = vmatprep.subr.mxu0 0.0
        %5311 = vmatpush1.msra.mxu0 0.0
        %5312 = vmatprep.subr.mxu0 0.0
        %5313 = vmatpush1.msra.mxu0 0.0
        %5314 = vmatprep.subr.mxu0 0.0
        %5315 = vmatpush1.msra.mxu0 0.0
        %5316 = vmatprep.subr.mxu0 0.0
        %5317 = vmatpush1.msra.mxu0 0.0
        %5318 = vmatprep.mubr.f32.mxu0 0.0
        %5319 = vmatmul.mubr.f32.gmra.mrb[0].mxu0 %v5252
        %v5320 = vpop.f32.mrb[0].mxu0
        %v5321 = vadd.f32 0.0, %v5320
        %v5322 = vpop.f32.mrb[0].mxu0
        %v5323 = vadd.f32 0.0, %v5322
        %5324 = vdwg.mxu0
        %v5326 = vsel %vm757, %v5323, 0
        %5328 = vmatprep.subr.mxu0 %v1185
        %5329 = vmatpush1.msra.mxu0 %v1184
        %5330 = vmatprep.subr.mxu0 %v1187
        %5331 = vmatpush1.msra.mxu0 %v1186
        %5332 = vmatprep.subr.mxu0 %v1189
        %5333 = vmatpush1.msra.mxu0 %v1188
        %5334 = vmatprep.subr.mxu0 %v1191
        %5335 = vmatpush1.msra.mxu0 %v1190
        %5336 = vmatprep.subr.mxu0 %v1193
        %5337 = vmatpush1.msra.mxu0 %v1192
        %5338 = vmatprep.subr.mxu0 %v1195
        %5339 = vmatpush1.msra.mxu0 %v1194
        %5340 = vmatprep.subr.mxu0 %v1197
        %5341 = vmatpush1.msra.mxu0 %v1196
        %5342 = vmatprep.subr.mxu0 %v1199
        %5343 = vmatpush1.msra.mxu0 %v1198
        %5344 = vmatprep.subr.mxu0 %v1201
        %5345 = vmatpush1.msra.mxu0 %v1200
        %5346 = vmatprep.subr.mxu0 %v1203
        %5347 = vmatpush1.msra.mxu0 %v1202
        %5348 = vmatprep.subr.mxu0 %v1205
        %5349 = vmatpush1.msra.mxu0 %v1204
        %5350 = vmatprep.subr.mxu0 %v1207
        %5351 = vmatpush1.msra.mxu0 %v1206
        %5352 = vmatprep.subr.mxu0 %v1209
        %5353 = vmatpush1.msra.mxu0 %v1208
        %5354 = vmatprep.subr.mxu0 %v1211
        %5355 = vmatpush1.msra.mxu0 %v1210
        %5356 = vmatprep.subr.mxu0 %v1213
        %5357 = vmatpush1.msra.mxu0 %v1212
        %5358 = vmatprep.subr.mxu0 %v1215
        %5359 = vmatpush1.msra.mxu0 %v1214
        %5360 = vmatprep.subr.mxu0 %v1217
        %5361 = vmatpush1.msra.mxu0 %v1216
        %5362 = vmatprep.subr.mxu0 %v1219
        %5363 = vmatpush1.msra.mxu0 %v1218
        %5364 = vmatprep.subr.mxu0 %v1221
        %5365 = vmatpush1.msra.mxu0 %v1220
        %5366 = vmatprep.subr.mxu0 %v1223
        %5367 = vmatpush1.msra.mxu0 %v1222
        %5368 = vmatprep.subr.mxu0 %v1225
        %5369 = vmatpush1.msra.mxu0 %v1224
        %5370 = vmatprep.subr.mxu0 %v1227
        %5371 = vmatpush1.msra.mxu0 %v1226
        %5372 = vmatprep.subr.mxu0 %v1229
        %5373 = vmatpush1.msra.mxu0 %v1228
        %5374 = vmatprep.subr.mxu0 %v1231
        %5375 = vmatpush1.msra.mxu0 %v1230
        %5376 = vmatprep.subr.mxu0 0.0
        %5377 = vmatpush1.msra.mxu0 0.0
        %5378 = vmatprep.subr.mxu0 0.0
        %5379 = vmatpush1.msra.mxu0 0.0
        %5380 = vmatprep.subr.mxu0 0.0
        %5381 = vmatpush1.msra.mxu0 0.0
        %5382 = vmatprep.subr.mxu0 0.0
        %5383 = vmatpush1.msra.mxu0 0.0
        %5384 = vmatprep.subr.mxu0 0.0
        %5385 = vmatpush1.msra.mxu0 0.0
        %5386 = vmatprep.subr.mxu0 0.0
        %5387 = vmatpush1.msra.mxu0 0.0
        %5388 = vmatprep.subr.mxu0 0.0
        %5389 = vmatpush1.msra.mxu0 0.0
        %5390 = vmatprep.subr.mxu0 0.0
        %5391 = vmatpush1.msra.mxu0 0.0
        %5392 = vmatprep.mubr.f32.mxu0 %v5326
        %5393 = vmatmul.mubr.f32.gmra.mrb[0].mxu0 %v5321
        %v5394 = vpop.f32.mrb[0].mxu0
        %v5395 = vadd.f32 0.0, %v5394
        %v5396 = vpop.f32.mrb[0].mxu0
        %v5397 = vadd.f32 0.0, %v5396
        %5398 = vdwg.mxu0
        %v5399 = vadd.f32 %v5247, %v5395
        %v5400 = vadd.f32 %v5248, %v5397
        %s5401 = scalar_lea.vmem %s11, 40
        %v5402 = vld [vmem:[%s5401] sm:$0xff]
        %v5404 = vsel %vm1863, %v5402, 0
        %5406 = vmatprep.subr.mxu0 %v4645
        %5407 = vmatpush1.msra.mxu0 %v4644
        %5408 = vmatprep.subr.mxu0 0.0
        %5409 = vmatpush1.msra.mxu0 0.0
        %5410 = vmatprep.subr.mxu0 0.0
        %5411 = vmatpush1.msra.mxu0 0.0
        %5412 = vmatprep.subr.mxu0 0.0
        %5413 = vmatpush1.msra.mxu0 0.0
        %5414 = vmatprep.subr.mxu0 0.0
        %5415 = vmatpush1.msra.mxu0 0.0
        %5416 = vmatprep.subr.mxu0 0.0
        %5417 = vmatpush1.msra.mxu0 0.0
        %5418 = vmatprep.subr.mxu0 0.0
        %5419 = vmatpush1.msra.mxu0 0.0
        %5420 = vmatprep.subr.mxu0 0.0
        %5421 = vmatpush1.msra.mxu0 0.0
        %5422 = vmatprep.subr.mxu0 0.0
        %5423 = vmatpush1.msra.mxu0 0.0
        %5424 = vmatprep.subr.mxu0 0.0
        %5425 = vmatpush1.msra.mxu0 0.0
        %5426 = vmatprep.subr.mxu0 0.0
        %5427 = vmatpush1.msra.mxu0 0.0
        %5428 = vmatprep.subr.mxu0 0.0
        %5429 = vmatpush1.msra.mxu0 0.0
        %5430 = vmatprep.subr.mxu0 0.0
        %5431 = vmatpush1.msra.mxu0 0.0
        %5432 = vmatprep.subr.mxu0 0.0
        %5433 = vmatpush1.msra.mxu0 0.0
        %5434 = vmatprep.subr.mxu0 0.0
        %5435 = vmatpush1.msra.mxu0 0.0
        %5436 = vmatprep.subr.mxu0 0.0
        %5437 = vmatpush1.msra.mxu0 0.0
        %5438 = vmatprep.subr.mxu0 0.0
        %5439 = vmatpush1.msra.mxu0 0.0
        %5440 = vmatprep.subr.mxu0 0.0
        %5441 = vmatpush1.msra.mxu0 0.0
        %5442 = vmatprep.subr.mxu0 0.0
        %5443 = vmatpush1.msra.mxu0 0.0
        %5444 = vmatprep.subr.mxu0 0.0
        %5445 = vmatpush1.msra.mxu0 0.0
        %5446 = vmatprep.subr.mxu0 0.0
        %5447 = vmatpush1.msra.mxu0 0.0
        %5448 = vmatprep.subr.mxu0 0.0
        %5449 = vmatpush1.msra.mxu0 0.0
        %5450 = vmatprep.subr.mxu0 0.0
        %5451 = vmatpush1.msra.mxu0 0.0
        %5452 = vmatprep.subr.mxu0 0.0
        %5453 = vmatpush1.msra.mxu0 0.0
        %5454 = vmatprep.subr.mxu0 0.0
        %5455 = vmatpush1.msra.mxu0 0.0
        %5456 = vmatprep.subr.mxu0 0.0
        %5457 = vmatpush1.msra.mxu0 0.0
        %5458 = vmatprep.subr.mxu0 0.0
        %5459 = vmatpush1.msra.mxu0 0.0
        %5460 = vmatprep.subr.mxu0 0.0
        %5461 = vmatpush1.msra.mxu0 0.0
        %5462 = vmatprep.subr.mxu0 0.0
        %5463 = vmatpush1.msra.mxu0 0.0
        %5464 = vmatprep.subr.mxu0 0.0
        %5465 = vmatpush1.msra.mxu0 0.0
        %5466 = vmatprep.subr.mxu0 0.0
        %5467 = vmatpush1.msra.mxu0 0.0
        %5468 = vmatprep.subr.mxu0 0.0
        %5469 = vmatpush1.msra.mxu0 0.0
        %5470 = vmatprep.mubr.f32.mxu0 0.0
        %5471 = vmatmul.mubr.f32.gmra.mrb[0].mxu0 %v5404
        %v5472 = vpop.f32.mrb[0].mxu0
        %v5473 = vadd.f32 0.0, %v5472
        %v5474 = vpop.f32.mrb[0].mxu0
        %v5475 = vadd.f32 0.0, %v5474
        %5476 = vdwg.mxu0
        %v5478 = vsel %vm757, %v5475, 0
        %5480 = vmatprep.subr.mxu0 %v1319
        %5481 = vmatpush1.msra.mxu0 %v1318
        %5482 = vmatprep.subr.mxu0 %v1321
        %5483 = vmatpush1.msra.mxu0 %v1320
        %5484 = vmatprep.subr.mxu0 %v1323
        %5485 = vmatpush1.msra.mxu0 %v1322
        %5486 = vmatprep.subr.mxu0 %v1325
        %5487 = vmatpush1.msra.mxu0 %v1324
        %5488 = vmatprep.subr.mxu0 %v1327
        %5489 = vmatpush1.msra.mxu0 %v1326
        %5490 = vmatprep.subr.mxu0 %v1329
        %5491 = vmatpush1.msra.mxu0 %v1328
        %5492 = vmatprep.subr.mxu0 %v1331
        %5493 = vmatpush1.msra.mxu0 %v1330
        %5494 = vmatprep.subr.mxu0 %v1333
        %5495 = vmatpush1.msra.mxu0 %v1332
        %5496 = vmatprep.subr.mxu0 %v1335
        %5497 = vmatpush1.msra.mxu0 %v1334
        %5498 = vmatprep.subr.mxu0 %v1337
        %5499 = vmatpush1.msra.mxu0 %v1336
        %5500 = vmatprep.subr.mxu0 %v1339
        %5501 = vmatpush1.msra.mxu0 %v1338
        %5502 = vmatprep.subr.mxu0 %v1341
        %5503 = vmatpush1.msra.mxu0 %v1340
        %5504 = vmatprep.subr.mxu0 %v1343
        %5505 = vmatpush1.msra.mxu0 %v1342
        %5506 = vmatprep.subr.mxu0 %v1345
        %5507 = vmatpush1.msra.mxu0 %v1344
        %5508 = vmatprep.subr.mxu0 %v1347
        %5509 = vmatpush1.msra.mxu0 %v1346
        %5510 = vmatprep.subr.mxu0 %v1349
        %5511 = vmatpush1.msra.mxu0 %v1348
        %5512 = vmatprep.subr.mxu0 %v1351
        %5513 = vmatpush1.msra.mxu0 %v1350
        %5514 = vmatprep.subr.mxu0 %v1353
        %5515 = vmatpush1.msra.mxu0 %v1352
        %5516 = vmatprep.subr.mxu0 %v1355
        %5517 = vmatpush1.msra.mxu0 %v1354
        %5518 = vmatprep.subr.mxu0 %v1357
        %5519 = vmatpush1.msra.mxu0 %v1356
        %5520 = vmatprep.subr.mxu0 %v1359
        %5521 = vmatpush1.msra.mxu0 %v1358
        %5522 = vmatprep.subr.mxu0 %v1361
        %5523 = vmatpush1.msra.mxu0 %v1360
        %5524 = vmatprep.subr.mxu0 %v1363
        %5525 = vmatpush1.msra.mxu0 %v1362
        %5526 = vmatprep.subr.mxu0 %v1365
        %5527 = vmatpush1.msra.mxu0 %v1364
        %5528 = vmatprep.subr.mxu0 0.0
        %5529 = vmatpush1.msra.mxu0 0.0
        %5530 = vmatprep.subr.mxu0 0.0
        %5531 = vmatpush1.msra.mxu0 0.0
        %5532 = vmatprep.subr.mxu0 0.0
        %5533 = vmatpush1.msra.mxu0 0.0
        %5534 = vmatprep.subr.mxu0 0.0
        %5535 = vmatpush1.msra.mxu0 0.0
        %5536 = vmatprep.subr.mxu0 0.0
        %5537 = vmatpush1.msra.mxu0 0.0
        %5538 = vmatprep.subr.mxu0 0.0
        %5539 = vmatpush1.msra.mxu0 0.0
        %5540 = vmatprep.subr.mxu0 0.0
        %5541 = vmatpush1.msra.mxu0 0.0
        %5542 = vmatprep.subr.mxu0 0.0
        %5543 = vmatpush1.msra.mxu0 0.0
        %5544 = vmatprep.mubr.f32.mxu0 %v5478
        %5545 = vmatmul.mubr.f32.gmra.mrb[0].mxu0 %v5473
        %v5546 = vpop.f32.mrb[0].mxu0
        %v5547 = vadd.f32 0.0, %v5546
        %v5548 = vpop.f32.mrb[0].mxu0
        %v5549 = vadd.f32 0.0, %v5548
        %5550 = vdwg.mxu0
        %v5551 = vadd.f32 %v5399, %v5547
        %v5552 = vadd.f32 %v5400, %v5549
        %s5553 = scalar_lea.vmem %s11, 48
        %v5554 = vld [vmem:[%s5553] sm:$0xff]
        %v5556 = vsel %vm1863, %v5554, 0
        %5558 = vmatprep.subr.mxu0 %v4645
        %5559 = vmatpush1.msra.mxu0 %v4644
        %5560 = vmatprep.subr.mxu0 0.0
        %5561 = vmatpush1.msra.mxu0 0.0
        %5562 = vmatprep.subr.mxu0 0.0
        %5563 = vmatpush1.msra.mxu0 0.0
        %5564 = vmatprep.subr.mxu0 0.0
        %5565 = vmatpush1.msra.mxu0 0.0
        %5566 = vmatprep.subr.mxu0 0.0
        %5567 = vmatpush1.msra.mxu0 0.0
        %5568 = vmatprep.subr.mxu0 0.0
        %5569 = vmatpush1.msra.mxu0 0.0
        %5570 = vmatprep.subr.mxu0 0.0
        %5571 = vmatpush1.msra.mxu0 0.0
        %5572 = vmatprep.subr.mxu0 0.0
        %5573 = vmatpush1.msra.mxu0 0.0
        %5574 = vmatprep.subr.mxu0 0.0
        %5575 = vmatpush1.msra.mxu0 0.0
        %5576 = vmatprep.subr.mxu0 0.0
        %5577 = vmatpush1.msra.mxu0 0.0
        %5578 = vmatprep.subr.mxu0 0.0
        %5579 = vmatpush1.msra.mxu0 0.0
        %5580 = vmatprep.subr.mxu0 0.0
        %5581 = vmatpush1.msra.mxu0 0.0
        %5582 = vmatprep.subr.mxu0 0.0
        %5583 = vmatpush1.msra.mxu0 0.0
        %5584 = vmatprep.subr.mxu0 0.0
        %5585 = vmatpush1.msra.mxu0 0.0
        %5586 = vmatprep.subr.mxu0 0.0
        %5587 = vmatpush1.msra.mxu0 0.0
        %5588 = vmatprep.subr.mxu0 0.0
        %5589 = vmatpush1.msra.mxu0 0.0
        %5590 = vmatprep.subr.mxu0 0.0
        %5591 = vmatpush1.msra.mxu0 0.0
        %5592 = vmatprep.subr.mxu0 0.0
        %5593 = vmatpush1.msra.mxu0 0.0
        %5594 = vmatprep.subr.mxu0 0.0
        %5595 = vmatpush1.msra.mxu0 0.0
        %5596 = vmatprep.subr.mxu0 0.0
        %5597 = vmatpush1.msra.mxu0 0.0
        %5598 = vmatprep.subr.mxu0 0.0
        %5599 = vmatpush1.msra.mxu0 0.0
        %5600 = vmatprep.subr.mxu0 0.0
        %5601 = vmatpush1.msra.mxu0 0.0
        %5602 = vmatprep.subr.mxu0 0.0
        %5603 = vmatpush1.msra.mxu0 0.0
        %5604 = vmatprep.subr.mxu0 0.0
        %5605 = vmatpush1.msra.mxu0 0.0
        %5606 = vmatprep.subr.mxu0 0.0
        %5607 = vmatpush1.msra.mxu0 0.0
        %5608 = vmatprep.subr.mxu0 0.0
        %5609 = vmatpush1.msra.mxu0 0.0
        %5610 = vmatprep.subr.mxu0 0.0
        %5611 = vmatpush1.msra.mxu0 0.0
        %5612 = vmatprep.subr.mxu0 0.0
        %5613 = vmatpush1.msra.mxu0 0.0
        %5614 = vmatprep.subr.mxu0 0.0
        %5615 = vmatpush1.msra.mxu0 0.0
        %5616 = vmatprep.subr.mxu0 0.0
        %5617 = vmatpush1.msra.mxu0 0.0
        %5618 = vmatprep.subr.mxu0 0.0
        %5619 = vmatpush1.msra.mxu0 0.0
        %5620 = vmatprep.subr.mxu0 0.0
        %5621 = vmatpush1.msra.mxu0 0.0
        %5622 = vmatprep.mubr.f32.mxu0 0.0
        %5623 = vmatmul.mubr.f32.gmra.mrb[0].mxu0 %v5556
        %v5624 = vpop.f32.mrb[0].mxu0
        %v5625 = vadd.f32 0.0, %v5624
        %v5626 = vpop.f32.mrb[0].mxu0
        %v5627 = vadd.f32 0.0, %v5626
        %5628 = vdwg.mxu0
        %v5630 = vsel %vm757, %v5627, 0
        %5632 = vmatprep.subr.mxu0 %v1453
        %5633 = vmatpush1.msra.mxu0 %v1452
        %5634 = vmatprep.subr.mxu0 %v1455
        %5635 = vmatpush1.msra.mxu0 %v1454
        %5636 = vmatprep.subr.mxu0 %v1457
        %5637 = vmatpush1.msra.mxu0 %v1456
        %5638 = vmatprep.subr.mxu0 %v1459
        %5639 = vmatpush1.msra.mxu0 %v1458
        %5640 = vmatprep.subr.mxu0 %v1461
        %5641 = vmatpush1.msra.mxu0 %v1460
        %5642 = vmatprep.subr.mxu0 %v1463
        %5643 = vmatpush1.msra.mxu0 %v1462
        %5644 = vmatprep.subr.mxu0 %v1465
        %5645 = vmatpush1.msra.mxu0 %v1464
        %5646 = vmatprep.subr.mxu0 %v1467
        %5647 = vmatpush1.msra.mxu0 %v1466
        %5648 = vmatprep.subr.mxu0 %v1469
        %5649 = vmatpush1.msra.mxu0 %v1468
        %5650 = vmatprep.subr.mxu0 %v1471
        %5651 = vmatpush1.msra.mxu0 %v1470
        %5652 = vmatprep.subr.mxu0 %v1473
        %5653 = vmatpush1.msra.mxu0 %v1472
        %5654 = vmatprep.subr.mxu0 %v1475
        %5655 = vmatpush1.msra.mxu0 %v1474
        %5656 = vmatprep.subr.mxu0 %v1477
        %5657 = vmatpush1.msra.mxu0 %v1476
        %5658 = vmatprep.subr.mxu0 %v1479
        %5659 = vmatpush1.msra.mxu0 %v1478
        %5660 = vmatprep.subr.mxu0 %v1481
        %5661 = vmatpush1.msra.mxu0 %v1480
        %5662 = vmatprep.subr.mxu0 %v1483
        %5663 = vmatpush1.msra.mxu0 %v1482
        %5664 = vmatprep.subr.mxu0 %v1485
        %5665 = vmatpush1.msra.mxu0 %v1484
        %5666 = vmatprep.subr.mxu0 %v1487
        %5667 = vmatpush1.msra.mxu0 %v1486
        %5668 = vmatprep.subr.mxu0 %v1489
        %5669 = vmatpush1.msra.mxu0 %v1488
        %5670 = vmatprep.subr.mxu0 %v1491
        %5671 = vmatpush1.msra.mxu0 %v1490
        %5672 = vmatprep.subr.mxu0 %v1493
        %5673 = vmatpush1.msra.mxu0 %v1492
        %5674 = vmatprep.subr.mxu0 %v1495
        %5675 = vmatpush1.msra.mxu0 %v1494
        %5676 = vmatprep.subr.mxu0 %v1497
        %5677 = vmatpush1.msra.mxu0 %v1496
        %5678 = vmatprep.subr.mxu0 %v1499
        %5679 = vmatpush1.msra.mxu0 %v1498
        %5680 = vmatprep.subr.mxu0 0.0
        %5681 = vmatpush1.msra.mxu0 0.0
        %5682 = vmatprep.subr.mxu0 0.0
        %5683 = vmatpush1.msra.mxu0 0.0
        %5684 = vmatprep.subr.mxu0 0.0
        %5685 = vmatpush1.msra.mxu0 0.0
        %5686 = vmatprep.subr.mxu0 0.0
        %5687 = vmatpush1.msra.mxu0 0.0
        %5688 = vmatprep.subr.mxu0 0.0
        %5689 = vmatpush1.msra.mxu0 0.0
        %5690 = vmatprep.subr.mxu0 0.0
        %5691 = vmatpush1.msra.mxu0 0.0
        %5692 = vmatprep.subr.mxu0 0.0
        %5693 = vmatpush1.msra.mxu0 0.0
        %5694 = vmatprep.subr.mxu0 0.0
        %5695 = vmatpush1.msra.mxu0 0.0
        %5696 = vmatprep.mubr.f32.mxu0 %v5630
        %5697 = vmatmul.mubr.f32.gmra.mrb[0].mxu0 %v5625
        %v5698 = vpop.f32.mrb[0].mxu0
        %v5699 = vadd.f32 0.0, %v5698
        %v5700 = vpop.f32.mrb[0].mxu0
        %v5701 = vadd.f32 0.0, %v5700
        %5702 = vdwg.mxu0
        %v5703 = vadd.f32 %v5551, %v5699
        %v5704 = vadd.f32 %v5552, %v5701
        %s5705 = scalar_lea.vmem %s11, 56
        %v5706 = vld [vmem:[%s5705] sm:$0xff]
        %v5708 = vsel %vm1863, %v5706, 0
        %5710 = vmatprep.subr.mxu0 %v4645
        %5711 = vmatpush1.msra.mxu0 %v4644
        %5712 = vmatprep.subr.mxu0 0.0
        %5713 = vmatpush1.msra.mxu0 0.0
        %5714 = vmatprep.subr.mxu0 0.0
        %5715 = vmatpush1.msra.mxu0 0.0
        %5716 = vmatprep.subr.mxu0 0.0
        %5717 = vmatpush1.msra.mxu0 0.0
        %5718 = vmatprep.subr.mxu0 0.0
        %5719 = vmatpush1.msra.mxu0 0.0
        %5720 = vmatprep.subr.mxu0 0.0
        %5721 = vmatpush1.msra.mxu0 0.0
        %5722 = vmatprep.subr.mxu0 0.0
        %5723 = vmatpush1.msra.mxu0 0.0
        %5724 = vmatprep.subr.mxu0 0.0
        %5725 = vmatpush1.msra.mxu0 0.0
        %5726 = vmatprep.subr.mxu0 0.0
        %5727 = vmatpush1.msra.mxu0 0.0
        %5728 = vmatprep.subr.mxu0 0.0
        %5729 = vmatpush1.msra.mxu0 0.0
        %5730 = vmatprep.subr.mxu0 0.0
        %5731 = vmatpush1.msra.mxu0 0.0
        %5732 = vmatprep.subr.mxu0 0.0
        %5733 = vmatpush1.msra.mxu0 0.0
        %5734 = vmatprep.subr.mxu0 0.0
        %5735 = vmatpush1.msra.mxu0 0.0
        %5736 = vmatprep.subr.mxu0 0.0
        %5737 = vmatpush1.msra.mxu0 0.0
        %5738 = vmatprep.subr.mxu0 0.0
        %5739 = vmatpush1.msra.mxu0 0.0
        %5740 = vmatprep.subr.mxu0 0.0
        %5741 = vmatpush1.msra.mxu0 0.0
        %5742 = vmatprep.subr.mxu0 0.0
        %5743 = vmatpush1.msra.mxu0 0.0
        %5744 = vmatprep.subr.mxu0 0.0
        %5745 = vmatpush1.msra.mxu0 0.0
        %5746 = vmatprep.subr.mxu0 0.0
        %5747 = vmatpush1.msra.mxu0 0.0
        %5748 = vmatprep.subr.mxu0 0.0
        %5749 = vmatpush1.msra.mxu0 0.0
        %5750 = vmatprep.subr.mxu0 0.0
        %5751 = vmatpush1.msra.mxu0 0.0
        %5752 = vmatprep.subr.mxu0 0.0
        %5753 = vmatpush1.msra.mxu0 0.0
        %5754 = vmatprep.subr.mxu0 0.0
        %5755 = vmatpush1.msra.mxu0 0.0
        %5756 = vmatprep.subr.mxu0 0.0
        %5757 = vmatpush1.msra.mxu0 0.0
        %5758 = vmatprep.subr.mxu0 0.0
        %5759 = vmatpush1.msra.mxu0 0.0
        %5760 = vmatprep.subr.mxu0 0.0
        %5761 = vmatpush1.msra.mxu0 0.0
        %5762 = vmatprep.subr.mxu0 0.0
        %5763 = vmatpush1.msra.mxu0 0.0
        %5764 = vmatprep.subr.mxu0 0.0
        %5765 = vmatpush1.msra.mxu0 0.0
        %5766 = vmatprep.subr.mxu0 0.0
        %5767 = vmatpush1.msra.mxu0 0.0
        %5768 = vmatprep.subr.mxu0 0.0
        %5769 = vmatpush1.msra.mxu0 0.0
        %5770 = vmatprep.subr.mxu0 0.0
        %5771 = vmatpush1.msra.mxu0 0.0
        %5772 = vmatprep.subr.mxu0 0.0
        %5773 = vmatpush1.msra.mxu0 0.0
        %5774 = vmatprep.mubr.f32.mxu0 0.0
        %5775 = vmatmul.mubr.f32.gmra.mrb[0].mxu0 %v5708
        %v5776 = vpop.f32.mrb[0].mxu0
        %v5777 = vadd.f32 0.0, %v5776
        %v5778 = vpop.f32.mrb[0].mxu0
        %v5779 = vadd.f32 0.0, %v5778
        %5780 = vdwg.mxu0
        %v5782 = vsel %vm757, %v5779, 0
        %5784 = vmatprep.subr.mxu0 %v1587
        %5785 = vmatpush1.msra.mxu0 %v1586
        %5786 = vmatprep.subr.mxu0 %v1589
        %5787 = vmatpush1.msra.mxu0 %v1588
        %5788 = vmatprep.subr.mxu0 %v1591
        %5789 = vmatpush1.msra.mxu0 %v1590
        %5790 = vmatprep.subr.mxu0 %v1593
        %5791 = vmatpush1.msra.mxu0 %v1592
        %5792 = vmatprep.subr.mxu0 %v1595
        %5793 = vmatpush1.msra.mxu0 %v1594
        %5794 = vmatprep.subr.mxu0 %v1597
        %5795 = vmatpush1.msra.mxu0 %v1596
        %5796 = vmatprep.subr.mxu0 %v1599
        %5797 = vmatpush1.msra.mxu0 %v1598
        %5798 = vmatprep.subr.mxu0 %v1601
        %5799 = vmatpush1.msra.mxu0 %v1600
        %5800 = vmatprep.subr.mxu0 %v1603
        %5801 = vmatpush1.msra.mxu0 %v1602
        %5802 = vmatprep.subr.mxu0 %v1605
        %5803 = vmatpush1.msra.mxu0 %v1604
        %5804 = vmatprep.subr.mxu0 %v1607
        %5805 = vmatpush1.msra.mxu0 %v1606
        %5806 = vmatprep.subr.mxu0 %v1609
        %5807 = vmatpush1.msra.mxu0 %v1608
        %5808 = vmatprep.subr.mxu0 %v1611
        %5809 = vmatpush1.msra.mxu0 %v1610
        %5810 = vmatprep.subr.mxu0 %v1613
        %5811 = vmatpush1.msra.mxu0 %v1612
        %5812 = vmatprep.subr.mxu0 %v1615
        %5813 = vmatpush1.msra.mxu0 %v1614
        %5814 = vmatprep.subr.mxu0 %v1617
        %5815 = vmatpush1.msra.mxu0 %v1616
        %5816 = vmatprep.subr.mxu0 %v1619
        %5817 = vmatpush1.msra.mxu0 %v1618
        %5818 = vmatprep.subr.mxu0 %v1621
        %5819 = vmatpush1.msra.mxu0 %v1620
        %5820 = vmatprep.subr.mxu0 %v1623
        %5821 = vmatpush1.msra.mxu0 %v1622
        %5822 = vmatprep.subr.mxu0 %v1625
        %5823 = vmatpush1.msra.mxu0 %v1624
        %5824 = vmatprep.subr.mxu0 %v1627
        %5825 = vmatpush1.msra.mxu0 %v1626
        %5826 = vmatprep.subr.mxu0 %v1629
        %5827 = vmatpush1.msra.mxu0 %v1628
        %5828 = vmatprep.subr.mxu0 %v1631
        %5829 = vmatpush1.msra.mxu0 %v1630
        %5830 = vmatprep.subr.mxu0 %v1633
        %5831 = vmatpush1.msra.mxu0 %v1632
        %5832 = vmatprep.subr.mxu0 0.0
        %5833 = vmatpush1.msra.mxu0 0.0
        %5834 = vmatprep.subr.mxu0 0.0
        %5835 = vmatpush1.msra.mxu0 0.0
        %5836 = vmatprep.subr.mxu0 0.0
        %5837 = vmatpush1.msra.mxu0 0.0
        %5838 = vmatprep.subr.mxu0 0.0
        %5839 = vmatpush1.msra.mxu0 0.0
        %5840 = vmatprep.subr.mxu0 0.0
        %5841 = vmatpush1.msra.mxu0 0.0
        %5842 = vmatprep.subr.mxu0 0.0
        %5843 = vmatpush1.msra.mxu0 0.0
        %5844 = vmatprep.subr.mxu0 0.0
        %5845 = vmatpush1.msra.mxu0 0.0
        %5846 = vmatprep.subr.mxu0 0.0
        %5847 = vmatpush1.msra.mxu0 0.0
        %5848 = vmatprep.mubr.f32.mxu0 %v5782
        %5849 = vmatmul.mubr.f32.gmra.mrb[0].mxu0 %v5777
        %v5850 = vpop.f32.mrb[0].mxu0
        %v5851 = vadd.f32 0.0, %v5850
        %v5852 = vpop.f32.mrb[0].mxu0
        %v5853 = vadd.f32 0.0, %v5852
        %5854 = vdwg.mxu0
        %v5855 = vadd.f32 %v5703, %v5851
        %v5856 = vadd.f32 %v5704, %v5853
        %s5857 = scalar_lea.vmem %s11, 64
        %v5858 = vld [vmem:[%s5857] sm:$0xff]
        %v5860 = vsel %vm1863, %v5858, 0
        %5862 = vmatprep.subr.mxu0 %v4645
        %5863 = vmatpush1.msra.mxu0 %v4644
        %5864 = vmatprep.subr.mxu0 0.0
        %5865 = vmatpush1.msra.mxu0 0.0
        %5866 = vmatprep.subr.mxu0 0.0
        %5867 = vmatpush1.msra.mxu0 0.0
        %5868 = vmatprep.subr.mxu0 0.0
        %5869 = vmatpush1.msra.mxu0 0.0
        %5870 = vmatprep.subr.mxu0 0.0
        %5871 = vmatpush1.msra.mxu0 0.0
        %5872 = vmatprep.subr.mxu0 0.0
        %5873 = vmatpush1.msra.mxu0 0.0
        %5874 = vmatprep.subr.mxu0 0.0
        %5875 = vmatpush1.msra.mxu0 0.0
        %5876 = vmatprep.subr.mxu0 0.0
        %5877 = vmatpush1.msra.mxu0 0.0
        %5878 = vmatprep.subr.mxu0 0.0
        %5879 = vmatpush1.msra.mxu0 0.0
        %5880 = vmatprep.subr.mxu0 0.0
        %5881 = vmatpush1.msra.mxu0 0.0
        %5882 = vmatprep.subr.mxu0 0.0
        %5883 = vmatpush1.msra.mxu0 0.0
        %5884 = vmatprep.subr.mxu0 0.0
        %5885 = vmatpush1.msra.mxu0 0.0
        %5886 = vmatprep.subr.mxu0 0.0
        %5887 = vmatpush1.msra.mxu0 0.0
        %5888 = vmatprep.subr.mxu0 0.0
        %5889 = vmatpush1.msra.mxu0 0.0
        %5890 = vmatprep.subr.mxu0 0.0
        %5891 = vmatpush1.msra.mxu0 0.0
        %5892 = vmatprep.subr.mxu0 0.0
        %5893 = vmatpush1.msra.mxu0 0.0
        %5894 = vmatprep.subr.mxu0 0.0
        %5895 = vmatpush1.msra.mxu0 0.0
        %5896 = vmatprep.subr.mxu0 0.0
        %5897 = vmatpush1.msra.mxu0 0.0
        %5898 = vmatprep.subr.mxu0 0.0
        %5899 = vmatpush1.msra.mxu0 0.0
        %5900 = vmatprep.subr.mxu0 0.0
        %5901 = vmatpush1.msra.mxu0 0.0
        %5902 = vmatprep.subr.mxu0 0.0
        %5903 = vmatpush1.msra.mxu0 0.0
        %5904 = vmatprep.subr.mxu0 0.0
        %5905 = vmatpush1.msra.mxu0 0.0
        %5906 = vmatprep.subr.mxu0 0.0
        %5907 = vmatpush1.msra.mxu0 0.0
        %5908 = vmatprep.subr.mxu0 0.0
        %5909 = vmatpush1.msra.mxu0 0.0
        %5910 = vmatprep.subr.mxu0 0.0
        %5911 = vmatpush1.msra.mxu0 0.0
        %5912 = vmatprep.subr.mxu0 0.0
        %5913 = vmatpush1.msra.mxu0 0.0
        %5914 = vmatprep.subr.mxu0 0.0
        %5915 = vmatpush1.msra.mxu0 0.0
        %5916 = vmatprep.subr.mxu0 0.0
        %5917 = vmatpush1.msra.mxu0 0.0
        %5918 = vmatprep.subr.mxu0 0.0
        %5919 = vmatpush1.msra.mxu0 0.0
        %5920 = vmatprep.subr.mxu0 0.0
        %5921 = vmatpush1.msra.mxu0 0.0
        %5922 = vmatprep.subr.mxu0 0.0
        %5923 = vmatpush1.msra.mxu0 0.0
        %5924 = vmatprep.subr.mxu0 0.0
        %5925 = vmatpush1.msra.mxu0 0.0
        %5926 = vmatprep.mubr.f32.mxu0 0.0
        %5927 = vmatmul.mubr.f32.gmra.mrb[0].mxu0 %v5860
        %v5928 = vpop.f32.mrb[0].mxu0
        %v5929 = vadd.f32 0.0, %v5928
        %v5930 = vpop.f32.mrb[0].mxu0
        %v5931 = vadd.f32 0.0, %v5930
        %5932 = vdwg.mxu0
        %v5934 = vsel %vm757, %v5931, 0
        %5936 = vmatprep.subr.mxu0 %v1721
        %5937 = vmatpush1.msra.mxu0 %v1720
        %5938 = vmatprep.subr.mxu0 %v1723
        %5939 = vmatpush1.msra.mxu0 %v1722
        %5940 = vmatprep.subr.mxu0 %v1725
        %5941 = vmatpush1.msra.mxu0 %v1724
        %5942 = vmatprep.subr.mxu0 %v1727
        %5943 = vmatpush1.msra.mxu0 %v1726
        %5944 = vmatprep.subr.mxu0 %v1729
        %5945 = vmatpush1.msra.mxu0 %v1728
        %5946 = vmatprep.subr.mxu0 %v1731
        %5947 = vmatpush1.msra.mxu0 %v1730
        %5948 = vmatprep.subr.mxu0 %v1733
        %5949 = vmatpush1.msra.mxu0 %v1732
        %5950 = vmatprep.subr.mxu0 %v1735
        %5951 = vmatpush1.msra.mxu0 %v1734
        %5952 = vmatprep.subr.mxu0 %v1737
        %5953 = vmatpush1.msra.mxu0 %v1736
        %5954 = vmatprep.subr.mxu0 %v1739
        %5955 = vmatpush1.msra.mxu0 %v1738
        %5956 = vmatprep.subr.mxu0 %v1741
        %5957 = vmatpush1.msra.mxu0 %v1740
        %5958 = vmatprep.subr.mxu0 %v1743
        %5959 = vmatpush1.msra.mxu0 %v1742
        %5960 = vmatprep.subr.mxu0 %v1745
        %5961 = vmatpush1.msra.mxu0 %v1744
        %5962 = vmatprep.subr.mxu0 %v1747
        %5963 = vmatpush1.msra.mxu0 %v1746
        %5964 = vmatprep.subr.mxu0 %v1749
        %5965 = vmatpush1.msra.mxu0 %v1748
        %5966 = vmatprep.subr.mxu0 %v1751
        %5967 = vmatpush1.msra.mxu0 %v1750
        %5968 = vmatprep.subr.mxu0 %v1753
        %5969 = vmatpush1.msra.mxu0 %v1752
        %5970 = vmatprep.subr.mxu0 %v1755
        %5971 = vmatpush1.msra.mxu0 %v1754
        %5972 = vmatprep.subr.mxu0 %v1757
        %5973 = vmatpush1.msra.mxu0 %v1756
        %5974 = vmatprep.subr.mxu0 %v1759
        %5975 = vmatpush1.msra.mxu0 %v1758
        %5976 = vmatprep.subr.mxu0 %v1761
        %5977 = vmatpush1.msra.mxu0 %v1760
        %5978 = vmatprep.subr.mxu0 %v1763
        %5979 = vmatpush1.msra.mxu0 %v1762
        %5980 = vmatprep.subr.mxu0 %v1765
        %5981 = vmatpush1.msra.mxu0 %v1764
        %5982 = vmatprep.subr.mxu0 %v1767
        %5983 = vmatpush1.msra.mxu0 %v1766
        %5984 = vmatprep.subr.mxu0 0.0
        %5985 = vmatpush1.msra.mxu0 0.0
        %5986 = vmatprep.subr.mxu0 0.0
        %5987 = vmatpush1.msra.mxu0 0.0
        %5988 = vmatprep.subr.mxu0 0.0
        %5989 = vmatpush1.msra.mxu0 0.0
        %5990 = vmatprep.subr.mxu0 0.0
        %5991 = vmatpush1.msra.mxu0 0.0
        %5992 = vmatprep.subr.mxu0 0.0
        %5993 = vmatpush1.msra.mxu0 0.0
        %5994 = vmatprep.subr.mxu0 0.0
        %5995 = vmatpush1.msra.mxu0 0.0
        %5996 = vmatprep.subr.mxu0 0.0
        %5997 = vmatpush1.msra.mxu0 0.0
        %5998 = vmatprep.subr.mxu0 0.0
        %5999 = vmatpush1.msra.mxu0 0.0
        %6000 = vmatprep.mubr.f32.mxu0 %v5934
        %6001 = vmatmul.mubr.f32.gmra.mrb[0].mxu0 %v5929
        %v6002 = vpop.f32.mrb[0].mxu0
        %v6003 = vadd.f32 0.0, %v6002
        %v6004 = vpop.f32.mrb[0].mxu0
        %v6005 = vadd.f32 0.0, %v6004
        %6006 = vdwg.mxu0
        %v6007 = vadd.f32 %v5855, %v6003
        %v6008 = vadd.f32 %v5856, %v6005
        %v6009 = vld [vmem:[%s12] sm:$0xff]
        %6011 = vset.pattern.permute.xlu0 0
        %6012 = vperm.xlu0 %6011, %v6009
        %v6013 = vpop.permute.xlu0 %6012
        %v6015 = vmul.f32 %v6007, %v6013
        %v6016 = vmul.f32 %v6008, %v6013
        %v6017 = vld [vmem:[%s13] sm:$0xff]
        %6019 = vset.pattern.permute.xlu0 0
        %6020 = vperm.xlu0 %6019, %v6017
        %v6021 = vpop.permute.xlu0 %6020
        %v6023 = vadd.f32 %v6015, %v6021
        %v6024 = vadd.f32 %v6016, %v6021
        %v6025 = vmax.f32 %v6023, 0.0
        %v6026 = vmax.f32 %v6024, 0.0
        %v6027 = vadd.f32 %v6025, %v3263
        %v6028 = vadd.f32 %v6026, %v3264
        %v6029 = vsel %vm757, %v6028, 0.0
        %v6030 = vadd.f32 %v6027, %v6029
        %6031 = vadd.xlane.f32.xlu0 %v6030
        %v6032 = vpop.xlane.xlu0 %6031
        %v6033 = vmul.f32 %v6032, %v3250
        %v6034 = vsub.f32 %v6027, %v6033
        %v6035 = vsub.f32 %v6028, %v6033
        %v6036 = vmul.f32 %v6034, %v6034
        %v6037 = vmul.f32 %v6035, %v6035
        %v6038 = vsel %vm757, %v6037, 0.0
        %v6039 = vadd.f32 %v6036, %v6038
        %6040 = vadd.xlane.f32.xlu0 %v6039
        %v6041 = vpop.xlane.xlu0 %6040
        %v6042 = vmul.f32 %v6041, %v3250
        %v6043 = vadd.f32 %v6042, 1e-05
        %v6044 = vrsqrt.pop %v6043
        %v6045 = vmul.f32 %v6034, %v6044
        %v6046 = vmul.f32 %v6035, %v6044
        %v6047 = vmax.f32 %v6045, 0.0
        %v6048 = vmax.f32 %v6046, 0.0
        %v6050 = vsel %vm757, %v6048, 0
        %6052 = vmatprep.subr.mxu0 %v1319
        %6053 = vmatpush1.msra.mxu0 %v1318
        %6054 = vmatprep.subr.mxu0 %v1321
        %6055 = vmatpush1.msra.mxu0 %v1320
        %6056 = vmatprep.subr.mxu0 %v1323
        %6057 = vmatpush1.msra.mxu0 %v1322
        %6058 = vmatprep.subr.mxu0 %v1325
        %6059 = vmatpush1.msra.mxu0 %v1324
        %6060 = vmatprep.subr.mxu0 %v1327
        %6061 = vmatpush1.msra.mxu0 %v1326
        %6062 = vmatprep.subr.mxu0 %v1329
        %6063 = vmatpush1.msra.mxu0 %v1328
        %6064 = vmatprep.subr.mxu0 %v1331
        %6065 = vmatpush1.msra.mxu0 %v1330
        %6066 = vmatprep.subr.mxu0 %v1333
        %6067 = vmatpush1.msra.mxu0 %v1332
        %6068 = vmatprep.subr.mxu0 %v1335
        %6069 = vmatpush1.msra.mxu0 %v1334
        %6070 = vmatprep.subr.mxu0 %v1337
        %6071 = vmatpush1.msra.mxu0 %v1336
        %6072 = vmatprep.subr.mxu0 %v1339
        %6073 = vmatpush1.msra.mxu0 %v1338
        %6074 = vmatprep.subr.mxu0 %v1341
        %6075 = vmatpush1.msra.mxu0 %v1340
        %6076 = vmatprep.subr.mxu0 %v1343
        %6077 = vmatpush1.msra.mxu0 %v1342
        %6078 = vmatprep.subr.mxu0 %v1345
        %6079 = vmatpush1.msra.mxu0 %v1344
        %6080 = vmatprep.subr.mxu0 %v1347
        %6081 = vmatpush1.msra.mxu0 %v1346
        %6082 = vmatprep.subr.mxu0 %v1349
        %6083 = vmatpush1.msra.mxu0 %v1348
        %6084 = vmatprep.subr.mxu0 %v1351
        %6085 = vmatpush1.msra.mxu0 %v1350
        %6086 = vmatprep.subr.mxu0 %v1353
        %6087 = vmatpush1.msra.mxu0 %v1352
        %6088 = vmatprep.subr.mxu0 %v1355
        %6089 = vmatpush1.msra.mxu0 %v1354
        %6090 = vmatprep.subr.mxu0 %v1357
        %6091 = vmatpush1.msra.mxu0 %v1356
        %6092 = vmatprep.subr.mxu0 %v1359
        %6093 = vmatpush1.msra.mxu0 %v1358
        %6094 = vmatprep.subr.mxu0 %v1361
        %6095 = vmatpush1.msra.mxu0 %v1360
        %6096 = vmatprep.subr.mxu0 %v1363
        %6097 = vmatpush1.msra.mxu0 %v1362
        %6098 = vmatprep.subr.mxu0 %v1365
        %6099 = vmatpush1.msra.mxu0 %v1364
        %6100 = vmatprep.subr.mxu0 0.0
        %6101 = vmatpush1.msra.mxu0 0.0
        %6102 = vmatprep.subr.mxu0 0.0
        %6103 = vmatpush1.msra.mxu0 0.0
        %6104 = vmatprep.subr.mxu0 0.0
        %6105 = vmatpush1.msra.mxu0 0.0
        %6106 = vmatprep.subr.mxu0 0.0
        %6107 = vmatpush1.msra.mxu0 0.0
        %6108 = vmatprep.subr.mxu0 0.0
        %6109 = vmatpush1.msra.mxu0 0.0
        %6110 = vmatprep.subr.mxu0 0.0
        %6111 = vmatpush1.msra.mxu0 0.0
        %6112 = vmatprep.subr.mxu0 0.0
        %6113 = vmatpush1.msra.mxu0 0.0
        %6114 = vmatprep.subr.mxu0 0.0
        %6115 = vmatpush1.msra.mxu0 0.0
        %6116 = vmatprep.mubr.f32.mxu0 %v6050
        %6117 = vmatmul.mubr.f32.gmra.mrb[0].mxu0 %v6047
        %v6118 = vpop.f32.mrb[0].mxu0
        %v6119 = vadd.f32 0.0, %v6118
        %v6120 = vpop.f32.mrb[0].mxu0
        %v6121 = vadd.f32 0.0, %v6120
        %6122 = vdwg.mxu0
        %v6123 = vmax.f32 %v6047, %v6119
        %v6124 = vmax.f32 %v6048, %v6121
        %v6126 = vsel %vm757, %v6124, 0
        %6128 = vmatprep.subr.mxu0 %v1587
        %6129 = vmatpush1.msra.mxu0 %v1586
        %6130 = vmatprep.subr.mxu0 %v1589
        %6131 = vmatpush1.msra.mxu0 %v1588
        %6132 = vmatprep.subr.mxu0 %v1591
        %6133 = vmatpush1.msra.mxu0 %v1590
        %6134 = vmatprep.subr.mxu0 %v1593
        %6135 = vmatpush1.msra.mxu0 %v1592
        %6136 = vmatprep.subr.mxu0 %v1595
        %6137 = vmatpush1.msra.mxu0 %v1594
        %6138 = vmatprep.subr.mxu0 %v1597
        %6139 = vmatpush1.msra.mxu0 %v1596
        %6140 = vmatprep.subr.mxu0 %v1599
        %6141 = vmatpush1.msra.mxu0 %v1598
        %6142 = vmatprep.subr.mxu0 %v1601
        %6143 = vmatpush1.msra.mxu0 %v1600
        %6144 = vmatprep.subr.mxu0 %v1603
        %6145 = vmatpush1.msra.mxu0 %v1602
        %6146 = vmatprep.subr.mxu0 %v1605
        %6147 = vmatpush1.msra.mxu0 %v1604
        %6148 = vmatprep.subr.mxu0 %v1607
        %6149 = vmatpush1.msra.mxu0 %v1606
        %6150 = vmatprep.subr.mxu0 %v1609
        %6151 = vmatpush1.msra.mxu0 %v1608
        %6152 = vmatprep.subr.mxu0 %v1611
        %6153 = vmatpush1.msra.mxu0 %v1610
        %6154 = vmatprep.subr.mxu0 %v1613
        %6155 = vmatpush1.msra.mxu0 %v1612
        %6156 = vmatprep.subr.mxu0 %v1615
        %6157 = vmatpush1.msra.mxu0 %v1614
        %6158 = vmatprep.subr.mxu0 %v1617
        %6159 = vmatpush1.msra.mxu0 %v1616
        %6160 = vmatprep.subr.mxu0 %v1619
        %6161 = vmatpush1.msra.mxu0 %v1618
        %6162 = vmatprep.subr.mxu0 %v1621
        %6163 = vmatpush1.msra.mxu0 %v1620
        %6164 = vmatprep.subr.mxu0 %v1623
        %6165 = vmatpush1.msra.mxu0 %v1622
        %6166 = vmatprep.subr.mxu0 %v1625
        %6167 = vmatpush1.msra.mxu0 %v1624
        %6168 = vmatprep.subr.mxu0 %v1627
        %6169 = vmatpush1.msra.mxu0 %v1626
        %6170 = vmatprep.subr.mxu0 %v1629
        %6171 = vmatpush1.msra.mxu0 %v1628
        %6172 = vmatprep.subr.mxu0 %v1631
        %6173 = vmatpush1.msra.mxu0 %v1630
        %6174 = vmatprep.subr.mxu0 %v1633
        %6175 = vmatpush1.msra.mxu0 %v1632
        %6176 = vmatprep.subr.mxu0 0.0
        %6177 = vmatpush1.msra.mxu0 0.0
        %6178 = vmatprep.subr.mxu0 0.0
        %6179 = vmatpush1.msra.mxu0 0.0
        %6180 = vmatprep.subr.mxu0 0.0
        %6181 = vmatpush1.msra.mxu0 0.0
        %6182 = vmatprep.subr.mxu0 0.0
        %6183 = vmatpush1.msra.mxu0 0.0
        %6184 = vmatprep.subr.mxu0 0.0
        %6185 = vmatpush1.msra.mxu0 0.0
        %6186 = vmatprep.subr.mxu0 0.0
        %6187 = vmatpush1.msra.mxu0 0.0
        %6188 = vmatprep.subr.mxu0 0.0
        %6189 = vmatpush1.msra.mxu0 0.0
        %6190 = vmatprep.subr.mxu0 0.0
        %6191 = vmatpush1.msra.mxu0 0.0
        %6192 = vmatprep.mubr.f32.mxu0 %v6126
        %6193 = vmatmul.mubr.f32.gmra.mrb[0].mxu0 %v6123
        %v6194 = vpop.f32.mrb[0].mxu0
        %v6195 = vadd.f32 0.0, %v6194
        %v6196 = vpop.f32.mrb[0].mxu0
        %v6197 = vadd.f32 0.0, %v6196
        %6198 = vdwg.mxu0
        %v6199 = vmax.f32 %v6123, %v6195
        %v6200 = vmax.f32 %v6124, %v6197
        %v6201 = vlaneseq
        %v6202 = vand.u32 %v6201, 127
        %vm6203 = vcmp.eq.s32.totalorder %v6202, 0
        %v6204 = vsel %vm6203, 1, 0
        %v6205 = vcvt.s32.f32 %v6204
        %v6207 = vsel %vm1863, %v6205, 0
        %6209 = vmatprep.subr.mxu0 %v6200
        %6210 = vmatpush1.msra.mxu0 %v6199
        %6211 = vmatprep.subr.mxu0 0.0
        %6212 = vmatpush1.msra.mxu0 0.0
        %6213 = vmatprep.subr.mxu0 0.0
        %6214 = vmatpush1.msra.mxu0 0.0
        %6215 = vmatprep.subr.mxu0 0.0
        %6216 = vmatpush1.msra.mxu0 0.0
        %6217 = vmatprep.subr.mxu0 0.0
        %6218 = vmatpush1.msra.mxu0 0.0
        %6219 = vmatprep.subr.mxu0 0.0
        %6220 = vmatpush1.msra.mxu0 0.0
        %6221 = vmatprep.subr.mxu0 0.0
        %6222 = vmatpush1.msra.mxu0 0.0
        %6223 = vmatprep.subr.mxu0 0.0
        %6224 = vmatpush1.msra.mxu0 0.0
        %6225 = vmatprep.subr.mxu0 0.0
        %6226 = vmatpush1.msra.mxu0 0.0
        %6227 = vmatprep.subr.mxu0 0.0
        %6228 = vmatpush1.msra.mxu0 0.0
        %6229 = vmatprep.subr.mxu0 0.0
        %6230 = vmatpush1.msra.mxu0 0.0
        %6231 = vmatprep.subr.mxu0 0.0
        %6232 = vmatpush1.msra.mxu0 0.0
        %6233 = vmatprep.subr.mxu0 0.0
        %6234 = vmatpush1.msra.mxu0 0.0
        %6235 = vmatprep.subr.mxu0 0.0
        %6236 = vmatpush1.msra.mxu0 0.0
        %6237 = vmatprep.subr.mxu0 0.0
        %6238 = vmatpush1.msra.mxu0 0.0
        %6239 = vmatprep.subr.mxu0 0.0
        %6240 = vmatpush1.msra.mxu0 0.0
        %6241 = vmatprep.subr.mxu0 0.0
        %6242 = vmatpush1.msra.mxu0 0.0
        %6243 = vmatprep.subr.mxu0 0.0
        %6244 = vmatpush1.msra.mxu0 0.0
        %6245 = vmatprep.subr.mxu0 0.0
        %6246 = vmatpush1.msra.mxu0 0.0
        %6247 = vmatprep.subr.mxu0 0.0
        %6248 = vmatpush1.msra.mxu0 0.0
        %6249 = vmatprep.subr.mxu0 0.0
        %6250 = vmatpush1.msra.mxu0 0.0
        %6251 = vmatprep.subr.mxu0 0.0
        %6252 = vmatpush1.msra.mxu0 0.0
        %6253 = vmatprep.subr.mxu0 0.0
        %6254 = vmatpush1.msra.mxu0 0.0
        %6255 = vmatprep.subr.mxu0 0.0
        %6256 = vmatpush1.msra.mxu0 0.0
        %6257 = vmatprep.subr.mxu0 0.0
        %6258 = vmatpush1.msra.mxu0 0.0
        %6259 = vmatprep.subr.mxu0 0.0
        %6260 = vmatpush1.msra.mxu0 0.0
        %6261 = vmatprep.subr.mxu0 0.0
        %6262 = vmatpush1.msra.mxu0 0.0
        %6263 = vmatprep.subr.mxu0 0.0
        %6264 = vmatpush1.msra.mxu0 0.0
        %6265 = vmatprep.subr.mxu0 0.0
        %6266 = vmatpush1.msra.mxu0 0.0
        %6267 = vmatprep.subr.mxu0 0.0
        %6268 = vmatpush1.msra.mxu0 0.0
        %6269 = vmatprep.subr.mxu0 0.0
        %6270 = vmatpush1.msra.mxu0 0.0
        %6271 = vmatprep.subr.mxu0 0.0
        %6272 = vmatpush1.msra.mxu0 0.0
        %6273 = vmatprep.mubr.f32.mxu0 0.0
        %6274 = vmatmul.mubr.f32.gmra.mrb[0].mxu0 %v6207
        %v6275 = vpop.f32.mrb[0].mxu0
        %v6276 = vadd.f32 0.0, %v6275
        %v6277 = vpop.f32.mrb[0].mxu0
        %v6278 = vadd.f32 0.0, %v6277
        %6279 = vdwg.mxu0
        %v6280 = vld [vmem:[%s14] sm:$0xff]
        %v6281 = vld [vmem:[%s14 + $0x8] sm:$0xff]
        %v6282 = vld [vmem:[%s14 + $0x10] sm:$0xff]
        %v6283 = vld [vmem:[%s14 + $0x18] sm:$0xff]
        %v6284 = vld [vmem:[%s14 + $0x20] sm:$0xff]
        %v6285 = vld [vmem:[%s14 + $0x28] sm:$0xff]
        %v6286 = vld [vmem:[%s14 + $0x30] sm:$0xff]
        %v6287 = vld [vmem:[%s14 + $0x38] sm:$0xff]
        %v6288 = vld [vmem:[%s14 + $0x40] sm:$0xff]
        %v6289 = vld [vmem:[%s14 + $0x48] sm:$0xff]
        %v6290 = vld [vmem:[%s14 + $0x50] sm:$0xff]
        %v6291 = vld [vmem:[%s14 + $0x58] sm:$0xff]
        %v6292 = vld [vmem:[%s14 + $0x60] sm:$0xff]
        %v6293 = vld [vmem:[%s14 + $0x68] sm:$0xff]
        %v6294 = vld [vmem:[%s14 + $0x70] sm:$0xff]
        %v6295 = vld [vmem:[%s14 + $0x78] sm:$0xff]
        %v6296 = vld [vmem:[%s14 + $0x80] sm:$0xff]
        %v6297 = vld [vmem:[%s14 + $0x88] sm:$0xff]
        %v6298 = vld [vmem:[%s14 + $0x90] sm:$0xff]
        %v6299 = vld [vmem:[%s14 + $0x98] sm:$0xff]
        %v6300 = vld [vmem:[%s14 + $0xa0] sm:$0xff]
        %v6301 = vld [vmem:[%s14 + $0xa8] sm:$0xff]
        %v6302 = vld [vmem:[%s14 + $0xb0] sm:$0xff]
        %v6303 = vld [vmem:[%s14 + $0xb8] sm:$0xff]
        %vm6304 = vcmp.eq.s32.totalorder %v6202, 1
        %v6305 = vsel %vm6304, 1, 0
        %v6306 = vcvt.s32.f32 %v6305
        %v6308 = vsel %vm1863, %v6306, 0
        %6310 = vmatprep.subr.mxu0 %v6200
        %6311 = vmatpush1.msra.mxu0 %v6199
        %6312 = vmatprep.subr.mxu0 0.0
        %6313 = vmatpush1.msra.mxu0 0.0
        %6314 = vmatprep.subr.mxu0 0.0
        %6315 = vmatpush1.msra.mxu0 0.0
        %6316 = vmatprep.subr.mxu0 0.0
        %6317 = vmatpush1.msra.mxu0 0.0
        %6318 = vmatprep.subr.mxu0 0.0
        %6319 = vmatpush1.msra.mxu0 0.0
        %6320 = vmatprep.subr.mxu0 0.0
        %6321 = vmatpush1.msra.mxu0 0.0
        %6322 = vmatprep.subr.mxu0 0.0
        %6323 = vmatpush1.msra.mxu0 0.0
        %6324 = vmatprep.subr.mxu0 0.0
        %6325 = vmatpush1.msra.mxu0 0.0
        %6326 = vmatprep.subr.mxu0 0.0
        %6327 = vmatpush1.msra.mxu0 0.0
        %6328 = vmatprep.subr.mxu0 0.0
        %6329 = vmatpush1.msra.mxu0 0.0
        %6330 = vmatprep.subr.mxu0 0.0
        %6331 = vmatpush1.msra.mxu0 0.0
        %6332 = vmatprep.subr.mxu0 0.0
        %6333 = vmatpush1.msra.mxu0 0.0
        %6334 = vmatprep.subr.mxu0 0.0
        %6335 = vmatpush1.msra.mxu0 0.0
        %6336 = vmatprep.subr.mxu0 0.0
        %6337 = vmatpush1.msra.mxu0 0.0
        %6338 = vmatprep.subr.mxu0 0.0
        %6339 = vmatpush1.msra.mxu0 0.0
        %6340 = vmatprep.subr.mxu0 0.0
        %6341 = vmatpush1.msra.mxu0 0.0
        %6342 = vmatprep.subr.mxu0 0.0
        %6343 = vmatpush1.msra.mxu0 0.0
        %6344 = vmatprep.subr.mxu0 0.0
        %6345 = vmatpush1.msra.mxu0 0.0
        %6346 = vmatprep.subr.mxu0 0.0
        %6347 = vmatpush1.msra.mxu0 0.0
        %6348 = vmatprep.subr.mxu0 0.0
        %6349 = vmatpush1.msra.mxu0 0.0
        %6350 = vmatprep.subr.mxu0 0.0
        %6351 = vmatpush1.msra.mxu0 0.0
        %6352 = vmatprep.subr.mxu0 0.0
        %6353 = vmatpush1.msra.mxu0 0.0
        %6354 = vmatprep.subr.mxu0 0.0
        %6355 = vmatpush1.msra.mxu0 0.0
        %6356 = vmatprep.subr.mxu0 0.0
        %6357 = vmatpush1.msra.mxu0 0.0
        %6358 = vmatprep.subr.mxu0 0.0
        %6359 = vmatpush1.msra.mxu0 0.0
        %6360 = vmatprep.subr.mxu0 0.0
        %6361 = vmatpush1.msra.mxu0 0.0
        %6362 = vmatprep.subr.mxu0 0.0
        %6363 = vmatpush1.msra.mxu0 0.0
        %6364 = vmatprep.subr.mxu0 0.0
        %6365 = vmatpush1.msra.mxu0 0.0
        %6366 = vmatprep.subr.mxu0 0.0
        %6367 = vmatpush1.msra.mxu0 0.0
        %6368 = vmatprep.subr.mxu0 0.0
        %6369 = vmatpush1.msra.mxu0 0.0
        %6370 = vmatprep.subr.mxu0 0.0
        %6371 = vmatpush1.msra.mxu0 0.0
        %6372 = vmatprep.subr.mxu0 0.0
        %6373 = vmatpush1.msra.mxu0 0.0
        %6374 = vmatprep.mubr.f32.mxu0 0.0
        %6375 = vmatmul.mubr.f32.gmra.mrb[0].mxu0 %v6308
        %v6376 = vpop.f32.mrb[0].mxu0
        %v6377 = vadd.f32 0.0, %v6376
        %v6378 = vpop.f32.mrb[0].mxu0
        %v6379 = vadd.f32 0.0, %v6378
        %6380 = vdwg.mxu0
        %s6381 = scalar_lea.vmem %s14, 192
        %v6382 = vld [vmem:[%s6381] sm:$0xff]
        %v6383 = vld [vmem:[%s6381 + $0x8] sm:$0xff]
        %v6384 = vld [vmem:[%s6381 + $0x10] sm:$0xff]
        %v6385 = vld [vmem:[%s6381 + $0x18] sm:$0xff]
        %v6386 = vld [vmem:[%s6381 + $0x20] sm:$0xff]
        %v6387 = vld [vmem:[%s6381 + $0x28] sm:$0xff]
        %v6388 = vld [vmem:[%s6381 + $0x30] sm:$0xff]
        %v6389 = vld [vmem:[%s6381 + $0x38] sm:$0xff]
        %v6390 = vld [vmem:[%s6381 + $0x40] sm:$0xff]
        %v6391 = vld [vmem:[%s6381 + $0x48] sm:$0xff]
        %v6392 = vld [vmem:[%s6381 + $0x50] sm:$0xff]
        %v6393 = vld [vmem:[%s6381 + $0x58] sm:$0xff]
        %v6394 = vld [vmem:[%s6381 + $0x60] sm:$0xff]
        %v6395 = vld [vmem:[%s6381 + $0x68] sm:$0xff]
        %v6396 = vld [vmem:[%s6381 + $0x70] sm:$0xff]
        %v6397 = vld [vmem:[%s6381 + $0x78] sm:$0xff]
        %v6398 = vld [vmem:[%s6381 + $0x80] sm:$0xff]
        %v6399 = vld [vmem:[%s6381 + $0x88] sm:$0xff]
        %v6400 = vld [vmem:[%s6381 + $0x90] sm:$0xff]
        %v6401 = vld [vmem:[%s6381 + $0x98] sm:$0xff]
        %v6402 = vld [vmem:[%s6381 + $0xa0] sm:$0xff]
        %v6403 = vld [vmem:[%s6381 + $0xa8] sm:$0xff]
        %v6404 = vld [vmem:[%s6381 + $0xb0] sm:$0xff]
        %v6405 = vld [vmem:[%s6381 + $0xb8] sm:$0xff]
        %v6407 = vsel %vm757, %v6379, 0
        %6409 = vmatprep.subr.mxu0 0.0
        %6410 = vmatpush1.msra.mxu0 %v6382
        %6411 = vmatprep.subr.mxu0 0.0
        %6412 = vmatpush1.msra.mxu0 %v6383
        %6413 = vmatprep.subr.mxu0 0.0
        %6414 = vmatpush1.msra.mxu0 %v6384
        %6415 = vmatprep.subr.mxu0 0.0
        %6416 = vmatpush1.msra.mxu0 %v6385
        %6417 = vmatprep.subr.mxu0 0.0
        %6418 = vmatpush1.msra.mxu0 %v6386
        %6419 = vmatprep.subr.mxu0 0.0
        %6420 = vmatpush1.msra.mxu0 %v6387
        %6421 = vmatprep.subr.mxu0 0.0
        %6422 = vmatpush1.msra.mxu0 %v6388
        %6423 = vmatprep.subr.mxu0 0.0
        %6424 = vmatpush1.msra.mxu0 %v6389
        %6425 = vmatprep.subr.mxu0 0.0
        %6426 = vmatpush1.msra.mxu0 %v6390
        %6427 = vmatprep.subr.mxu0 0.0
        %6428 = vmatpush1.msra.mxu0 %v6391
        %6429 = vmatprep.subr.mxu0 0.0
        %6430 = vmatpush1.msra.mxu0 %v6392
        %6431 = vmatprep.subr.mxu0 0.0
        %6432 = vmatpush1.msra.mxu0 %v6393
        %6433 = vmatprep.subr.mxu0 0.0
        %6434 = vmatpush1.msra.mxu0 %v6394
        %6435 = vmatprep.subr.mxu0 0.0
        %6436 = vmatpush1.msra.mxu0 %v6395
        %6437 = vmatprep.subr.mxu0 0.0
        %6438 = vmatpush1.msra.mxu0 %v6396
        %6439 = vmatprep.subr.mxu0 0.0
        %6440 = vmatpush1.msra.mxu0 %v6397
        %6441 = vmatprep.subr.mxu0 0.0
        %6442 = vmatpush1.msra.mxu0 %v6398
        %6443 = vmatprep.subr.mxu0 0.0
        %6444 = vmatpush1.msra.mxu0 %v6399
        %6445 = vmatprep.subr.mxu0 0.0
        %6446 = vmatpush1.msra.mxu0 %v6400
        %6447 = vmatprep.subr.mxu0 0.0
        %6448 = vmatpush1.msra.mxu0 %v6401
        %6449 = vmatprep.subr.mxu0 0.0
        %6450 = vmatpush1.msra.mxu0 %v6402
        %6451 = vmatprep.subr.mxu0 0.0
        %6452 = vmatpush1.msra.mxu0 %v6403
        %6453 = vmatprep.subr.mxu0 0.0
        %6454 = vmatpush1.msra.mxu0 %v6404
        %6455 = vmatprep.subr.mxu0 0.0
        %6456 = vmatpush1.msra.mxu0 %v6405
        %6457 = vmatprep.subr.mxu0 0.0
        %6458 = vmatpush1.msra.mxu0 0.0
        %6459 = vmatprep.subr.mxu0 0.0
        %6460 = vmatpush1.msra.mxu0 0.0
        %6461 = vmatprep.subr.mxu0 0.0
        %6462 = vmatpush1.msra.mxu0 0.0
        %6463 = vmatprep.subr.mxu0 0.0
        %6464 = vmatpush1.msra.mxu0 0.0
        %6465 = vmatprep.subr.mxu0 0.0
        %6466 = vmatpush1.msra.mxu0 0.0
        %6467 = vmatprep.subr.mxu0 0.0
        %6468 = vmatpush1.msra.mxu0 0.0
        %6469 = vmatprep.subr.mxu0 0.0
        %6470 = vmatpush1.msra.mxu0 0.0
        %6471 = vmatprep.subr.mxu0 0.0
        %6472 = vmatpush1.msra.mxu0 0.0
        %6473 = vmatprep.mubr.f32.mxu0 %v6407
        %6474 = vmatmul.mubr.f32.gmra.mrb[0].mxu0 %v6377
        %v6475 = vpop.f32.mrb[0].mxu0
        %v6476 = vadd.f32 0.0, %v6475
        %v6477 = vpop.f32.mrb[0].mxu0
        %6478 = vdwg.mxu0
        %v6480 = vsel %vm757, %v6278, 0
        %6482 = vmatprep.subr.mxu0 0.0
        %6483 = vmatpush1.msra.mxu0 %v6280
        %6484 = vmatprep.subr.mxu0 0.0
        %6485 = vmatpush1.msra.mxu0 %v6281
        %6486 = vmatprep.subr.mxu0 0.0
        %6487 = vmatpush1.msra.mxu0 %v6282
        %6488 = vmatprep.subr.mxu0 0.0
        %6489 = vmatpush1.msra.mxu0 %v6283
        %6490 = vmatprep.subr.mxu0 0.0
        %6491 = vmatpush1.msra.mxu0 %v6284
        %6492 = vmatprep.subr.mxu0 0.0
        %6493 = vmatpush1.msra.mxu0 %v6285
        %6494 = vmatprep.subr.mxu0 0.0
        %6495 = vmatpush1.msra.mxu0 %v6286
        %6496 = vmatprep.subr.mxu0 0.0
        %6497 = vmatpush1.msra.mxu0 %v6287
        %6498 = vmatprep.subr.mxu0 0.0
        %6499 = vmatpush1.msra.mxu0 %v6288
        %6500 = vmatprep.subr.mxu0 0.0
        %6501 = vmatpush1.msra.mxu0 %v6289
        %6502 = vmatprep.subr.mxu0 0.0
        %6503 = vmatpush1.msra.mxu0 %v6290
        %6504 = vmatprep.subr.mxu0 0.0
        %6505 = vmatpush1.msra.mxu0 %v6291
        %6506 = vmatprep.subr.mxu0 0.0
        %6507 = vmatpush1.msra.mxu0 %v6292
        %6508 = vmatprep.subr.mxu0 0.0
        %6509 = vmatpush1.msra.mxu0 %v6293
        %6510 = vmatprep.subr.mxu0 0.0
        %6511 = vmatpush1.msra.mxu0 %v6294
        %6512 = vmatprep.subr.mxu0 0.0
        %6513 = vmatpush1.msra.mxu0 %v6295
        %6514 = vmatprep.subr.mxu0 0.0
        %6515 = vmatpush1.msra.mxu0 %v6296
        %6516 = vmatprep.subr.mxu0 0.0
        %6517 = vmatpush1.msra.mxu0 %v6297
        %6518 = vmatprep.subr.mxu0 0.0
        %6519 = vmatpush1.msra.mxu0 %v6298
        %6520 = vmatprep.subr.mxu0 0.0
        %6521 = vmatpush1.msra.mxu0 %v6299
        %6522 = vmatprep.subr.mxu0 0.0
        %6523 = vmatpush1.msra.mxu0 %v6300
        %6524 = vmatprep.subr.mxu0 0.0
        %6525 = vmatpush1.msra.mxu0 %v6301
        %6526 = vmatprep.subr.mxu0 0.0
        %6527 = vmatpush1.msra.mxu0 %v6302
        %6528 = vmatprep.subr.mxu0 0.0
        %6529 = vmatpush1.msra.mxu0 %v6303
        %6530 = vmatprep.subr.mxu0 0.0
        %6531 = vmatpush1.msra.mxu0 0.0
        %6532 = vmatprep.subr.mxu0 0.0
        %6533 = vmatpush1.msra.mxu0 0.0
        %6534 = vmatprep.subr.mxu0 0.0
        %6535 = vmatpush1.msra.mxu0 0.0
        %6536 = vmatprep.subr.mxu0 0.0
        %6537 = vmatpush1.msra.mxu0 0.0
        %6538 = vmatprep.subr.mxu0 0.0
        %6539 = vmatpush1.msra.mxu0 0.0
        %6540 = vmatprep.subr.mxu0 0.0
        %6541 = vmatpush1.msra.mxu0 0.0
        %6542 = vmatprep.subr.mxu0 0.0
        %6543 = vmatpush1.msra.mxu0 0.0
        %6544 = vmatprep.subr.mxu0 0.0
        %6545 = vmatpush1.msra.mxu0 0.0
        %6546 = vmatprep.mubr.f32.mxu0 %v6480
        %6547 = vmatmul.mubr.f32.gmra.mrb[0].mxu0 %v6276
        %v6548 = vpop.f32.mrb[0].mxu0
        %v6549 = vadd.f32 %v6476, %v6548
        %v6550 = vpop.f32.mrb[0].mxu0
        %6551 = vdwg.mxu0
        %vm6552 = vcmp.eq.s32.totalorder %v6202, 2
        %v6553 = vsel %vm6552, 1, 0
        %v6554 = vcvt.s32.f32 %v6553
        %v6556 = vsel %vm1863, %v6554, 0
        %6558 = vmatprep.subr.mxu0 %v6200
        %6559 = vmatpush1.msra.mxu0 %v6199
        %6560 = vmatprep.subr.mxu0 0.0
        %6561 = vmatpush1.msra.mxu0 0.0
        %6562 = vmatprep.subr.mxu0 0.0
        %6563 = vmatpush1.msra.mxu0 0.0
        %6564 = vmatprep.subr.mxu0 0.0
        %6565 = vmatpush1.msra.mxu0 0.0
        %6566 = vmatprep.subr.mxu0 0.0
        %6567 = vmatpush1.msra.mxu0 0.0
        %6568 = vmatprep.subr.mxu0 0.0
        %6569 = vmatpush1.msra.mxu0 0.0
        %6570 = vmatprep.subr.mxu0 0.0
        %6571 = vmatpush1.msra.mxu0 0.0
        %6572 = vmatprep.subr.mxu0 0.0
        %6573 = vmatpush1.msra.mxu0 0.0
        %6574 = vmatprep.subr.mxu0 0.0
        %6575 = vmatpush1.msra.mxu0 0.0
        %6576 = vmatprep.subr.mxu0 0.0
        %6577 = vmatpush1.msra.mxu0 0.0
        %6578 = vmatprep.subr.mxu0 0.0
        %6579 = vmatpush1.msra.mxu0 0.0
        %6580 = vmatprep.subr.mxu0 0.0
        %6581 = vmatpush1.msra.mxu0 0.0
        %6582 = vmatprep.subr.mxu0 0.0
        %6583 = vmatpush1.msra.mxu0 0.0
        %6584 = vmatprep.subr.mxu0 0.0
        %6585 = vmatpush1.msra.mxu0 0.0
        %6586 = vmatprep.subr.mxu0 0.0
        %6587 = vmatpush1.msra.mxu0 0.0
        %6588 = vmatprep.subr.mxu0 0.0
        %6589 = vmatpush1.msra.mxu0 0.0
        %6590 = vmatprep.subr.mxu0 0.0
        %6591 = vmatpush1.msra.mxu0 0.0
        %6592 = vmatprep.subr.mxu0 0.0
        %6593 = vmatpush1.msra.mxu0 0.0
        %6594 = vmatprep.subr.mxu0 0.0
        %6595 = vmatpush1.msra.mxu0 0.0
        %6596 = vmatprep.subr.mxu0 0.0
        %6597 = vmatpush1.msra.mxu0 0.0
        %6598 = vmatprep.subr.mxu0 0.0
        %6599 = vmatpush1.msra.mxu0 0.0
        %6600 = vmatprep.subr.mxu0 0.0
        %6601 = vmatpush1.msra.mxu0 0.0
        %6602 = vmatprep.subr.mxu0 0.0
        %6603 = vmatpush1.msra.mxu0 0.0
        %6604 = vmatprep.subr.mxu0 0.0
        %6605 = vmatpush1.msra.mxu0 0.0
        %6606 = vmatprep.subr.mxu0 0.0
        %6607 = vmatpush1.msra.mxu0 0.0
        %6608 = vmatprep.subr.mxu0 0.0
        %6609 = vmatpush1.msra.mxu0 0.0
        %6610 = vmatprep.subr.mxu0 0.0
        %6611 = vmatpush1.msra.mxu0 0.0
        %6612 = vmatprep.subr.mxu0 0.0
        %6613 = vmatpush1.msra.mxu0 0.0
        %6614 = vmatprep.subr.mxu0 0.0
        %6615 = vmatpush1.msra.mxu0 0.0
        %6616 = vmatprep.subr.mxu0 0.0
        %6617 = vmatpush1.msra.mxu0 0.0
        %6618 = vmatprep.subr.mxu0 0.0
        %6619 = vmatpush1.msra.mxu0 0.0
        %6620 = vmatprep.subr.mxu0 0.0
        %6621 = vmatpush1.msra.mxu0 0.0
        %6622 = vmatprep.mubr.f32.mxu0 0.0
        %6623 = vmatmul.mubr.f32.gmra.mrb[0].mxu0 %v6556
        %v6624 = vpop.f32.mrb[0].mxu0
        %v6625 = vadd.f32 0.0, %v6624
        %v6626 = vpop.f32.mrb[0].mxu0
        %v6627 = vadd.f32 0.0, %v6626
        %6628 = vdwg.mxu0
        %s6629 = scalar_lea.vmem %s14, 384
        %v6630 = vld [vmem:[%s6629] sm:$0xff]
        %v6631 = vld [vmem:[%s6629 + $0x8] sm:$0xff]
        %v6632 = vld [vmem:[%s6629 + $0x10] sm:$0xff]
        %v6633 = vld [vmem:[%s6629 + $0x18] sm:$0xff]
        %v6634 = vld [vmem:[%s6629 + $0x20] sm:$0xff]
        %v6635 = vld [vmem:[%s6629 + $0x28] sm:$0xff]
        %v6636 = vld [vmem:[%s6629 + $0x30] sm:$0xff]
        %v6637 = vld [vmem:[%s6629 + $0x38] sm:$0xff]
        %v6638 = vld [vmem:[%s6629 + $0x40] sm:$0xff]
        %v6639 = vld [vmem:[%s6629 + $0x48] sm:$0xff]
        %v6640 = vld [vmem:[%s6629 + $0x50] sm:$0xff]
        %v6641 = vld [vmem:[%s6629 + $0x58] sm:$0xff]
        %v6642 = vld [vmem:[%s6629 + $0x60] sm:$0xff]
        %v6643 = vld [vmem:[%s6629 + $0x68] sm:$0xff]
        %v6644 = vld [vmem:[%s6629 + $0x70] sm:$0xff]
        %v6645 = vld [vmem:[%s6629 + $0x78] sm:$0xff]
        %v6646 = vld [vmem:[%s6629 + $0x80] sm:$0xff]
        %v6647 = vld [vmem:[%s6629 + $0x88] sm:$0xff]
        %v6648 = vld [vmem:[%s6629 + $0x90] sm:$0xff]
        %v6649 = vld [vmem:[%s6629 + $0x98] sm:$0xff]
        %v6650 = vld [vmem:[%s6629 + $0xa0] sm:$0xff]
        %v6651 = vld [vmem:[%s6629 + $0xa8] sm:$0xff]
        %v6652 = vld [vmem:[%s6629 + $0xb0] sm:$0xff]
        %v6653 = vld [vmem:[%s6629 + $0xb8] sm:$0xff]
        %v6655 = vsel %vm757, %v6627, 0
        %6657 = vmatprep.subr.mxu0 0.0
        %6658 = vmatpush1.msra.mxu0 %v6630
        %6659 = vmatprep.subr.mxu0 0.0
        %6660 = vmatpush1.msra.mxu0 %v6631
        %6661 = vmatprep.subr.mxu0 0.0
        %6662 = vmatpush1.msra.mxu0 %v6632
        %6663 = vmatprep.subr.mxu0 0.0
        %6664 = vmatpush1.msra.mxu0 %v6633
        %6665 = vmatprep.subr.mxu0 0.0
        %6666 = vmatpush1.msra.mxu0 %v6634
        %6667 = vmatprep.subr.mxu0 0.0
        %6668 = vmatpush1.msra.mxu0 %v6635
        %6669 = vmatprep.subr.mxu0 0.0
        %6670 = vmatpush1.msra.mxu0 %v6636
        %6671 = vmatprep.subr.mxu0 0.0
        %6672 = vmatpush1.msra.mxu0 %v6637
        %6673 = vmatprep.subr.mxu0 0.0
        %6674 = vmatpush1.msra.mxu0 %v6638
        %6675 = vmatprep.subr.mxu0 0.0
        %6676 = vmatpush1.msra.mxu0 %v6639
        %6677 = vmatprep.subr.mxu0 0.0
        %6678 = vmatpush1.msra.mxu0 %v6640
        %6679 = vmatprep.subr.mxu0 0.0
        %6680 = vmatpush1.msra.mxu0 %v6641
        %6681 = vmatprep.subr.mxu0 0.0
        %6682 = vmatpush1.msra.mxu0 %v6642
        %6683 = vmatprep.subr.mxu0 0.0
        %6684 = vmatpush1.msra.mxu0 %v6643
        %6685 = vmatprep.subr.mxu0 0.0
        %6686 = vmatpush1.msra.mxu0 %v6644
        %6687 = vmatprep.subr.mxu0 0.0
        %6688 = vmatpush1.msra.mxu0 %v6645
        %6689 = vmatprep.subr.mxu0 0.0
        %6690 = vmatpush1.msra.mxu0 %v6646
        %6691 = vmatprep.subr.mxu0 0.0
        %6692 = vmatpush1.msra.mxu0 %v6647
        %6693 = vmatprep.subr.mxu0 0.0
        %6694 = vmatpush1.msra.mxu0 %v6648
        %6695 = vmatprep.subr.mxu0 0.0
        %6696 = vmatpush1.msra.mxu0 %v6649
        %6697 = vmatprep.subr.mxu0 0.0
        %6698 = vmatpush1.msra.mxu0 %v6650
        %6699 = vmatprep.subr.mxu0 0.0
        %6700 = vmatpush1.msra.mxu0 %v6651
        %6701 = vmatprep.subr.mxu0 0.0
        %6702 = vmatpush1.msra.mxu0 %v6652
        %6703 = vmatprep.subr.mxu0 0.0
        %6704 = vmatpush1.msra.mxu0 %v6653
        %6705 = vmatprep.subr.mxu0 0.0
        %6706 = vmatpush1.msra.mxu0 0.0
        %6707 = vmatprep.subr.mxu0 0.0
        %6708 = vmatpush1.msra.mxu0 0.0
        %6709 = vmatprep.subr.mxu0 0.0
        %6710 = vmatpush1.msra.mxu0 0.0
        %6711 = vmatprep.subr.mxu0 0.0
        %6712 = vmatpush1.msra.mxu0 0.0
        %6713 = vmatprep.subr.mxu0 0.0
        %6714 = vmatpush1.msra.mxu0 0.0
        %6715 = vmatprep.subr.mxu0 0.0
        %6716 = vmatpush1.msra.mxu0 0.0
        %6717 = vmatprep.subr.mxu0 0.0
        %6718 = vmatpush1.msra.mxu0 0.0
        %6719 = vmatprep.subr.mxu0 0.0
        %6720 = vmatpush1.msra.mxu0 0.0
        %6721 = vmatprep.mubr.f32.mxu0 %v6655
        %6722 = vmatmul.mubr.f32.gmra.mrb[0].mxu0 %v6625
        %v6723 = vpop.f32.mrb[0].mxu0
        %v6724 = vadd.f32 0.0, %v6723
        %v6725 = vpop.f32.mrb[0].mxu0
        %6726 = vdwg.mxu0
        %v6727 = vadd.f32 %v6549, %v6724
        %vm6728 = vcmp.eq.s32.totalorder %v6202, 3
        %v6729 = vsel %vm6728, 1, 0
        %v6730 = vcvt.s32.f32 %v6729
        %v6732 = vsel %vm1863, %v6730, 0
        %6734 = vmatprep.subr.mxu0 %v6200
        %6735 = vmatpush1.msra.mxu0 %v6199
        %6736 = vmatprep.subr.mxu0 0.0
        %6737 = vmatpush1.msra.mxu0 0.0
        %6738 = vmatprep.subr.mxu0 0.0
        %6739 = vmatpush1.msra.mxu0 0.0
        %6740 = vmatprep.subr.mxu0 0.0
        %6741 = vmatpush1.msra.mxu0 0.0
        %6742 = vmatprep.subr.mxu0 0.0
        %6743 = vmatpush1.msra.mxu0 0.0
        %6744 = vmatprep.subr.mxu0 0.0
        %6745 = vmatpush1.msra.mxu0 0.0
        %6746 = vmatprep.subr.mxu0 0.0
        %6747 = vmatpush1.msra.mxu0 0.0
        %6748 = vmatprep.subr.mxu0 0.0
        %6749 = vmatpush1.msra.mxu0 0.0
        %6750 = vmatprep.subr.mxu0 0.0
        %6751 = vmatpush1.msra.mxu0 0.0
        %6752 = vmatprep.subr.mxu0 0.0
        %6753 = vmatpush1.msra.mxu0 0.0
        %6754 = vmatprep.subr.mxu0 0.0
        %6755 = vmatpush1.msra.mxu0 0.0
        %6756 = vmatprep.subr.mxu0 0.0
        %6757 = vmatpush1.msra.mxu0 0.0
        %6758 = vmatprep.subr.mxu0 0.0
        %6759 = vmatpush1.msra.mxu0 0.0
        %6760 = vmatprep.subr.mxu0 0.0
        %6761 = vmatpush1.msra.mxu0 0.0
        %6762 = vmatprep.subr.mxu0 0.0
        %6763 = vmatpush1.msra.mxu0 0.0
        %6764 = vmatprep.subr.mxu0 0.0
        %6765 = vmatpush1.msra.mxu0 0.0
        %6766 = vmatprep.subr.mxu0 0.0
        %6767 = vmatpush1.msra.mxu0 0.0
        %6768 = vmatprep.subr.mxu0 0.0
        %6769 = vmatpush1.msra.mxu0 0.0
        %6770 = vmatprep.subr.mxu0 0.0
        %6771 = vmatpush1.msra.mxu0 0.0
        %6772 = vmatprep.subr.mxu0 0.0
        %6773 = vmatpush1.msra.mxu0 0.0
        %6774 = vmatprep.subr.mxu0 0.0
        %6775 = vmatpush1.msra.mxu0 0.0
        %6776 = vmatprep.subr.mxu0 0.0
        %6777 = vmatpush1.msra.mxu0 0.0
        %6778 = vmatprep.subr.mxu0 0.0
        %6779 = vmatpush1.msra.mxu0 0.0
        %6780 = vmatprep.subr.mxu0 0.0
        %6781 = vmatpush1.msra.mxu0 0.0
        %6782 = vmatprep.subr.mxu0 0.0
        %6783 = vmatpush1.msra.mxu0 0.0
        %6784 = vmatprep.subr.mxu0 0.0
        %6785 = vmatpush1.msra.mxu0 0.0
        %6786 = vmatprep.subr.mxu0 0.0
        %6787 = vmatpush1.msra.mxu0 0.0
        %6788 = vmatprep.subr.mxu0 0.0
        %6789 = vmatpush1.msra.mxu0 0.0
        %6790 = vmatprep.subr.mxu0 0.0
        %6791 = vmatpush1.msra.mxu0 0.0
        %6792 = vmatprep.subr.mxu0 0.0
        %6793 = vmatpush1.msra.mxu0 0.0
        %6794 = vmatprep.subr.mxu0 0.0
        %6795 = vmatpush1.msra.mxu0 0.0
        %6796 = vmatprep.subr.mxu0 0.0
        %6797 = vmatpush1.msra.mxu0 0.0
        %6798 = vmatprep.mubr.f32.mxu0 0.0
        %6799 = vmatmul.mubr.f32.gmra.mrb[0].mxu0 %v6732
        %v6800 = vpop.f32.mrb[0].mxu0
        %v6801 = vadd.f32 0.0, %v6800
        %v6802 = vpop.f32.mrb[0].mxu0
        %v6803 = vadd.f32 0.0, %v6802
        %6804 = vdwg.mxu0
        %s6805 = scalar_lea.vmem %s14, 576
        %v6806 = vld [vmem:[%s6805] sm:$0xff]
        %v6807 = vld [vmem:[%s6805 + $0x8] sm:$0xff]
        %v6808 = vld [vmem:[%s6805 + $0x10] sm:$0xff]
        %v6809 = vld [vmem:[%s6805 + $0x18] sm:$0xff]
        %v6810 = vld [vmem:[%s6805 + $0x20] sm:$0xff]
        %v6811 = vld [vmem:[%s6805 + $0x28] sm:$0xff]
        %v6812 = vld [vmem:[%s6805 + $0x30] sm:$0xff]
        %v6813 = vld [vmem:[%s6805 + $0x38] sm:$0xff]
        %v6814 = vld [vmem:[%s6805 + $0x40] sm:$0xff]
        %v6815 = vld [vmem:[%s6805 + $0x48] sm:$0xff]
        %v6816 = vld [vmem:[%s6805 + $0x50] sm:$0xff]
        %v6817 = vld [vmem:[%s6805 + $0x58] sm:$0xff]
        %v6818 = vld [vmem:[%s6805 + $0x60] sm:$0xff]
        %v6819 = vld [vmem:[%s6805 + $0x68] sm:$0xff]
        %v6820 = vld [vmem:[%s6805 + $0x70] sm:$0xff]
        %v6821 = vld [vmem:[%s6805 + $0x78] sm:$0xff]
        %v6822 = vld [vmem:[%s6805 + $0x80] sm:$0xff]
        %v6823 = vld [vmem:[%s6805 + $0x88] sm:$0xff]
        %v6824 = vld [vmem:[%s6805 + $0x90] sm:$0xff]
        %v6825 = vld [vmem:[%s6805 + $0x98] sm:$0xff]
        %v6826 = vld [vmem:[%s6805 + $0xa0] sm:$0xff]
        %v6827 = vld [vmem:[%s6805 + $0xa8] sm:$0xff]
        %v6828 = vld [vmem:[%s6805 + $0xb0] sm:$0xff]
        %v6829 = vld [vmem:[%s6805 + $0xb8] sm:$0xff]
        %v6831 = vsel %vm757, %v6803, 0
        %6833 = vmatprep.subr.mxu0 0.0
        %6834 = vmatpush1.msra.mxu0 %v6806
        %6835 = vmatprep.subr.mxu0 0.0
        %6836 = vmatpush1.msra.mxu0 %v6807
        %6837 = vmatprep.subr.mxu0 0.0
        %6838 = vmatpush1.msra.mxu0 %v6808
        %6839 = vmatprep.subr.mxu0 0.0
        %6840 = vmatpush1.msra.mxu0 %v6809
        %6841 = vmatprep.subr.mxu0 0.0
        %6842 = vmatpush1.msra.mxu0 %v6810
        %6843 = vmatprep.subr.mxu0 0.0
        %6844 = vmatpush1.msra.mxu0 %v6811
        %6845 = vmatprep.subr.mxu0 0.0
        %6846 = vmatpush1.msra.mxu0 %v6812
        %6847 = vmatprep.subr.mxu0 0.0
        %6848 = vmatpush1.msra.mxu0 %v6813
        %6849 = vmatprep.subr.mxu0 0.0
        %6850 = vmatpush1.msra.mxu0 %v6814
        %6851 = vmatprep.subr.mxu0 0.0
        %6852 = vmatpush1.msra.mxu0 %v6815
        %6853 = vmatprep.subr.mxu0 0.0
        %6854 = vmatpush1.msra.mxu0 %v6816
        %6855 = vmatprep.subr.mxu0 0.0
        %6856 = vmatpush1.msra.mxu0 %v6817
        %6857 = vmatprep.subr.mxu0 0.0
        %6858 = vmatpush1.msra.mxu0 %v6818
        %6859 = vmatprep.subr.mxu0 0.0
        %6860 = vmatpush1.msra.mxu0 %v6819
        %6861 = vmatprep.subr.mxu0 0.0
        %6862 = vmatpush1.msra.mxu0 %v6820
        %6863 = vmatprep.subr.mxu0 0.0
        %6864 = vmatpush1.msra.mxu0 %v6821
        %6865 = vmatprep.subr.mxu0 0.0
        %6866 = vmatpush1.msra.mxu0 %v6822
        %6867 = vmatprep.subr.mxu0 0.0
        %6868 = vmatpush1.msra.mxu0 %v6823
        %6869 = vmatprep.subr.mxu0 0.0
        %6870 = vmatpush1.msra.mxu0 %v6824
        %6871 = vmatprep.subr.mxu0 0.0
        %6872 = vmatpush1.msra.mxu0 %v6825
        %6873 = vmatprep.subr.mxu0 0.0
        %6874 = vmatpush1.msra.mxu0 %v6826
        %6875 = vmatprep.subr.mxu0 0.0
        %6876 = vmatpush1.msra.mxu0 %v6827
        %6877 = vmatprep.subr.mxu0 0.0
        %6878 = vmatpush1.msra.mxu0 %v6828
        %6879 = vmatprep.subr.mxu0 0.0
        %6880 = vmatpush1.msra.mxu0 %v6829
        %6881 = vmatprep.subr.mxu0 0.0
        %6882 = vmatpush1.msra.mxu0 0.0
        %6883 = vmatprep.subr.mxu0 0.0
        %6884 = vmatpush1.msra.mxu0 0.0
        %6885 = vmatprep.subr.mxu0 0.0
        %6886 = vmatpush1.msra.mxu0 0.0
        %6887 = vmatprep.subr.mxu0 0.0
        %6888 = vmatpush1.msra.mxu0 0.0
        %6889 = vmatprep.subr.mxu0 0.0
        %6890 = vmatpush1.msra.mxu0 0.0
        %6891 = vmatprep.subr.mxu0 0.0
        %6892 = vmatpush1.msra.mxu0 0.0
        %6893 = vmatprep.subr.mxu0 0.0
        %6894 = vmatpush1.msra.mxu0 0.0
        %6895 = vmatprep.subr.mxu0 0.0
        %6896 = vmatpush1.msra.mxu0 0.0
        %6897 = vmatprep.mubr.f32.mxu0 %v6831
        %6898 = vmatmul.mubr.f32.gmra.mrb[0].mxu0 %v6801
        %v6899 = vpop.f32.mrb[0].mxu0
        %v6900 = vadd.f32 0.0, %v6899
        %v6901 = vpop.f32.mrb[0].mxu0
        %6902 = vdwg.mxu0
        %v6903 = vadd.f32 %v6727, %v6900
        %vm6904 = vcmp.eq.s32.totalorder %v6202, 4
        %v6905 = vsel %vm6904, 1, 0
        %v6906 = vcvt.s32.f32 %v6905
        %v6908 = vsel %vm1863, %v6906, 0
        %6910 = vmatprep.subr.mxu0 %v6200
        %6911 = vmatpush1.msra.mxu0 %v6199
        %6912 = vmatprep.subr.mxu0 0.0
        %6913 = vmatpush1.msra.mxu0 0.0
        %6914 = vmatprep.subr.mxu0 0.0
        %6915 = vmatpush1.msra.mxu0 0.0
        %6916 = vmatprep.subr.mxu0 0.0
        %6917 = vmatpush1.msra.mxu0 0.0
        %6918 = vmatprep.subr.mxu0 0.0
        %6919 = vmatpush1.msra.mxu0 0.0
        %6920 = vmatprep.subr.mxu0 0.0
        %6921 = vmatpush1.msra.mxu0 0.0
        %6922 = vmatprep.subr.mxu0 0.0
        %6923 = vmatpush1.msra.mxu0 0.0
        %6924 = vmatprep.subr.mxu0 0.0
        %6925 = vmatpush1.msra.mxu0 0.0
        %6926 = vmatprep.subr.mxu0 0.0
        %6927 = vmatpush1.msra.mxu0 0.0
        %6928 = vmatprep.subr.mxu0 0.0
        %6929 = vmatpush1.msra.mxu0 0.0
        %6930 = vmatprep.subr.mxu0 0.0
        %6931 = vmatpush1.msra.mxu0 0.0
        %6932 = vmatprep.subr.mxu0 0.0
        %6933 = vmatpush1.msra.mxu0 0.0
        %6934 = vmatprep.subr.mxu0 0.0
        %6935 = vmatpush1.msra.mxu0 0.0
        %6936 = vmatprep.subr.mxu0 0.0
        %6937 = vmatpush1.msra.mxu0 0.0
        %6938 = vmatprep.subr.mxu0 0.0
        %6939 = vmatpush1.msra.mxu0 0.0
        %6940 = vmatprep.subr.mxu0 0.0
        %6941 = vmatpush1.msra.mxu0 0.0
        %6942 = vmatprep.subr.mxu0 0.0
        %6943 = vmatpush1.msra.mxu0 0.0
        %6944 = vmatprep.subr.mxu0 0.0
        %6945 = vmatpush1.msra.mxu0 0.0
        %6946 = vmatprep.subr.mxu0 0.0
        %6947 = vmatpush1.msra.mxu0 0.0
        %6948 = vmatprep.subr.mxu0 0.0
        %6949 = vmatpush1.msra.mxu0 0.0
        %6950 = vmatprep.subr.mxu0 0.0
        %6951 = vmatpush1.msra.mxu0 0.0
        %6952 = vmatprep.subr.mxu0 0.0
        %6953 = vmatpush1.msra.mxu0 0.0
        %6954 = vmatprep.subr.mxu0 0.0
        %6955 = vmatpush1.msra.mxu0 0.0
        %6956 = vmatprep.subr.mxu0 0.0
        %6957 = vmatpush1.msra.mxu0 0.0
        %6958 = vmatprep.subr.mxu0 0.0
        %6959 = vmatpush1.msra.mxu0 0.0
        %6960 = vmatprep.subr.mxu0 0.0
        %6961 = vmatpush1.msra.mxu0 0.0
        %6962 = vmatprep.subr.mxu0 0.0
        %6963 = vmatpush1.msra.mxu0 0.0
        %6964 = vmatprep.subr.mxu0 0.0
        %6965 = vmatpush1.msra.mxu0 0.0
        %6966 = vmatprep.subr.mxu0 0.0
        %6967 = vmatpush1.msra.mxu0 0.0
        %6968 = vmatprep.subr.mxu0 0.0
        %6969 = vmatpush1.msra.mxu0 0.0
        %6970 = vmatprep.subr.mxu0 0.0
        %6971 = vmatpush1.msra.mxu0 0.0
        %6972 = vmatprep.subr.mxu0 0.0
        %6973 = vmatpush1.msra.mxu0 0.0
        %6974 = vmatprep.mubr.f32.mxu0 0.0
        %6975 = vmatmul.mubr.f32.gmra.mrb[0].mxu0 %v6908
        %v6976 = vpop.f32.mrb[0].mxu0
        %v6977 = vadd.f32 0.0, %v6976
        %v6978 = vpop.f32.mrb[0].mxu0
        %v6979 = vadd.f32 0.0, %v6978
        %6980 = vdwg.mxu0
        %s6981 = scalar_lea.vmem %s14, 768
        %v6982 = vld [vmem:[%s6981] sm:$0xff]
        %v6983 = vld [vmem:[%s6981 + $0x8] sm:$0xff]
        %v6984 = vld [vmem:[%s6981 + $0x10] sm:$0xff]
        %v6985 = vld [vmem:[%s6981 + $0x18] sm:$0xff]
        %v6986 = vld [vmem:[%s6981 + $0x20] sm:$0xff]
        %v6987 = vld [vmem:[%s6981 + $0x28] sm:$0xff]
        %v6988 = vld [vmem:[%s6981 + $0x30] sm:$0xff]
        %v6989 = vld [vmem:[%s6981 + $0x38] sm:$0xff]
        %v6990 = vld [vmem:[%s6981 + $0x40] sm:$0xff]
        %v6991 = vld [vmem:[%s6981 + $0x48] sm:$0xff]
        %v6992 = vld [vmem:[%s6981 + $0x50] sm:$0xff]
        %v6993 = vld [vmem:[%s6981 + $0x58] sm:$0xff]
        %v6994 = vld [vmem:[%s6981 + $0x60] sm:$0xff]
        %v6995 = vld [vmem:[%s6981 + $0x68] sm:$0xff]
        %v6996 = vld [vmem:[%s6981 + $0x70] sm:$0xff]
        %v6997 = vld [vmem:[%s6981 + $0x78] sm:$0xff]
        %v6998 = vld [vmem:[%s6981 + $0x80] sm:$0xff]
        %v6999 = vld [vmem:[%s6981 + $0x88] sm:$0xff]
        %v7000 = vld [vmem:[%s6981 + $0x90] sm:$0xff]
        %v7001 = vld [vmem:[%s6981 + $0x98] sm:$0xff]
        %v7002 = vld [vmem:[%s6981 + $0xa0] sm:$0xff]
        %v7003 = vld [vmem:[%s6981 + $0xa8] sm:$0xff]
        %v7004 = vld [vmem:[%s6981 + $0xb0] sm:$0xff]
        %v7005 = vld [vmem:[%s6981 + $0xb8] sm:$0xff]
        %v7007 = vsel %vm757, %v6979, 0
        %7009 = vmatprep.subr.mxu0 0.0
        %7010 = vmatpush1.msra.mxu0 %v6982
        %7011 = vmatprep.subr.mxu0 0.0
        %7012 = vmatpush1.msra.mxu0 %v6983
        %7013 = vmatprep.subr.mxu0 0.0
        %7014 = vmatpush1.msra.mxu0 %v6984
        %7015 = vmatprep.subr.mxu0 0.0
        %7016 = vmatpush1.msra.mxu0 %v6985
        %7017 = vmatprep.subr.mxu0 0.0
        %7018 = vmatpush1.msra.mxu0 %v6986
        %7019 = vmatprep.subr.mxu0 0.0
        %7020 = vmatpush1.msra.mxu0 %v6987
        %7021 = vmatprep.subr.mxu0 0.0
        %7022 = vmatpush1.msra.mxu0 %v6988
        %7023 = vmatprep.subr.mxu0 0.0
        %7024 = vmatpush1.msra.mxu0 %v6989
        %7025 = vmatprep.subr.mxu0 0.0
        %7026 = vmatpush1.msra.mxu0 %v6990
        %7027 = vmatprep.subr.mxu0 0.0
        %7028 = vmatpush1.msra.mxu0 %v6991
        %7029 = vmatprep.subr.mxu0 0.0
        %7030 = vmatpush1.msra.mxu0 %v6992
        %7031 = vmatprep.subr.mxu0 0.0
        %7032 = vmatpush1.msra.mxu0 %v6993
        %7033 = vmatprep.subr.mxu0 0.0
        %7034 = vmatpush1.msra.mxu0 %v6994
        %7035 = vmatprep.subr.mxu0 0.0
        %7036 = vmatpush1.msra.mxu0 %v6995
        %7037 = vmatprep.subr.mxu0 0.0
        %7038 = vmatpush1.msra.mxu0 %v6996
        %7039 = vmatprep.subr.mxu0 0.0
        %7040 = vmatpush1.msra.mxu0 %v6997
        %7041 = vmatprep.subr.mxu0 0.0
        %7042 = vmatpush1.msra.mxu0 %v6998
        %7043 = vmatprep.subr.mxu0 0.0
        %7044 = vmatpush1.msra.mxu0 %v6999
        %7045 = vmatprep.subr.mxu0 0.0
        %7046 = vmatpush1.msra.mxu0 %v7000
        %7047 = vmatprep.subr.mxu0 0.0
        %7048 = vmatpush1.msra.mxu0 %v7001
        %7049 = vmatprep.subr.mxu0 0.0
        %7050 = vmatpush1.msra.mxu0 %v7002
        %7051 = vmatprep.subr.mxu0 0.0
        %7052 = vmatpush1.msra.mxu0 %v7003
        %7053 = vmatprep.subr.mxu0 0.0
        %7054 = vmatpush1.msra.mxu0 %v7004
        %7055 = vmatprep.subr.mxu0 0.0
        %7056 = vmatpush1.msra.mxu0 %v7005
        %7057 = vmatprep.subr.mxu0 0.0
        %7058 = vmatpush1.msra.mxu0 0.0
        %7059 = vmatprep.subr.mxu0 0.0
        %7060 = vmatpush1.msra.mxu0 0.0
        %7061 = vmatprep.subr.mxu0 0.0
        %7062 = vmatpush1.msra.mxu0 0.0
        %7063 = vmatprep.subr.mxu0 0.0
        %7064 = vmatpush1.msra.mxu0 0.0
        %7065 = vmatprep.subr.mxu0 0.0
        %7066 = vmatpush1.msra.mxu0 0.0
        %7067 = vmatprep.subr.mxu0 0.0
        %7068 = vmatpush1.msra.mxu0 0.0
        %7069 = vmatprep.subr.mxu0 0.0
        %7070 = vmatpush1.msra.mxu0 0.0
        %7071 = vmatprep.subr.mxu0 0.0
        %7072 = vmatpush1.msra.mxu0 0.0
        %7073 = vmatprep.mubr.f32.mxu0 %v7007
        %7074 = vmatmul.mubr.f32.gmra.mrb[0].mxu0 %v6977
        %v7075 = vpop.f32.mrb[0].mxu0
        %v7076 = vadd.f32 0.0, %v7075
        %v7077 = vpop.f32.mrb[0].mxu0
        %7078 = vdwg.mxu0
        %v7079 = vadd.f32 %v6903, %v7076
        %vm7080 = vcmp.eq.s32.totalorder %v6202, 5
        %v7081 = vsel %vm7080, 1, 0
        %v7082 = vcvt.s32.f32 %v7081
        %v7084 = vsel %vm1863, %v7082, 0
        %7086 = vmatprep.subr.mxu0 %v6200
        %7087 = vmatpush1.msra.mxu0 %v6199
        %7088 = vmatprep.subr.mxu0 0.0
        %7089 = vmatpush1.msra.mxu0 0.0
        %7090 = vmatprep.subr.mxu0 0.0
        %7091 = vmatpush1.msra.mxu0 0.0
        %7092 = vmatprep.subr.mxu0 0.0
        %7093 = vmatpush1.msra.mxu0 0.0
        %7094 = vmatprep.subr.mxu0 0.0
        %7095 = vmatpush1.msra.mxu0 0.0
        %7096 = vmatprep.subr.mxu0 0.0
        %7097 = vmatpush1.msra.mxu0 0.0
        %7098 = vmatprep.subr.mxu0 0.0
        %7099 = vmatpush1.msra.mxu0 0.0
        %7100 = vmatprep.subr.mxu0 0.0
        %7101 = vmatpush1.msra.mxu0 0.0
        %7102 = vmatprep.subr.mxu0 0.0
        %7103 = vmatpush1.msra.mxu0 0.0
        %7104 = vmatprep.subr.mxu0 0.0
        %7105 = vmatpush1.msra.mxu0 0.0
        %7106 = vmatprep.subr.mxu0 0.0
        %7107 = vmatpush1.msra.mxu0 0.0
        %7108 = vmatprep.subr.mxu0 0.0
        %7109 = vmatpush1.msra.mxu0 0.0
        %7110 = vmatprep.subr.mxu0 0.0
        %7111 = vmatpush1.msra.mxu0 0.0
        %7112 = vmatprep.subr.mxu0 0.0
        %7113 = vmatpush1.msra.mxu0 0.0
        %7114 = vmatprep.subr.mxu0 0.0
        %7115 = vmatpush1.msra.mxu0 0.0
        %7116 = vmatprep.subr.mxu0 0.0
        %7117 = vmatpush1.msra.mxu0 0.0
        %7118 = vmatprep.subr.mxu0 0.0
        %7119 = vmatpush1.msra.mxu0 0.0
        %7120 = vmatprep.subr.mxu0 0.0
        %7121 = vmatpush1.msra.mxu0 0.0
        %7122 = vmatprep.subr.mxu0 0.0
        %7123 = vmatpush1.msra.mxu0 0.0
        %7124 = vmatprep.subr.mxu0 0.0
        %7125 = vmatpush1.msra.mxu0 0.0
        %7126 = vmatprep.subr.mxu0 0.0
        %7127 = vmatpush1.msra.mxu0 0.0
        %7128 = vmatprep.subr.mxu0 0.0
        %7129 = vmatpush1.msra.mxu0 0.0
        %7130 = vmatprep.subr.mxu0 0.0
        %7131 = vmatpush1.msra.mxu0 0.0
        %7132 = vmatprep.subr.mxu0 0.0
        %7133 = vmatpush1.msra.mxu0 0.0
        %7134 = vmatprep.subr.mxu0 0.0
        %7135 = vmatpush1.msra.mxu0 0.0
        %7136 = vmatprep.subr.mxu0 0.0
        %7137 = vmatpush1.msra.mxu0 0.0
        %7138 = vmatprep.subr.mxu0 0.0
        %7139 = vmatpush1.msra.mxu0 0.0
        %7140 = vmatprep.subr.mxu0 0.0
        %7141 = vmatpush1.msra.mxu0 0.0
        %7142 = vmatprep.subr.mxu0 0.0
        %7143 = vmatpush1.msra.mxu0 0.0
        %7144 = vmatprep.subr.mxu0 0.0
        %7145 = vmatpush1.msra.mxu0 0.0
        %7146 = vmatprep.subr.mxu0 0.0
        %7147 = vmatpush1.msra.mxu0 0.0
        %7148 = vmatprep.subr.mxu0 0.0
        %7149 = vmatpush1.msra.mxu0 0.0
        %7150 = vmatprep.mubr.f32.mxu0 0.0
        %7151 = vmatmul.mubr.f32.gmra.mrb[0].mxu0 %v7084
        %v7152 = vpop.f32.mrb[0].mxu0
        %v7153 = vadd.f32 0.0, %v7152
        %v7154 = vpop.f32.mrb[0].mxu0
        %v7155 = vadd.f32 0.0, %v7154
        %7156 = vdwg.mxu0
        %s7157 = scalar_lea.vmem %s14, 960
        %v7158 = vld [vmem:[%s7157] sm:$0xff]
        %v7159 = vld [vmem:[%s7157 + $0x8] sm:$0xff]
        %v7160 = vld [vmem:[%s7157 + $0x10] sm:$0xff]
        %v7161 = vld [vmem:[%s7157 + $0x18] sm:$0xff]
        %v7162 = vld [vmem:[%s7157 + $0x20] sm:$0xff]
        %v7163 = vld [vmem:[%s7157 + $0x28] sm:$0xff]
        %v7164 = vld [vmem:[%s7157 + $0x30] sm:$0xff]
        %v7165 = vld [vmem:[%s7157 + $0x38] sm:$0xff]
        %v7166 = vld [vmem:[%s7157 + $0x40] sm:$0xff]
        %v7167 = vld [vmem:[%s7157 + $0x48] sm:$0xff]
        %v7168 = vld [vmem:[%s7157 + $0x50] sm:$0xff]
        %v7169 = vld [vmem:[%s7157 + $0x58] sm:$0xff]
        %v7170 = vld [vmem:[%s7157 + $0x60] sm:$0xff]
        %v7171 = vld [vmem:[%s7157 + $0x68] sm:$0xff]
        %v7172 = vld [vmem:[%s7157 + $0x70] sm:$0xff]
        %v7173 = vld [vmem:[%s7157 + $0x78] sm:$0xff]
        %v7174 = vld [vmem:[%s7157 + $0x80] sm:$0xff]
        %v7175 = vld [vmem:[%s7157 + $0x88] sm:$0xff]
        %v7176 = vld [vmem:[%s7157 + $0x90] sm:$0xff]
        %v7177 = vld [vmem:[%s7157 + $0x98] sm:$0xff]
        %v7178 = vld [vmem:[%s7157 + $0xa0] sm:$0xff]
        %v7179 = vld [vmem:[%s7157 + $0xa8] sm:$0xff]
        %v7180 = vld [vmem:[%s7157 + $0xb0] sm:$0xff]
        %v7181 = vld [vmem:[%s7157 + $0xb8] sm:$0xff]
        %v7183 = vsel %vm757, %v7155, 0
        %7185 = vmatprep.subr.mxu0 0.0
        %7186 = vmatpush1.msra.mxu0 %v7158
        %7187 = vmatprep.subr.mxu0 0.0
        %7188 = vmatpush1.msra.mxu0 %v7159
        %7189 = vmatprep.subr.mxu0 0.0
        %7190 = vmatpush1.msra.mxu0 %v7160
        %7191 = vmatprep.subr.mxu0 0.0
        %7192 = vmatpush1.msra.mxu0 %v7161
        %7193 = vmatprep.subr.mxu0 0.0
        %7194 = vmatpush1.msra.mxu0 %v7162
        %7195 = vmatprep.subr.mxu0 0.0
        %7196 = vmatpush1.msra.mxu0 %v7163
        %7197 = vmatprep.subr.mxu0 0.0
        %7198 = vmatpush1.msra.mxu0 %v7164
        %7199 = vmatprep.subr.mxu0 0.0
        %7200 = vmatpush1.msra.mxu0 %v7165
        %7201 = vmatprep.subr.mxu0 0.0
        %7202 = vmatpush1.msra.mxu0 %v7166
        %7203 = vmatprep.subr.mxu0 0.0
        %7204 = vmatpush1.msra.mxu0 %v7167
        %7205 = vmatprep.subr.mxu0 0.0
        %7206 = vmatpush1.msra.mxu0 %v7168
        %7207 = vmatprep.subr.mxu0 0.0
        %7208 = vmatpush1.msra.mxu0 %v7169
        %7209 = vmatprep.subr.mxu0 0.0
        %7210 = vmatpush1.msra.mxu0 %v7170
        %7211 = vmatprep.subr.mxu0 0.0
        %7212 = vmatpush1.msra.mxu0 %v7171
        %7213 = vmatprep.subr.mxu0 0.0
        %7214 = vmatpush1.msra.mxu0 %v7172
        %7215 = vmatprep.subr.mxu0 0.0
        %7216 = vmatpush1.msra.mxu0 %v7173
        %7217 = vmatprep.subr.mxu0 0.0
        %7218 = vmatpush1.msra.mxu0 %v7174
        %7219 = vmatprep.subr.mxu0 0.0
        %7220 = vmatpush1.msra.mxu0 %v7175
        %7221 = vmatprep.subr.mxu0 0.0
        %7222 = vmatpush1.msra.mxu0 %v7176
        %7223 = vmatprep.subr.mxu0 0.0
        %7224 = vmatpush1.msra.mxu0 %v7177
        %7225 = vmatprep.subr.mxu0 0.0
        %7226 = vmatpush1.msra.mxu0 %v7178
        %7227 = vmatprep.subr.mxu0 0.0
        %7228 = vmatpush1.msra.mxu0 %v7179
        %7229 = vmatprep.subr.mxu0 0.0
        %7230 = vmatpush1.msra.mxu0 %v7180
        %7231 = vmatprep.subr.mxu0 0.0
        %7232 = vmatpush1.msra.mxu0 %v7181
        %7233 = vmatprep.subr.mxu0 0.0
        %7234 = vmatpush1.msra.mxu0 0.0
        %7235 = vmatprep.subr.mxu0 0.0
        %7236 = vmatpush1.msra.mxu0 0.0
        %7237 = vmatprep.subr.mxu0 0.0
        %7238 = vmatpush1.msra.mxu0 0.0
        %7239 = vmatprep.subr.mxu0 0.0
        %7240 = vmatpush1.msra.mxu0 0.0
        %7241 = vmatprep.subr.mxu0 0.0
        %7242 = vmatpush1.msra.mxu0 0.0
        %7243 = vmatprep.subr.mxu0 0.0
        %7244 = vmatpush1.msra.mxu0 0.0
        %7245 = vmatprep.subr.mxu0 0.0
        %7246 = vmatpush1.msra.mxu0 0.0
        %7247 = vmatprep.subr.mxu0 0.0
        %7248 = vmatpush1.msra.mxu0 0.0
        %7249 = vmatprep.mubr.f32.mxu0 %v7183
        %7250 = vmatmul.mubr.f32.gmra.mrb[0].mxu0 %v7153
        %v7251 = vpop.f32.mrb[0].mxu0
        %v7252 = vadd.f32 0.0, %v7251
        %v7253 = vpop.f32.mrb[0].mxu0
        %7254 = vdwg.mxu0
        %v7255 = vadd.f32 %v7079, %v7252
        %vm7256 = vcmp.eq.s32.totalorder %v6202, 6
        %v7257 = vsel %vm7256, 1, 0
        %v7258 = vcvt.s32.f32 %v7257
        %v7260 = vsel %vm1863, %v7258, 0
        %7262 = vmatprep.subr.mxu0 %v6200
        %7263 = vmatpush1.msra.mxu0 %v6199
        %7264 = vmatprep.subr.mxu0 0.0
        %7265 = vmatpush1.msra.mxu0 0.0
        %7266 = vmatprep.subr.mxu0 0.0
        %7267 = vmatpush1.msra.mxu0 0.0
        %7268 = vmatprep.subr.mxu0 0.0
        %7269 = vmatpush1.msra.mxu0 0.0
        %7270 = vmatprep.subr.mxu0 0.0
        %7271 = vmatpush1.msra.mxu0 0.0
        %7272 = vmatprep.subr.mxu0 0.0
        %7273 = vmatpush1.msra.mxu0 0.0
        %7274 = vmatprep.subr.mxu0 0.0
        %7275 = vmatpush1.msra.mxu0 0.0
        %7276 = vmatprep.subr.mxu0 0.0
        %7277 = vmatpush1.msra.mxu0 0.0
        %7278 = vmatprep.subr.mxu0 0.0
        %7279 = vmatpush1.msra.mxu0 0.0
        %7280 = vmatprep.subr.mxu0 0.0
        %7281 = vmatpush1.msra.mxu0 0.0
        %7282 = vmatprep.subr.mxu0 0.0
        %7283 = vmatpush1.msra.mxu0 0.0
        %7284 = vmatprep.subr.mxu0 0.0
        %7285 = vmatpush1.msra.mxu0 0.0
        %7286 = vmatprep.subr.mxu0 0.0
        %7287 = vmatpush1.msra.mxu0 0.0
        %7288 = vmatprep.subr.mxu0 0.0
        %7289 = vmatpush1.msra.mxu0 0.0
        %7290 = vmatprep.subr.mxu0 0.0
        %7291 = vmatpush1.msra.mxu0 0.0
        %7292 = vmatprep.subr.mxu0 0.0
        %7293 = vmatpush1.msra.mxu0 0.0
        %7294 = vmatprep.subr.mxu0 0.0
        %7295 = vmatpush1.msra.mxu0 0.0
        %7296 = vmatprep.subr.mxu0 0.0
        %7297 = vmatpush1.msra.mxu0 0.0
        %7298 = vmatprep.subr.mxu0 0.0
        %7299 = vmatpush1.msra.mxu0 0.0
        %7300 = vmatprep.subr.mxu0 0.0
        %7301 = vmatpush1.msra.mxu0 0.0
        %7302 = vmatprep.subr.mxu0 0.0
        %7303 = vmatpush1.msra.mxu0 0.0
        %7304 = vmatprep.subr.mxu0 0.0
        %7305 = vmatpush1.msra.mxu0 0.0
        %7306 = vmatprep.subr.mxu0 0.0
        %7307 = vmatpush1.msra.mxu0 0.0
        %7308 = vmatprep.subr.mxu0 0.0
        %7309 = vmatpush1.msra.mxu0 0.0
        %7310 = vmatprep.subr.mxu0 0.0
        %7311 = vmatpush1.msra.mxu0 0.0
        %7312 = vmatprep.subr.mxu0 0.0
        %7313 = vmatpush1.msra.mxu0 0.0
        %7314 = vmatprep.subr.mxu0 0.0
        %7315 = vmatpush1.msra.mxu0 0.0
        %7316 = vmatprep.subr.mxu0 0.0
        %7317 = vmatpush1.msra.mxu0 0.0
        %7318 = vmatprep.subr.mxu0 0.0
        %7319 = vmatpush1.msra.mxu0 0.0
        %7320 = vmatprep.subr.mxu0 0.0
        %7321 = vmatpush1.msra.mxu0 0.0
        %7322 = vmatprep.subr.mxu0 0.0
        %7323 = vmatpush1.msra.mxu0 0.0
        %7324 = vmatprep.subr.mxu0 0.0
        %7325 = vmatpush1.msra.mxu0 0.0
        %7326 = vmatprep.mubr.f32.mxu0 0.0
        %7327 = vmatmul.mubr.f32.gmra.mrb[0].mxu0 %v7260
        %v7328 = vpop.f32.mrb[0].mxu0
        %v7329 = vadd.f32 0.0, %v7328
        %v7330 = vpop.f32.mrb[0].mxu0
        %v7331 = vadd.f32 0.0, %v7330
        %7332 = vdwg.mxu0
        %s7333 = scalar_lea.vmem %s14, 1152
        %v7334 = vld [vmem:[%s7333] sm:$0xff]
        %v7335 = vld [vmem:[%s7333 + $0x8] sm:$0xff]
        %v7336 = vld [vmem:[%s7333 + $0x10] sm:$0xff]
        %v7337 = vld [vmem:[%s7333 + $0x18] sm:$0xff]
        %v7338 = vld [vmem:[%s7333 + $0x20] sm:$0xff]
        %v7339 = vld [vmem:[%s7333 + $0x28] sm:$0xff]
        %v7340 = vld [vmem:[%s7333 + $0x30] sm:$0xff]
        %v7341 = vld [vmem:[%s7333 + $0x38] sm:$0xff]
        %v7342 = vld [vmem:[%s7333 + $0x40] sm:$0xff]
        %v7343 = vld [vmem:[%s7333 + $0x48] sm:$0xff]
        %v7344 = vld [vmem:[%s7333 + $0x50] sm:$0xff]
        %v7345 = vld [vmem:[%s7333 + $0x58] sm:$0xff]
        %v7346 = vld [vmem:[%s7333 + $0x60] sm:$0xff]
        %v7347 = vld [vmem:[%s7333 + $0x68] sm:$0xff]
        %v7348 = vld [vmem:[%s7333 + $0x70] sm:$0xff]
        %v7349 = vld [vmem:[%s7333 + $0x78] sm:$0xff]
        %v7350 = vld [vmem:[%s7333 + $0x80] sm:$0xff]
        %v7351 = vld [vmem:[%s7333 + $0x88] sm:$0xff]
        %v7352 = vld [vmem:[%s7333 + $0x90] sm:$0xff]
        %v7353 = vld [vmem:[%s7333 + $0x98] sm:$0xff]
        %v7354 = vld [vmem:[%s7333 + $0xa0] sm:$0xff]
        %v7355 = vld [vmem:[%s7333 + $0xa8] sm:$0xff]
        %v7356 = vld [vmem:[%s7333 + $0xb0] sm:$0xff]
        %v7357 = vld [vmem:[%s7333 + $0xb8] sm:$0xff]
        %v7359 = vsel %vm757, %v7331, 0
        %7361 = vmatprep.subr.mxu0 0.0
        %7362 = vmatpush1.msra.mxu0 %v7334
        %7363 = vmatprep.subr.mxu0 0.0
        %7364 = vmatpush1.msra.mxu0 %v7335
        %7365 = vmatprep.subr.mxu0 0.0
        %7366 = vmatpush1.msra.mxu0 %v7336
        %7367 = vmatprep.subr.mxu0 0.0
        %7368 = vmatpush1.msra.mxu0 %v7337
        %7369 = vmatprep.subr.mxu0 0.0
        %7370 = vmatpush1.msra.mxu0 %v7338
        %7371 = vmatprep.subr.mxu0 0.0
        %7372 = vmatpush1.msra.mxu0 %v7339
        %7373 = vmatprep.subr.mxu0 0.0
        %7374 = vmatpush1.msra.mxu0 %v7340
        %7375 = vmatprep.subr.mxu0 0.0
        %7376 = vmatpush1.msra.mxu0 %v7341
        %7377 = vmatprep.subr.mxu0 0.0
        %7378 = vmatpush1.msra.mxu0 %v7342
        %7379 = vmatprep.subr.mxu0 0.0
        %7380 = vmatpush1.msra.mxu0 %v7343
        %7381 = vmatprep.subr.mxu0 0.0
        %7382 = vmatpush1.msra.mxu0 %v7344
        %7383 = vmatprep.subr.mxu0 0.0
        %7384 = vmatpush1.msra.mxu0 %v7345
        %7385 = vmatprep.subr.mxu0 0.0
        %7386 = vmatpush1.msra.mxu0 %v7346
        %7387 = vmatprep.subr.mxu0 0.0
        %7388 = vmatpush1.msra.mxu0 %v7347
        %7389 = vmatprep.subr.mxu0 0.0
        %7390 = vmatpush1.msra.mxu0 %v7348
        %7391 = vmatprep.subr.mxu0 0.0
        %7392 = vmatpush1.msra.mxu0 %v7349
        %7393 = vmatprep.subr.mxu0 0.0
        %7394 = vmatpush1.msra.mxu0 %v7350
        %7395 = vmatprep.subr.mxu0 0.0
        %7396 = vmatpush1.msra.mxu0 %v7351
        %7397 = vmatprep.subr.mxu0 0.0
        %7398 = vmatpush1.msra.mxu0 %v7352
        %7399 = vmatprep.subr.mxu0 0.0
        %7400 = vmatpush1.msra.mxu0 %v7353
        %7401 = vmatprep.subr.mxu0 0.0
        %7402 = vmatpush1.msra.mxu0 %v7354
        %7403 = vmatprep.subr.mxu0 0.0
        %7404 = vmatpush1.msra.mxu0 %v7355
        %7405 = vmatprep.subr.mxu0 0.0
        %7406 = vmatpush1.msra.mxu0 %v7356
        %7407 = vmatprep.subr.mxu0 0.0
        %7408 = vmatpush1.msra.mxu0 %v7357
        %7409 = vmatprep.subr.mxu0 0.0
        %7410 = vmatpush1.msra.mxu0 0.0
        %7411 = vmatprep.subr.mxu0 0.0
        %7412 = vmatpush1.msra.mxu0 0.0
        %7413 = vmatprep.subr.mxu0 0.0
        %7414 = vmatpush1.msra.mxu0 0.0
        %7415 = vmatprep.subr.mxu0 0.0
        %7416 = vmatpush1.msra.mxu0 0.0
        %7417 = vmatprep.subr.mxu0 0.0
        %7418 = vmatpush1.msra.mxu0 0.0
        %7419 = vmatprep.subr.mxu0 0.0
        %7420 = vmatpush1.msra.mxu0 0.0
        %7421 = vmatprep.subr.mxu0 0.0
        %7422 = vmatpush1.msra.mxu0 0.0
        %7423 = vmatprep.subr.mxu0 0.0
        %7424 = vmatpush1.msra.mxu0 0.0
        %7425 = vmatprep.mubr.f32.mxu0 %v7359
        %7426 = vmatmul.mubr.f32.gmra.mrb[0].mxu0 %v7329
        %v7427 = vpop.f32.mrb[0].mxu0
        %v7428 = vadd.f32 0.0, %v7427
        %v7429 = vpop.f32.mrb[0].mxu0
        %7430 = vdwg.mxu0
        %v7431 = vadd.f32 %v7255, %v7428
        %vm7432 = vcmp.eq.s32.totalorder %v6202, 7
        %v7433 = vsel %vm7432, 1, 0
        %v7434 = vcvt.s32.f32 %v7433
        %v7436 = vsel %vm1863, %v7434, 0
        %7438 = vmatprep.subr.mxu0 %v6200
        %7439 = vmatpush1.msra.mxu0 %v6199
        %7440 = vmatprep.subr.mxu0 0.0
        %7441 = vmatpush1.msra.mxu0 0.0
        %7442 = vmatprep.subr.mxu0 0.0
        %7443 = vmatpush1.msra.mxu0 0.0
        %7444 = vmatprep.subr.mxu0 0.0
        %7445 = vmatpush1.msra.mxu0 0.0
        %7446 = vmatprep.subr.mxu0 0.0
        %7447 = vmatpush1.msra.mxu0 0.0
        %7448 = vmatprep.subr.mxu0 0.0
        %7449 = vmatpush1.msra.mxu0 0.0
        %7450 = vmatprep.subr.mxu0 0.0
        %7451 = vmatpush1.msra.mxu0 0.0
        %7452 = vmatprep.subr.mxu0 0.0
        %7453 = vmatpush1.msra.mxu0 0.0
        %7454 = vmatprep.subr.mxu0 0.0
        %7455 = vmatpush1.msra.mxu0 0.0
        %7456 = vmatprep.subr.mxu0 0.0
        %7457 = vmatpush1.msra.mxu0 0.0
        %7458 = vmatprep.subr.mxu0 0.0
        %7459 = vmatpush1.msra.mxu0 0.0
        %7460 = vmatprep.subr.mxu0 0.0
        %7461 = vmatpush1.msra.mxu0 0.0
        %7462 = vmatprep.subr.mxu0 0.0
        %7463 = vmatpush1.msra.mxu0 0.0
        %7464 = vmatprep.subr.mxu0 0.0
        %7465 = vmatpush1.msra.mxu0 0.0
        %7466 = vmatprep.subr.mxu0 0.0
        %7467 = vmatpush1.msra.mxu0 0.0
        %7468 = vmatprep.subr.mxu0 0.0
        %7469 = vmatpush1.msra.mxu0 0.0
        %7470 = vmatprep.subr.mxu0 0.0
        %7471 = vmatpush1.msra.mxu0 0.0
        %7472 = vmatprep.subr.mxu0 0.0
        %7473 = vmatpush1.msra.mxu0 0.0
        %7474 = vmatprep.subr.mxu0 0.0
        %7475 = vmatpush1.msra.mxu0 0.0
        %7476 = vmatprep.subr.mxu0 0.0
        %7477 = vmatpush1.msra.mxu0 0.0
        %7478 = vmatprep.subr.mxu0 0.0
        %7479 = vmatpush1.msra.mxu0 0.0
        %7480 = vmatprep.subr.mxu0 0.0
        %7481 = vmatpush1.msra.mxu0 0.0
        %7482 = vmatprep.subr.mxu0 0.0
        %7483 = vmatpush1.msra.mxu0 0.0
        %7484 = vmatprep.subr.mxu0 0.0
        %7485 = vmatpush1.msra.mxu0 0.0
        %7486 = vmatprep.subr.mxu0 0.0
        %7487 = vmatpush1.msra.mxu0 0.0
        %7488 = vmatprep.subr.mxu0 0.0
        %7489 = vmatpush1.msra.mxu0 0.0
        %7490 = vmatprep.subr.mxu0 0.0
        %7491 = vmatpush1.msra.mxu0 0.0
        %7492 = vmatprep.subr.mxu0 0.0
        %7493 = vmatpush1.msra.mxu0 0.0
        %7494 = vmatprep.subr.mxu0 0.0
        %7495 = vmatpush1.msra.mxu0 0.0
        %7496 = vmatprep.subr.mxu0 0.0
        %7497 = vmatpush1.msra.mxu0 0.0
        %7498 = vmatprep.subr.mxu0 0.0
        %7499 = vmatpush1.msra.mxu0 0.0
        %7500 = vmatprep.subr.mxu0 0.0
        %7501 = vmatpush1.msra.mxu0 0.0
        %7502 = vmatprep.mubr.f32.mxu0 0.0
        %7503 = vmatmul.mubr.f32.gmra.mrb[0].mxu0 %v7436
        %v7504 = vpop.f32.mrb[0].mxu0
        %v7505 = vadd.f32 0.0, %v7504
        %v7506 = vpop.f32.mrb[0].mxu0
        %v7507 = vadd.f32 0.0, %v7506
        %7508 = vdwg.mxu0
        %s7509 = scalar_lea.vmem %s14, 1344
        %v7510 = vld [vmem:[%s7509] sm:$0xff]
        %v7511 = vld [vmem:[%s7509 + $0x8] sm:$0xff]
        %v7512 = vld [vmem:[%s7509 + $0x10] sm:$0xff]
        %v7513 = vld [vmem:[%s7509 + $0x18] sm:$0xff]
        %v7514 = vld [vmem:[%s7509 + $0x20] sm:$0xff]
        %v7515 = vld [vmem:[%s7509 + $0x28] sm:$0xff]
        %v7516 = vld [vmem:[%s7509 + $0x30] sm:$0xff]
        %v7517 = vld [vmem:[%s7509 + $0x38] sm:$0xff]
        %v7518 = vld [vmem:[%s7509 + $0x40] sm:$0xff]
        %v7519 = vld [vmem:[%s7509 + $0x48] sm:$0xff]
        %v7520 = vld [vmem:[%s7509 + $0x50] sm:$0xff]
        %v7521 = vld [vmem:[%s7509 + $0x58] sm:$0xff]
        %v7522 = vld [vmem:[%s7509 + $0x60] sm:$0xff]
        %v7523 = vld [vmem:[%s7509 + $0x68] sm:$0xff]
        %v7524 = vld [vmem:[%s7509 + $0x70] sm:$0xff]
        %v7525 = vld [vmem:[%s7509 + $0x78] sm:$0xff]
        %v7526 = vld [vmem:[%s7509 + $0x80] sm:$0xff]
        %v7527 = vld [vmem:[%s7509 + $0x88] sm:$0xff]
        %v7528 = vld [vmem:[%s7509 + $0x90] sm:$0xff]
        %v7529 = vld [vmem:[%s7509 + $0x98] sm:$0xff]
        %v7530 = vld [vmem:[%s7509 + $0xa0] sm:$0xff]
        %v7531 = vld [vmem:[%s7509 + $0xa8] sm:$0xff]
        %v7532 = vld [vmem:[%s7509 + $0xb0] sm:$0xff]
        %v7533 = vld [vmem:[%s7509 + $0xb8] sm:$0xff]
        %v7535 = vsel %vm757, %v7507, 0
        %7537 = vmatprep.subr.mxu0 0.0
        %7538 = vmatpush1.msra.mxu0 %v7510
        %7539 = vmatprep.subr.mxu0 0.0
        %7540 = vmatpush1.msra.mxu0 %v7511
        %7541 = vmatprep.subr.mxu0 0.0
        %7542 = vmatpush1.msra.mxu0 %v7512
        %7543 = vmatprep.subr.mxu0 0.0
        %7544 = vmatpush1.msra.mxu0 %v7513
        %7545 = vmatprep.subr.mxu0 0.0
        %7546 = vmatpush1.msra.mxu0 %v7514
        %7547 = vmatprep.subr.mxu0 0.0
        %7548 = vmatpush1.msra.mxu0 %v7515
        %7549 = vmatprep.subr.mxu0 0.0
        %7550 = vmatpush1.msra.mxu0 %v7516
        %7551 = vmatprep.subr.mxu0 0.0
        %7552 = vmatpush1.msra.mxu0 %v7517
        %7553 = vmatprep.subr.mxu0 0.0
        %7554 = vmatpush1.msra.mxu0 %v7518
        %7555 = vmatprep.subr.mxu0 0.0
        %7556 = vmatpush1.msra.mxu0 %v7519
        %7557 = vmatprep.subr.mxu0 0.0
        %7558 = vmatpush1.msra.mxu0 %v7520
        %7559 = vmatprep.subr.mxu0 0.0
        %7560 = vmatpush1.msra.mxu0 %v7521
        %7561 = vmatprep.subr.mxu0 0.0
        %7562 = vmatpush1.msra.mxu0 %v7522
        %7563 = vmatprep.subr.mxu0 0.0
        %7564 = vmatpush1.msra.mxu0 %v7523
        %7565 = vmatprep.subr.mxu0 0.0
        %7566 = vmatpush1.msra.mxu0 %v7524
        %7567 = vmatprep.subr.mxu0 0.0
        %7568 = vmatpush1.msra.mxu0 %v7525
        %7569 = vmatprep.subr.mxu0 0.0
        %7570 = vmatpush1.msra.mxu0 %v7526
        %7571 = vmatprep.subr.mxu0 0.0
        %7572 = vmatpush1.msra.mxu0 %v7527
        %7573 = vmatprep.subr.mxu0 0.0
        %7574 = vmatpush1.msra.mxu0 %v7528
        %7575 = vmatprep.subr.mxu0 0.0
        %7576 = vmatpush1.msra.mxu0 %v7529
        %7577 = vmatprep.subr.mxu0 0.0
        %7578 = vmatpush1.msra.mxu0 %v7530
        %7579 = vmatprep.subr.mxu0 0.0
        %7580 = vmatpush1.msra.mxu0 %v7531
        %7581 = vmatprep.subr.mxu0 0.0
        %7582 = vmatpush1.msra.mxu0 %v7532
        %7583 = vmatprep.subr.mxu0 0.0
        %7584 = vmatpush1.msra.mxu0 %v7533
        %7585 = vmatprep.subr.mxu0 0.0
        %7586 = vmatpush1.msra.mxu0 0.0
        %7587 = vmatprep.subr.mxu0 0.0
        %7588 = vmatpush1.msra.mxu0 0.0
        %7589 = vmatprep.subr.mxu0 0.0
        %7590 = vmatpush1.msra.mxu0 0.0
        %7591 = vmatprep.subr.mxu0 0.0
        %7592 = vmatpush1.msra.mxu0 0.0
        %7593 = vmatprep.subr.mxu0 0.0
        %7594 = vmatpush1.msra.mxu0 0.0
        %7595 = vmatprep.subr.mxu0 0.0
        %7596 = vmatpush1.msra.mxu0 0.0
        %7597 = vmatprep.subr.mxu0 0.0
        %7598 = vmatpush1.msra.mxu0 0.0
        %7599 = vmatprep.subr.mxu0 0.0
        %7600 = vmatpush1.msra.mxu0 0.0
        %7601 = vmatprep.mubr.f32.mxu0 %v7535
        %7602 = vmatmul.mubr.f32.gmra.mrb[0].mxu0 %v7505
        %v7603 = vpop.f32.mrb[0].mxu0
        %v7604 = vadd.f32 0.0, %v7603
        %v7605 = vpop.f32.mrb[0].mxu0
        %7606 = vdwg.mxu0
        %v7607 = vadd.f32 %v7431, %v7604
        %v7608 = vld [vmem:[#allocation7] sm:$0x1]
        %v7609 = vadd.f32 %v7607, %v7608
        %v7610 = vmax.f32 %v7609, 0.0
        %v7611 = vld [vmem:[%s16] sm:$0xff]
        %v7612 = vld [vmem:[#allocation8] sm:$0x1]
        %v7614 = vsel %vm1863, %v7610, 0
        %7616 = vmatprep.subr.mxu0 0.0
        %7617 = vmatpush1.msra.mxu0 %v7611
        %7618 = vmatprep.subr.mxu0 0.0
        %7619 = vmatpush1.msra.mxu0 0.0
        %7620 = vmatprep.subr.mxu0 0.0
        %7621 = vmatpush1.msra.mxu0 0.0
        %7622 = vmatprep.subr.mxu0 0.0
        %7623 = vmatpush1.msra.mxu0 0.0
        %7624 = vmatprep.subr.mxu0 0.0
        %7625 = vmatpush1.msra.mxu0 0.0
        %7626 = vmatprep.subr.mxu0 0.0
        %7627 = vmatpush1.msra.mxu0 0.0
        %7628 = vmatprep.subr.mxu0 0.0
        %7629 = vmatpush1.msra.mxu0 0.0
        %7630 = vmatprep.subr.mxu0 0.0
        %7631 = vmatpush1.msra.mxu0 0.0
        %7632 = vmatprep.subr.mxu0 0.0
        %7633 = vmatpush1.msra.mxu0 0.0
        %7634 = vmatprep.subr.mxu0 0.0
        %7635 = vmatpush1.msra.mxu0 0.0
        %7636 = vmatprep.subr.mxu0 0.0
        %7637 = vmatpush1.msra.mxu0 0.0
        %7638 = vmatprep.subr.mxu0 0.0
        %7639 = vmatpush1.msra.mxu0 0.0
        %7640 = vmatprep.subr.mxu0 0.0
        %7641 = vmatpush1.msra.mxu0 0.0
        %7642 = vmatprep.subr.mxu0 0.0
        %7643 = vmatpush1.msra.mxu0 0.0
        %7644 = vmatprep.subr.mxu0 0.0
        %7645 = vmatpush1.msra.mxu0 0.0
        %7646 = vmatprep.subr.mxu0 0.0
        %7647 = vmatpush1.msra.mxu0 0.0
        %7648 = vmatprep.subr.mxu0 0.0
        %7649 = vmatpush1.msra.mxu0 0.0
        %7650 = vmatprep.subr.mxu0 0.0
        %7651 = vmatpush1.msra.mxu0 0.0
        %7652 = vmatprep.subr.mxu0 0.0
        %7653 = vmatpush1.msra.mxu0 0.0
        %7654 = vmatprep.subr.mxu0 0.0
        %7655 = vmatpush1.msra.mxu0 0.0
        %7656 = vmatprep.subr.mxu0 0.0
        %7657 = vmatpush1.msra.mxu0 0.0
        %7658 = vmatprep.subr.mxu0 0.0
        %7659 = vmatpush1.msra.mxu0 0.0
        %7660 = vmatprep.subr.mxu0 0.0
        %7661 = vmatpush1.msra.mxu0 0.0
        %7662 = vmatprep.subr.mxu0 0.0
        %7663 = vmatpush1.msra.mxu0 0.0
        %7664 = vmatprep.subr.mxu0 0.0
        %7665 = vmatpush1.msra.mxu0 0.0
        %7666 = vmatprep.subr.mxu0 0.0
        %7667 = vmatpush1.msra.mxu0 0.0
        %7668 = vmatprep.subr.mxu0 0.0
        %7669 = vmatpush1.msra.mxu0 0.0
        %7670 = vmatprep.subr.mxu0 0.0
        %7671 = vmatpush1.msra.mxu0 0.0
        %7672 = vmatprep.subr.mxu0 0.0
        %7673 = vmatpush1.msra.mxu0 0.0
        %7674 = vmatprep.subr.mxu0 0.0
        %7675 = vmatpush1.msra.mxu0 0.0
        %7676 = vmatprep.subr.mxu0 0.0
        %7677 = vmatpush1.msra.mxu0 0.0
        %7678 = vmatprep.subr.mxu0 0.0
        %7679 = vmatpush1.msra.mxu0 0.0
        %7680 = vmatprep.mubr.f32.mxu0 0.0
        %7681 = vmatmul.mubr.f32.gmra.mrb[0].mxu0 %v7614
        %v7682 = vpop.f32.mrb[0].mxu0
        %v7683 = vadd.f32 %v7612, %v7682
        %v7684 = vpop.f32.mrb[0].mxu0
        %7685 = vdwg.mxu0
        %vm7686 = vcmask 24576
        %7687 = vst.msk [vmem:[%s630] sm:$0x1] %vm7686, %v7683
        %s7688 = sand.u32 %s428, 1
        %s7689 = scalar_lea.sflag [#allocation4], %s7688
        %s7690 = sand.u32 %s428, 1
        %s7691 = scalar_lea.vmem [#allocation10], %s7690
        // Predicated region
        $region109: #{tpu_custom_call.1} parent=91 // pred_check
          %p7692 = pneg %p438
        $region110: #{tpu_custom_call.1} parent=91 // pred_check_branch
          %7694 = sbr.rel (%p7692) target = $region112
        $region111: #{tpu_custom_call.1} parent=91 // pred_region
          %s7696 = ssub.s32 16, 16
          %7697 = vsyncadd %s7689, %s7696
          %s7698 = smul.addr %s37, 16
          %s7699 = scalar_lea.hbm %s18, %s7698
          %s7701 = sshll.u32 %s7691, 4
          %s7702 = int_to_ptr.vmem [resolvable:$true] %s7701
          %7704 = dma.vmem_to_hbm [thread:$0]  %s7702, 16, %s7699, %s7689
        $region112: #{tpu_custom_call.1} parent=91 // pred_fallthru
          _
      $region92: #{tpu_custom_call.1} parent=5 // pred_fallthru
        _
      %p7705 = scmp.le.s32.totalorder 2, %s32
      // Predicated region
      $region113: #{tpu_custom_call.1} parent=5 // pred_check
        %p7706 = pneg %p7705
      $region114: #{tpu_custom_call.1} parent=5 // pred_check_branch
        %7708 = sbr.rel (%p7706) target = $region116
      $region115: #{tpu_custom_call.1} parent=5 // pred_region
        %s7709 = ssub.s32 %s32, 2
        // Predicated region
        $region117: #{tpu_custom_call.1} parent=115 // pred_check
          %p7710 = pneg %p444
        $region118: #{tpu_custom_call.1} parent=115 // pred_check_branch
          %7712 = sbr.rel (%p7710) target = $region120
        $region119: #{tpu_custom_call.1} parent=115 // pred_region
          %s7713 = sand.u32 %s429, 1
          %s7714 = scalar_lea.sflag [#allocation4], %s7713
          %s7715 = sand.u32 %s429, 1
          %s7716 = scalar_lea.vmem [#allocation10], %s7715
          %7717 = dma.done %s7714, 16
        $region120: #{tpu_custom_call.1} parent=115 // pred_fallthru
          _
      $region116: #{tpu_custom_call.1} parent=5 // pred_fallthru
        _
    $region6: #{tpu_custom_call.1} parent=1 // loop_footer
      %s36 = sadd.s32 1, %s32
    $region7: #{tpu_custom_call.1} parent=1 // loop_footer_branch
      %31 = sbr.rel target = $region3
    $region8: #{tpu_custom_call.1} parent=1 // loop_exit
      _
    %7718 = vsyncpa [#allocation3], 1
    %s7719 = scalar_lea.sflag [#allocation3], 1
    %7720 = vsyncpa %s7719, 1
    %7721 = vsyncpa [#allocation6], 1
    %7722 = vsyncpa [#allocation9], 1
    %7723 = vsyncpa [#allocation4], 1
    %s7724 = scalar_lea.sflag [#allocation4], 1
    %7725 = vsyncpa %s7724, 1

</llo_original>
